<compile_context>
chip_gen: v5e
topology: v5e:2x2
jax: 0.10.0
libtpu: 0.0.40
codegen_flags: <defaults>
</compile_context>

<pallas_src>
import functools

import numpy as np
import jax
import jax.numpy as jnp
from jax import lax
from jax.experimental import pallas as pl
from jax.experimental.pallas import tpu as pltpu


def _combine_masked_weight(weight_oihw, masks_c, masks_k, aw_c, aw_k):
    """Fold sum_i aw_c[i]*masks_c[i] and sum_j aw_k[j]*masks_k[j] into the
    weight.  Mathematically identical to masking inside the conv; doing it
    once here removes all per-tap / per-channel mask math from the kernel."""
    C_out, _, K, _ = weight_oihw.shape
    mask_c = jnp.einsum('i,ic->c', aw_c.astype(jnp.float32),
                        masks_c.reshape(-1, C_out).astype(jnp.float32))
    mask_k = jnp.einsum('i,ikl->kl', aw_k.astype(jnp.float32),
                        masks_k.reshape(-1, K, K).astype(jnp.float32))
    return (weight_oihw.astype(jnp.float32)
            * mask_c[:, None, None, None] * mask_k[None, None, :, :])


def _sk_conv_mm_kernel(x_ref, w_ref, b_ref, o_ref, *,
                       K, stride, dilation, TH, Wo, C_in, C_out):
    """Dense / grouped conv: K*K MXU matmuls accumulated in f32.

    x_ref: (1, Hp, Wp, C_in)     bf16  (padded image, resident per batch)
    w_ref: (K*K, C_in, C_out)    bf16  (mask-folded; block-diagonal if grouped)
    b_ref: (1, C_out)            f32
    o_ref: (1, 1, TH*Wo, C_out)  lane-dense slab, only real channels written
    """
    t = pl.program_id(1)
    h_base = pl.multiple_of(t * (TH * stride), TH * stride)

    acc = jnp.zeros((TH * Wo, C_out), jnp.float32)
    for kh in range(K):
        for kw in range(K):
            p = kh * K + kw
            h0 = h_base + kh * dilation
            w0 = kw * dilation
            if stride == 1:
                patch = x_ref[0, pl.ds(h0, TH), pl.ds(w0, Wo), :]
            else:
                # TODO(synk): for stride>1 a single per-tile decimation copy
                # would replace K*K strided sublane reads with dense reads.
                patch = x_ref[0, pl.ds(h0, TH, stride),
                              pl.ds(w0, Wo, stride), :]
            lhs = patch.reshape(TH * Wo, C_in)
            acc = acc + jnp.dot(lhs, w_ref[p],
                                preferred_element_type=jnp.float32)
    acc = acc + b_ref[...]                       # f32 epilogue (broadcast once)
    o_ref[0, 0] = acc.astype(o_ref.dtype)


def _sk_conv_dw_kernel(x_ref, w_ref, b_ref, o_ref, *,
                       K, stride, dilation, TH, Wo):
    """Depthwise path (groups == c_in == c_out): VPU broadcast FMA per tap.

    x_ref: (1, Hp, Wp, C) bf16;  w_ref: (K*K, C) bf16;  b_ref: (1, C) f32
    o_ref: (1, TH, Wo, C)
    """
    t = pl.program_id(1)
    h_base = pl.multiple_of(t * (TH * stride), TH * stride)
    C = x_ref.shape[-1]

    w_f32 = w_ref[...].astype(jnp.float32)       # (K*K, C), upcast hoisted
    acc = jnp.zeros((TH, Wo, C), jnp.float32)
    for kh in range(K):
        for kw in range(K):
            p = kh * K + kw
            h0 = h_base + kh * dilation
            w0 = kw * dilation
            if stride == 1:
                patch = x_ref[0, pl.ds(h0, TH), pl.ds(w0, Wo), :]
            else:
                patch = x_ref[0, pl.ds(h0, TH, stride),
                              pl.ds(w0, Wo, stride), :]
            acc = acc + patch.astype(jnp.float32) * w_f32[p].reshape(1, 1, C)

    o_ref[0] = (acc + b_ref[...].reshape(1, 1, C)).astype(o_ref.dtype)


def _vmem_budget_bytes():
    """Generation-aware VMEM budget (~88% of physical: ~112 MiB on v5e/v6e,
    ~56 MiB on v7x) instead of a flat cap."""
    try:
        cap = int(pltpu.get_tpu_info().vmem_capacity_bytes)
    except Exception:
        cap = 64 * 2 ** 20          # conservative (v7x-sized) fallback
    return max(int(0.88 * cap), 32 * 2 ** 20)


def super_kernel_conv(x_nchw, weight_oihw, bias, masks_c, masks_k, aw_c, aw_k,
                      *, stride=1, dilation=1, padding='same', groups=1,
                      block_rows=None):
    """Forward pass of SuperKernelConv (PyTorch NCHW semantics)."""
    N, C_in, H, W = x_nchw.shape
    C_out, cig, K, K2 = weight_oihw.shape
    assert K == K2 and cig * groups == C_in and C_out % groups == 0
    cog = C_out // groups

    # uninas get_padding('same', max_k, stride, 1) -> (max_k - 1) // 2
    pad = (K - 1) // 2 if padding == 'same' else int(padding)
    Hp, Wp = H + 2 * pad, W + 2 * pad
    Ho = (Hp - dilation * (K - 1) - 1) // stride + 1
    Wo = (Wp - dilation * (K - 1) - 1) // stride + 1

    # Fold the architecture-weighted masks into the weight (once, in f32).
    w_masked = _combine_masked_weight(weight_oihw, masks_c, masks_k, aw_c, aw_k)

    # Glue: NCHW -> NHWC.
    # TODO(synk): keeping activations NHWC across layers would avoid this
    # HBM transpose / pad / cast round-trip per layer.
    x_nhwc = jnp.transpose(x_nchw, (0, 2, 3, 1))

    bias_f32 = (jnp.zeros((C_out,), jnp.float32) if bias is None
                else bias.astype(jnp.float32).reshape(C_out))
    out_dtype = x_nchw.dtype          # conv output dtype follows input (PyTorch)
    out_isize = jnp.dtype(out_dtype).itemsize
    depthwise = (cig == 1 and cog == 1)   # module default groups=-1 -> c_out

    budget = _vmem_budget_bytes()

    # ----- row-tile (TH) selection -------------------------------------------
    # Working-set estimate (2x = Pallas double buffering per BlockSpec'd op):
    #   image  ~ 2 * Hp*Wp*C_in*2B   weight ~ 2 * K*K*C_in*C_out*2B
    #   bias   ~ 2 * C_out*4B        output ~ 2 * TH*Wo*C_out*out_isize
    #   f32 accumulator / patch temps ~ TH*Wo*(C_out*4 + C_in*2)
    fixed_bytes = (2 * Hp * Wp * C_in * 2 + 2 * K * K * C_in * C_out * 2
                   + 2 * C_out * 4)

    def _tile_bytes(th):
        return (2 * th * Wo * C_out * out_isize
                + th * Wo * (C_out * 4 + C_in * 2))

    if block_rows is None:
        # Target a large MXU M per step (fewer grid steps, longer lane-dense
        # stores), then shrink until the working set fits the VMEM budget.
        TH = min(Ho, max(1, (2048 + Wo - 1) // max(Wo, 1)))
        if depthwise:
            # Cap the depthwise f32 accumulator to ~512 KiB (VPU/vreg path).
            TH = min(TH, max(1, (512 * 1024) // max(Wo * C_out * 4, 1)))
        while TH > 1 and fixed_bytes + _tile_bytes(TH) > budget:
            TH = max(1, TH // 2)
    else:
        TH = max(1, min(int(block_rows), Ho))
    n_th = (Ho + TH - 1) // TH
    Ho_pad = n_th * TH                          # ragged last tile -> pad rows

    # Pad the input so every (possibly ragged) row tile's window is in bounds.
    Hp_need = (Ho_pad - 1) * stride + dilation * (K - 1) + 1
    x_pad = jnp.pad(x_nhwc, ((0, 0), (pad, pad + max(0, Hp_need - Hp)),
                             (pad, pad), (0, 0)))
    Hp_pad = x_pad.shape[1]
    x_pad = x_pad.astype(jnp.bfloat16)          # halve input DMA bytes

    flops = 2 * N * Ho * Wo * C_out * K * K * cig
    bytes_accessed = (N * Hp_pad * Wp * C_in * 2
                      + K * K * C_in * C_out * 2
                      + N * Ho * Wo * C_out * out_isize)
    cost = pl.CostEstimate(flops=flops, transcendentals=0,
                           bytes_accessed=bytes_accessed)
    cparams = pltpu.CompilerParams(
        dimension_semantics=("parallel", "parallel"),
        vmem_limit_bytes=budget)
    # TODO(synk): for images too large to stay resident in VMEM (v7x, 64 MiB),
    # switch the image to memory_space=pl.ANY plus a manually double-buffered
    # haloed row-window DMA (trades away the "parallel" batch axis).

    if depthwise:
        # weight (C, 1, K, K) -> (K*K, C)
        w_dw = jnp.transpose(w_masked[:, 0], (1, 2, 0)).reshape(K * K, C_out)
        w_dw = w_dw.astype(jnp.bfloat16)

        kernel = functools.partial(_sk_conv_dw_kernel, K=K, stride=stride,
                                   dilation=dilation, TH=TH, Wo=Wo)
        out_nhwc = pl.pallas_call(
            kernel,
            out_shape=jax.ShapeDtypeStruct((N, Ho_pad, Wo, C_out), out_dtype),
            grid=(N, n_th),
            in_specs=[
                pl.BlockSpec((1, Hp_pad, Wp, C_in), lambda n, t: (n, 0, 0, 0)),
                pl.BlockSpec((K * K, C_out), lambda n, t: (0, 0)),
                pl.BlockSpec((1, C_out), lambda n, t: (0, 0)),
            ],
            out_specs=pl.BlockSpec((1, TH, Wo, C_out),
                                   lambda n, t: (n, t, 0, 0)),
            compiler_params=cparams,
            cost_estimate=cost,
        )(x_pad, w_dw, bias_f32.reshape(1, C_out))
        out_nhwc = out_nhwc[:, :Ho]
    else:
        # Per-tap (C_in, C_out) weights; grouped convs become one dense matmul
        # per tap with a block-diagonal RHS (no per-group padding / loop).
        w_kk = jnp.transpose(w_masked, (2, 3, 1, 0)).reshape(K * K, cig, C_out)
        if groups == 1:
            w_taps = w_kk
        else:
            w_taps = jnp.zeros((K * K, C_in, C_out), jnp.float32)
            for g in range(groups):
                w_taps = w_taps.at[:, g * cig:(g + 1) * cig,
                                   g * cog:(g + 1) * cog].set(
                    w_kk[:, :, g * cog:(g + 1) * cog])
        w_taps = w_taps.astype(jnp.bfloat16)

        kernel = functools.partial(_sk_conv_mm_kernel, K=K, stride=stride,
                                   dilation=dilation, TH=TH, Wo=Wo,
                                   C_in=C_in, C_out=C_out)
        out_slab = pl.pallas_call(
            kernel,
            out_shape=jax.ShapeDtypeStruct((N, n_th, TH * Wo, C_out),
                                           out_dtype),
            grid=(N, n_th),
            in_specs=[
                pl.BlockSpec((1, Hp_pad, Wp, C_in), lambda n, t: (n, 0, 0, 0)),
                pl.BlockSpec((K * K, C_in, C_out), lambda n, t: (0, 0, 0)),
                pl.BlockSpec((1, C_out), lambda n, t: (0, 0)),
            ],
            out_specs=pl.BlockSpec((1, 1, TH * Wo, C_out),
                                   lambda n, t: (n, t, 0, 0)),
            compiler_params=cparams,
            cost_estimate=cost,
        )(x_pad, w_taps, bias_f32.reshape(1, C_out))
        out_nhwc = out_slab.reshape(N, Ho_pad, Wo, C_out)[:, :Ho]

    return jnp.transpose(out_nhwc, (0, 3, 1, 2))    # back to NCHW


if __name__ == "__main__":
    key = jax.random.PRNGKey(0)
    N, C, H, W = 2, 4, 16, 16
    k_sizes = (3, 5)
    c_multipliers = (0.5, 1.0)
    max_k = max(k_sizes)
    stride, dilation = 1, 1
    pad = (max_k - 1) // 2

    k_w, k_wd, k_ac, k_ak, k_x, k_b = jax.random.split(key, 6)

    # registered buffers: channel masks and kernel-size masks (as in __init__)
    channels = [int(C * cm) for cm in sorted(c_multipliers)]
    masks_c = jnp.stack([(jnp.arange(C) < cs).astype(jnp.float32)
                         for cs in channels])                     # (n_c, C_out)
    mk_list = []
    for k in sorted(k_sizes):
        dk = (max_k - k) // 2
        m = jnp.zeros((max_k, max_k), jnp.float32)
        m = m + 1.0 if dk == 0 else m.at[dk:-dk, dk:-dk].set(1.0)
        mk_list.append(m)
    masks_k = jnp.stack(mk_list)                                  # (n_k, K, K)

    # TODO(synk): StrategyManager architecture weights are synthesized here as
    # softmax weights (what ws.combine_info yields for differentiable NAS).
    aw_c = jax.nn.softmax(jax.random.normal(k_ac, (len(channels),)))
    aw_k = jax.nn.softmax(jax.random.normal(k_ak, (len(k_sizes),)))

    x = jax.random.normal(k_x, (N, C, H, W), dtype=jnp.float32)
    std = (2.0 / (C * max_k * max_k)) ** 0.5    # kaiming_normal_(fan_out)

    def reference(x_in, w_masked, b, groups):
        # PyTorch-equivalent masked-weight conv2d, with the kernel's bf16
        # matmul-operand rounding mirrored (accumulation stays f32 in both).
        xb = x_in.astype(jnp.bfloat16).astype(jnp.float32)
        wb = w_masked.astype(jnp.bfloat16).astype(jnp.float32)
        out = lax.conv_general_dilated(
            xb, wb, window_strides=(stride, stride),
            padding=[(pad, pad), (pad, pad)],
            rhs_dilation=(dilation, dilation),
            dimension_numbers=('NCHW', 'OIHW', 'NCHW'),
            feature_group_count=groups, precision=lax.Precision.HIGHEST)
        if b is not None:
            out = out + b[None, :, None, None]
        return out

    # --- case 1: groups=1 (dense conv, per-tap MXU path, auto tile size) -----
    groups = 1
    weight = std * jax.random.normal(
        k_w, (C, C // groups, max_k, max_k), dtype=jnp.float32)
    out1 = super_kernel_conv(x, weight, None, masks_c, masks_k, aw_c, aw_k,
                             stride=stride, dilation=dilation, padding='same',
                             groups=groups)
    out1 = jax.block_until_ready(out1)
    ref1 = reference(x, _combine_masked_weight(weight, masks_c, masks_k,
                                               aw_c, aw_k), None, groups)
    assert out1.shape == (N, C, H, W)
    np.testing.assert_allclose(np.asarray(out1), np.asarray(ref1),
                               rtol=2e-3, atol=2e-3)

    # --- case 2: depthwise (module default groups=-1 -> c_out), with bias ----
    groups = C
    weight_dw = std * jax.random.normal(k_wd, (C, 1, max_k, max_k),
                                        dtype=jnp.float32)
    bias = 0.1 * jax.random.normal(k_b, (C,), dtype=jnp.float32)
    out2 = super_kernel_conv(x, weight_dw, bias, masks_c, masks_k, aw_c, aw_k,
                             stride=stride, dilation=dilation, padding='same',
                             groups=groups)
    out2 = jax.block_until_ready(out2)
    ref2 = reference(x, _combine_masked_weight(weight_dw, masks_c, masks_k,
                                               aw_c, aw_k), bias, groups)
    assert out2.shape == (N, C, H, W)
    np.testing.assert_allclose(np.asarray(out2), np.asarray(ref2),
                               rtol=2e-3, atol=2e-3)

    # --- case 3: ragged row tiles (block_rows=5 does not divide Ho=16) -------
    out3 = super_kernel_conv(x, weight, None, masks_c, masks_k, aw_c, aw_k,
                             stride=stride, dilation=dilation, padding='same',
                             groups=1, block_rows=5)
    out3 = jax.block_until_ready(out3)
    assert out3.shape == (N, C, H, W)
    np.testing.assert_allclose(np.asarray(out3), np.asarray(ref1),
                               rtol=2e-3, atol=2e-3)

    print("KERNEL_OK")
</pallas_src>

<mosaic_0001>
module attributes {stable_mosaic.version = 11 : i64} {
  func.func @_sk_conv_mm_kernel(%arg0: i32, %arg1: i32, %arg2: memref<1x20x20x4xbf16, #tpu.memory_space<vmem>>, %arg3: memref<25x4x4xbf16, #tpu.memory_space<vmem>>, %arg4: memref<1x4xf32, #tpu.memory_space<vmem>>, %arg5: memref<1x1x256x4xf32, #tpu.memory_space<vmem>>) attributes {dimension_semantics = [#tpu.dimension_semantics<parallel>, #tpu.dimension_semantics<parallel>], iteration_bounds = array<i64: 2, 1>, scalar_prefetch = 0 : i64, scratch_operands = 0 : i64, tpu.core_type = #tpu.core_type<tc>, window_params = [{transform_indices = @transform_0, window_bounds = array<i64: 1, 20, 20, 4>}, {pipeline_mode = #tpu.pipeline_mode<synchronous>, transform_indices = @transform_1, window_bounds = array<i64: 25, 4, 4>}, {pipeline_mode = #tpu.pipeline_mode<synchronous>, transform_indices = @transform_2, window_bounds = array<i64: 1, 4>}, {transform_indices = @transform_3, window_bounds = array<i64: 1, 1, 256, 4>}]} {
    %c16_i32 = arith.constant 16 : i32
    %0 = arith.muli %arg1, %c16_i32 : i32
    %1 = tpu.assume_multiple %0, 16 : i32
    %cst = arith.constant 0.000000e+00 : f32
    %2 = vector.broadcast %cst : f32 to vector<256x4xf32>
    %c0_i32 = arith.constant 0 : i32
    %3 = arith.addi %1, %c0_i32 : i32
    %c0 = arith.constant 0 : index
    %4 = arith.index_cast %3 : i32 to index
    %c0_0 = arith.constant 0 : index
    %c0_1 = arith.constant 0 : index
    %5 = vector.load %arg2[%c0, %4, %c0_0, %c0_1] : memref<1x20x20x4xbf16, #tpu.memory_space<vmem>>, vector<1x16x16x4xbf16>
    %6 = vector.shape_cast %5 : vector<1x16x16x4xbf16> to vector<16x16x4xbf16>
    %7 = vector.shape_cast %6 : vector<16x16x4xbf16> to vector<256x4xbf16>
    %c0_2 = arith.constant 0 : index
    %c0_3 = arith.constant 0 : index
    %c0_4 = arith.constant 0 : index
    %8 = vector.load %arg3[%c0_2, %c0_3, %c0_4] : memref<25x4x4xbf16, #tpu.memory_space<vmem>>, vector<1x4x4xbf16>
    %9 = vector.shape_cast %8 : vector<1x4x4xbf16> to vector<4x4xbf16>
    %cst_5 = arith.constant dense<0.000000e+00> : vector<256x4xf32>
    %10 = tpu.matmul %7, %9, %cst_5 {dimension_numbers = #tpu.dot_dimension_numbers<[1], [0], [0], [1], [0, 0, 1, 1], [], []>} : vector<256x4xbf16>, vector<4x4xbf16>, vector<256x4xf32> -> vector<256x4xf32>
    %11 = arith.addf %2, %10 : vector<256x4xf32>
    %c0_i32_6 = arith.constant 0 : i32
    %12 = arith.addi %1, %c0_i32_6 : i32
    %c0_7 = arith.constant 0 : index
    %13 = arith.index_cast %12 : i32 to index
    %c1 = arith.constant 1 : index
    %c0_8 = arith.constant 0 : index
    %14 = vector.load %arg2[%c0_7, %13, %c1, %c0_8] : memref<1x20x20x4xbf16, #tpu.memory_space<vmem>>, vector<1x16x16x4xbf16>
    %15 = vector.shape_cast %14 : vector<1x16x16x4xbf16> to vector<16x16x4xbf16>
    %16 = vector.shape_cast %15 : vector<16x16x4xbf16> to vector<256x4xbf16>
    %c1_9 = arith.constant 1 : index
    %c0_10 = arith.constant 0 : index
    %c0_11 = arith.constant 0 : index
    %17 = vector.load %arg3[%c1_9, %c0_10, %c0_11] : memref<25x4x4xbf16, #tpu.memory_space<vmem>>, vector<1x4x4xbf16>
    %18 = vector.shape_cast %17 : vector<1x4x4xbf16> to vector<4x4xbf16>
    %cst_12 = arith.constant dense<0.000000e+00> : vector<256x4xf32>
    %19 = tpu.matmul %16, %18, %cst_12 {dimension_numbers = #tpu.dot_dimension_numbers<[1], [0], [0], [1], [0, 0, 1, 1], [], []>} : vector<256x4xbf16>, vector<4x4xbf16>, vector<256x4xf32> -> vector<256x4xf32>
    %20 = arith.addf %11, %19 : vector<256x4xf32>
    %c0_i32_13 = arith.constant 0 : i32
    %21 = arith.addi %1, %c0_i32_13 : i32
    %c0_14 = arith.constant 0 : index
    %22 = arith.index_cast %21 : i32 to index
    %c2 = arith.constant 2 : index
    %c0_15 = arith.constant 0 : index
    %23 = vector.load %arg2[%c0_14, %22, %c2, %c0_15] : memref<1x20x20x4xbf16, #tpu.memory_space<vmem>>, vector<1x16x16x4xbf16>
    %24 = vector.shape_cast %23 : vector<1x16x16x4xbf16> to vector<16x16x4xbf16>
    %25 = vector.shape_cast %24 : vector<16x16x4xbf16> to vector<256x4xbf16>
    %c2_16 = arith.constant 2 : index
    %c0_17 = arith.constant 0 : index
    %c0_18 = arith.constant 0 : index
    %26 = vector.load %arg3[%c2_16, %c0_17, %c0_18] : memref<25x4x4xbf16, #tpu.memory_space<vmem>>, vector<1x4x4xbf16>
    %27 = vector.shape_cast %26 : vector<1x4x4xbf16> to vector<4x4xbf16>
    %cst_19 = arith.constant dense<0.000000e+00> : vector<256x4xf32>
    %28 = tpu.matmul %25, %27, %cst_19 {dimension_numbers = #tpu.dot_dimension_numbers<[1], [0], [0], [1], [0, 0, 1, 1], [], []>} : vector<256x4xbf16>, vector<4x4xbf16>, vector<256x4xf32> -> vector<256x4xf32>
    %29 = arith.addf %20, %28 : vector<256x4xf32>
    %c0_i32_20 = arith.constant 0 : i32
    %30 = arith.addi %1, %c0_i32_20 : i32
    %c0_21 = arith.constant 0 : index
    %31 = arith.index_cast %30 : i32 to index
    %c3 = arith.constant 3 : index
    %c0_22 = arith.constant 0 : index
    %32 = vector.load %arg2[%c0_21, %31, %c3, %c0_22] : memref<1x20x20x4xbf16, #tpu.memory_space<vmem>>, vector<1x16x16x4xbf16>
    %33 = vector.shape_cast %32 : vector<1x16x16x4xbf16> to vector<16x16x4xbf16>
    %34 = vector.shape_cast %33 : vector<16x16x4xbf16> to vector<256x4xbf16>
    %c3_23 = arith.constant 3 : index
    %c0_24 = arith.constant 0 : index
    %c0_25 = arith.constant 0 : index
    %35 = vector.load %arg3[%c3_23, %c0_24, %c0_25] : memref<25x4x4xbf16, #tpu.memory_space<vmem>>, vector<1x4x4xbf16>
    %36 = vector.shape_cast %35 : vector<1x4x4xbf16> to vector<4x4xbf16>
    %cst_26 = arith.constant dense<0.000000e+00> : vector<256x4xf32>
    %37 = tpu.matmul %34, %36, %cst_26 {dimension_numbers = #tpu.dot_dimension_numbers<[1], [0], [0], [1], [0, 0, 1, 1], [], []>} : vector<256x4xbf16>, vector<4x4xbf16>, vector<256x4xf32> -> vector<256x4xf32>
    %38 = arith.addf %29, %37 : vector<256x4xf32>
    %c0_i32_27 = arith.constant 0 : i32
    %39 = arith.addi %1, %c0_i32_27 : i32
    %c0_28 = arith.constant 0 : index
    %40 = arith.index_cast %39 : i32 to index
    %c4 = arith.constant 4 : index
    %c0_29 = arith.constant 0 : index
    %41 = vector.load %arg2[%c0_28, %40, %c4, %c0_29] : memref<1x20x20x4xbf16, #tpu.memory_space<vmem>>, vector<1x16x16x4xbf16>
    %42 = vector.shape_cast %41 : vector<1x16x16x4xbf16> to vector<16x16x4xbf16>
    %43 = vector.shape_cast %42 : vector<16x16x4xbf16> to vector<256x4xbf16>
    %c4_30 = arith.constant 4 : index
    %c0_31 = arith.constant 0 : index
    %c0_32 = arith.constant 0 : index
    %44 = vector.load %arg3[%c4_30, %c0_31, %c0_32] : memref<25x4x4xbf16, #tpu.memory_space<vmem>>, vector<1x4x4xbf16>
    %45 = vector.shape_cast %44 : vector<1x4x4xbf16> to vector<4x4xbf16>
    %cst_33 = arith.constant dense<0.000000e+00> : vector<256x4xf32>
    %46 = tpu.matmul %43, %45, %cst_33 {dimension_numbers = #tpu.dot_dimension_numbers<[1], [0], [0], [1], [0, 0, 1, 1], [], []>} : vector<256x4xbf16>, vector<4x4xbf16>, vector<256x4xf32> -> vector<256x4xf32>
    %47 = arith.addf %38, %46 : vector<256x4xf32>
    %c1_i32 = arith.constant 1 : i32
    %48 = arith.addi %1, %c1_i32 : i32
    %c0_34 = arith.constant 0 : index
    %49 = arith.index_cast %48 : i32 to index
    %c0_35 = arith.constant 0 : index
    %c0_36 = arith.constant 0 : index
    %50 = vector.load %arg2[%c0_34, %49, %c0_35, %c0_36] : memref<1x20x20x4xbf16, #tpu.memory_space<vmem>>, vector<1x16x16x4xbf16>
    %51 = vector.shape_cast %50 : vector<1x16x16x4xbf16> to vector<16x16x4xbf16>
    %52 = vector.shape_cast %51 : vector<16x16x4xbf16> to vector<256x4xbf16>
    %c5 = arith.constant 5 : index
    %c0_37 = arith.constant 0 : index
    %c0_38 = arith.constant 0 : index
    %53 = vector.load %arg3[%c5, %c0_37, %c0_38] : memref<25x4x4xbf16, #tpu.memory_space<vmem>>, vector<1x4x4xbf16>
    %54 = vector.shape_cast %53 : vector<1x4x4xbf16> to vector<4x4xbf16>
    %cst_39 = arith.constant dense<0.000000e+00> : vector<256x4xf32>
    %55 = tpu.matmul %52, %54, %cst_39 {dimension_numbers = #tpu.dot_dimension_numbers<[1], [0], [0], [1], [0, 0, 1, 1], [], []>} : vector<256x4xbf16>, vector<4x4xbf16>, vector<256x4xf32> -> vector<256x4xf32>
    %56 = arith.addf %47, %55 : vector<256x4xf32>
    %c1_i32_40 = arith.constant 1 : i32
    %57 = arith.addi %1, %c1_i32_40 : i32
    %c0_41 = arith.constant 0 : index
    %58 = arith.index_cast %57 : i32 to index
    %c1_42 = arith.constant 1 : index
    %c0_43 = arith.constant 0 : index
    %59 = vector.load %arg2[%c0_41, %58, %c1_42, %c0_43] : memref<1x20x20x4xbf16, #tpu.memory_space<vmem>>, vector<1x16x16x4xbf16>
    %60 = vector.shape_cast %59 : vector<1x16x16x4xbf16> to vector<16x16x4xbf16>
    %61 = vector.shape_cast %60 : vector<16x16x4xbf16> to vector<256x4xbf16>
    %c6 = arith.constant 6 : index
    %c0_44 = arith.constant 0 : index
    %c0_45 = arith.constant 0 : index
    %62 = vector.load %arg3[%c6, %c0_44, %c0_45] : memref<25x4x4xbf16, #tpu.memory_space<vmem>>, vector<1x4x4xbf16>
    %63 = vector.shape_cast %62 : vector<1x4x4xbf16> to vector<4x4xbf16>
    %cst_46 = arith.constant dense<0.000000e+00> : vector<256x4xf32>
    %64 = tpu.matmul %61, %63, %cst_46 {dimension_numbers = #tpu.dot_dimension_numbers<[1], [0], [0], [1], [0, 0, 1, 1], [], []>} : vector<256x4xbf16>, vector<4x4xbf16>, vector<256x4xf32> -> vector<256x4xf32>
    %65 = arith.addf %56, %64 : vector<256x4xf32>
    %c1_i32_47 = arith.constant 1 : i32
    %66 = arith.addi %1, %c1_i32_47 : i32
    %c0_48 = arith.constant 0 : index
    %67 = arith.index_cast %66 : i32 to index
    %c2_49 = arith.constant 2 : index
    %c0_50 = arith.constant 0 : index
    %68 = vector.load %arg2[%c0_48, %67, %c2_49, %c0_50] : memref<1x20x20x4xbf16, #tpu.memory_space<vmem>>, vector<1x16x16x4xbf16>
    %69 = vector.shape_cast %68 : vector<1x16x16x4xbf16> to vector<16x16x4xbf16>
    %70 = vector.shape_cast %69 : vector<16x16x4xbf16> to vector<256x4xbf16>
    %c7 = arith.constant 7 : index
    %c0_51 = arith.constant 0 : index
    %c0_52 = arith.constant 0 : index
    %71 = vector.load %arg3[%c7, %c0_51, %c0_52] : memref<25x4x4xbf16, #tpu.memory_space<vmem>>, vector<1x4x4xbf16>
    %72 = vector.shape_cast %71 : vector<1x4x4xbf16> to vector<4x4xbf16>
    %cst_53 = arith.constant dense<0.000000e+00> : vector<256x4xf32>
    %73 = tpu.matmul %70, %72, %cst_53 {dimension_numbers = #tpu.dot_dimension_numbers<[1], [0], [0], [1], [0, 0, 1, 1], [], []>} : vector<256x4xbf16>, vector<4x4xbf16>, vector<256x4xf32> -> vector<256x4xf32>
    %74 = arith.addf %65, %73 : vector<256x4xf32>
    %c1_i32_54 = arith.constant 1 : i32
    %75 = arith.addi %1, %c1_i32_54 : i32
    %c0_55 = arith.constant 0 : index
    %76 = arith.index_cast %75 : i32 to index
    %c3_56 = arith.constant 3 : index
    %c0_57 = arith.constant 0 : index
    %77 = vector.load %arg2[%c0_55, %76, %c3_56, %c0_57] : memref<1x20x20x4xbf16, #tpu.memory_space<vmem>>, vector<1x16x16x4xbf16>
    %78 = vector.shape_cast %77 : vector<1x16x16x4xbf16> to vector<16x16x4xbf16>
    %79 = vector.shape_cast %78 : vector<16x16x4xbf16> to vector<256x4xbf16>
    %c8 = arith.constant 8 : index
    %c0_58 = arith.constant 0 : index
    %c0_59 = arith.constant 0 : index
    %80 = vector.load %arg3[%c8, %c0_58, %c0_59] : memref<25x4x4xbf16, #tpu.memory_space<vmem>>, vector<1x4x4xbf16>
    %81 = vector.shape_cast %80 : vector<1x4x4xbf16> to vector<4x4xbf16>
    %cst_60 = arith.constant dense<0.000000e+00> : vector<256x4xf32>
    %82 = tpu.matmul %79, %81, %cst_60 {dimension_numbers = #tpu.dot_dimension_numbers<[1], [0], [0], [1], [0, 0, 1, 1], [], []>} : vector<256x4xbf16>, vector<4x4xbf16>, vector<256x4xf32> -> vector<256x4xf32>
    %83 = arith.addf %74, %82 : vector<256x4xf32>
    %c1_i32_61 = arith.constant 1 : i32
    %84 = arith.addi %1, %c1_i32_61 : i32
    %c0_62 = arith.constant 0 : index
    %85 = arith.index_cast %84 : i32 to index
    %c4_63 = arith.constant 4 : index
    %c0_64 = arith.constant 0 : index
    %86 = vector.load %arg2[%c0_62, %85, %c4_63, %c0_64] : memref<1x20x20x4xbf16, #tpu.memory_space<vmem>>, vector<1x16x16x4xbf16>
    %87 = vector.shape_cast %86 : vector<1x16x16x4xbf16> to vector<16x16x4xbf16>
    %88 = vector.shape_cast %87 : vector<16x16x4xbf16> to vector<256x4xbf16>
    %c9 = arith.constant 9 : index
    %c0_65 = arith.constant 0 : index
    %c0_66 = arith.constant 0 : index
    %89 = vector.load %arg3[%c9, %c0_65, %c0_66] : memref<25x4x4xbf16, #tpu.memory_space<vmem>>, vector<1x4x4xbf16>
    %90 = vector.shape_cast %89 : vector<1x4x4xbf16> to vector<4x4xbf16>
    %cst_67 = arith.constant dense<0.000000e+00> : vector<256x4xf32>
    %91 = tpu.matmul %88, %90, %cst_67 {dimension_numbers = #tpu.dot_dimension_numbers<[1], [0], [0], [1], [0, 0, 1, 1], [], []>} : vector<256x4xbf16>, vector<4x4xbf16>, vector<256x4xf32> -> vector<256x4xf32>
    %92 = arith.addf %83, %91 : vector<256x4xf32>
    %c2_i32 = arith.constant 2 : i32
    %93 = arith.addi %1, %c2_i32 : i32
    %c0_68 = arith.constant 0 : index
    %94 = arith.index_cast %93 : i32 to index
    %c0_69 = arith.constant 0 : index
    %c0_70 = arith.constant 0 : index
    %95 = vector.load %arg2[%c0_68, %94, %c0_69, %c0_70] : memref<1x20x20x4xbf16, #tpu.memory_space<vmem>>, vector<1x16x16x4xbf16>
    %96 = vector.shape_cast %95 : vector<1x16x16x4xbf16> to vector<16x16x4xbf16>
    %97 = vector.shape_cast %96 : vector<16x16x4xbf16> to vector<256x4xbf16>
    %c10 = arith.constant 10 : index
    %c0_71 = arith.constant 0 : index
    %c0_72 = arith.constant 0 : index
    %98 = vector.load %arg3[%c10, %c0_71, %c0_72] : memref<25x4x4xbf16, #tpu.memory_space<vmem>>, vector<1x4x4xbf16>
    %99 = vector.shape_cast %98 : vector<1x4x4xbf16> to vector<4x4xbf16>
    %cst_73 = arith.constant dense<0.000000e+00> : vector<256x4xf32>
    %100 = tpu.matmul %97, %99, %cst_73 {dimension_numbers = #tpu.dot_dimension_numbers<[1], [0], [0], [1], [0, 0, 1, 1], [], []>} : vector<256x4xbf16>, vector<4x4xbf16>, vector<256x4xf32> -> vector<256x4xf32>
    %101 = arith.addf %92, %100 : vector<256x4xf32>
    %c2_i32_74 = arith.constant 2 : i32
    %102 = arith.addi %1, %c2_i32_74 : i32
    %c0_75 = arith.constant 0 : index
    %103 = arith.index_cast %102 : i32 to index
    %c1_76 = arith.constant 1 : index
    %c0_77 = arith.constant 0 : index
    %104 = vector.load %arg2[%c0_75, %103, %c1_76, %c0_77] : memref<1x20x20x4xbf16, #tpu.memory_space<vmem>>, vector<1x16x16x4xbf16>
    %105 = vector.shape_cast %104 : vector<1x16x16x4xbf16> to vector<16x16x4xbf16>
    %106 = vector.shape_cast %105 : vector<16x16x4xbf16> to vector<256x4xbf16>
    %c11 = arith.constant 11 : index
    %c0_78 = arith.constant 0 : index
    %c0_79 = arith.constant 0 : index
    %107 = vector.load %arg3[%c11, %c0_78, %c0_79] : memref<25x4x4xbf16, #tpu.memory_space<vmem>>, vector<1x4x4xbf16>
    %108 = vector.shape_cast %107 : vector<1x4x4xbf16> to vector<4x4xbf16>
    %cst_80 = arith.constant dense<0.000000e+00> : vector<256x4xf32>
    %109 = tpu.matmul %106, %108, %cst_80 {dimension_numbers = #tpu.dot_dimension_numbers<[1], [0], [0], [1], [0, 0, 1, 1], [], []>} : vector<256x4xbf16>, vector<4x4xbf16>, vector<256x4xf32> -> vector<256x4xf32>
    %110 = arith.addf %101, %109 : vector<256x4xf32>
    %c2_i32_81 = arith.constant 2 : i32
    %111 = arith.addi %1, %c2_i32_81 : i32
    %c0_82 = arith.constant 0 : index
    %112 = arith.index_cast %111 : i32 to index
    %c2_83 = arith.constant 2 : index
    %c0_84 = arith.constant 0 : index
    %113 = vector.load %arg2[%c0_82, %112, %c2_83, %c0_84] : memref<1x20x20x4xbf16, #tpu.memory_space<vmem>>, vector<1x16x16x4xbf16>
    %114 = vector.shape_cast %113 : vector<1x16x16x4xbf16> to vector<16x16x4xbf16>
    %115 = vector.shape_cast %114 : vector<16x16x4xbf16> to vector<256x4xbf16>
    %c12 = arith.constant 12 : index
    %c0_85 = arith.constant 0 : index
    %c0_86 = arith.constant 0 : index
    %116 = vector.load %arg3[%c12, %c0_85, %c0_86] : memref<25x4x4xbf16, #tpu.memory_space<vmem>>, vector<1x4x4xbf16>
    %117 = vector.shape_cast %116 : vector<1x4x4xbf16> to vector<4x4xbf16>
    %cst_87 = arith.constant dense<0.000000e+00> : vector<256x4xf32>
    %118 = tpu.matmul %115, %117, %cst_87 {dimension_numbers = #tpu.dot_dimension_numbers<[1], [0], [0], [1], [0, 0, 1, 1], [], []>} : vector<256x4xbf16>, vector<4x4xbf16>, vector<256x4xf32> -> vector<256x4xf32>
    %119 = arith.addf %110, %118 : vector<256x4xf32>
    %c2_i32_88 = arith.constant 2 : i32
    %120 = arith.addi %1, %c2_i32_88 : i32
    %c0_89 = arith.constant 0 : index
    %121 = arith.index_cast %120 : i32 to index
    %c3_90 = arith.constant 3 : index
    %c0_91 = arith.constant 0 : index
    %122 = vector.load %arg2[%c0_89, %121, %c3_90, %c0_91] : memref<1x20x20x4xbf16, #tpu.memory_space<vmem>>, vector<1x16x16x4xbf16>
    %123 = vector.shape_cast %122 : vector<1x16x16x4xbf16> to vector<16x16x4xbf16>
    %124 = vector.shape_cast %123 : vector<16x16x4xbf16> to vector<256x4xbf16>
    %c13 = arith.constant 13 : index
    %c0_92 = arith.constant 0 : index
    %c0_93 = arith.constant 0 : index
    %125 = vector.load %arg3[%c13, %c0_92, %c0_93] : memref<25x4x4xbf16, #tpu.memory_space<vmem>>, vector<1x4x4xbf16>
    %126 = vector.shape_cast %125 : vector<1x4x4xbf16> to vector<4x4xbf16>
    %cst_94 = arith.constant dense<0.000000e+00> : vector<256x4xf32>
    %127 = tpu.matmul %124, %126, %cst_94 {dimension_numbers = #tpu.dot_dimension_numbers<[1], [0], [0], [1], [0, 0, 1, 1], [], []>} : vector<256x4xbf16>, vector<4x4xbf16>, vector<256x4xf32> -> vector<256x4xf32>
    %128 = arith.addf %119, %127 : vector<256x4xf32>
    %c2_i32_95 = arith.constant 2 : i32
    %129 = arith.addi %1, %c2_i32_95 : i32
    %c0_96 = arith.constant 0 : index
    %130 = arith.index_cast %129 : i32 to index
    %c4_97 = arith.constant 4 : index
    %c0_98 = arith.constant 0 : index
    %131 = vector.load %arg2[%c0_96, %130, %c4_97, %c0_98] : memref<1x20x20x4xbf16, #tpu.memory_space<vmem>>, vector<1x16x16x4xbf16>
    %132 = vector.shape_cast %131 : vector<1x16x16x4xbf16> to vector<16x16x4xbf16>
    %133 = vector.shape_cast %132 : vector<16x16x4xbf16> to vector<256x4xbf16>
    %c14 = arith.constant 14 : index
    %c0_99 = arith.constant 0 : index
    %c0_100 = arith.constant 0 : index
    %134 = vector.load %arg3[%c14, %c0_99, %c0_100] : memref<25x4x4xbf16, #tpu.memory_space<vmem>>, vector<1x4x4xbf16>
    %135 = vector.shape_cast %134 : vector<1x4x4xbf16> to vector<4x4xbf16>
    %cst_101 = arith.constant dense<0.000000e+00> : vector<256x4xf32>
    %136 = tpu.matmul %133, %135, %cst_101 {dimension_numbers = #tpu.dot_dimension_numbers<[1], [0], [0], [1], [0, 0, 1, 1], [], []>} : vector<256x4xbf16>, vector<4x4xbf16>, vector<256x4xf32> -> vector<256x4xf32>
    %137 = arith.addf %128, %136 : vector<256x4xf32>
    %c3_i32 = arith.constant 3 : i32
    %138 = arith.addi %1, %c3_i32 : i32
    %c0_102 = arith.constant 0 : index
    %139 = arith.index_cast %138 : i32 to index
    %c0_103 = arith.constant 0 : index
    %c0_104 = arith.constant 0 : index
    %140 = vector.load %arg2[%c0_102, %139, %c0_103, %c0_104] : memref<1x20x20x4xbf16, #tpu.memory_space<vmem>>, vector<1x16x16x4xbf16>
    %141 = vector.shape_cast %140 : vector<1x16x16x4xbf16> to vector<16x16x4xbf16>
    %142 = vector.shape_cast %141 : vector<16x16x4xbf16> to vector<256x4xbf16>
    %c15 = arith.constant 15 : index
    %c0_105 = arith.constant 0 : index
    %c0_106 = arith.constant 0 : index
    %143 = vector.load %arg3[%c15, %c0_105, %c0_106] : memref<25x4x4xbf16, #tpu.memory_space<vmem>>, vector<1x4x4xbf16>
    %144 = vector.shape_cast %143 : vector<1x4x4xbf16> to vector<4x4xbf16>
    %cst_107 = arith.constant dense<0.000000e+00> : vector<256x4xf32>
    %145 = tpu.matmul %142, %144, %cst_107 {dimension_numbers = #tpu.dot_dimension_numbers<[1], [0], [0], [1], [0, 0, 1, 1], [], []>} : vector<256x4xbf16>, vector<4x4xbf16>, vector<256x4xf32> -> vector<256x4xf32>
    %146 = arith.addf %137, %145 : vector<256x4xf32>
    %c3_i32_108 = arith.constant 3 : i32
    %147 = arith.addi %1, %c3_i32_108 : i32
    %c0_109 = arith.constant 0 : index
    %148 = arith.index_cast %147 : i32 to index
    %c1_110 = arith.constant 1 : index
    %c0_111 = arith.constant 0 : index
    %149 = vector.load %arg2[%c0_109, %148, %c1_110, %c0_111] : memref<1x20x20x4xbf16, #tpu.memory_space<vmem>>, vector<1x16x16x4xbf16>
    %150 = vector.shape_cast %149 : vector<1x16x16x4xbf16> to vector<16x16x4xbf16>
    %151 = vector.shape_cast %150 : vector<16x16x4xbf16> to vector<256x4xbf16>
    %c16 = arith.constant 16 : index
    %c0_112 = arith.constant 0 : index
    %c0_113 = arith.constant 0 : index
    %152 = vector.load %arg3[%c16, %c0_112, %c0_113] : memref<25x4x4xbf16, #tpu.memory_space<vmem>>, vector<1x4x4xbf16>
    %153 = vector.shape_cast %152 : vector<1x4x4xbf16> to vector<4x4xbf16>
    %cst_114 = arith.constant dense<0.000000e+00> : vector<256x4xf32>
    %154 = tpu.matmul %151, %153, %cst_114 {dimension_numbers = #tpu.dot_dimension_numbers<[1], [0], [0], [1], [0, 0, 1, 1], [], []>} : vector<256x4xbf16>, vector<4x4xbf16>, vector<256x4xf32> -> vector<256x4xf32>
    %155 = arith.addf %146, %154 : vector<256x4xf32>
    %c3_i32_115 = arith.constant 3 : i32
    %156 = arith.addi %1, %c3_i32_115 : i32
    %c0_116 = arith.constant 0 : index
    %157 = arith.index_cast %156 : i32 to index
    %c2_117 = arith.constant 2 : index
    %c0_118 = arith.constant 0 : index
    %158 = vector.load %arg2[%c0_116, %157, %c2_117, %c0_118] : memref<1x20x20x4xbf16, #tpu.memory_space<vmem>>, vector<1x16x16x4xbf16>
    %159 = vector.shape_cast %158 : vector<1x16x16x4xbf16> to vector<16x16x4xbf16>
    %160 = vector.shape_cast %159 : vector<16x16x4xbf16> to vector<256x4xbf16>
    %c17 = arith.constant 17 : index
    %c0_119 = arith.constant 0 : index
    %c0_120 = arith.constant 0 : index
    %161 = vector.load %arg3[%c17, %c0_119, %c0_120] : memref<25x4x4xbf16, #tpu.memory_space<vmem>>, vector<1x4x4xbf16>
    %162 = vector.shape_cast %161 : vector<1x4x4xbf16> to vector<4x4xbf16>
    %cst_121 = arith.constant dense<0.000000e+00> : vector<256x4xf32>
    %163 = tpu.matmul %160, %162, %cst_121 {dimension_numbers = #tpu.dot_dimension_numbers<[1], [0], [0], [1], [0, 0, 1, 1], [], []>} : vector<256x4xbf16>, vector<4x4xbf16>, vector<256x4xf32> -> vector<256x4xf32>
    %164 = arith.addf %155, %163 : vector<256x4xf32>
    %c3_i32_122 = arith.constant 3 : i32
    %165 = arith.addi %1, %c3_i32_122 : i32
    %c0_123 = arith.constant 0 : index
    %166 = arith.index_cast %165 : i32 to index
    %c3_124 = arith.constant 3 : index
    %c0_125 = arith.constant 0 : index
    %167 = vector.load %arg2[%c0_123, %166, %c3_124, %c0_125] : memref<1x20x20x4xbf16, #tpu.memory_space<vmem>>, vector<1x16x16x4xbf16>
    %168 = vector.shape_cast %167 : vector<1x16x16x4xbf16> to vector<16x16x4xbf16>
    %169 = vector.shape_cast %168 : vector<16x16x4xbf16> to vector<256x4xbf16>
    %c18 = arith.constant 18 : index
    %c0_126 = arith.constant 0 : index
    %c0_127 = arith.constant 0 : index
    %170 = vector.load %arg3[%c18, %c0_126, %c0_127] : memref<25x4x4xbf16, #tpu.memory_space<vmem>>, vector<1x4x4xbf16>
    %171 = vector.shape_cast %170 : vector<1x4x4xbf16> to vector<4x4xbf16>
    %cst_128 = arith.constant dense<0.000000e+00> : vector<256x4xf32>
    %172 = tpu.matmul %169, %171, %cst_128 {dimension_numbers = #tpu.dot_dimension_numbers<[1], [0], [0], [1], [0, 0, 1, 1], [], []>} : vector<256x4xbf16>, vector<4x4xbf16>, vector<256x4xf32> -> vector<256x4xf32>
    %173 = arith.addf %164, %172 : vector<256x4xf32>
    %c3_i32_129 = arith.constant 3 : i32
    %174 = arith.addi %1, %c3_i32_129 : i32
    %c0_130 = arith.constant 0 : index
    %175 = arith.index_cast %174 : i32 to index
    %c4_131 = arith.constant 4 : index
    %c0_132 = arith.constant 0 : index
    %176 = vector.load %arg2[%c0_130, %175, %c4_131, %c0_132] : memref<1x20x20x4xbf16, #tpu.memory_space<vmem>>, vector<1x16x16x4xbf16>
    %177 = vector.shape_cast %176 : vector<1x16x16x4xbf16> to vector<16x16x4xbf16>
    %178 = vector.shape_cast %177 : vector<16x16x4xbf16> to vector<256x4xbf16>
    %c19 = arith.constant 19 : index
    %c0_133 = arith.constant 0 : index
    %c0_134 = arith.constant 0 : index
    %179 = vector.load %arg3[%c19, %c0_133, %c0_134] : memref<25x4x4xbf16, #tpu.memory_space<vmem>>, vector<1x4x4xbf16>
    %180 = vector.shape_cast %179 : vector<1x4x4xbf16> to vector<4x4xbf16>
    %cst_135 = arith.constant dense<0.000000e+00> : vector<256x4xf32>
    %181 = tpu.matmul %178, %180, %cst_135 {dimension_numbers = #tpu.dot_dimension_numbers<[1], [0], [0], [1], [0, 0, 1, 1], [], []>} : vector<256x4xbf16>, vector<4x4xbf16>, vector<256x4xf32> -> vector<256x4xf32>
    %182 = arith.addf %173, %181 : vector<256x4xf32>
    %c4_i32 = arith.constant 4 : i32
    %183 = arith.addi %1, %c4_i32 : i32
    %c0_136 = arith.constant 0 : index
    %184 = arith.index_cast %183 : i32 to index
    %c0_137 = arith.constant 0 : index
    %c0_138 = arith.constant 0 : index
    %185 = vector.load %arg2[%c0_136, %184, %c0_137, %c0_138] : memref<1x20x20x4xbf16, #tpu.memory_space<vmem>>, vector<1x16x16x4xbf16>
    %186 = vector.shape_cast %185 : vector<1x16x16x4xbf16> to vector<16x16x4xbf16>
    %187 = vector.shape_cast %186 : vector<16x16x4xbf16> to vector<256x4xbf16>
    %c20 = arith.constant 20 : index
    %c0_139 = arith.constant 0 : index
    %c0_140 = arith.constant 0 : index
    %188 = vector.load %arg3[%c20, %c0_139, %c0_140] : memref<25x4x4xbf16, #tpu.memory_space<vmem>>, vector<1x4x4xbf16>
    %189 = vector.shape_cast %188 : vector<1x4x4xbf16> to vector<4x4xbf16>
    %cst_141 = arith.constant dense<0.000000e+00> : vector<256x4xf32>
    %190 = tpu.matmul %187, %189, %cst_141 {dimension_numbers = #tpu.dot_dimension_numbers<[1], [0], [0], [1], [0, 0, 1, 1], [], []>} : vector<256x4xbf16>, vector<4x4xbf16>, vector<256x4xf32> -> vector<256x4xf32>
    %191 = arith.addf %182, %190 : vector<256x4xf32>
    %c4_i32_142 = arith.constant 4 : i32
    %192 = arith.addi %1, %c4_i32_142 : i32
    %c0_143 = arith.constant 0 : index
    %193 = arith.index_cast %192 : i32 to index
    %c1_144 = arith.constant 1 : index
    %c0_145 = arith.constant 0 : index
    %194 = vector.load %arg2[%c0_143, %193, %c1_144, %c0_145] : memref<1x20x20x4xbf16, #tpu.memory_space<vmem>>, vector<1x16x16x4xbf16>
    %195 = vector.shape_cast %194 : vector<1x16x16x4xbf16> to vector<16x16x4xbf16>
    %196 = vector.shape_cast %195 : vector<16x16x4xbf16> to vector<256x4xbf16>
    %c21 = arith.constant 21 : index
    %c0_146 = arith.constant 0 : index
    %c0_147 = arith.constant 0 : index
    %197 = vector.load %arg3[%c21, %c0_146, %c0_147] : memref<25x4x4xbf16, #tpu.memory_space<vmem>>, vector<1x4x4xbf16>
    %198 = vector.shape_cast %197 : vector<1x4x4xbf16> to vector<4x4xbf16>
    %cst_148 = arith.constant dense<0.000000e+00> : vector<256x4xf32>
    %199 = tpu.matmul %196, %198, %cst_148 {dimension_numbers = #tpu.dot_dimension_numbers<[1], [0], [0], [1], [0, 0, 1, 1], [], []>} : vector<256x4xbf16>, vector<4x4xbf16>, vector<256x4xf32> -> vector<256x4xf32>
    %200 = arith.addf %191, %199 : vector<256x4xf32>
    %c4_i32_149 = arith.constant 4 : i32
    %201 = arith.addi %1, %c4_i32_149 : i32
    %c0_150 = arith.constant 0 : index
    %202 = arith.index_cast %201 : i32 to index
    %c2_151 = arith.constant 2 : index
    %c0_152 = arith.constant 0 : index
    %203 = vector.load %arg2[%c0_150, %202, %c2_151, %c0_152] : memref<1x20x20x4xbf16, #tpu.memory_space<vmem>>, vector<1x16x16x4xbf16>
    %204 = vector.shape_cast %203 : vector<1x16x16x4xbf16> to vector<16x16x4xbf16>
    %205 = vector.shape_cast %204 : vector<16x16x4xbf16> to vector<256x4xbf16>
    %c22 = arith.constant 22 : index
    %c0_153 = arith.constant 0 : index
    %c0_154 = arith.constant 0 : index
    %206 = vector.load %arg3[%c22, %c0_153, %c0_154] : memref<25x4x4xbf16, #tpu.memory_space<vmem>>, vector<1x4x4xbf16>
    %207 = vector.shape_cast %206 : vector<1x4x4xbf16> to vector<4x4xbf16>
    %cst_155 = arith.constant dense<0.000000e+00> : vector<256x4xf32>
    %208 = tpu.matmul %205, %207, %cst_155 {dimension_numbers = #tpu.dot_dimension_numbers<[1], [0], [0], [1], [0, 0, 1, 1], [], []>} : vector<256x4xbf16>, vector<4x4xbf16>, vector<256x4xf32> -> vector<256x4xf32>
    %209 = arith.addf %200, %208 : vector<256x4xf32>
    %c4_i32_156 = arith.constant 4 : i32
    %210 = arith.addi %1, %c4_i32_156 : i32
    %c0_157 = arith.constant 0 : index
    %211 = arith.index_cast %210 : i32 to index
    %c3_158 = arith.constant 3 : index
    %c0_159 = arith.constant 0 : index
    %212 = vector.load %arg2[%c0_157, %211, %c3_158, %c0_159] : memref<1x20x20x4xbf16, #tpu.memory_space<vmem>>, vector<1x16x16x4xbf16>
    %213 = vector.shape_cast %212 : vector<1x16x16x4xbf16> to vector<16x16x4xbf16>
    %214 = vector.shape_cast %213 : vector<16x16x4xbf16> to vector<256x4xbf16>
    %c23 = arith.constant 23 : index
    %c0_160 = arith.constant 0 : index
    %c0_161 = arith.constant 0 : index
    %215 = vector.load %arg3[%c23, %c0_160, %c0_161] : memref<25x4x4xbf16, #tpu.memory_space<vmem>>, vector<1x4x4xbf16>
    %216 = vector.shape_cast %215 : vector<1x4x4xbf16> to vector<4x4xbf16>
    %cst_162 = arith.constant dense<0.000000e+00> : vector<256x4xf32>
    %217 = tpu.matmul %214, %216, %cst_162 {dimension_numbers = #tpu.dot_dimension_numbers<[1], [0], [0], [1], [0, 0, 1, 1], [], []>} : vector<256x4xbf16>, vector<4x4xbf16>, vector<256x4xf32> -> vector<256x4xf32>
    %218 = arith.addf %209, %217 : vector<256x4xf32>
    %c4_i32_163 = arith.constant 4 : i32
    %219 = arith.addi %1, %c4_i32_163 : i32
    %c0_164 = arith.constant 0 : index
    %220 = arith.index_cast %219 : i32 to index
    %c4_165 = arith.constant 4 : index
    %c0_166 = arith.constant 0 : index
    %221 = vector.load %arg2[%c0_164, %220, %c4_165, %c0_166] : memref<1x20x20x4xbf16, #tpu.memory_space<vmem>>, vector<1x16x16x4xbf16>
    %222 = vector.shape_cast %221 : vector<1x16x16x4xbf16> to vector<16x16x4xbf16>
    %223 = vector.shape_cast %222 : vector<16x16x4xbf16> to vector<256x4xbf16>
    %c24 = arith.constant 24 : index
    %c0_167 = arith.constant 0 : index
    %c0_168 = arith.constant 0 : index
    %224 = vector.load %arg3[%c24, %c0_167, %c0_168] : memref<25x4x4xbf16, #tpu.memory_space<vmem>>, vector<1x4x4xbf16>
    %225 = vector.shape_cast %224 : vector<1x4x4xbf16> to vector<4x4xbf16>
    %cst_169 = arith.constant dense<0.000000e+00> : vector<256x4xf32>
    %226 = tpu.matmul %223, %225, %cst_169 {dimension_numbers = #tpu.dot_dimension_numbers<[1], [0], [0], [1], [0, 0, 1, 1], [], []>} : vector<256x4xbf16>, vector<4x4xbf16>, vector<256x4xf32> -> vector<256x4xf32>
    %227 = arith.addf %218, %226 : vector<256x4xf32>
    %c0_170 = arith.constant 0 : index
    %c0_171 = arith.constant 0 : index
    %228 = vector.load %arg4[%c0_170, %c0_171] : memref<1x4xf32, #tpu.memory_space<vmem>>, vector<1x4xf32>
    %229 = vector.broadcast %228 : vector<1x4xf32> to vector<256x4xf32>
    %230 = arith.addf %227, %229 : vector<256x4xf32>
    %c0_172 = arith.constant 0 : index
    %c0_173 = arith.constant 0 : index
    %c0_174 = arith.constant 0 : index
    %c0_175 = arith.constant 0 : index
    %231 = vector.load %arg5[%c0_172, %c0_173, %c0_174, %c0_175] : memref<1x1x256x4xf32, #tpu.memory_space<vmem>>, vector<1x1x256x4xf32>
    %232 = vector.shape_cast %231 : vector<1x1x256x4xf32> to vector<256x4xf32>
    %233 = vector.shape_cast %230 : vector<256x4xf32> to vector<1x1x256x4xf32>
    tpu.vector_store %arg5[%c0_172, %c0_173, %c0_174, %c0_175], %233 {strides = array<i32>} : memref<1x1x256x4xf32, #tpu.memory_space<vmem>>, vector<1x1x256x4xf32>,
    return
  }
  func.func @transform_0(%arg0: i32, %arg1: i32) -> (i32, i32, i32, i32) {
    %c0_i32 = arith.constant 0 : i32
    %c0_i32_0 = arith.constant 0 : i32
    %c0_i32_1 = arith.constant 0 : i32
    %c0_i32_2 = arith.constant 0 : i32
    return %arg0, %c0_i32, %c0_i32_0, %c0_i32_1 : i32, i32, i32, i32
  }
  func.func @transform_1(%arg0: i32, %arg1: i32) -> (i32, i32, i32) {
    %c0_i32 = arith.constant 0 : i32
    %c0_i32_0 = arith.constant 0 : i32
    %c0_i32_1 = arith.constant 0 : i32
    %c0_i32_2 = arith.constant 0 : i32
    return %c0_i32, %c0_i32_0, %c0_i32_1 : i32, i32, i32
  }
  func.func @transform_2(%arg0: i32, %arg1: i32) -> (i32, i32) {
    %c0_i32 = arith.constant 0 : i32
    %c0_i32_0 = arith.constant 0 : i32
    %c0_i32_1 = arith.constant 0 : i32
    return %c0_i32, %c0_i32_0 : i32, i32
  }
  func.func @transform_3(%arg0: i32, %arg1: i32) -> (i32, i32, i32, i32) {
    %c0_i32 = arith.constant 0 : i32
    %c0_i32_0 = arith.constant 0 : i32
    %c0_i32_1 = arith.constant 0 : i32
    return %arg0, %arg1, %c0_i32, %c0_i32_0 : i32, i32, i32, i32
  }
}

</mosaic_0001>

<llo_original>
// kernel: tpu_custom_call.1
$region0: #{tpu_custom_call.1}
  #allocation0 [shape = 'u32[]', space=smem, size = 0x4, offset = 0x4, fixed_abs, tag = 'smem constant byte address 0x4 - core index']
  #allocation1 [shape = 'u32[72,128]{1,0:T(1,128)}', space=vmem, size = 0x9000, scoped, tag = 'internal scratch']
  %s0 = inlined_call_operand.vmem [shape: bf16[2,20,20,4], index: 0, kind: input, shape index: {}]
  %s1 = inlined_call_operand.vmem [shape: bf16[25,4,4], index: 1, kind: input, shape index: {}]
  %s2 = inlined_call_operand.vmem [shape: f32[1,4], index: 2, kind: input, shape index: {}]
  %s3 = inlined_call_operand.vmem [shape: f32[2,1,256,4], index: 3, kind: output, shape index: {}]
  %s4 = sld [smem:[#allocation0]]
  $region45: #{tpu_custom_call.1} parent=0
    _
  %s6 = ssub.s32 1, %s4
  %s7 = scalar_select 0, %s6, %s4
  loop: start=0, step=1, limit=4
  $region2: #{tpu_custom_call.1} parent=0 // loop_pre_header
    _
  $region3: #{tpu_custom_call.1} parent=0 // loop_header
    %s9 = sphi 0, %s13
    %p10 = scmp.ge.s32.totalorder %s9, 4
    %s16 = sphi 0, %s28
    %s17 = sphi 0, %s24
    %s18 = sphi 0, %s16
    %s19 = sphi 0, %s17
    %s20 = sphi 0, %s18
    %s21 = sphi 0, %s19
    %s31 = sphi 0, %s33
    %s34 = sphi 0, %s31
    %s35 = sphi 0, %s34
    %s51 = sphi 0, %s35
    %s55 = sphi 0, %s55
    %s57 = sphi 0, %s55
    %s58 = sphi 0, %s57
    %s72 = sphi 0, %s58
    %s76 = sphi 0, %s76
    %s78 = sphi 0, %s76
    %s79 = sphi 0, %s78
    %s93 = sphi 0, %s79
    %s101 = sphi 0, %s103
    %s104 = sphi 0, %s101
    %s105 = sphi 0, %s104
    %s121 = sphi 0, %s105
  $region4: #{tpu_custom_call.1} parent=0 // loop_header_branch
    %12 = sbr.rel (%p10) target = $region8
  $region5: #{tpu_custom_call.1} parent=0 // loop_body
    %s14 = ssub.s32 %s9, 1
    %s15 = ssub.s32 %s9, 2
    %s22 = sadd.s32 1, %s17
    %p23 = scmp.ge.s32.totalorder %s22, 1
    %s24 = scalar_select %p23, 0, %s22
    %s25 = sadd.s32 1, %s16
    %s26 = scalar_select %p23, %s25, %s16
    %p27 = scmp.ge.s32.totalorder %s26, 2
    %s28 = scalar_select %p27, 0, %s26
    %s29 = ssub.s32 %s16, %s28
    %p30 = scmp.eq.s32.totalorder %s29, 0
    %s32 = sadd.s32 %s31, 1
    %s33 = scalar_select %p30, %s31, %s32
    %p36 = pneg %p30
    %p37 = scmp.eq.s32.totalorder %s9, 1
    %p38 = por %p36, %p37
    %p39 = scmp.ne.s32.totalorder %s31, %s34
    %p40 = scmp.eq.s32.totalorder %s9, 0
    %p41 = por %p39, %p40
    %p42 = scmp.ne.s32.totalorder %s31, %s34
    %p43 = scmp.eq.s32.totalorder %s14, 1
    %p44 = por %p42, %p43
    %p45 = scmp.ne.s32.totalorder %s34, %s35
    %p46 = scmp.eq.s32.totalorder %s14, 0
    %p47 = por %p45, %p46
    %p48 = scmp.ne.s32.totalorder %s34, %s35
    %p49 = scmp.eq.s32.totalorder %s15, 1
    %p50 = por %p48, %p49
    %p52 = scmp.ne.s32.totalorder %s35, %s51
    %p53 = scmp.eq.s32.totalorder %s15, 0
    %p54 = por %p52, %p53
    %s56 = sadd.s32 %s55, 1
    %p59 = scmp.eq.s32.totalorder %s9, 1
    %p60 = scmp.ne.s32.totalorder %s55, %s57
    %p61 = scmp.eq.s32.totalorder %s9, 0
    %p62 = por %p60, %p61
    %p63 = scmp.ne.s32.totalorder %s55, %s57
    %p64 = scmp.eq.s32.totalorder %s14, 1
    %p65 = por %p63, %p64
    %p66 = scmp.ne.s32.totalorder %s57, %s58
    %p67 = scmp.eq.s32.totalorder %s14, 0
    %p68 = por %p66, %p67
    %p69 = scmp.ne.s32.totalorder %s57, %s58
    %p70 = scmp.eq.s32.totalorder %s15, 1
    %p71 = por %p69, %p70
    %p73 = scmp.ne.s32.totalorder %s58, %s72
    %p74 = scmp.eq.s32.totalorder %s15, 0
    %p75 = por %p73, %p74
    %s77 = sadd.s32 %s76, 1
    %p80 = scmp.eq.s32.totalorder %s9, 1
    %p81 = scmp.ne.s32.totalorder %s76, %s78
    %p82 = scmp.eq.s32.totalorder %s9, 0
    %p83 = por %p81, %p82
    %p84 = scmp.ne.s32.totalorder %s76, %s78
    %p85 = scmp.eq.s32.totalorder %s14, 1
    %p86 = por %p84, %p85
    %p87 = scmp.ne.s32.totalorder %s78, %s79
    %p88 = scmp.eq.s32.totalorder %s14, 0
    %p89 = por %p87, %p88
    %p90 = scmp.ne.s32.totalorder %s78, %s79
    %p91 = scmp.eq.s32.totalorder %s15, 1
    %p92 = por %p90, %p91
    %p94 = scmp.ne.s32.totalorder %s79, %s93
    %p95 = scmp.eq.s32.totalorder %s15, 0
    %p96 = por %p94, %p95
    %s97 = ssub.s32 %s16, %s28
    %s98 = ssub.s32 %s17, %s24
    %s99 = sor.u32 %s97, %s98
    %p100 = scmp.eq.s32.totalorder %s99, 0
    %s102 = sadd.s32 %s101, 1
    %s103 = scalar_select %p100, %s101, %s102
    %p106 = pneg %p100
    %p107 = scmp.eq.s32.totalorder %s9, 1
    %p108 = por %p106, %p107
    %p109 = scmp.ne.s32.totalorder %s101, %s104
    %p110 = scmp.eq.s32.totalorder %s9, 0
    %p111 = por %p109, %p110
    %p112 = scmp.ne.s32.totalorder %s101, %s104
    %p113 = scmp.eq.s32.totalorder %s14, 1
    %p114 = por %p112, %p113
    %p115 = scmp.ne.s32.totalorder %s104, %s105
    %p116 = scmp.eq.s32.totalorder %s14, 0
    %p117 = por %p115, %p116
    %p118 = scmp.ne.s32.totalorder %s104, %s105
    %p119 = scmp.eq.s32.totalorder %s15, 1
    %p120 = por %p118, %p119
    %p122 = scmp.ne.s32.totalorder %s105, %s121
    %p123 = scmp.eq.s32.totalorder %s15, 0
    %p124 = por %p122, %p123
    %p125 = scmp.le.s32.totalorder 1, %s9
    %p126 = scmp.lt.s32.totalorder %s9, 3
    %p127 = pnand %p125, %p126
    %p128 = pneg %p127
    // Predicated region
    $region9: #{tpu_custom_call.1} parent=5 // pred_check
      _
    $region10: #{tpu_custom_call.1} parent=5 // pred_check_branch
      %130 = sbr.rel (%p127) target = $region12
    $region11: #{tpu_custom_call.1} parent=5 // pred_region
      %s131 = ssub.s32 %s9, 1
      // Predicated region
      $region13: #{tpu_custom_call.1} parent=11 // pred_check
        %p132 = pneg %p68
      $region14: #{tpu_custom_call.1} parent=11 // pred_check_branch
        %134 = sbr.rel (%p132) target = $region16
      $region15: #{tpu_custom_call.1} parent=11 // pred_region
        _
      $region16: #{tpu_custom_call.1} parent=11 // pred_fallthru
        _
      // Predicated region
      $region17: #{tpu_custom_call.1} parent=11 // pred_check
        %p135 = pneg %p89
      $region18: #{tpu_custom_call.1} parent=11 // pred_check_branch
        %137 = sbr.rel (%p135) target = $region20
      $region19: #{tpu_custom_call.1} parent=11 // pred_region
        _
      $region20: #{tpu_custom_call.1} parent=11 // pred_fallthru
        _
    $region12: #{tpu_custom_call.1} parent=5 // pred_fallthru
      _
    %p138 = scmp.lt.s32.totalorder %s9, 2
    // Predicated region
    $region21: #{tpu_custom_call.1} parent=5 // pred_check
      %p139 = pneg %p138
    $region22: #{tpu_custom_call.1} parent=5 // pred_check_branch
      %141 = sbr.rel (%p139) target = $region24
    $region23: #{tpu_custom_call.1} parent=5 // pred_region
      // Predicated region
      $region25: #{tpu_custom_call.1} parent=23 // pred_check
        %p142 = pneg %p41
      $region26: #{tpu_custom_call.1} parent=23 // pred_check_branch
        %144 = sbr.rel (%p142) target = $region28
      $region27: #{tpu_custom_call.1} parent=23 // pred_region
        %p145 = scmp.lt.s32.totalorder %s16, 1
        %s146 = scalar_select %p145, %s16, 1
        %s147 = smul.addr %s146, 60
        %s148 = smul.addr %s147, 4
        %s149 = scalar_lea.vmem %s0, %s148
      $region28: #{tpu_custom_call.1} parent=23 // pred_fallthru
        _
    $region24: #{tpu_custom_call.1} parent=5 // pred_fallthru
      _
    %p150 = scmp.le.s32.totalorder 1, %s9
    %p151 = scmp.lt.s32.totalorder %s9, 3
    %p152 = pnand %p150, %p151
    %p153 = pneg %p152
    // Predicated region
    $region29: #{tpu_custom_call.1} parent=5 // pred_check
      _
    $region30: #{tpu_custom_call.1} parent=5 // pred_check_branch
      %155 = sbr.rel (%p152) target = $region32
    $region31: #{tpu_custom_call.1} parent=5 // pred_region
      %s156 = ssub.s32 %s9, 1
      %p157 = scmp.lt.s32.totalorder %s18, 1
      %s158 = scalar_select %p157, %s18, 1
      %s159 = smul.addr %s158, 60
      %s160 = smul.addr %s159, 4
      %s161 = scalar_lea.vmem %s0, %s160
      %p162 = pneg %p47
      %p163 = pneg %p44
      %p164 = pneg %p68
      %p165 = pneg %p65
      %p166 = pneg %p89
      %p167 = pneg %p86
      %p168 = pneg %p117
      %p169 = pneg %p114
      %p170 = scmp.lt.s32.totalorder %s18, 1
      %s171 = scalar_select %p170, %s18, 1
      %p172 = scmp.lt.s32.totalorder %s19, 0
      %s173 = scalar_select %p172, %s19, 0
      %s174 = smul.addr %s173, 32
      %s175 = smul.addr %s171, 32
      %s176 = sadd.s32 %s174, %s175
      %s177 = smul.addr %s176, 8
      %s178 = scalar_lea.vmem %s3, %s177
      %p179 = scmp.lt.s32.totalorder %s18, 1
      %s180 = scalar_select %p179, %s18, 1
      %s181 = smul.addr %s180, 60
      %s182 = smul.addr %s181, 4
      %s183 = scalar_lea.vmem %s0, %s182
      %p184 = scmp.lt.s32.totalorder %s18, 1
      %s185 = scalar_select %p184, %s18, 1
      %p186 = scmp.lt.s32.totalorder %s19, 0
      %s187 = scalar_select %p186, %s19, 0
      %s188 = smul.addr %s187, 32
      %s189 = smul.addr %s185, 32
      %s190 = sadd.s32 %s188, %s189
      %s191 = smul.addr %s190, 8
      %s192 = scalar_lea.vmem %s3, %s191
      %s194 = smul.u32 %s19, 16
      %s195 = smul.u32 %s194, 3
      %s196 = smul.addr %s195, 4
      %s197 = scalar_lea.vmem %s183, %s196
      %v198 = vld [vmem:[%s197] sm:$0xf]
      %v199 = vld [vmem:[%s197 + $0x4] sm:$0xf]
      %v200 = vld [vmem:[%s197 + $0xc] sm:$0xf]
      %v201 = vld [vmem:[%s197 + $0x10] sm:$0xf]
      %v202 = vld [vmem:[%s197 + $0x18] sm:$0xf]
      %v203 = vld [vmem:[%s197 + $0x1c] sm:$0xf]
      %v204 = vld [vmem:[%s197 + $0x24] sm:$0xf]
      %v205 = vld [vmem:[%s197 + $0x28] sm:$0xf]
      %v206 = vld [vmem:[%s197 + $0x30] sm:$0xf]
      %v207 = vld [vmem:[%s197 + $0x34] sm:$0xf]
      %v208 = vld [vmem:[%s197 + $0x3c] sm:$0xf]
      %v209 = vld [vmem:[%s197 + $0x40] sm:$0xf]
      %v210 = vld [vmem:[%s197 + $0x48] sm:$0xf]
      %v211 = vld [vmem:[%s197 + $0x4c] sm:$0xf]
      %v212 = vld [vmem:[%s197 + $0x54] sm:$0xf]
      %v213 = vld [vmem:[%s197 + $0x58] sm:$0xf]
      %v214 = vld [vmem:[%s197 + $0x60] sm:$0xf]
      %v215 = vld [vmem:[%s197 + $0x64] sm:$0xf]
      %v216 = vld [vmem:[%s197 + $0x6c] sm:$0xf]
      %v217 = vld [vmem:[%s197 + $0x70] sm:$0xf]
      %v218 = vld [vmem:[%s197 + $0x78] sm:$0xf]
      %v219 = vld [vmem:[%s197 + $0x7c] sm:$0xf]
      %v220 = vld [vmem:[%s197 + $0x84] sm:$0xf]
      %v221 = vld [vmem:[%s197 + $0x88] sm:$0xf]
      %v222 = vld [vmem:[%s197 + $0x90] sm:$0xf]
      %v223 = vld [vmem:[%s197 + $0x94] sm:$0xf]
      %v224 = vld [vmem:[%s197 + $0x9c] sm:$0xf]
      %v225 = vld [vmem:[%s197 + $0xa0] sm:$0xf]
      %v226 = vld [vmem:[%s197 + $0xa8] sm:$0xf]
      %v227 = vld [vmem:[%s197 + $0xac] sm:$0xf]
      %v228 = vld [vmem:[%s197 + $0xb4] sm:$0xf]
      %v229 = vld [vmem:[%s197 + $0xb8] sm:$0xf]
      %v230 = vld [vmem:[%s1] sm:$0x3]
      %v231 = vld [vmem:[%s197 + $0x8] sm:$0x1]
      %v232 = vld [vmem:[%s197 + $0x14] sm:$0x1]
      %v233 = vld [vmem:[%s197 + $0x20] sm:$0x1]
      %v234 = vld [vmem:[%s197 + $0x2c] sm:$0x1]
      %v235 = vld [vmem:[%s197 + $0x38] sm:$0x1]
      %v236 = vld [vmem:[%s197 + $0x44] sm:$0x1]
      %v237 = vld [vmem:[%s197 + $0x50] sm:$0x1]
      %v238 = vld [vmem:[%s197 + $0x5c] sm:$0x1]
      %v239 = vld [vmem:[%s197 + $0x68] sm:$0x1]
      %v240 = vld [vmem:[%s197 + $0x74] sm:$0x1]
      %v241 = vld [vmem:[%s197 + $0x80] sm:$0x1]
      %v242 = vld [vmem:[%s197 + $0x8c] sm:$0x1]
      %v243 = vld [vmem:[%s197 + $0x98] sm:$0x1]
      %v244 = vld [vmem:[%s197 + $0xa4] sm:$0x1]
      %v245 = vld [vmem:[%s197 + $0xb0] sm:$0x1]
      %v246 = vld [vmem:[%s197 + $0xbc] sm:$0x1]
      %vm247 = vsmask.f32 3328
      %vm248 = vsmask.f32 7440
      %vm249 = vmor %vm247, %vm248
      %v251 = vshrl.u32 %v198, 16
      %v253 = vrot.slane %v251, 4
      %v254 = vshll.u32 %v198, 16
      %v256 = vrot.slane %v254, 5
      %v257 = vor.u32 %v253, %v256
      %v258 = vrot.slane %v257, 4
      %v260 = vshll.u32 %v199, 16
      %v262 = vrot.slane %v260, 5
      %v263 = vsel %vm249, %v258, %v262
      %v264 = vshrl.u32 %v199, 16
      %v266 = vrot.slane %v264, 4
      %v267 = vor.u32 %v266, %v262
      %v268 = vrot.slane %v267, 4
      %v270 = vshll.u32 %v231, 16
      %v272 = vrot.slane %v270, 5
      %v273 = vsel %vm249, %v268, %v272
      %v275 = vshrl.u32 %v200, 16
      %v277 = vrot.slane %v275, 4
      %v278 = vshll.u32 %v200, 16
      %v280 = vrot.slane %v278, 5
      %v281 = vor.u32 %v277, %v280
      %v282 = vrot.slane %v281, 4
      %v284 = vshll.u32 %v201, 16
      %v286 = vrot.slane %v284, 5
      %v287 = vsel %vm249, %v282, %v286
      %v288 = vshrl.u32 %v201, 16
      %v290 = vrot.slane %v288, 4
      %v291 = vor.u32 %v290, %v286
      %v292 = vrot.slane %v291, 4
      %v294 = vshll.u32 %v232, 16
      %v296 = vrot.slane %v294, 5
      %v297 = vsel %vm249, %v292, %v296
      %v299 = vshrl.u32 %v202, 16
      %v301 = vrot.slane %v299, 4
      %v302 = vshll.u32 %v202, 16
      %v304 = vrot.slane %v302, 5
      %v305 = vor.u32 %v301, %v304
      %v306 = vrot.slane %v305, 4
      %v308 = vshll.u32 %v203, 16
      %v310 = vrot.slane %v308, 5
      %v311 = vsel %vm249, %v306, %v310
      %v312 = vshrl.u32 %v203, 16
      %v314 = vrot.slane %v312, 4
      %v315 = vor.u32 %v314, %v310
      %v316 = vrot.slane %v315, 4
      %v318 = vshll.u32 %v233, 16
      %v320 = vrot.slane %v318, 5
      %v321 = vsel %vm249, %v316, %v320
      %v323 = vshrl.u32 %v204, 16
      %v325 = vrot.slane %v323, 4
      %v326 = vshll.u32 %v204, 16
      %v328 = vrot.slane %v326, 5
      %v329 = vor.u32 %v325, %v328
      %v330 = vrot.slane %v329, 4
      %v332 = vshll.u32 %v205, 16
      %v334 = vrot.slane %v332, 5
      %v335 = vsel %vm249, %v330, %v334
      %v336 = vshrl.u32 %v205, 16
      %v338 = vrot.slane %v336, 4
      %v339 = vor.u32 %v338, %v334
      %v340 = vrot.slane %v339, 4
      %v342 = vshll.u32 %v234, 16
      %v344 = vrot.slane %v342, 5
      %v345 = vsel %vm249, %v340, %v344
      %v347 = vshrl.u32 %v206, 16
      %v349 = vrot.slane %v347, 4
      %v350 = vshll.u32 %v206, 16
      %v352 = vrot.slane %v350, 5
      %v353 = vor.u32 %v349, %v352
      %v354 = vrot.slane %v353, 4
      %v356 = vshll.u32 %v207, 16
      %v358 = vrot.slane %v356, 5
      %v359 = vsel %vm249, %v354, %v358
      %v360 = vshrl.u32 %v207, 16
      %v362 = vrot.slane %v360, 4
      %v363 = vor.u32 %v362, %v358
      %v364 = vrot.slane %v363, 4
      %v366 = vshll.u32 %v235, 16
      %v368 = vrot.slane %v366, 5
      %v369 = vsel %vm249, %v364, %v368
      %v371 = vshrl.u32 %v208, 16
      %v373 = vrot.slane %v371, 4
      %v374 = vshll.u32 %v208, 16
      %v376 = vrot.slane %v374, 5
      %v377 = vor.u32 %v373, %v376
      %v378 = vrot.slane %v377, 4
      %v380 = vshll.u32 %v209, 16
      %v382 = vrot.slane %v380, 5
      %v383 = vsel %vm249, %v378, %v382
      %v384 = vshrl.u32 %v209, 16
      %v386 = vrot.slane %v384, 4
      %v387 = vor.u32 %v386, %v382
      %v388 = vrot.slane %v387, 4
      %v390 = vshll.u32 %v236, 16
      %v392 = vrot.slane %v390, 5
      %v393 = vsel %vm249, %v388, %v392
      %v395 = vshrl.u32 %v210, 16
      %v397 = vrot.slane %v395, 4
      %v398 = vshll.u32 %v210, 16
      %v400 = vrot.slane %v398, 5
      %v401 = vor.u32 %v397, %v400
      %v402 = vrot.slane %v401, 4
      %v404 = vshll.u32 %v211, 16
      %v406 = vrot.slane %v404, 5
      %v407 = vsel %vm249, %v402, %v406
      %v408 = vshrl.u32 %v211, 16
      %v410 = vrot.slane %v408, 4
      %v411 = vor.u32 %v410, %v406
      %v412 = vrot.slane %v411, 4
      %v414 = vshll.u32 %v237, 16
      %v416 = vrot.slane %v414, 5
      %v417 = vsel %vm249, %v412, %v416
      %v419 = vshrl.u32 %v212, 16
      %v421 = vrot.slane %v419, 4
      %v422 = vshll.u32 %v212, 16
      %v424 = vrot.slane %v422, 5
      %v425 = vor.u32 %v421, %v424
      %v426 = vrot.slane %v425, 4
      %v428 = vshll.u32 %v213, 16
      %v430 = vrot.slane %v428, 5
      %v431 = vsel %vm249, %v426, %v430
      %v432 = vshrl.u32 %v213, 16
      %v434 = vrot.slane %v432, 4
      %v435 = vor.u32 %v434, %v430
      %v436 = vrot.slane %v435, 4
      %v438 = vshll.u32 %v238, 16
      %v440 = vrot.slane %v438, 5
      %v441 = vsel %vm249, %v436, %v440
      %v443 = vshrl.u32 %v214, 16
      %v445 = vrot.slane %v443, 4
      %v446 = vshll.u32 %v214, 16
      %v448 = vrot.slane %v446, 5
      %v449 = vor.u32 %v445, %v448
      %v450 = vrot.slane %v449, 4
      %v452 = vshll.u32 %v215, 16
      %v454 = vrot.slane %v452, 5
      %v455 = vsel %vm249, %v450, %v454
      %v456 = vshrl.u32 %v215, 16
      %v458 = vrot.slane %v456, 4
      %v459 = vor.u32 %v458, %v454
      %v460 = vrot.slane %v459, 4
      %v462 = vshll.u32 %v239, 16
      %v464 = vrot.slane %v462, 5
      %v465 = vsel %vm249, %v460, %v464
      %v467 = vshrl.u32 %v216, 16
      %v469 = vrot.slane %v467, 4
      %v470 = vshll.u32 %v216, 16
      %v472 = vrot.slane %v470, 5
      %v473 = vor.u32 %v469, %v472
      %v474 = vrot.slane %v473, 4
      %v476 = vshll.u32 %v217, 16
      %v478 = vrot.slane %v476, 5
      %v479 = vsel %vm249, %v474, %v478
      %v480 = vshrl.u32 %v217, 16
      %v482 = vrot.slane %v480, 4
      %v483 = vor.u32 %v482, %v478
      %v484 = vrot.slane %v483, 4
      %v486 = vshll.u32 %v240, 16
      %v488 = vrot.slane %v486, 5
      %v489 = vsel %vm249, %v484, %v488
      %v491 = vshrl.u32 %v218, 16
      %v493 = vrot.slane %v491, 4
      %v494 = vshll.u32 %v218, 16
      %v496 = vrot.slane %v494, 5
      %v497 = vor.u32 %v493, %v496
      %v498 = vrot.slane %v497, 4
      %v500 = vshll.u32 %v219, 16
      %v502 = vrot.slane %v500, 5
      %v503 = vsel %vm249, %v498, %v502
      %v504 = vshrl.u32 %v219, 16
      %v506 = vrot.slane %v504, 4
      %v507 = vor.u32 %v506, %v502
      %v508 = vrot.slane %v507, 4
      %v510 = vshll.u32 %v241, 16
      %v512 = vrot.slane %v510, 5
      %v513 = vsel %vm249, %v508, %v512
      %v515 = vshrl.u32 %v220, 16
      %v517 = vrot.slane %v515, 4
      %v518 = vshll.u32 %v220, 16
      %v520 = vrot.slane %v518, 5
      %v521 = vor.u32 %v517, %v520
      %v522 = vrot.slane %v521, 4
      %v524 = vshll.u32 %v221, 16
      %v526 = vrot.slane %v524, 5
      %v527 = vsel %vm249, %v522, %v526
      %v528 = vshrl.u32 %v221, 16
      %v530 = vrot.slane %v528, 4
      %v531 = vor.u32 %v530, %v526
      %v532 = vrot.slane %v531, 4
      %v534 = vshll.u32 %v242, 16
      %v536 = vrot.slane %v534, 5
      %v537 = vsel %vm249, %v532, %v536
      %v539 = vshrl.u32 %v222, 16
      %v541 = vrot.slane %v539, 4
      %v542 = vshll.u32 %v222, 16
      %v544 = vrot.slane %v542, 5
      %v545 = vor.u32 %v541, %v544
      %v546 = vrot.slane %v545, 4
      %v548 = vshll.u32 %v223, 16
      %v550 = vrot.slane %v548, 5
      %v551 = vsel %vm249, %v546, %v550
      %v552 = vshrl.u32 %v223, 16
      %v554 = vrot.slane %v552, 4
      %v555 = vor.u32 %v554, %v550
      %v556 = vrot.slane %v555, 4
      %v558 = vshll.u32 %v243, 16
      %v560 = vrot.slane %v558, 5
      %v561 = vsel %vm249, %v556, %v560
      %v563 = vshrl.u32 %v224, 16
      %v565 = vrot.slane %v563, 4
      %v566 = vshll.u32 %v224, 16
      %v568 = vrot.slane %v566, 5
      %v569 = vor.u32 %v565, %v568
      %v570 = vrot.slane %v569, 4
      %v572 = vshll.u32 %v225, 16
      %v574 = vrot.slane %v572, 5
      %v575 = vsel %vm249, %v570, %v574
      %v576 = vshrl.u32 %v225, 16
      %v578 = vrot.slane %v576, 4
      %v579 = vor.u32 %v578, %v574
      %v580 = vrot.slane %v579, 4
      %v582 = vshll.u32 %v244, 16
      %v584 = vrot.slane %v582, 5
      %v585 = vsel %vm249, %v580, %v584
      %v587 = vshrl.u32 %v226, 16
      %v589 = vrot.slane %v587, 4
      %v590 = vshll.u32 %v226, 16
      %v592 = vrot.slane %v590, 5
      %v593 = vor.u32 %v589, %v592
      %v594 = vrot.slane %v593, 4
      %v596 = vshll.u32 %v227, 16
      %v598 = vrot.slane %v596, 5
      %v599 = vsel %vm249, %v594, %v598
      %v600 = vshrl.u32 %v227, 16
      %v602 = vrot.slane %v600, 4
      %v603 = vor.u32 %v602, %v598
      %v604 = vrot.slane %v603, 4
      %v606 = vshll.u32 %v245, 16
      %v608 = vrot.slane %v606, 5
      %v609 = vsel %vm249, %v604, %v608
      %v611 = vshrl.u32 %v228, 16
      %v613 = vrot.slane %v611, 4
      %v614 = vshll.u32 %v228, 16
      %v616 = vrot.slane %v614, 5
      %v617 = vor.u32 %v613, %v616
      %v618 = vrot.slane %v617, 4
      %v620 = vshll.u32 %v229, 16
      %v622 = vrot.slane %v620, 5
      %v623 = vsel %vm249, %v618, %v622
      %v624 = vshrl.u32 %v229, 16
      %v626 = vrot.slane %v624, 4
      %v627 = vor.u32 %v626, %v622
      %v628 = vrot.slane %v627, 4
      %v630 = vshll.u32 %v246, 16
      %v632 = vrot.slane %v630, 5
      %v633 = vsel %vm249, %v628, %v632
      %s634 = scalar_lea.vmem %s1, 2
      %v635 = vld [vmem:[%s634] sm:$0x3]
      %v636 = vunpack.c.l.b16 %v263
      %v637 = vunpack.c.l.b16 %v273
      %v638 = vunpack.c.l.b16 %v287
      %v639 = vunpack.c.l.b16 %v297
      %v640 = vunpack.c.l.b16 %v311
      %v641 = vunpack.c.l.b16 %v321
      %v642 = vunpack.c.l.b16 %v335
      %v643 = vunpack.c.l.b16 %v345
      %v644 = vunpack.c.l.b16 %v359
      %v645 = vunpack.c.l.b16 %v369
      %v646 = vunpack.c.l.b16 %v383
      %v647 = vunpack.c.l.b16 %v393
      %v648 = vunpack.c.l.b16 %v407
      %v649 = vunpack.c.l.b16 %v417
      %v650 = vunpack.c.l.b16 %v431
      %v651 = vunpack.c.l.b16 %v441
      %v652 = vunpack.c.l.b16 %v455
      %v653 = vunpack.c.l.b16 %v465
      %v654 = vunpack.c.l.b16 %v479
      %v655 = vunpack.c.l.b16 %v489
      %v656 = vunpack.c.l.b16 %v503
      %v657 = vunpack.c.l.b16 %v513
      %v658 = vunpack.c.l.b16 %v527
      %v659 = vunpack.c.l.b16 %v537
      %v660 = vunpack.c.l.b16 %v551
      %v661 = vunpack.c.l.b16 %v561
      %v662 = vunpack.c.l.b16 %v575
      %v663 = vunpack.c.l.b16 %v585
      %v664 = vunpack.c.l.b16 %v599
      %v665 = vunpack.c.l.b16 %v609
      %v666 = vunpack.c.l.b16 %v623
      %v667 = vunpack.c.l.b16 %v633
      %v668 = vpack.c.b16 %v637, %v636
      %v669 = vpack.c.b16 %v639, %v638
      %v670 = vpack.c.b16 %v641, %v640
      %v671 = vpack.c.b16 %v643, %v642
      %v672 = vpack.c.b16 %v645, %v644
      %v673 = vpack.c.b16 %v647, %v646
      %v674 = vpack.c.b16 %v649, %v648
      %v675 = vpack.c.b16 %v651, %v650
      %v676 = vpack.c.b16 %v653, %v652
      %v677 = vpack.c.b16 %v655, %v654
      %v678 = vpack.c.b16 %v657, %v656
      %v679 = vpack.c.b16 %v659, %v658
      %v680 = vpack.c.b16 %v661, %v660
      %v681 = vpack.c.b16 %v663, %v662
      %v682 = vpack.c.b16 %v665, %v664
      %v683 = vpack.c.b16 %v667, %v666
      %vm684 = vcmask 31744
      %v686 = vsel %vm684, %v668, 0
      %v689 = vsel %vm684, %v669, 0
      %v692 = vsel %vm684, %v670, 0
      %v695 = vsel %vm684, %v671, 0
      %v698 = vsel %vm684, %v672, 0
      %v701 = vsel %vm684, %v673, 0
      %v704 = vsel %vm684, %v674, 0
      %v707 = vsel %vm684, %v675, 0
      %v710 = vsel %vm684, %v676, 0
      %v713 = vsel %vm684, %v677, 0
      %v716 = vsel %vm684, %v678, 0
      %v719 = vsel %vm684, %v679, 0
      %v722 = vsel %vm684, %v680, 0
      %v725 = vsel %vm684, %v681, 0
      %v728 = vsel %vm684, %v682, 0
      %v731 = vsel %vm684, %v683, 0
      %vm733 = vcmask 1041408
      %v735 = vsel %vm733, %v635, 0
      %737 = vmatpush.bf16.msra.mxu0 0
      %738 = vmatpush.bf16.msra.mxu0 0
      %739 = vmatpush.bf16.msra.mxu0 0
      %740 = vmatpush.bf16.msra.mxu0 0
      %741 = vmatpush.bf16.msra.mxu0 0
      %742 = vmatpush.bf16.msra.mxu0 0
      %743 = vmatpush.bf16.msra.mxu0 0
      %744 = vmatpush.bf16.msra.mxu0 %v735
      %745 = vmatmul.bf16.gmra.mxu0 %v686
      %v746 = vpop.f32.mrf.mxu0
      %v747 = vadd.f32 0.0, %v746
      %v748 = vpop.f32.mrf.mxu0
      %v749 = vadd.f32 0.0, %v748
      %750 = vmatmul.bf16.gmra.mxu0 %v689
      %v751 = vpop.f32.mrf.mxu0
      %v752 = vadd.f32 0.0, %v751
      %v753 = vpop.f32.mrf.mxu0
      %v754 = vadd.f32 0.0, %v753
      %755 = vmatmul.bf16.gmra.mxu0 %v692
      %v756 = vpop.f32.mrf.mxu0
      %v757 = vadd.f32 0.0, %v756
      %v758 = vpop.f32.mrf.mxu0
      %v759 = vadd.f32 0.0, %v758
      %760 = vmatmul.bf16.gmra.mxu0 %v695
      %v761 = vpop.f32.mrf.mxu0
      %v762 = vadd.f32 0.0, %v761
      %v763 = vpop.f32.mrf.mxu0
      %v764 = vadd.f32 0.0, %v763
      %765 = vmatmul.bf16.gmra.mxu0 %v698
      %v766 = vpop.f32.mrf.mxu0
      %v767 = vadd.f32 0.0, %v766
      %v768 = vpop.f32.mrf.mxu0
      %v769 = vadd.f32 0.0, %v768
      %770 = vmatmul.bf16.gmra.mxu0 %v701
      %v771 = vpop.f32.mrf.mxu0
      %v772 = vadd.f32 0.0, %v771
      %v773 = vpop.f32.mrf.mxu0
      %v774 = vadd.f32 0.0, %v773
      %775 = vmatmul.bf16.gmra.mxu0 %v704
      %v776 = vpop.f32.mrf.mxu0
      %v777 = vadd.f32 0.0, %v776
      %v778 = vpop.f32.mrf.mxu0
      %v779 = vadd.f32 0.0, %v778
      %780 = vmatmul.bf16.gmra.mxu0 %v707
      %v781 = vpop.f32.mrf.mxu0
      %v782 = vadd.f32 0.0, %v781
      %v783 = vpop.f32.mrf.mxu0
      %v784 = vadd.f32 0.0, %v783
      %785 = vmatmul.bf16.gmra.mxu0 %v710
      %v786 = vpop.f32.mrf.mxu0
      %v787 = vadd.f32 0.0, %v786
      %v788 = vpop.f32.mrf.mxu0
      %v789 = vadd.f32 0.0, %v788
      %790 = vmatmul.bf16.gmra.mxu0 %v713
      %v791 = vpop.f32.mrf.mxu0
      %v792 = vadd.f32 0.0, %v791
      %v793 = vpop.f32.mrf.mxu0
      %v794 = vadd.f32 0.0, %v793
      %795 = vmatmul.bf16.gmra.mxu0 %v716
      %v796 = vpop.f32.mrf.mxu0
      %v797 = vadd.f32 0.0, %v796
      %v798 = vpop.f32.mrf.mxu0
      %v799 = vadd.f32 0.0, %v798
      %800 = vmatmul.bf16.gmra.mxu0 %v719
      %v801 = vpop.f32.mrf.mxu0
      %v802 = vadd.f32 0.0, %v801
      %v803 = vpop.f32.mrf.mxu0
      %v804 = vadd.f32 0.0, %v803
      %805 = vmatmul.bf16.gmra.mxu0 %v722
      %v806 = vpop.f32.mrf.mxu0
      %v807 = vadd.f32 0.0, %v806
      %v808 = vpop.f32.mrf.mxu0
      %v809 = vadd.f32 0.0, %v808
      %810 = vmatmul.bf16.gmra.mxu0 %v725
      %v811 = vpop.f32.mrf.mxu0
      %v812 = vadd.f32 0.0, %v811
      %v813 = vpop.f32.mrf.mxu0
      %v814 = vadd.f32 0.0, %v813
      %815 = vmatmul.bf16.gmra.mxu0 %v728
      %v816 = vpop.f32.mrf.mxu0
      %v817 = vadd.f32 0.0, %v816
      %v818 = vpop.f32.mrf.mxu0
      %v819 = vadd.f32 0.0, %v818
      %820 = vmatmul.bf16.gmra.mxu0 %v731
      %v821 = vpop.f32.mrf.mxu0
      %v822 = vadd.f32 0.0, %v821
      %v823 = vpop.f32.mrf.mxu0
      %v824 = vadd.f32 0.0, %v823
      %825 = vdwg.mxu0
      %v858 = vunpack.c.l.b16 %v198
      %v859 = vunpack.c.l.b16 %v199
      %v860 = vunpack.c.l.b16 %v200
      %v861 = vunpack.c.l.b16 %v201
      %v862 = vunpack.c.l.b16 %v202
      %v863 = vunpack.c.l.b16 %v203
      %v864 = vunpack.c.l.b16 %v204
      %v865 = vunpack.c.l.b16 %v205
      %v866 = vunpack.c.l.b16 %v206
      %v867 = vunpack.c.l.b16 %v207
      %v868 = vunpack.c.l.b16 %v208
      %v869 = vunpack.c.l.b16 %v209
      %v870 = vunpack.c.l.b16 %v210
      %v871 = vunpack.c.l.b16 %v211
      %v872 = vunpack.c.l.b16 %v212
      %v873 = vunpack.c.l.b16 %v213
      %v874 = vunpack.c.l.b16 %v214
      %v875 = vunpack.c.l.b16 %v215
      %v876 = vunpack.c.l.b16 %v216
      %v877 = vunpack.c.l.b16 %v217
      %v878 = vunpack.c.l.b16 %v218
      %v879 = vunpack.c.l.b16 %v219
      %v880 = vunpack.c.l.b16 %v220
      %v881 = vunpack.c.l.b16 %v221
      %v882 = vunpack.c.l.b16 %v222
      %v883 = vunpack.c.l.b16 %v223
      %v884 = vunpack.c.l.b16 %v224
      %v885 = vunpack.c.l.b16 %v225
      %v886 = vunpack.c.l.b16 %v226
      %v887 = vunpack.c.l.b16 %v227
      %v888 = vunpack.c.l.b16 %v228
      %v889 = vunpack.c.l.b16 %v229
      %v890 = vpack.c.b16 %v859, %v858
      %v891 = vpack.c.b16 %v861, %v860
      %v892 = vpack.c.b16 %v863, %v862
      %v893 = vpack.c.b16 %v865, %v864
      %v894 = vpack.c.b16 %v867, %v866
      %v895 = vpack.c.b16 %v869, %v868
      %v896 = vpack.c.b16 %v871, %v870
      %v897 = vpack.c.b16 %v873, %v872
      %v898 = vpack.c.b16 %v875, %v874
      %v899 = vpack.c.b16 %v877, %v876
      %v900 = vpack.c.b16 %v879, %v878
      %v901 = vpack.c.b16 %v881, %v880
      %v902 = vpack.c.b16 %v883, %v882
      %v903 = vpack.c.b16 %v885, %v884
      %v904 = vpack.c.b16 %v887, %v886
      %v905 = vpack.c.b16 %v889, %v888
      %v907 = vsel %vm684, %v890, 0
      %v910 = vsel %vm684, %v891, 0
      %v913 = vsel %vm684, %v892, 0
      %v916 = vsel %vm684, %v893, 0
      %v919 = vsel %vm684, %v894, 0
      %v922 = vsel %vm684, %v895, 0
      %v925 = vsel %vm684, %v896, 0
      %v928 = vsel %vm684, %v897, 0
      %v931 = vsel %vm684, %v898, 0
      %v934 = vsel %vm684, %v899, 0
      %v937 = vsel %vm684, %v900, 0
      %v940 = vsel %vm684, %v901, 0
      %v943 = vsel %vm684, %v902, 0
      %v946 = vsel %vm684, %v903, 0
      %v949 = vsel %vm684, %v904, 0
      %v952 = vsel %vm684, %v905, 0
      %v955 = vsel %vm733, %v230, 0
      %957 = vmatpush.bf16.msra.mxu0 0
      %958 = vmatpush.bf16.msra.mxu0 0
      %959 = vmatpush.bf16.msra.mxu0 0
      %960 = vmatpush.bf16.msra.mxu0 0
      %961 = vmatpush.bf16.msra.mxu0 0
      %962 = vmatpush.bf16.msra.mxu0 0
      %963 = vmatpush.bf16.msra.mxu0 0
      %964 = vmatpush.bf16.msra.mxu0 %v955
      %965 = vmatmul.bf16.gmra.mxu0 %v907
      %v966 = vpop.f32.mrf.mxu0
      %v967 = vadd.f32 %v747, %v966
      %v968 = vpop.f32.mrf.mxu0
      %v969 = vadd.f32 %v749, %v968
      %970 = vmatmul.bf16.gmra.mxu0 %v910
      %v971 = vpop.f32.mrf.mxu0
      %v972 = vadd.f32 %v752, %v971
      %v973 = vpop.f32.mrf.mxu0
      %v974 = vadd.f32 %v754, %v973
      %975 = vmatmul.bf16.gmra.mxu0 %v913
      %v976 = vpop.f32.mrf.mxu0
      %v977 = vadd.f32 %v757, %v976
      %v978 = vpop.f32.mrf.mxu0
      %v979 = vadd.f32 %v759, %v978
      %980 = vmatmul.bf16.gmra.mxu0 %v916
      %v981 = vpop.f32.mrf.mxu0
      %v982 = vadd.f32 %v762, %v981
      %v983 = vpop.f32.mrf.mxu0
      %v984 = vadd.f32 %v764, %v983
      %985 = vmatmul.bf16.gmra.mxu0 %v919
      %v986 = vpop.f32.mrf.mxu0
      %v987 = vadd.f32 %v767, %v986
      %v988 = vpop.f32.mrf.mxu0
      %v989 = vadd.f32 %v769, %v988
      %990 = vmatmul.bf16.gmra.mxu0 %v922
      %v991 = vpop.f32.mrf.mxu0
      %v992 = vadd.f32 %v772, %v991
      %v993 = vpop.f32.mrf.mxu0
      %v994 = vadd.f32 %v774, %v993
      %995 = vmatmul.bf16.gmra.mxu0 %v925
      %v996 = vpop.f32.mrf.mxu0
      %v997 = vadd.f32 %v777, %v996
      %v998 = vpop.f32.mrf.mxu0
      %v999 = vadd.f32 %v779, %v998
      %1000 = vmatmul.bf16.gmra.mxu0 %v928
      %v1001 = vpop.f32.mrf.mxu0
      %v1002 = vadd.f32 %v782, %v1001
      %v1003 = vpop.f32.mrf.mxu0
      %v1004 = vadd.f32 %v784, %v1003
      %1005 = vmatmul.bf16.gmra.mxu0 %v931
      %v1006 = vpop.f32.mrf.mxu0
      %v1007 = vadd.f32 %v787, %v1006
      %v1008 = vpop.f32.mrf.mxu0
      %v1009 = vadd.f32 %v789, %v1008
      %1010 = vmatmul.bf16.gmra.mxu0 %v934
      %v1011 = vpop.f32.mrf.mxu0
      %v1012 = vadd.f32 %v792, %v1011
      %v1013 = vpop.f32.mrf.mxu0
      %v1014 = vadd.f32 %v794, %v1013
      %1015 = vmatmul.bf16.gmra.mxu0 %v937
      %v1016 = vpop.f32.mrf.mxu0
      %v1017 = vadd.f32 %v797, %v1016
      %v1018 = vpop.f32.mrf.mxu0
      %v1019 = vadd.f32 %v799, %v1018
      %1020 = vmatmul.bf16.gmra.mxu0 %v940
      %v1021 = vpop.f32.mrf.mxu0
      %v1022 = vadd.f32 %v802, %v1021
      %v1023 = vpop.f32.mrf.mxu0
      %v1024 = vadd.f32 %v804, %v1023
      %1025 = vmatmul.bf16.gmra.mxu0 %v943
      %v1026 = vpop.f32.mrf.mxu0
      %v1027 = vadd.f32 %v807, %v1026
      %v1028 = vpop.f32.mrf.mxu0
      %v1029 = vadd.f32 %v809, %v1028
      %1030 = vmatmul.bf16.gmra.mxu0 %v946
      %v1031 = vpop.f32.mrf.mxu0
      %v1032 = vadd.f32 %v812, %v1031
      %v1033 = vpop.f32.mrf.mxu0
      %v1034 = vadd.f32 %v814, %v1033
      %1035 = vmatmul.bf16.gmra.mxu0 %v949
      %v1036 = vpop.f32.mrf.mxu0
      %v1037 = vadd.f32 %v817, %v1036
      %v1038 = vpop.f32.mrf.mxu0
      %v1039 = vadd.f32 %v819, %v1038
      %1040 = vmatmul.bf16.gmra.mxu0 %v952
      %v1041 = vpop.f32.mrf.mxu0
      %v1042 = vadd.f32 %v822, %v1041
      %v1043 = vpop.f32.mrf.mxu0
      %v1044 = vadd.f32 %v824, %v1043
      %1045 = vdwg.mxu0
      %v1046 = vld [vmem:[%s197] sm:$0xe]
      %v1047 = vld [vmem:[%s197 + $0xc] sm:$0xe]
      %v1048 = vld [vmem:[%s197 + $0x18] sm:$0xe]
      %v1049 = vld [vmem:[%s197 + $0x24] sm:$0xe]
      %v1050 = vld [vmem:[%s197 + $0x30] sm:$0xe]
      %v1051 = vld [vmem:[%s197 + $0x3c] sm:$0xe]
      %v1052 = vld [vmem:[%s197 + $0x48] sm:$0xe]
      %v1053 = vld [vmem:[%s197 + $0x54] sm:$0xe]
      %v1054 = vld [vmem:[%s197 + $0x60] sm:$0xe]
      %v1055 = vld [vmem:[%s197 + $0x6c] sm:$0xe]
      %v1056 = vld [vmem:[%s197 + $0x78] sm:$0xe]
      %v1057 = vld [vmem:[%s197 + $0x84] sm:$0xe]
      %v1058 = vld [vmem:[%s197 + $0x90] sm:$0xe]
      %v1059 = vld [vmem:[%s197 + $0x9c] sm:$0xe]
      %v1060 = vld [vmem:[%s197 + $0xa8] sm:$0xe]
      %v1061 = vld [vmem:[%s197 + $0xb4] sm:$0xe]
      %vm1094 = vcmask 1042432
      %vm1095 = vcmask 1046532
      %vm1096 = vmor %vm1094, %vm1095
      %v1097 = vrot.slane %v1046, 5
      %v1098 = vrot.slane %v1097, 4
      %v1099 = vrot.slane %v199, 5
      %v1100 = vsel %vm1096, %v1098, %v1099
      %v1101 = vrot.slane %v1099, 4
      %v1102 = vrot.slane %v231, 5
      %v1103 = vsel %vm1096, %v1101, %v1102
      %v1104 = vrot.slane %v1047, 5
      %v1105 = vrot.slane %v1104, 4
      %v1106 = vrot.slane %v201, 5
      %v1107 = vsel %vm1096, %v1105, %v1106
      %v1108 = vrot.slane %v1106, 4
      %v1109 = vrot.slane %v232, 5
      %v1110 = vsel %vm1096, %v1108, %v1109
      %v1111 = vrot.slane %v1048, 5
      %v1112 = vrot.slane %v1111, 4
      %v1113 = vrot.slane %v203, 5
      %v1114 = vsel %vm1096, %v1112, %v1113
      %v1115 = vrot.slane %v1113, 4
      %v1116 = vrot.slane %v233, 5
      %v1117 = vsel %vm1096, %v1115, %v1116
      %v1118 = vrot.slane %v1049, 5
      %v1119 = vrot.slane %v1118, 4
      %v1120 = vrot.slane %v205, 5
      %v1121 = vsel %vm1096, %v1119, %v1120
      %v1122 = vrot.slane %v1120, 4
      %v1123 = vrot.slane %v234, 5
      %v1124 = vsel %vm1096, %v1122, %v1123
      %v1125 = vrot.slane %v1050, 5
      %v1126 = vrot.slane %v1125, 4
      %v1127 = vrot.slane %v207, 5
      %v1128 = vsel %vm1096, %v1126, %v1127
      %v1129 = vrot.slane %v1127, 4
      %v1130 = vrot.slane %v235, 5
      %v1131 = vsel %vm1096, %v1129, %v1130
      %v1132 = vrot.slane %v1051, 5
      %v1133 = vrot.slane %v1132, 4
      %v1134 = vrot.slane %v209, 5
      %v1135 = vsel %vm1096, %v1133, %v1134
      %v1136 = vrot.slane %v1134, 4
      %v1137 = vrot.slane %v236, 5
      %v1138 = vsel %vm1096, %v1136, %v1137
      %v1139 = vrot.slane %v1052, 5
      %v1140 = vrot.slane %v1139, 4
      %v1141 = vrot.slane %v211, 5
      %v1142 = vsel %vm1096, %v1140, %v1141
      %v1143 = vrot.slane %v1141, 4
      %v1144 = vrot.slane %v237, 5
      %v1145 = vsel %vm1096, %v1143, %v1144
      %v1146 = vrot.slane %v1053, 5
      %v1147 = vrot.slane %v1146, 4
      %v1148 = vrot.slane %v213, 5
      %v1149 = vsel %vm1096, %v1147, %v1148
      %v1150 = vrot.slane %v1148, 4
      %v1151 = vrot.slane %v238, 5
      %v1152 = vsel %vm1096, %v1150, %v1151
      %v1153 = vrot.slane %v1054, 5
      %v1154 = vrot.slane %v1153, 4
      %v1155 = vrot.slane %v215, 5
      %v1156 = vsel %vm1096, %v1154, %v1155
      %v1157 = vrot.slane %v1155, 4
      %v1158 = vrot.slane %v239, 5
      %v1159 = vsel %vm1096, %v1157, %v1158
      %v1160 = vrot.slane %v1055, 5
      %v1161 = vrot.slane %v1160, 4
      %v1162 = vrot.slane %v217, 5
      %v1163 = vsel %vm1096, %v1161, %v1162
      %v1164 = vrot.slane %v1162, 4
      %v1165 = vrot.slane %v240, 5
      %v1166 = vsel %vm1096, %v1164, %v1165
      %v1167 = vrot.slane %v1056, 5
      %v1168 = vrot.slane %v1167, 4
      %v1169 = vrot.slane %v219, 5
      %v1170 = vsel %vm1096, %v1168, %v1169
      %v1171 = vrot.slane %v1169, 4
      %v1172 = vrot.slane %v241, 5
      %v1173 = vsel %vm1096, %v1171, %v1172
      %v1174 = vrot.slane %v1057, 5
      %v1175 = vrot.slane %v1174, 4
      %v1176 = vrot.slane %v221, 5
      %v1177 = vsel %vm1096, %v1175, %v1176
      %v1178 = vrot.slane %v1176, 4
      %v1179 = vrot.slane %v242, 5
      %v1180 = vsel %vm1096, %v1178, %v1179
      %v1181 = vrot.slane %v1058, 5
      %v1182 = vrot.slane %v1181, 4
      %v1183 = vrot.slane %v223, 5
      %v1184 = vsel %vm1096, %v1182, %v1183
      %v1185 = vrot.slane %v1183, 4
      %v1186 = vrot.slane %v243, 5
      %v1187 = vsel %vm1096, %v1185, %v1186
      %v1188 = vrot.slane %v1059, 5
      %v1189 = vrot.slane %v1188, 4
      %v1190 = vrot.slane %v225, 5
      %v1191 = vsel %vm1096, %v1189, %v1190
      %v1192 = vrot.slane %v1190, 4
      %v1193 = vrot.slane %v244, 5
      %v1194 = vsel %vm1096, %v1192, %v1193
      %v1195 = vrot.slane %v1060, 5
      %v1196 = vrot.slane %v1195, 4
      %v1197 = vrot.slane %v227, 5
      %v1198 = vsel %vm1096, %v1196, %v1197
      %v1199 = vrot.slane %v1197, 4
      %v1200 = vrot.slane %v245, 5
      %v1201 = vsel %vm1096, %v1199, %v1200
      %v1202 = vrot.slane %v1061, 5
      %v1203 = vrot.slane %v1202, 4
      %v1204 = vrot.slane %v229, 5
      %v1205 = vsel %vm1096, %v1203, %v1204
      %v1206 = vrot.slane %v1204, 4
      %v1207 = vrot.slane %v246, 5
      %v1208 = vsel %vm1096, %v1206, %v1207
      %s1209 = scalar_lea.vmem %s1, 4
      %v1210 = vld [vmem:[%s1209] sm:$0x3]
      %v1211 = vunpack.c.l.b16 %v1100
      %v1212 = vunpack.c.l.b16 %v1103
      %v1213 = vunpack.c.l.b16 %v1107
      %v1214 = vunpack.c.l.b16 %v1110
      %v1215 = vunpack.c.l.b16 %v1114
      %v1216 = vunpack.c.l.b16 %v1117
      %v1217 = vunpack.c.l.b16 %v1121
      %v1218 = vunpack.c.l.b16 %v1124
      %v1219 = vunpack.c.l.b16 %v1128
      %v1220 = vunpack.c.l.b16 %v1131
      %v1221 = vunpack.c.l.b16 %v1135
      %v1222 = vunpack.c.l.b16 %v1138
      %v1223 = vunpack.c.l.b16 %v1142
      %v1224 = vunpack.c.l.b16 %v1145
      %v1225 = vunpack.c.l.b16 %v1149
      %v1226 = vunpack.c.l.b16 %v1152
      %v1227 = vunpack.c.l.b16 %v1156
      %v1228 = vunpack.c.l.b16 %v1159
      %v1229 = vunpack.c.l.b16 %v1163
      %v1230 = vunpack.c.l.b16 %v1166
      %v1231 = vunpack.c.l.b16 %v1170
      %v1232 = vunpack.c.l.b16 %v1173
      %v1233 = vunpack.c.l.b16 %v1177
      %v1234 = vunpack.c.l.b16 %v1180
      %v1235 = vunpack.c.l.b16 %v1184
      %v1236 = vunpack.c.l.b16 %v1187
      %v1237 = vunpack.c.l.b16 %v1191
      %v1238 = vunpack.c.l.b16 %v1194
      %v1239 = vunpack.c.l.b16 %v1198
      %v1240 = vunpack.c.l.b16 %v1201
      %v1241 = vunpack.c.l.b16 %v1205
      %v1242 = vunpack.c.l.b16 %v1208
      %v1243 = vpack.c.b16 %v1212, %v1211
      %v1244 = vpack.c.b16 %v1214, %v1213
      %v1245 = vpack.c.b16 %v1216, %v1215
      %v1246 = vpack.c.b16 %v1218, %v1217
      %v1247 = vpack.c.b16 %v1220, %v1219
      %v1248 = vpack.c.b16 %v1222, %v1221
      %v1249 = vpack.c.b16 %v1224, %v1223
      %v1250 = vpack.c.b16 %v1226, %v1225
      %v1251 = vpack.c.b16 %v1228, %v1227
      %v1252 = vpack.c.b16 %v1230, %v1229
      %v1253 = vpack.c.b16 %v1232, %v1231
      %v1254 = vpack.c.b16 %v1234, %v1233
      %v1255 = vpack.c.b16 %v1236, %v1235
      %v1256 = vpack.c.b16 %v1238, %v1237
      %v1257 = vpack.c.b16 %v1240, %v1239
      %v1258 = vpack.c.b16 %v1242, %v1241
      %v1260 = vsel %vm684, %v1243, 0
      %v1263 = vsel %vm684, %v1244, 0
      %v1266 = vsel %vm684, %v1245, 0
      %v1269 = vsel %vm684, %v1246, 0
      %v1272 = vsel %vm684, %v1247, 0
      %v1275 = vsel %vm684, %v1248, 0
      %v1278 = vsel %vm684, %v1249, 0
      %v1281 = vsel %vm684, %v1250, 0
      %v1284 = vsel %vm684, %v1251, 0
      %v1287 = vsel %vm684, %v1252, 0
      %v1290 = vsel %vm684, %v1253, 0
      %v1293 = vsel %vm684, %v1254, 0
      %v1296 = vsel %vm684, %v1255, 0
      %v1299 = vsel %vm684, %v1256, 0
      %v1302 = vsel %vm684, %v1257, 0
      %v1305 = vsel %vm684, %v1258, 0
      %v1308 = vsel %vm733, %v1210, 0
      %1310 = vmatpush.bf16.msra.mxu0 0
      %1311 = vmatpush.bf16.msra.mxu0 0
      %1312 = vmatpush.bf16.msra.mxu0 0
      %1313 = vmatpush.bf16.msra.mxu0 0
      %1314 = vmatpush.bf16.msra.mxu0 0
      %1315 = vmatpush.bf16.msra.mxu0 0
      %1316 = vmatpush.bf16.msra.mxu0 0
      %1317 = vmatpush.bf16.msra.mxu0 %v1308
      %1318 = vmatmul.bf16.gmra.mxu0 %v1260
      %v1319 = vpop.f32.mrf.mxu0
      %v1320 = vadd.f32 0.0, %v1319
      %v1321 = vpop.f32.mrf.mxu0
      %v1322 = vadd.f32 0.0, %v1321
      %1323 = vmatmul.bf16.gmra.mxu0 %v1263
      %v1324 = vpop.f32.mrf.mxu0
      %v1325 = vadd.f32 0.0, %v1324
      %v1326 = vpop.f32.mrf.mxu0
      %v1327 = vadd.f32 0.0, %v1326
      %1328 = vmatmul.bf16.gmra.mxu0 %v1266
      %v1329 = vpop.f32.mrf.mxu0
      %v1330 = vadd.f32 0.0, %v1329
      %v1331 = vpop.f32.mrf.mxu0
      %v1332 = vadd.f32 0.0, %v1331
      %1333 = vmatmul.bf16.gmra.mxu0 %v1269
      %v1334 = vpop.f32.mrf.mxu0
      %v1335 = vadd.f32 0.0, %v1334
      %v1336 = vpop.f32.mrf.mxu0
      %v1337 = vadd.f32 0.0, %v1336
      %1338 = vmatmul.bf16.gmra.mxu0 %v1272
      %v1339 = vpop.f32.mrf.mxu0
      %v1340 = vadd.f32 0.0, %v1339
      %v1341 = vpop.f32.mrf.mxu0
      %v1342 = vadd.f32 0.0, %v1341
      %1343 = vmatmul.bf16.gmra.mxu0 %v1275
      %v1344 = vpop.f32.mrf.mxu0
      %v1345 = vadd.f32 0.0, %v1344
      %v1346 = vpop.f32.mrf.mxu0
      %v1347 = vadd.f32 0.0, %v1346
      %1348 = vmatmul.bf16.gmra.mxu0 %v1278
      %v1349 = vpop.f32.mrf.mxu0
      %v1350 = vadd.f32 0.0, %v1349
      %v1351 = vpop.f32.mrf.mxu0
      %v1352 = vadd.f32 0.0, %v1351
      %1353 = vmatmul.bf16.gmra.mxu0 %v1281
      %v1354 = vpop.f32.mrf.mxu0
      %v1355 = vadd.f32 0.0, %v1354
      %v1356 = vpop.f32.mrf.mxu0
      %v1357 = vadd.f32 0.0, %v1356
      %1358 = vmatmul.bf16.gmra.mxu0 %v1284
      %v1359 = vpop.f32.mrf.mxu0
      %v1360 = vadd.f32 0.0, %v1359
      %v1361 = vpop.f32.mrf.mxu0
      %v1362 = vadd.f32 0.0, %v1361
      %1363 = vmatmul.bf16.gmra.mxu0 %v1287
      %v1364 = vpop.f32.mrf.mxu0
      %v1365 = vadd.f32 0.0, %v1364
      %v1366 = vpop.f32.mrf.mxu0
      %v1367 = vadd.f32 0.0, %v1366
      %1368 = vmatmul.bf16.gmra.mxu0 %v1290
      %v1369 = vpop.f32.mrf.mxu0
      %v1370 = vadd.f32 0.0, %v1369
      %v1371 = vpop.f32.mrf.mxu0
      %v1372 = vadd.f32 0.0, %v1371
      %1373 = vmatmul.bf16.gmra.mxu0 %v1293
      %v1374 = vpop.f32.mrf.mxu0
      %v1375 = vadd.f32 0.0, %v1374
      %v1376 = vpop.f32.mrf.mxu0
      %v1377 = vadd.f32 0.0, %v1376
      %1378 = vmatmul.bf16.gmra.mxu0 %v1296
      %v1379 = vpop.f32.mrf.mxu0
      %v1380 = vadd.f32 0.0, %v1379
      %v1381 = vpop.f32.mrf.mxu0
      %v1382 = vadd.f32 0.0, %v1381
      %1383 = vmatmul.bf16.gmra.mxu0 %v1299
      %v1384 = vpop.f32.mrf.mxu0
      %v1385 = vadd.f32 0.0, %v1384
      %v1386 = vpop.f32.mrf.mxu0
      %v1387 = vadd.f32 0.0, %v1386
      %1388 = vmatmul.bf16.gmra.mxu0 %v1302
      %v1389 = vpop.f32.mrf.mxu0
      %v1390 = vadd.f32 0.0, %v1389
      %v1391 = vpop.f32.mrf.mxu0
      %v1392 = vadd.f32 0.0, %v1391
      %1393 = vmatmul.bf16.gmra.mxu0 %v1305
      %v1394 = vpop.f32.mrf.mxu0
      %v1395 = vadd.f32 0.0, %v1394
      %v1396 = vpop.f32.mrf.mxu0
      %v1397 = vadd.f32 0.0, %v1396
      %1398 = vdwg.mxu0
      %v1399 = vadd.f32 %v967, %v1320
      %v1400 = vadd.f32 %v969, %v1322
      %v1401 = vadd.f32 %v972, %v1325
      %v1402 = vadd.f32 %v974, %v1327
      %v1403 = vadd.f32 %v977, %v1330
      %v1404 = vadd.f32 %v979, %v1332
      %v1405 = vadd.f32 %v982, %v1335
      %v1406 = vadd.f32 %v984, %v1337
      %v1407 = vadd.f32 %v987, %v1340
      %v1408 = vadd.f32 %v989, %v1342
      %v1409 = vadd.f32 %v992, %v1345
      %v1410 = vadd.f32 %v994, %v1347
      %v1411 = vadd.f32 %v997, %v1350
      %v1412 = vadd.f32 %v999, %v1352
      %v1413 = vadd.f32 %v1002, %v1355
      %v1414 = vadd.f32 %v1004, %v1357
      %v1415 = vadd.f32 %v1007, %v1360
      %v1416 = vadd.f32 %v1009, %v1362
      %v1417 = vadd.f32 %v1012, %v1365
      %v1418 = vadd.f32 %v1014, %v1367
      %v1419 = vadd.f32 %v1017, %v1370
      %v1420 = vadd.f32 %v1019, %v1372
      %v1421 = vadd.f32 %v1022, %v1375
      %v1422 = vadd.f32 %v1024, %v1377
      %v1423 = vadd.f32 %v1027, %v1380
      %v1424 = vadd.f32 %v1029, %v1382
      %v1425 = vadd.f32 %v1032, %v1385
      %v1426 = vadd.f32 %v1034, %v1387
      %v1427 = vadd.f32 %v1037, %v1390
      %v1428 = vadd.f32 %v1039, %v1392
      %v1429 = vadd.f32 %v1042, %v1395
      %v1430 = vadd.f32 %v1044, %v1397
      %v1431 = vld [vmem:[%s197 + $0x8] sm:$0x3]
      %v1432 = vld [vmem:[%s197 + $0x14] sm:$0x3]
      %v1433 = vld [vmem:[%s197 + $0x20] sm:$0x3]
      %v1434 = vld [vmem:[%s197 + $0x2c] sm:$0x3]
      %v1435 = vld [vmem:[%s197 + $0x38] sm:$0x3]
      %v1436 = vld [vmem:[%s197 + $0x44] sm:$0x3]
      %v1437 = vld [vmem:[%s197 + $0x50] sm:$0x3]
      %v1438 = vld [vmem:[%s197 + $0x5c] sm:$0x3]
      %v1439 = vld [vmem:[%s197 + $0x68] sm:$0x3]
      %v1440 = vld [vmem:[%s197 + $0x74] sm:$0x3]
      %v1441 = vld [vmem:[%s197 + $0x80] sm:$0x3]
      %v1442 = vld [vmem:[%s197 + $0x8c] sm:$0x3]
      %v1443 = vld [vmem:[%s197 + $0x98] sm:$0x3]
      %v1444 = vld [vmem:[%s197 + $0xa4] sm:$0x3]
      %v1445 = vld [vmem:[%s197 + $0xb0] sm:$0x3]
      %v1446 = vld [vmem:[%s197 + $0xbc] sm:$0x3]
      %vm1447 = vsmask.f32 2304
      %vm1448 = vsmask.f32 6416
      %vm1449 = vmor %vm1447, %vm1448
      %v1451 = vshrl.u32 %v1046, 16
      %v1453 = vrot.slane %v1451, 5
      %v1454 = vshll.u32 %v1046, 16
      %v1456 = vrot.slane %v1454, 6
      %v1457 = vor.u32 %v1453, %v1456
      %v1458 = vrot.slane %v1457, 4
      %v1459 = vrot.slane %v264, 5
      %v1460 = vrot.slane %v260, 6
      %v1461 = vor.u32 %v1459, %v1460
      %v1462 = vsel %vm1449, %v1458, %v1461
      %v1463 = vrot.slane %v1461, 4
      %v1465 = vshrl.u32 %v1431, 16
      %v1467 = vrot.slane %v1465, 5
      %v1468 = vshll.u32 %v1431, 16
      %v1470 = vrot.slane %v1468, 6
      %v1471 = vor.u32 %v1467, %v1470
      %v1472 = vsel %vm1449, %v1463, %v1471
      %v1474 = vshrl.u32 %v1047, 16
      %v1476 = vrot.slane %v1474, 5
      %v1477 = vshll.u32 %v1047, 16
      %v1479 = vrot.slane %v1477, 6
      %v1480 = vor.u32 %v1476, %v1479
      %v1481 = vrot.slane %v1480, 4
      %v1482 = vrot.slane %v288, 5
      %v1483 = vrot.slane %v284, 6
      %v1484 = vor.u32 %v1482, %v1483
      %v1485 = vsel %vm1449, %v1481, %v1484
      %v1486 = vrot.slane %v1484, 4
      %v1488 = vshrl.u32 %v1432, 16
      %v1490 = vrot.slane %v1488, 5
      %v1491 = vshll.u32 %v1432, 16
      %v1493 = vrot.slane %v1491, 6
      %v1494 = vor.u32 %v1490, %v1493
      %v1495 = vsel %vm1449, %v1486, %v1494
      %v1497 = vshrl.u32 %v1048, 16
      %v1499 = vrot.slane %v1497, 5
      %v1500 = vshll.u32 %v1048, 16
      %v1502 = vrot.slane %v1500, 6
      %v1503 = vor.u32 %v1499, %v1502
      %v1504 = vrot.slane %v1503, 4
      %v1505 = vrot.slane %v312, 5
      %v1506 = vrot.slane %v308, 6
      %v1507 = vor.u32 %v1505, %v1506
      %v1508 = vsel %vm1449, %v1504, %v1507
      %v1509 = vrot.slane %v1507, 4
      %v1511 = vshrl.u32 %v1433, 16
      %v1513 = vrot.slane %v1511, 5
      %v1514 = vshll.u32 %v1433, 16
      %v1516 = vrot.slane %v1514, 6
      %v1517 = vor.u32 %v1513, %v1516
      %v1518 = vsel %vm1449, %v1509, %v1517
      %v1520 = vshrl.u32 %v1049, 16
      %v1522 = vrot.slane %v1520, 5
      %v1523 = vshll.u32 %v1049, 16
      %v1525 = vrot.slane %v1523, 6
      %v1526 = vor.u32 %v1522, %v1525
      %v1527 = vrot.slane %v1526, 4
      %v1528 = vrot.slane %v336, 5
      %v1529 = vrot.slane %v332, 6
      %v1530 = vor.u32 %v1528, %v1529
      %v1531 = vsel %vm1449, %v1527, %v1530
      %v1532 = vrot.slane %v1530, 4
      %v1534 = vshrl.u32 %v1434, 16
      %v1536 = vrot.slane %v1534, 5
      %v1537 = vshll.u32 %v1434, 16
      %v1539 = vrot.slane %v1537, 6
      %v1540 = vor.u32 %v1536, %v1539
      %v1541 = vsel %vm1449, %v1532, %v1540
      %v1543 = vshrl.u32 %v1050, 16
      %v1545 = vrot.slane %v1543, 5
      %v1546 = vshll.u32 %v1050, 16
      %v1548 = vrot.slane %v1546, 6
      %v1549 = vor.u32 %v1545, %v1548
      %v1550 = vrot.slane %v1549, 4
      %v1551 = vrot.slane %v360, 5
      %v1552 = vrot.slane %v356, 6
      %v1553 = vor.u32 %v1551, %v1552
      %v1554 = vsel %vm1449, %v1550, %v1553
      %v1555 = vrot.slane %v1553, 4
      %v1557 = vshrl.u32 %v1435, 16
      %v1559 = vrot.slane %v1557, 5
      %v1560 = vshll.u32 %v1435, 16
      %v1562 = vrot.slane %v1560, 6
      %v1563 = vor.u32 %v1559, %v1562
      %v1564 = vsel %vm1449, %v1555, %v1563
      %v1566 = vshrl.u32 %v1051, 16
      %v1568 = vrot.slane %v1566, 5
      %v1569 = vshll.u32 %v1051, 16
      %v1571 = vrot.slane %v1569, 6
      %v1572 = vor.u32 %v1568, %v1571
      %v1573 = vrot.slane %v1572, 4
      %v1574 = vrot.slane %v384, 5
      %v1575 = vrot.slane %v380, 6
      %v1576 = vor.u32 %v1574, %v1575
      %v1577 = vsel %vm1449, %v1573, %v1576
      %v1578 = vrot.slane %v1576, 4
      %v1580 = vshrl.u32 %v1436, 16
      %v1582 = vrot.slane %v1580, 5
      %v1583 = vshll.u32 %v1436, 16
      %v1585 = vrot.slane %v1583, 6
      %v1586 = vor.u32 %v1582, %v1585
      %v1587 = vsel %vm1449, %v1578, %v1586
      %v1589 = vshrl.u32 %v1052, 16
      %v1591 = vrot.slane %v1589, 5
      %v1592 = vshll.u32 %v1052, 16
      %v1594 = vrot.slane %v1592, 6
      %v1595 = vor.u32 %v1591, %v1594
      %v1596 = vrot.slane %v1595, 4
      %v1597 = vrot.slane %v408, 5
      %v1598 = vrot.slane %v404, 6
      %v1599 = vor.u32 %v1597, %v1598
      %v1600 = vsel %vm1449, %v1596, %v1599
      %v1601 = vrot.slane %v1599, 4
      %v1603 = vshrl.u32 %v1437, 16
      %v1605 = vrot.slane %v1603, 5
      %v1606 = vshll.u32 %v1437, 16
      %v1608 = vrot.slane %v1606, 6
      %v1609 = vor.u32 %v1605, %v1608
      %v1610 = vsel %vm1449, %v1601, %v1609
      %v1612 = vshrl.u32 %v1053, 16
      %v1614 = vrot.slane %v1612, 5
      %v1615 = vshll.u32 %v1053, 16
      %v1617 = vrot.slane %v1615, 6
      %v1618 = vor.u32 %v1614, %v1617
      %v1619 = vrot.slane %v1618, 4
      %v1620 = vrot.slane %v432, 5
      %v1621 = vrot.slane %v428, 6
      %v1622 = vor.u32 %v1620, %v1621
      %v1623 = vsel %vm1449, %v1619, %v1622
      %v1624 = vrot.slane %v1622, 4
      %v1626 = vshrl.u32 %v1438, 16
      %v1628 = vrot.slane %v1626, 5
      %v1629 = vshll.u32 %v1438, 16
      %v1631 = vrot.slane %v1629, 6
      %v1632 = vor.u32 %v1628, %v1631
      %v1633 = vsel %vm1449, %v1624, %v1632
      %v1635 = vshrl.u32 %v1054, 16
      %v1637 = vrot.slane %v1635, 5
      %v1638 = vshll.u32 %v1054, 16
      %v1640 = vrot.slane %v1638, 6
      %v1641 = vor.u32 %v1637, %v1640
      %v1642 = vrot.slane %v1641, 4
      %v1643 = vrot.slane %v456, 5
      %v1644 = vrot.slane %v452, 6
      %v1645 = vor.u32 %v1643, %v1644
      %v1646 = vsel %vm1449, %v1642, %v1645
      %v1647 = vrot.slane %v1645, 4
      %v1649 = vshrl.u32 %v1439, 16
      %v1651 = vrot.slane %v1649, 5
      %v1652 = vshll.u32 %v1439, 16
      %v1654 = vrot.slane %v1652, 6
      %v1655 = vor.u32 %v1651, %v1654
      %v1656 = vsel %vm1449, %v1647, %v1655
      %v1658 = vshrl.u32 %v1055, 16
      %v1660 = vrot.slane %v1658, 5
      %v1661 = vshll.u32 %v1055, 16
      %v1663 = vrot.slane %v1661, 6
      %v1664 = vor.u32 %v1660, %v1663
      %v1665 = vrot.slane %v1664, 4
      %v1666 = vrot.slane %v480, 5
      %v1667 = vrot.slane %v476, 6
      %v1668 = vor.u32 %v1666, %v1667
      %v1669 = vsel %vm1449, %v1665, %v1668
      %v1670 = vrot.slane %v1668, 4
      %v1672 = vshrl.u32 %v1440, 16
      %v1674 = vrot.slane %v1672, 5
      %v1675 = vshll.u32 %v1440, 16
      %v1677 = vrot.slane %v1675, 6
      %v1678 = vor.u32 %v1674, %v1677
      %v1679 = vsel %vm1449, %v1670, %v1678
      %v1681 = vshrl.u32 %v1056, 16
      %v1683 = vrot.slane %v1681, 5
      %v1684 = vshll.u32 %v1056, 16
      %v1686 = vrot.slane %v1684, 6
      %v1687 = vor.u32 %v1683, %v1686
      %v1688 = vrot.slane %v1687, 4
      %v1689 = vrot.slane %v504, 5
      %v1690 = vrot.slane %v500, 6
      %v1691 = vor.u32 %v1689, %v1690
      %v1692 = vsel %vm1449, %v1688, %v1691
      %v1693 = vrot.slane %v1691, 4
      %v1695 = vshrl.u32 %v1441, 16
      %v1697 = vrot.slane %v1695, 5
      %v1698 = vshll.u32 %v1441, 16
      %v1700 = vrot.slane %v1698, 6
      %v1701 = vor.u32 %v1697, %v1700
      %v1702 = vsel %vm1449, %v1693, %v1701
      %v1704 = vshrl.u32 %v1057, 16
      %v1706 = vrot.slane %v1704, 5
      %v1707 = vshll.u32 %v1057, 16
      %v1709 = vrot.slane %v1707, 6
      %v1710 = vor.u32 %v1706, %v1709
      %v1711 = vrot.slane %v1710, 4
      %v1712 = vrot.slane %v528, 5
      %v1713 = vrot.slane %v524, 6
      %v1714 = vor.u32 %v1712, %v1713
      %v1715 = vsel %vm1449, %v1711, %v1714
      %v1716 = vrot.slane %v1714, 4
      %v1718 = vshrl.u32 %v1442, 16
      %v1720 = vrot.slane %v1718, 5
      %v1721 = vshll.u32 %v1442, 16
      %v1723 = vrot.slane %v1721, 6
      %v1724 = vor.u32 %v1720, %v1723
      %v1725 = vsel %vm1449, %v1716, %v1724
      %v1727 = vshrl.u32 %v1058, 16
      %v1729 = vrot.slane %v1727, 5
      %v1730 = vshll.u32 %v1058, 16
      %v1732 = vrot.slane %v1730, 6
      %v1733 = vor.u32 %v1729, %v1732
      %v1734 = vrot.slane %v1733, 4
      %v1735 = vrot.slane %v552, 5
      %v1736 = vrot.slane %v548, 6
      %v1737 = vor.u32 %v1735, %v1736
      %v1738 = vsel %vm1449, %v1734, %v1737
      %v1739 = vrot.slane %v1737, 4
      %v1741 = vshrl.u32 %v1443, 16
      %v1743 = vrot.slane %v1741, 5
      %v1744 = vshll.u32 %v1443, 16
      %v1746 = vrot.slane %v1744, 6
      %v1747 = vor.u32 %v1743, %v1746
      %v1748 = vsel %vm1449, %v1739, %v1747
      %v1750 = vshrl.u32 %v1059, 16
      %v1752 = vrot.slane %v1750, 5
      %v1753 = vshll.u32 %v1059, 16
      %v1755 = vrot.slane %v1753, 6
      %v1756 = vor.u32 %v1752, %v1755
      %v1757 = vrot.slane %v1756, 4
      %v1758 = vrot.slane %v576, 5
      %v1759 = vrot.slane %v572, 6
      %v1760 = vor.u32 %v1758, %v1759
      %v1761 = vsel %vm1449, %v1757, %v1760
      %v1762 = vrot.slane %v1760, 4
      %v1764 = vshrl.u32 %v1444, 16
      %v1766 = vrot.slane %v1764, 5
      %v1767 = vshll.u32 %v1444, 16
      %v1769 = vrot.slane %v1767, 6
      %v1770 = vor.u32 %v1766, %v1769
      %v1771 = vsel %vm1449, %v1762, %v1770
      %v1773 = vshrl.u32 %v1060, 16
      %v1775 = vrot.slane %v1773, 5
      %v1776 = vshll.u32 %v1060, 16
      %v1778 = vrot.slane %v1776, 6
      %v1779 = vor.u32 %v1775, %v1778
      %v1780 = vrot.slane %v1779, 4
      %v1781 = vrot.slane %v600, 5
      %v1782 = vrot.slane %v596, 6
      %v1783 = vor.u32 %v1781, %v1782
      %v1784 = vsel %vm1449, %v1780, %v1783
      %v1785 = vrot.slane %v1783, 4
      %v1787 = vshrl.u32 %v1445, 16
      %v1789 = vrot.slane %v1787, 5
      %v1790 = vshll.u32 %v1445, 16
      %v1792 = vrot.slane %v1790, 6
      %v1793 = vor.u32 %v1789, %v1792
      %v1794 = vsel %vm1449, %v1785, %v1793
      %v1796 = vshrl.u32 %v1061, 16
      %v1798 = vrot.slane %v1796, 5
      %v1799 = vshll.u32 %v1061, 16
      %v1801 = vrot.slane %v1799, 6
      %v1802 = vor.u32 %v1798, %v1801
      %v1803 = vrot.slane %v1802, 4
      %v1804 = vrot.slane %v624, 5
      %v1805 = vrot.slane %v620, 6
      %v1806 = vor.u32 %v1804, %v1805
      %v1807 = vsel %vm1449, %v1803, %v1806
      %v1808 = vrot.slane %v1806, 4
      %v1810 = vshrl.u32 %v1446, 16
      %v1812 = vrot.slane %v1810, 5
      %v1813 = vshll.u32 %v1446, 16
      %v1815 = vrot.slane %v1813, 6
      %v1816 = vor.u32 %v1812, %v1815
      %v1817 = vsel %vm1449, %v1808, %v1816
      %s1818 = scalar_lea.vmem %s1, 6
      %v1819 = vld [vmem:[%s1818] sm:$0x3]
      %v1820 = vunpack.c.l.b16 %v1462
      %v1821 = vunpack.c.l.b16 %v1472
      %v1822 = vunpack.c.l.b16 %v1485
      %v1823 = vunpack.c.l.b16 %v1495
      %v1824 = vunpack.c.l.b16 %v1508
      %v1825 = vunpack.c.l.b16 %v1518
      %v1826 = vunpack.c.l.b16 %v1531
      %v1827 = vunpack.c.l.b16 %v1541
      %v1828 = vunpack.c.l.b16 %v1554
      %v1829 = vunpack.c.l.b16 %v1564
      %v1830 = vunpack.c.l.b16 %v1577
      %v1831 = vunpack.c.l.b16 %v1587
      %v1832 = vunpack.c.l.b16 %v1600
      %v1833 = vunpack.c.l.b16 %v1610
      %v1834 = vunpack.c.l.b16 %v1623
      %v1835 = vunpack.c.l.b16 %v1633
      %v1836 = vunpack.c.l.b16 %v1646
      %v1837 = vunpack.c.l.b16 %v1656
      %v1838 = vunpack.c.l.b16 %v1669
      %v1839 = vunpack.c.l.b16 %v1679
      %v1840 = vunpack.c.l.b16 %v1692
      %v1841 = vunpack.c.l.b16 %v1702
      %v1842 = vunpack.c.l.b16 %v1715
      %v1843 = vunpack.c.l.b16 %v1725
      %v1844 = vunpack.c.l.b16 %v1738
      %v1845 = vunpack.c.l.b16 %v1748
      %v1846 = vunpack.c.l.b16 %v1761
      %v1847 = vunpack.c.l.b16 %v1771
      %v1848 = vunpack.c.l.b16 %v1784
      %v1849 = vunpack.c.l.b16 %v1794
      %v1850 = vunpack.c.l.b16 %v1807
      %v1851 = vunpack.c.l.b16 %v1817
      %v1852 = vpack.c.b16 %v1821, %v1820
      %v1853 = vpack.c.b16 %v1823, %v1822
      %v1854 = vpack.c.b16 %v1825, %v1824
      %v1855 = vpack.c.b16 %v1827, %v1826
      %v1856 = vpack.c.b16 %v1829, %v1828
      %v1857 = vpack.c.b16 %v1831, %v1830
      %v1858 = vpack.c.b16 %v1833, %v1832
      %v1859 = vpack.c.b16 %v1835, %v1834
      %v1860 = vpack.c.b16 %v1837, %v1836
      %v1861 = vpack.c.b16 %v1839, %v1838
      %v1862 = vpack.c.b16 %v1841, %v1840
      %v1863 = vpack.c.b16 %v1843, %v1842
      %v1864 = vpack.c.b16 %v1845, %v1844
      %v1865 = vpack.c.b16 %v1847, %v1846
      %v1866 = vpack.c.b16 %v1849, %v1848
      %v1867 = vpack.c.b16 %v1851, %v1850
      %v1869 = vsel %vm684, %v1852, 0
      %v1872 = vsel %vm684, %v1853, 0
      %v1875 = vsel %vm684, %v1854, 0
      %v1878 = vsel %vm684, %v1855, 0
      %v1881 = vsel %vm684, %v1856, 0
      %v1884 = vsel %vm684, %v1857, 0
      %v1887 = vsel %vm684, %v1858, 0
      %v1890 = vsel %vm684, %v1859, 0
      %v1893 = vsel %vm684, %v1860, 0
      %v1896 = vsel %vm684, %v1861, 0
      %v1899 = vsel %vm684, %v1862, 0
      %v1902 = vsel %vm684, %v1863, 0
      %v1905 = vsel %vm684, %v1864, 0
      %v1908 = vsel %vm684, %v1865, 0
      %v1911 = vsel %vm684, %v1866, 0
      %v1914 = vsel %vm684, %v1867, 0
      %v1917 = vsel %vm733, %v1819, 0
      %1919 = vmatpush.bf16.msra.mxu0 0
      %1920 = vmatpush.bf16.msra.mxu0 0
      %1921 = vmatpush.bf16.msra.mxu0 0
      %1922 = vmatpush.bf16.msra.mxu0 0
      %1923 = vmatpush.bf16.msra.mxu0 0
      %1924 = vmatpush.bf16.msra.mxu0 0
      %1925 = vmatpush.bf16.msra.mxu0 0
      %1926 = vmatpush.bf16.msra.mxu0 %v1917
      %1927 = vmatmul.bf16.gmra.mxu0 %v1869
      %v1928 = vpop.f32.mrf.mxu0
      %v1929 = vadd.f32 0.0, %v1928
      %v1930 = vpop.f32.mrf.mxu0
      %v1931 = vadd.f32 0.0, %v1930
      %1932 = vmatmul.bf16.gmra.mxu0 %v1872
      %v1933 = vpop.f32.mrf.mxu0
      %v1934 = vadd.f32 0.0, %v1933
      %v1935 = vpop.f32.mrf.mxu0
      %v1936 = vadd.f32 0.0, %v1935
      %1937 = vmatmul.bf16.gmra.mxu0 %v1875
      %v1938 = vpop.f32.mrf.mxu0
      %v1939 = vadd.f32 0.0, %v1938
      %v1940 = vpop.f32.mrf.mxu0
      %v1941 = vadd.f32 0.0, %v1940
      %1942 = vmatmul.bf16.gmra.mxu0 %v1878
      %v1943 = vpop.f32.mrf.mxu0
      %v1944 = vadd.f32 0.0, %v1943
      %v1945 = vpop.f32.mrf.mxu0
      %v1946 = vadd.f32 0.0, %v1945
      %1947 = vmatmul.bf16.gmra.mxu0 %v1881
      %v1948 = vpop.f32.mrf.mxu0
      %v1949 = vadd.f32 0.0, %v1948
      %v1950 = vpop.f32.mrf.mxu0
      %v1951 = vadd.f32 0.0, %v1950
      %1952 = vmatmul.bf16.gmra.mxu0 %v1884
      %v1953 = vpop.f32.mrf.mxu0
      %v1954 = vadd.f32 0.0, %v1953
      %v1955 = vpop.f32.mrf.mxu0
      %v1956 = vadd.f32 0.0, %v1955
      %1957 = vmatmul.bf16.gmra.mxu0 %v1887
      %v1958 = vpop.f32.mrf.mxu0
      %v1959 = vadd.f32 0.0, %v1958
      %v1960 = vpop.f32.mrf.mxu0
      %v1961 = vadd.f32 0.0, %v1960
      %1962 = vmatmul.bf16.gmra.mxu0 %v1890
      %v1963 = vpop.f32.mrf.mxu0
      %v1964 = vadd.f32 0.0, %v1963
      %v1965 = vpop.f32.mrf.mxu0
      %v1966 = vadd.f32 0.0, %v1965
      %1967 = vmatmul.bf16.gmra.mxu0 %v1893
      %v1968 = vpop.f32.mrf.mxu0
      %v1969 = vadd.f32 0.0, %v1968
      %v1970 = vpop.f32.mrf.mxu0
      %v1971 = vadd.f32 0.0, %v1970
      %1972 = vmatmul.bf16.gmra.mxu0 %v1896
      %v1973 = vpop.f32.mrf.mxu0
      %v1974 = vadd.f32 0.0, %v1973
      %v1975 = vpop.f32.mrf.mxu0
      %v1976 = vadd.f32 0.0, %v1975
      %1977 = vmatmul.bf16.gmra.mxu0 %v1899
      %v1978 = vpop.f32.mrf.mxu0
      %v1979 = vadd.f32 0.0, %v1978
      %v1980 = vpop.f32.mrf.mxu0
      %v1981 = vadd.f32 0.0, %v1980
      %1982 = vmatmul.bf16.gmra.mxu0 %v1902
      %v1983 = vpop.f32.mrf.mxu0
      %v1984 = vadd.f32 0.0, %v1983
      %v1985 = vpop.f32.mrf.mxu0
      %v1986 = vadd.f32 0.0, %v1985
      %1987 = vmatmul.bf16.gmra.mxu0 %v1905
      %v1988 = vpop.f32.mrf.mxu0
      %v1989 = vadd.f32 0.0, %v1988
      %v1990 = vpop.f32.mrf.mxu0
      %v1991 = vadd.f32 0.0, %v1990
      %1992 = vmatmul.bf16.gmra.mxu0 %v1908
      %v1993 = vpop.f32.mrf.mxu0
      %v1994 = vadd.f32 0.0, %v1993
      %v1995 = vpop.f32.mrf.mxu0
      %v1996 = vadd.f32 0.0, %v1995
      %1997 = vmatmul.bf16.gmra.mxu0 %v1911
      %v1998 = vpop.f32.mrf.mxu0
      %v1999 = vadd.f32 0.0, %v1998
      %v2000 = vpop.f32.mrf.mxu0
      %v2001 = vadd.f32 0.0, %v2000
      %2002 = vmatmul.bf16.gmra.mxu0 %v1914
      %v2003 = vpop.f32.mrf.mxu0
      %v2004 = vadd.f32 0.0, %v2003
      %v2005 = vpop.f32.mrf.mxu0
      %v2006 = vadd.f32 0.0, %v2005
      %2007 = vdwg.mxu0
      %v2008 = vadd.f32 %v1399, %v1929
      %v2009 = vadd.f32 %v1400, %v1931
      %v2010 = vadd.f32 %v1401, %v1934
      %v2011 = vadd.f32 %v1402, %v1936
      %v2012 = vadd.f32 %v1403, %v1939
      %v2013 = vadd.f32 %v1404, %v1941
      %v2014 = vadd.f32 %v1405, %v1944
      %v2015 = vadd.f32 %v1406, %v1946
      %v2016 = vadd.f32 %v1407, %v1949
      %v2017 = vadd.f32 %v1408, %v1951
      %v2018 = vadd.f32 %v1409, %v1954
      %v2019 = vadd.f32 %v1410, %v1956
      %v2020 = vadd.f32 %v1411, %v1959
      %v2021 = vadd.f32 %v1412, %v1961
      %v2022 = vadd.f32 %v1413, %v1964
      %v2023 = vadd.f32 %v1414, %v1966
      %v2024 = vadd.f32 %v1415, %v1969
      %v2025 = vadd.f32 %v1416, %v1971
      %v2026 = vadd.f32 %v1417, %v1974
      %v2027 = vadd.f32 %v1418, %v1976
      %v2028 = vadd.f32 %v1419, %v1979
      %v2029 = vadd.f32 %v1420, %v1981
      %v2030 = vadd.f32 %v1421, %v1984
      %v2031 = vadd.f32 %v1422, %v1986
      %v2032 = vadd.f32 %v1423, %v1989
      %v2033 = vadd.f32 %v1424, %v1991
      %v2034 = vadd.f32 %v1425, %v1994
      %v2035 = vadd.f32 %v1426, %v1996
      %v2036 = vadd.f32 %v1427, %v1999
      %v2037 = vadd.f32 %v1428, %v2001
      %v2038 = vadd.f32 %v1429, %v2004
      %v2039 = vadd.f32 %v1430, %v2006
      %v2040 = vld [vmem:[%s197] sm:$0xc]
      %v2041 = vld [vmem:[%s197 + $0xc] sm:$0xc]
      %v2042 = vld [vmem:[%s197 + $0x18] sm:$0xc]
      %v2043 = vld [vmem:[%s197 + $0x24] sm:$0xc]
      %v2044 = vld [vmem:[%s197 + $0x30] sm:$0xc]
      %v2045 = vld [vmem:[%s197 + $0x3c] sm:$0xc]
      %v2046 = vld [vmem:[%s197 + $0x48] sm:$0xc]
      %v2047 = vld [vmem:[%s197 + $0x54] sm:$0xc]
      %v2048 = vld [vmem:[%s197 + $0x60] sm:$0xc]
      %v2049 = vld [vmem:[%s197 + $0x6c] sm:$0xc]
      %v2050 = vld [vmem:[%s197 + $0x78] sm:$0xc]
      %v2051 = vld [vmem:[%s197 + $0x84] sm:$0xc]
      %v2052 = vld [vmem:[%s197 + $0x90] sm:$0xc]
      %v2053 = vld [vmem:[%s197 + $0x9c] sm:$0xc]
      %v2054 = vld [vmem:[%s197 + $0xa8] sm:$0xc]
      %v2055 = vld [vmem:[%s197 + $0xb4] sm:$0xc]
      %vm2088 = vcmask 1041408
      %vm2089 = vcmask 1045508
      %vm2090 = vmor %vm2088, %vm2089
      %v2091 = vrot.slane %v2040, 6
      %v2092 = vrot.slane %v2091, 4
      %v2093 = vrot.slane %v199, 6
      %v2094 = vsel %vm2090, %v2092, %v2093
      %v2095 = vrot.slane %v2093, 4
      %v2096 = vrot.slane %v1431, 6
      %v2097 = vsel %vm2090, %v2095, %v2096
      %v2098 = vrot.slane %v2041, 6
      %v2099 = vrot.slane %v2098, 4
      %v2100 = vrot.slane %v201, 6
      %v2101 = vsel %vm2090, %v2099, %v2100
      %v2102 = vrot.slane %v2100, 4
      %v2103 = vrot.slane %v1432, 6
      %v2104 = vsel %vm2090, %v2102, %v2103
      %v2105 = vrot.slane %v2042, 6
      %v2106 = vrot.slane %v2105, 4
      %v2107 = vrot.slane %v203, 6
      %v2108 = vsel %vm2090, %v2106, %v2107
      %v2109 = vrot.slane %v2107, 4
      %v2110 = vrot.slane %v1433, 6
      %v2111 = vsel %vm2090, %v2109, %v2110
      %v2112 = vrot.slane %v2043, 6
      %v2113 = vrot.slane %v2112, 4
      %v2114 = vrot.slane %v205, 6
      %v2115 = vsel %vm2090, %v2113, %v2114
      %v2116 = vrot.slane %v2114, 4
      %v2117 = vrot.slane %v1434, 6
      %v2118 = vsel %vm2090, %v2116, %v2117
      %v2119 = vrot.slane %v2044, 6
      %v2120 = vrot.slane %v2119, 4
      %v2121 = vrot.slane %v207, 6
      %v2122 = vsel %vm2090, %v2120, %v2121
      %v2123 = vrot.slane %v2121, 4
      %v2124 = vrot.slane %v1435, 6
      %v2125 = vsel %vm2090, %v2123, %v2124
      %v2126 = vrot.slane %v2045, 6
      %v2127 = vrot.slane %v2126, 4
      %v2128 = vrot.slane %v209, 6
      %v2129 = vsel %vm2090, %v2127, %v2128
      %v2130 = vrot.slane %v2128, 4
      %v2131 = vrot.slane %v1436, 6
      %v2132 = vsel %vm2090, %v2130, %v2131
      %v2133 = vrot.slane %v2046, 6
      %v2134 = vrot.slane %v2133, 4
      %v2135 = vrot.slane %v211, 6
      %v2136 = vsel %vm2090, %v2134, %v2135
      %v2137 = vrot.slane %v2135, 4
      %v2138 = vrot.slane %v1437, 6
      %v2139 = vsel %vm2090, %v2137, %v2138
      %v2140 = vrot.slane %v2047, 6
      %v2141 = vrot.slane %v2140, 4
      %v2142 = vrot.slane %v213, 6
      %v2143 = vsel %vm2090, %v2141, %v2142
      %v2144 = vrot.slane %v2142, 4
      %v2145 = vrot.slane %v1438, 6
      %v2146 = vsel %vm2090, %v2144, %v2145
      %v2147 = vrot.slane %v2048, 6
      %v2148 = vrot.slane %v2147, 4
      %v2149 = vrot.slane %v215, 6
      %v2150 = vsel %vm2090, %v2148, %v2149
      %v2151 = vrot.slane %v2149, 4
      %v2152 = vrot.slane %v1439, 6
      %v2153 = vsel %vm2090, %v2151, %v2152
      %v2154 = vrot.slane %v2049, 6
      %v2155 = vrot.slane %v2154, 4
      %v2156 = vrot.slane %v217, 6
      %v2157 = vsel %vm2090, %v2155, %v2156
      %v2158 = vrot.slane %v2156, 4
      %v2159 = vrot.slane %v1440, 6
      %v2160 = vsel %vm2090, %v2158, %v2159
      %v2161 = vrot.slane %v2050, 6
      %v2162 = vrot.slane %v2161, 4
      %v2163 = vrot.slane %v219, 6
      %v2164 = vsel %vm2090, %v2162, %v2163
      %v2165 = vrot.slane %v2163, 4
      %v2166 = vrot.slane %v1441, 6
      %v2167 = vsel %vm2090, %v2165, %v2166
      %v2168 = vrot.slane %v2051, 6
      %v2169 = vrot.slane %v2168, 4
      %v2170 = vrot.slane %v221, 6
      %v2171 = vsel %vm2090, %v2169, %v2170
      %v2172 = vrot.slane %v2170, 4
      %v2173 = vrot.slane %v1442, 6
      %v2174 = vsel %vm2090, %v2172, %v2173
      %v2175 = vrot.slane %v2052, 6
      %v2176 = vrot.slane %v2175, 4
      %v2177 = vrot.slane %v223, 6
      %v2178 = vsel %vm2090, %v2176, %v2177
      %v2179 = vrot.slane %v2177, 4
      %v2180 = vrot.slane %v1443, 6
      %v2181 = vsel %vm2090, %v2179, %v2180
      %v2182 = vrot.slane %v2053, 6
      %v2183 = vrot.slane %v2182, 4
      %v2184 = vrot.slane %v225, 6
      %v2185 = vsel %vm2090, %v2183, %v2184
      %v2186 = vrot.slane %v2184, 4
      %v2187 = vrot.slane %v1444, 6
      %v2188 = vsel %vm2090, %v2186, %v2187
      %v2189 = vrot.slane %v2054, 6
      %v2190 = vrot.slane %v2189, 4
      %v2191 = vrot.slane %v227, 6
      %v2192 = vsel %vm2090, %v2190, %v2191
      %v2193 = vrot.slane %v2191, 4
      %v2194 = vrot.slane %v1445, 6
      %v2195 = vsel %vm2090, %v2193, %v2194
      %v2196 = vrot.slane %v2055, 6
      %v2197 = vrot.slane %v2196, 4
      %v2198 = vrot.slane %v229, 6
      %v2199 = vsel %vm2090, %v2197, %v2198
      %v2200 = vrot.slane %v2198, 4
      %v2201 = vrot.slane %v1446, 6
      %v2202 = vsel %vm2090, %v2200, %v2201
      %s2203 = scalar_lea.vmem %s1, 8
      %v2204 = vld [vmem:[%s2203] sm:$0x3]
      %v2205 = vunpack.c.l.b16 %v2094
      %v2206 = vunpack.c.l.b16 %v2097
      %v2207 = vunpack.c.l.b16 %v2101
      %v2208 = vunpack.c.l.b16 %v2104
      %v2209 = vunpack.c.l.b16 %v2108
      %v2210 = vunpack.c.l.b16 %v2111
      %v2211 = vunpack.c.l.b16 %v2115
      %v2212 = vunpack.c.l.b16 %v2118
      %v2213 = vunpack.c.l.b16 %v2122
      %v2214 = vunpack.c.l.b16 %v2125
      %v2215 = vunpack.c.l.b16 %v2129
      %v2216 = vunpack.c.l.b16 %v2132
      %v2217 = vunpack.c.l.b16 %v2136
      %v2218 = vunpack.c.l.b16 %v2139
      %v2219 = vunpack.c.l.b16 %v2143
      %v2220 = vunpack.c.l.b16 %v2146
      %v2221 = vunpack.c.l.b16 %v2150
      %v2222 = vunpack.c.l.b16 %v2153
      %v2223 = vunpack.c.l.b16 %v2157
      %v2224 = vunpack.c.l.b16 %v2160
      %v2225 = vunpack.c.l.b16 %v2164
      %v2226 = vunpack.c.l.b16 %v2167
      %v2227 = vunpack.c.l.b16 %v2171
      %v2228 = vunpack.c.l.b16 %v2174
      %v2229 = vunpack.c.l.b16 %v2178
      %v2230 = vunpack.c.l.b16 %v2181
      %v2231 = vunpack.c.l.b16 %v2185
      %v2232 = vunpack.c.l.b16 %v2188
      %v2233 = vunpack.c.l.b16 %v2192
      %v2234 = vunpack.c.l.b16 %v2195
      %v2235 = vunpack.c.l.b16 %v2199
      %v2236 = vunpack.c.l.b16 %v2202
      %v2237 = vpack.c.b16 %v2206, %v2205
      %v2238 = vpack.c.b16 %v2208, %v2207
      %v2239 = vpack.c.b16 %v2210, %v2209
      %v2240 = vpack.c.b16 %v2212, %v2211
      %v2241 = vpack.c.b16 %v2214, %v2213
      %v2242 = vpack.c.b16 %v2216, %v2215
      %v2243 = vpack.c.b16 %v2218, %v2217
      %v2244 = vpack.c.b16 %v2220, %v2219
      %v2245 = vpack.c.b16 %v2222, %v2221
      %v2246 = vpack.c.b16 %v2224, %v2223
      %v2247 = vpack.c.b16 %v2226, %v2225
      %v2248 = vpack.c.b16 %v2228, %v2227
      %v2249 = vpack.c.b16 %v2230, %v2229
      %v2250 = vpack.c.b16 %v2232, %v2231
      %v2251 = vpack.c.b16 %v2234, %v2233
      %v2252 = vpack.c.b16 %v2236, %v2235
      %v2254 = vsel %vm684, %v2237, 0
      %v2257 = vsel %vm684, %v2238, 0
      %v2260 = vsel %vm684, %v2239, 0
      %v2263 = vsel %vm684, %v2240, 0
      %v2266 = vsel %vm684, %v2241, 0
      %v2269 = vsel %vm684, %v2242, 0
      %v2272 = vsel %vm684, %v2243, 0
      %v2275 = vsel %vm684, %v2244, 0
      %v2278 = vsel %vm684, %v2245, 0
      %v2281 = vsel %vm684, %v2246, 0
      %v2284 = vsel %vm684, %v2247, 0
      %v2287 = vsel %vm684, %v2248, 0
      %v2290 = vsel %vm684, %v2249, 0
      %v2293 = vsel %vm684, %v2250, 0
      %v2296 = vsel %vm684, %v2251, 0
      %v2299 = vsel %vm684, %v2252, 0
      %v2302 = vsel %vm733, %v2204, 0
      %2304 = vmatpush.bf16.msra.mxu0 0
      %2305 = vmatpush.bf16.msra.mxu0 0
      %2306 = vmatpush.bf16.msra.mxu0 0
      %2307 = vmatpush.bf16.msra.mxu0 0
      %2308 = vmatpush.bf16.msra.mxu0 0
      %2309 = vmatpush.bf16.msra.mxu0 0
      %2310 = vmatpush.bf16.msra.mxu0 0
      %2311 = vmatpush.bf16.msra.mxu0 %v2302
      %2312 = vmatmul.bf16.gmra.mxu0 %v2254
      %v2313 = vpop.f32.mrf.mxu0
      %v2314 = vadd.f32 0.0, %v2313
      %v2315 = vpop.f32.mrf.mxu0
      %v2316 = vadd.f32 0.0, %v2315
      %2317 = vmatmul.bf16.gmra.mxu0 %v2257
      %v2318 = vpop.f32.mrf.mxu0
      %v2319 = vadd.f32 0.0, %v2318
      %v2320 = vpop.f32.mrf.mxu0
      %v2321 = vadd.f32 0.0, %v2320
      %2322 = vmatmul.bf16.gmra.mxu0 %v2260
      %v2323 = vpop.f32.mrf.mxu0
      %v2324 = vadd.f32 0.0, %v2323
      %v2325 = vpop.f32.mrf.mxu0
      %v2326 = vadd.f32 0.0, %v2325
      %2327 = vmatmul.bf16.gmra.mxu0 %v2263
      %v2328 = vpop.f32.mrf.mxu0
      %v2329 = vadd.f32 0.0, %v2328
      %v2330 = vpop.f32.mrf.mxu0
      %v2331 = vadd.f32 0.0, %v2330
      %2332 = vmatmul.bf16.gmra.mxu0 %v2266
      %v2333 = vpop.f32.mrf.mxu0
      %v2334 = vadd.f32 0.0, %v2333
      %v2335 = vpop.f32.mrf.mxu0
      %v2336 = vadd.f32 0.0, %v2335
      %2337 = vmatmul.bf16.gmra.mxu0 %v2269
      %v2338 = vpop.f32.mrf.mxu0
      %v2339 = vadd.f32 0.0, %v2338
      %v2340 = vpop.f32.mrf.mxu0
      %v2341 = vadd.f32 0.0, %v2340
      %2342 = vmatmul.bf16.gmra.mxu0 %v2272
      %v2343 = vpop.f32.mrf.mxu0
      %v2344 = vadd.f32 0.0, %v2343
      %v2345 = vpop.f32.mrf.mxu0
      %v2346 = vadd.f32 0.0, %v2345
      %2347 = vmatmul.bf16.gmra.mxu0 %v2275
      %v2348 = vpop.f32.mrf.mxu0
      %v2349 = vadd.f32 0.0, %v2348
      %v2350 = vpop.f32.mrf.mxu0
      %v2351 = vadd.f32 0.0, %v2350
      %2352 = vmatmul.bf16.gmra.mxu0 %v2278
      %v2353 = vpop.f32.mrf.mxu0
      %v2354 = vadd.f32 0.0, %v2353
      %v2355 = vpop.f32.mrf.mxu0
      %v2356 = vadd.f32 0.0, %v2355
      %2357 = vmatmul.bf16.gmra.mxu0 %v2281
      %v2358 = vpop.f32.mrf.mxu0
      %v2359 = vadd.f32 0.0, %v2358
      %v2360 = vpop.f32.mrf.mxu0
      %v2361 = vadd.f32 0.0, %v2360
      %2362 = vmatmul.bf16.gmra.mxu0 %v2284
      %v2363 = vpop.f32.mrf.mxu0
      %v2364 = vadd.f32 0.0, %v2363
      %v2365 = vpop.f32.mrf.mxu0
      %v2366 = vadd.f32 0.0, %v2365
      %2367 = vmatmul.bf16.gmra.mxu0 %v2287
      %v2368 = vpop.f32.mrf.mxu0
      %v2369 = vadd.f32 0.0, %v2368
      %v2370 = vpop.f32.mrf.mxu0
      %v2371 = vadd.f32 0.0, %v2370
      %2372 = vmatmul.bf16.gmra.mxu0 %v2290
      %v2373 = vpop.f32.mrf.mxu0
      %v2374 = vadd.f32 0.0, %v2373
      %v2375 = vpop.f32.mrf.mxu0
      %v2376 = vadd.f32 0.0, %v2375
      %2377 = vmatmul.bf16.gmra.mxu0 %v2293
      %v2378 = vpop.f32.mrf.mxu0
      %v2379 = vadd.f32 0.0, %v2378
      %v2380 = vpop.f32.mrf.mxu0
      %v2381 = vadd.f32 0.0, %v2380
      %2382 = vmatmul.bf16.gmra.mxu0 %v2296
      %v2383 = vpop.f32.mrf.mxu0
      %v2384 = vadd.f32 0.0, %v2383
      %v2385 = vpop.f32.mrf.mxu0
      %v2386 = vadd.f32 0.0, %v2385
      %2387 = vmatmul.bf16.gmra.mxu0 %v2299
      %v2388 = vpop.f32.mrf.mxu0
      %v2389 = vadd.f32 0.0, %v2388
      %v2390 = vpop.f32.mrf.mxu0
      %v2391 = vadd.f32 0.0, %v2390
      %2392 = vdwg.mxu0
      %v2393 = vadd.f32 %v2008, %v2314
      %v2394 = vadd.f32 %v2009, %v2316
      %v2395 = vadd.f32 %v2010, %v2319
      %v2396 = vadd.f32 %v2011, %v2321
      %v2397 = vadd.f32 %v2012, %v2324
      %v2398 = vadd.f32 %v2013, %v2326
      %v2399 = vadd.f32 %v2014, %v2329
      %v2400 = vadd.f32 %v2015, %v2331
      %v2401 = vadd.f32 %v2016, %v2334
      %v2402 = vadd.f32 %v2017, %v2336
      %v2403 = vadd.f32 %v2018, %v2339
      %v2404 = vadd.f32 %v2019, %v2341
      %v2405 = vadd.f32 %v2020, %v2344
      %v2406 = vadd.f32 %v2021, %v2346
      %v2407 = vadd.f32 %v2022, %v2349
      %v2408 = vadd.f32 %v2023, %v2351
      %v2409 = vadd.f32 %v2024, %v2354
      %v2410 = vadd.f32 %v2025, %v2356
      %v2411 = vadd.f32 %v2026, %v2359
      %v2412 = vadd.f32 %v2027, %v2361
      %v2413 = vadd.f32 %v2028, %v2364
      %v2414 = vadd.f32 %v2029, %v2366
      %v2415 = vadd.f32 %v2030, %v2369
      %v2416 = vadd.f32 %v2031, %v2371
      %v2417 = vadd.f32 %v2032, %v2374
      %v2418 = vadd.f32 %v2033, %v2376
      %v2419 = vadd.f32 %v2034, %v2379
      %v2420 = vadd.f32 %v2035, %v2381
      %v2421 = vadd.f32 %v2036, %v2384
      %v2422 = vadd.f32 %v2037, %v2386
      %v2423 = vadd.f32 %v2038, %v2389
      %v2424 = vadd.f32 %v2039, %v2391
      %s2425 = sadd.s32 %s194, 1
      %s2426 = smul.u32 %s2425, 3
      %s2427 = smul.addr %s2426, 4
      %s2428 = scalar_lea.vmem %s183, %s2427
      %v2429 = vld [vmem:[%s2428] sm:$0xf]
      %v2430 = vld [vmem:[%s2428 + $0x4] sm:$0xf]
      %v2431 = vld [vmem:[%s2428 + $0xc] sm:$0xf]
      %v2432 = vld [vmem:[%s2428 + $0x10] sm:$0xf]
      %v2433 = vld [vmem:[%s2428 + $0x18] sm:$0xf]
      %v2434 = vld [vmem:[%s2428 + $0x1c] sm:$0xf]
      %v2435 = vld [vmem:[%s2428 + $0x24] sm:$0xf]
      %v2436 = vld [vmem:[%s2428 + $0x28] sm:$0xf]
      %v2437 = vld [vmem:[%s2428 + $0x30] sm:$0xf]
      %v2438 = vld [vmem:[%s2428 + $0x34] sm:$0xf]
      %v2439 = vld [vmem:[%s2428 + $0x3c] sm:$0xf]
      %v2440 = vld [vmem:[%s2428 + $0x40] sm:$0xf]
      %v2441 = vld [vmem:[%s2428 + $0x48] sm:$0xf]
      %v2442 = vld [vmem:[%s2428 + $0x4c] sm:$0xf]
      %v2443 = vld [vmem:[%s2428 + $0x54] sm:$0xf]
      %v2444 = vld [vmem:[%s2428 + $0x58] sm:$0xf]
      %v2445 = vld [vmem:[%s2428 + $0x60] sm:$0xf]
      %v2446 = vld [vmem:[%s2428 + $0x64] sm:$0xf]
      %v2447 = vld [vmem:[%s2428 + $0x6c] sm:$0xf]
      %v2448 = vld [vmem:[%s2428 + $0x70] sm:$0xf]
      %v2449 = vld [vmem:[%s2428 + $0x78] sm:$0xf]
      %v2450 = vld [vmem:[%s2428 + $0x7c] sm:$0xf]
      %v2451 = vld [vmem:[%s2428 + $0x84] sm:$0xf]
      %v2452 = vld [vmem:[%s2428 + $0x88] sm:$0xf]
      %v2453 = vld [vmem:[%s2428 + $0x90] sm:$0xf]
      %v2454 = vld [vmem:[%s2428 + $0x94] sm:$0xf]
      %v2455 = vld [vmem:[%s2428 + $0x9c] sm:$0xf]
      %v2456 = vld [vmem:[%s2428 + $0xa0] sm:$0xf]
      %v2457 = vld [vmem:[%s2428 + $0xa8] sm:$0xf]
      %v2458 = vld [vmem:[%s2428 + $0xac] sm:$0xf]
      %v2459 = vld [vmem:[%s2428 + $0xb4] sm:$0xf]
      %v2460 = vld [vmem:[%s2428 + $0xb8] sm:$0xf]
      %s2461 = scalar_lea.vmem %s1, 10
      %v2462 = vld [vmem:[%s2461] sm:$0x3]
      %v2495 = vunpack.c.l.b16 %v2429
      %v2496 = vunpack.c.l.b16 %v2430
      %v2497 = vunpack.c.l.b16 %v2431
      %v2498 = vunpack.c.l.b16 %v2432
      %v2499 = vunpack.c.l.b16 %v2433
      %v2500 = vunpack.c.l.b16 %v2434
      %v2501 = vunpack.c.l.b16 %v2435
      %v2502 = vunpack.c.l.b16 %v2436
      %v2503 = vunpack.c.l.b16 %v2437
      %v2504 = vunpack.c.l.b16 %v2438
      %v2505 = vunpack.c.l.b16 %v2439
      %v2506 = vunpack.c.l.b16 %v2440
      %v2507 = vunpack.c.l.b16 %v2441
      %v2508 = vunpack.c.l.b16 %v2442
      %v2509 = vunpack.c.l.b16 %v2443
      %v2510 = vunpack.c.l.b16 %v2444
      %v2511 = vunpack.c.l.b16 %v2445
      %v2512 = vunpack.c.l.b16 %v2446
      %v2513 = vunpack.c.l.b16 %v2447
      %v2514 = vunpack.c.l.b16 %v2448
      %v2515 = vunpack.c.l.b16 %v2449
      %v2516 = vunpack.c.l.b16 %v2450
      %v2517 = vunpack.c.l.b16 %v2451
      %v2518 = vunpack.c.l.b16 %v2452
      %v2519 = vunpack.c.l.b16 %v2453
      %v2520 = vunpack.c.l.b16 %v2454
      %v2521 = vunpack.c.l.b16 %v2455
      %v2522 = vunpack.c.l.b16 %v2456
      %v2523 = vunpack.c.l.b16 %v2457
      %v2524 = vunpack.c.l.b16 %v2458
      %v2525 = vunpack.c.l.b16 %v2459
      %v2526 = vunpack.c.l.b16 %v2460
      %v2527 = vpack.c.b16 %v2496, %v2495
      %v2528 = vpack.c.b16 %v2498, %v2497
      %v2529 = vpack.c.b16 %v2500, %v2499
      %v2530 = vpack.c.b16 %v2502, %v2501
      %v2531 = vpack.c.b16 %v2504, %v2503
      %v2532 = vpack.c.b16 %v2506, %v2505
      %v2533 = vpack.c.b16 %v2508, %v2507
      %v2534 = vpack.c.b16 %v2510, %v2509
      %v2535 = vpack.c.b16 %v2512, %v2511
      %v2536 = vpack.c.b16 %v2514, %v2513
      %v2537 = vpack.c.b16 %v2516, %v2515
      %v2538 = vpack.c.b16 %v2518, %v2517
      %v2539 = vpack.c.b16 %v2520, %v2519
      %v2540 = vpack.c.b16 %v2522, %v2521
      %v2541 = vpack.c.b16 %v2524, %v2523
      %v2542 = vpack.c.b16 %v2526, %v2525
      %v2544 = vsel %vm684, %v2527, 0
      %v2547 = vsel %vm684, %v2528, 0
      %v2550 = vsel %vm684, %v2529, 0
      %v2553 = vsel %vm684, %v2530, 0
      %v2556 = vsel %vm684, %v2531, 0
      %v2559 = vsel %vm684, %v2532, 0
      %v2562 = vsel %vm684, %v2533, 0
      %v2565 = vsel %vm684, %v2534, 0
      %v2568 = vsel %vm684, %v2535, 0
      %v2571 = vsel %vm684, %v2536, 0
      %v2574 = vsel %vm684, %v2537, 0
      %v2577 = vsel %vm684, %v2538, 0
      %v2580 = vsel %vm684, %v2539, 0
      %v2583 = vsel %vm684, %v2540, 0
      %v2586 = vsel %vm684, %v2541, 0
      %v2589 = vsel %vm684, %v2542, 0
      %v2592 = vsel %vm733, %v2462, 0
      %2594 = vmatpush.bf16.msra.mxu0 0
      %2595 = vmatpush.bf16.msra.mxu0 0
      %2596 = vmatpush.bf16.msra.mxu0 0
      %2597 = vmatpush.bf16.msra.mxu0 0
      %2598 = vmatpush.bf16.msra.mxu0 0
      %2599 = vmatpush.bf16.msra.mxu0 0
      %2600 = vmatpush.bf16.msra.mxu0 0
      %2601 = vmatpush.bf16.msra.mxu0 %v2592
      %2602 = vmatmul.bf16.gmra.mxu0 %v2544
      %v2603 = vpop.f32.mrf.mxu0
      %v2604 = vadd.f32 0.0, %v2603
      %v2605 = vpop.f32.mrf.mxu0
      %v2606 = vadd.f32 0.0, %v2605
      %2607 = vmatmul.bf16.gmra.mxu0 %v2547
      %v2608 = vpop.f32.mrf.mxu0
      %v2609 = vadd.f32 0.0, %v2608
      %v2610 = vpop.f32.mrf.mxu0
      %v2611 = vadd.f32 0.0, %v2610
      %2612 = vmatmul.bf16.gmra.mxu0 %v2550
      %v2613 = vpop.f32.mrf.mxu0
      %v2614 = vadd.f32 0.0, %v2613
      %v2615 = vpop.f32.mrf.mxu0
      %v2616 = vadd.f32 0.0, %v2615
      %2617 = vmatmul.bf16.gmra.mxu0 %v2553
      %v2618 = vpop.f32.mrf.mxu0
      %v2619 = vadd.f32 0.0, %v2618
      %v2620 = vpop.f32.mrf.mxu0
      %v2621 = vadd.f32 0.0, %v2620
      %2622 = vmatmul.bf16.gmra.mxu0 %v2556
      %v2623 = vpop.f32.mrf.mxu0
      %v2624 = vadd.f32 0.0, %v2623
      %v2625 = vpop.f32.mrf.mxu0
      %v2626 = vadd.f32 0.0, %v2625
      %2627 = vmatmul.bf16.gmra.mxu0 %v2559
      %v2628 = vpop.f32.mrf.mxu0
      %v2629 = vadd.f32 0.0, %v2628
      %v2630 = vpop.f32.mrf.mxu0
      %v2631 = vadd.f32 0.0, %v2630
      %2632 = vmatmul.bf16.gmra.mxu0 %v2562
      %v2633 = vpop.f32.mrf.mxu0
      %v2634 = vadd.f32 0.0, %v2633
      %v2635 = vpop.f32.mrf.mxu0
      %v2636 = vadd.f32 0.0, %v2635
      %2637 = vmatmul.bf16.gmra.mxu0 %v2565
      %v2638 = vpop.f32.mrf.mxu0
      %v2639 = vadd.f32 0.0, %v2638
      %v2640 = vpop.f32.mrf.mxu0
      %v2641 = vadd.f32 0.0, %v2640
      %2642 = vmatmul.bf16.gmra.mxu0 %v2568
      %v2643 = vpop.f32.mrf.mxu0
      %v2644 = vadd.f32 0.0, %v2643
      %v2645 = vpop.f32.mrf.mxu0
      %v2646 = vadd.f32 0.0, %v2645
      %2647 = vmatmul.bf16.gmra.mxu0 %v2571
      %v2648 = vpop.f32.mrf.mxu0
      %v2649 = vadd.f32 0.0, %v2648
      %v2650 = vpop.f32.mrf.mxu0
      %v2651 = vadd.f32 0.0, %v2650
      %2652 = vmatmul.bf16.gmra.mxu0 %v2574
      %v2653 = vpop.f32.mrf.mxu0
      %v2654 = vadd.f32 0.0, %v2653
      %v2655 = vpop.f32.mrf.mxu0
      %v2656 = vadd.f32 0.0, %v2655
      %2657 = vmatmul.bf16.gmra.mxu0 %v2577
      %v2658 = vpop.f32.mrf.mxu0
      %v2659 = vadd.f32 0.0, %v2658
      %v2660 = vpop.f32.mrf.mxu0
      %v2661 = vadd.f32 0.0, %v2660
      %2662 = vmatmul.bf16.gmra.mxu0 %v2580
      %v2663 = vpop.f32.mrf.mxu0
      %v2664 = vadd.f32 0.0, %v2663
      %v2665 = vpop.f32.mrf.mxu0
      %v2666 = vadd.f32 0.0, %v2665
      %2667 = vmatmul.bf16.gmra.mxu0 %v2583
      %v2668 = vpop.f32.mrf.mxu0
      %v2669 = vadd.f32 0.0, %v2668
      %v2670 = vpop.f32.mrf.mxu0
      %v2671 = vadd.f32 0.0, %v2670
      %2672 = vmatmul.bf16.gmra.mxu0 %v2586
      %v2673 = vpop.f32.mrf.mxu0
      %v2674 = vadd.f32 0.0, %v2673
      %v2675 = vpop.f32.mrf.mxu0
      %v2676 = vadd.f32 0.0, %v2675
      %2677 = vmatmul.bf16.gmra.mxu0 %v2589
      %v2678 = vpop.f32.mrf.mxu0
      %v2679 = vadd.f32 0.0, %v2678
      %v2680 = vpop.f32.mrf.mxu0
      %v2681 = vadd.f32 0.0, %v2680
      %2682 = vdwg.mxu0
      %v2683 = vadd.f32 %v2393, %v2604
      %v2684 = vadd.f32 %v2394, %v2606
      %v2685 = vadd.f32 %v2395, %v2609
      %v2686 = vadd.f32 %v2396, %v2611
      %v2687 = vadd.f32 %v2397, %v2614
      %v2688 = vadd.f32 %v2398, %v2616
      %v2689 = vadd.f32 %v2399, %v2619
      %v2690 = vadd.f32 %v2400, %v2621
      %v2691 = vadd.f32 %v2401, %v2624
      %v2692 = vadd.f32 %v2402, %v2626
      %v2693 = vadd.f32 %v2403, %v2629
      %v2694 = vadd.f32 %v2404, %v2631
      %v2695 = vadd.f32 %v2405, %v2634
      %v2696 = vadd.f32 %v2406, %v2636
      %v2697 = vadd.f32 %v2407, %v2639
      %v2698 = vadd.f32 %v2408, %v2641
      %v2699 = vadd.f32 %v2409, %v2644
      %v2700 = vadd.f32 %v2410, %v2646
      %v2701 = vadd.f32 %v2411, %v2649
      %v2702 = vadd.f32 %v2412, %v2651
      %v2703 = vadd.f32 %v2413, %v2654
      %v2704 = vadd.f32 %v2414, %v2656
      %v2705 = vadd.f32 %v2415, %v2659
      %v2706 = vadd.f32 %v2416, %v2661
      %v2707 = vadd.f32 %v2417, %v2664
      %v2708 = vadd.f32 %v2418, %v2666
      %v2709 = vadd.f32 %v2419, %v2669
      %v2710 = vadd.f32 %v2420, %v2671
      %v2711 = vadd.f32 %v2421, %v2674
      %v2712 = vadd.f32 %v2422, %v2676
      %v2713 = vadd.f32 %v2423, %v2679
      %v2714 = vadd.f32 %v2424, %v2681
      %v2715 = vld [vmem:[%s2428] sm:$0xf]
      %v2716 = vld [vmem:[%s2428 + $0x4] sm:$0xf]
      %v2717 = vld [vmem:[%s2428 + $0x8] sm:$0x1]
      %v2718 = vld [vmem:[%s2428 + $0xc] sm:$0xf]
      %v2719 = vld [vmem:[%s2428 + $0x10] sm:$0xf]
      %v2720 = vld [vmem:[%s2428 + $0x14] sm:$0x1]
      %v2721 = vld [vmem:[%s2428 + $0x18] sm:$0xf]
      %v2722 = vld [vmem:[%s2428 + $0x1c] sm:$0xf]
      %v2723 = vld [vmem:[%s2428 + $0x20] sm:$0x1]
      %v2724 = vld [vmem:[%s2428 + $0x24] sm:$0xf]
      %v2725 = vld [vmem:[%s2428 + $0x28] sm:$0xf]
      %v2726 = vld [vmem:[%s2428 + $0x2c] sm:$0x1]
      %v2727 = vld [vmem:[%s2428 + $0x30] sm:$0xf]
      %v2728 = vld [vmem:[%s2428 + $0x34] sm:$0xf]
      %v2729 = vld [vmem:[%s2428 + $0x38] sm:$0x1]
      %v2730 = vld [vmem:[%s2428 + $0x3c] sm:$0xf]
      %v2731 = vld [vmem:[%s2428 + $0x40] sm:$0xf]
      %v2732 = vld [vmem:[%s2428 + $0x44] sm:$0x1]
      %v2733 = vld [vmem:[%s2428 + $0x48] sm:$0xf]
      %v2734 = vld [vmem:[%s2428 + $0x4c] sm:$0xf]
      %v2735 = vld [vmem:[%s2428 + $0x50] sm:$0x1]
      %v2736 = vld [vmem:[%s2428 + $0x54] sm:$0xf]
      %v2737 = vld [vmem:[%s2428 + $0x58] sm:$0xf]
      %v2738 = vld [vmem:[%s2428 + $0x5c] sm:$0x1]
      %v2739 = vld [vmem:[%s2428 + $0x60] sm:$0xf]
      %v2740 = vld [vmem:[%s2428 + $0x64] sm:$0xf]
      %v2741 = vld [vmem:[%s2428 + $0x68] sm:$0x1]
      %v2742 = vld [vmem:[%s2428 + $0x6c] sm:$0xf]
      %v2743 = vld [vmem:[%s2428 + $0x70] sm:$0xf]
      %v2744 = vld [vmem:[%s2428 + $0x74] sm:$0x1]
      %v2745 = vld [vmem:[%s2428 + $0x78] sm:$0xf]
      %v2746 = vld [vmem:[%s2428 + $0x7c] sm:$0xf]
      %v2747 = vld [vmem:[%s2428 + $0x80] sm:$0x1]
      %v2748 = vld [vmem:[%s2428 + $0x84] sm:$0xf]
      %v2749 = vld [vmem:[%s2428 + $0x88] sm:$0xf]
      %v2750 = vld [vmem:[%s2428 + $0x8c] sm:$0x1]
      %v2751 = vld [vmem:[%s2428 + $0x90] sm:$0xf]
      %v2752 = vld [vmem:[%s2428 + $0x94] sm:$0xf]
      %v2753 = vld [vmem:[%s2428 + $0x98] sm:$0x1]
      %v2754 = vld [vmem:[%s2428 + $0x9c] sm:$0xf]
      %v2755 = vld [vmem:[%s2428 + $0xa0] sm:$0xf]
      %v2756 = vld [vmem:[%s2428 + $0xa4] sm:$0x1]
      %v2757 = vld [vmem:[%s2428 + $0xa8] sm:$0xf]
      %v2758 = vld [vmem:[%s2428 + $0xac] sm:$0xf]
      %v2759 = vld [vmem:[%s2428 + $0xb0] sm:$0x1]
      %v2760 = vld [vmem:[%s2428 + $0xb4] sm:$0xf]
      %v2761 = vld [vmem:[%s2428 + $0xb8] sm:$0xf]
      %v2762 = vld [vmem:[%s2428 + $0xbc] sm:$0x1]
      %v2764 = vshrl.u32 %v2715, 16
      %v2766 = vrot.slane %v2764, 4
      %v2767 = vshll.u32 %v2715, 16
      %v2769 = vrot.slane %v2767, 5
      %v2770 = vor.u32 %v2766, %v2769
      %v2771 = vrot.slane %v2770, 4
      %v2773 = vshll.u32 %v2716, 16
      %v2775 = vrot.slane %v2773, 5
      %v2776 = vsel %vm249, %v2771, %v2775
      %v2777 = vshrl.u32 %v2716, 16
      %v2779 = vrot.slane %v2777, 4
      %v2780 = vor.u32 %v2779, %v2775
      %v2781 = vrot.slane %v2780, 4
      %v2783 = vshll.u32 %v2717, 16
      %v2785 = vrot.slane %v2783, 5
      %v2786 = vsel %vm249, %v2781, %v2785
      %v2788 = vshrl.u32 %v2718, 16
      %v2790 = vrot.slane %v2788, 4
      %v2791 = vshll.u32 %v2718, 16
      %v2793 = vrot.slane %v2791, 5
      %v2794 = vor.u32 %v2790, %v2793
      %v2795 = vrot.slane %v2794, 4
      %v2797 = vshll.u32 %v2719, 16
      %v2799 = vrot.slane %v2797, 5
      %v2800 = vsel %vm249, %v2795, %v2799
      %v2801 = vshrl.u32 %v2719, 16
      %v2803 = vrot.slane %v2801, 4
      %v2804 = vor.u32 %v2803, %v2799
      %v2805 = vrot.slane %v2804, 4
      %v2807 = vshll.u32 %v2720, 16
      %v2809 = vrot.slane %v2807, 5
      %v2810 = vsel %vm249, %v2805, %v2809
      %v2812 = vshrl.u32 %v2721, 16
      %v2814 = vrot.slane %v2812, 4
      %v2815 = vshll.u32 %v2721, 16
      %v2817 = vrot.slane %v2815, 5
      %v2818 = vor.u32 %v2814, %v2817
      %v2819 = vrot.slane %v2818, 4
      %v2821 = vshll.u32 %v2722, 16
      %v2823 = vrot.slane %v2821, 5
      %v2824 = vsel %vm249, %v2819, %v2823
      %v2825 = vshrl.u32 %v2722, 16
      %v2827 = vrot.slane %v2825, 4
      %v2828 = vor.u32 %v2827, %v2823
      %v2829 = vrot.slane %v2828, 4
      %v2831 = vshll.u32 %v2723, 16
      %v2833 = vrot.slane %v2831, 5
      %v2834 = vsel %vm249, %v2829, %v2833
      %v2836 = vshrl.u32 %v2724, 16
      %v2838 = vrot.slane %v2836, 4
      %v2839 = vshll.u32 %v2724, 16
      %v2841 = vrot.slane %v2839, 5
      %v2842 = vor.u32 %v2838, %v2841
      %v2843 = vrot.slane %v2842, 4
      %v2845 = vshll.u32 %v2725, 16
      %v2847 = vrot.slane %v2845, 5
      %v2848 = vsel %vm249, %v2843, %v2847
      %v2849 = vshrl.u32 %v2725, 16
      %v2851 = vrot.slane %v2849, 4
      %v2852 = vor.u32 %v2851, %v2847
      %v2853 = vrot.slane %v2852, 4
      %v2855 = vshll.u32 %v2726, 16
      %v2857 = vrot.slane %v2855, 5
      %v2858 = vsel %vm249, %v2853, %v2857
      %v2860 = vshrl.u32 %v2727, 16
      %v2862 = vrot.slane %v2860, 4
      %v2863 = vshll.u32 %v2727, 16
      %v2865 = vrot.slane %v2863, 5
      %v2866 = vor.u32 %v2862, %v2865
      %v2867 = vrot.slane %v2866, 4
      %v2869 = vshll.u32 %v2728, 16
      %v2871 = vrot.slane %v2869, 5
      %v2872 = vsel %vm249, %v2867, %v2871
      %v2873 = vshrl.u32 %v2728, 16
      %v2875 = vrot.slane %v2873, 4
      %v2876 = vor.u32 %v2875, %v2871
      %v2877 = vrot.slane %v2876, 4
      %v2879 = vshll.u32 %v2729, 16
      %v2881 = vrot.slane %v2879, 5
      %v2882 = vsel %vm249, %v2877, %v2881
      %v2884 = vshrl.u32 %v2730, 16
      %v2886 = vrot.slane %v2884, 4
      %v2887 = vshll.u32 %v2730, 16
      %v2889 = vrot.slane %v2887, 5
      %v2890 = vor.u32 %v2886, %v2889
      %v2891 = vrot.slane %v2890, 4
      %v2893 = vshll.u32 %v2731, 16
      %v2895 = vrot.slane %v2893, 5
      %v2896 = vsel %vm249, %v2891, %v2895
      %v2897 = vshrl.u32 %v2731, 16
      %v2899 = vrot.slane %v2897, 4
      %v2900 = vor.u32 %v2899, %v2895
      %v2901 = vrot.slane %v2900, 4
      %v2903 = vshll.u32 %v2732, 16
      %v2905 = vrot.slane %v2903, 5
      %v2906 = vsel %vm249, %v2901, %v2905
      %v2908 = vshrl.u32 %v2733, 16
      %v2910 = vrot.slane %v2908, 4
      %v2911 = vshll.u32 %v2733, 16
      %v2913 = vrot.slane %v2911, 5
      %v2914 = vor.u32 %v2910, %v2913
      %v2915 = vrot.slane %v2914, 4
      %v2917 = vshll.u32 %v2734, 16
      %v2919 = vrot.slane %v2917, 5
      %v2920 = vsel %vm249, %v2915, %v2919
      %v2921 = vshrl.u32 %v2734, 16
      %v2923 = vrot.slane %v2921, 4
      %v2924 = vor.u32 %v2923, %v2919
      %v2925 = vrot.slane %v2924, 4
      %v2927 = vshll.u32 %v2735, 16
      %v2929 = vrot.slane %v2927, 5
      %v2930 = vsel %vm249, %v2925, %v2929
      %v2932 = vshrl.u32 %v2736, 16
      %v2934 = vrot.slane %v2932, 4
      %v2935 = vshll.u32 %v2736, 16
      %v2937 = vrot.slane %v2935, 5
      %v2938 = vor.u32 %v2934, %v2937
      %v2939 = vrot.slane %v2938, 4
      %v2941 = vshll.u32 %v2737, 16
      %v2943 = vrot.slane %v2941, 5
      %v2944 = vsel %vm249, %v2939, %v2943
      %v2945 = vshrl.u32 %v2737, 16
      %v2947 = vrot.slane %v2945, 4
      %v2948 = vor.u32 %v2947, %v2943
      %v2949 = vrot.slane %v2948, 4
      %v2951 = vshll.u32 %v2738, 16
      %v2953 = vrot.slane %v2951, 5
      %v2954 = vsel %vm249, %v2949, %v2953
      %v2956 = vshrl.u32 %v2739, 16
      %v2958 = vrot.slane %v2956, 4
      %v2959 = vshll.u32 %v2739, 16
      %v2961 = vrot.slane %v2959, 5
      %v2962 = vor.u32 %v2958, %v2961
      %v2963 = vrot.slane %v2962, 4
      %v2965 = vshll.u32 %v2740, 16
      %v2967 = vrot.slane %v2965, 5
      %v2968 = vsel %vm249, %v2963, %v2967
      %v2969 = vshrl.u32 %v2740, 16
      %v2971 = vrot.slane %v2969, 4
      %v2972 = vor.u32 %v2971, %v2967
      %v2973 = vrot.slane %v2972, 4
      %v2975 = vshll.u32 %v2741, 16
      %v2977 = vrot.slane %v2975, 5
      %v2978 = vsel %vm249, %v2973, %v2977
      %v2980 = vshrl.u32 %v2742, 16
      %v2982 = vrot.slane %v2980, 4
      %v2983 = vshll.u32 %v2742, 16
      %v2985 = vrot.slane %v2983, 5
      %v2986 = vor.u32 %v2982, %v2985
      %v2987 = vrot.slane %v2986, 4
      %v2989 = vshll.u32 %v2743, 16
      %v2991 = vrot.slane %v2989, 5
      %v2992 = vsel %vm249, %v2987, %v2991
      %v2993 = vshrl.u32 %v2743, 16
      %v2995 = vrot.slane %v2993, 4
      %v2996 = vor.u32 %v2995, %v2991
      %v2997 = vrot.slane %v2996, 4
      %v2999 = vshll.u32 %v2744, 16
      %v3001 = vrot.slane %v2999, 5
      %v3002 = vsel %vm249, %v2997, %v3001
      %v3004 = vshrl.u32 %v2745, 16
      %v3006 = vrot.slane %v3004, 4
      %v3007 = vshll.u32 %v2745, 16
      %v3009 = vrot.slane %v3007, 5
      %v3010 = vor.u32 %v3006, %v3009
      %v3011 = vrot.slane %v3010, 4
      %v3013 = vshll.u32 %v2746, 16
      %v3015 = vrot.slane %v3013, 5
      %v3016 = vsel %vm249, %v3011, %v3015
      %v3017 = vshrl.u32 %v2746, 16
      %v3019 = vrot.slane %v3017, 4
      %v3020 = vor.u32 %v3019, %v3015
      %v3021 = vrot.slane %v3020, 4
      %v3023 = vshll.u32 %v2747, 16
      %v3025 = vrot.slane %v3023, 5
      %v3026 = vsel %vm249, %v3021, %v3025
      %v3028 = vshrl.u32 %v2748, 16
      %v3030 = vrot.slane %v3028, 4
      %v3031 = vshll.u32 %v2748, 16
      %v3033 = vrot.slane %v3031, 5
      %v3034 = vor.u32 %v3030, %v3033
      %v3035 = vrot.slane %v3034, 4
      %v3037 = vshll.u32 %v2749, 16
      %v3039 = vrot.slane %v3037, 5
      %v3040 = vsel %vm249, %v3035, %v3039
      %v3041 = vshrl.u32 %v2749, 16
      %v3043 = vrot.slane %v3041, 4
      %v3044 = vor.u32 %v3043, %v3039
      %v3045 = vrot.slane %v3044, 4
      %v3047 = vshll.u32 %v2750, 16
      %v3049 = vrot.slane %v3047, 5
      %v3050 = vsel %vm249, %v3045, %v3049
      %v3052 = vshrl.u32 %v2751, 16
      %v3054 = vrot.slane %v3052, 4
      %v3055 = vshll.u32 %v2751, 16
      %v3057 = vrot.slane %v3055, 5
      %v3058 = vor.u32 %v3054, %v3057
      %v3059 = vrot.slane %v3058, 4
      %v3061 = vshll.u32 %v2752, 16
      %v3063 = vrot.slane %v3061, 5
      %v3064 = vsel %vm249, %v3059, %v3063
      %v3065 = vshrl.u32 %v2752, 16
      %v3067 = vrot.slane %v3065, 4
      %v3068 = vor.u32 %v3067, %v3063
      %v3069 = vrot.slane %v3068, 4
      %v3071 = vshll.u32 %v2753, 16
      %v3073 = vrot.slane %v3071, 5
      %v3074 = vsel %vm249, %v3069, %v3073
      %v3076 = vshrl.u32 %v2754, 16
      %v3078 = vrot.slane %v3076, 4
      %v3079 = vshll.u32 %v2754, 16
      %v3081 = vrot.slane %v3079, 5
      %v3082 = vor.u32 %v3078, %v3081
      %v3083 = vrot.slane %v3082, 4
      %v3085 = vshll.u32 %v2755, 16
      %v3087 = vrot.slane %v3085, 5
      %v3088 = vsel %vm249, %v3083, %v3087
      %v3089 = vshrl.u32 %v2755, 16
      %v3091 = vrot.slane %v3089, 4
      %v3092 = vor.u32 %v3091, %v3087
      %v3093 = vrot.slane %v3092, 4
      %v3095 = vshll.u32 %v2756, 16
      %v3097 = vrot.slane %v3095, 5
      %v3098 = vsel %vm249, %v3093, %v3097
      %v3100 = vshrl.u32 %v2757, 16
      %v3102 = vrot.slane %v3100, 4
      %v3103 = vshll.u32 %v2757, 16
      %v3105 = vrot.slane %v3103, 5
      %v3106 = vor.u32 %v3102, %v3105
      %v3107 = vrot.slane %v3106, 4
      %v3109 = vshll.u32 %v2758, 16
      %v3111 = vrot.slane %v3109, 5
      %v3112 = vsel %vm249, %v3107, %v3111
      %v3113 = vshrl.u32 %v2758, 16
      %v3115 = vrot.slane %v3113, 4
      %v3116 = vor.u32 %v3115, %v3111
      %v3117 = vrot.slane %v3116, 4
      %v3119 = vshll.u32 %v2759, 16
      %v3121 = vrot.slane %v3119, 5
      %v3122 = vsel %vm249, %v3117, %v3121
      %v3124 = vshrl.u32 %v2760, 16
      %v3126 = vrot.slane %v3124, 4
      %v3127 = vshll.u32 %v2760, 16
      %v3129 = vrot.slane %v3127, 5
      %v3130 = vor.u32 %v3126, %v3129
      %v3131 = vrot.slane %v3130, 4
      %v3133 = vshll.u32 %v2761, 16
      %v3135 = vrot.slane %v3133, 5
      %v3136 = vsel %vm249, %v3131, %v3135
      %v3137 = vshrl.u32 %v2761, 16
      %v3139 = vrot.slane %v3137, 4
      %v3140 = vor.u32 %v3139, %v3135
      %v3141 = vrot.slane %v3140, 4
      %v3143 = vshll.u32 %v2762, 16
      %v3145 = vrot.slane %v3143, 5
      %v3146 = vsel %vm249, %v3141, %v3145
      %s3147 = scalar_lea.vmem %s1, 12
      %v3148 = vld [vmem:[%s3147] sm:$0x3]
      %v3149 = vunpack.c.l.b16 %v2776
      %v3150 = vunpack.c.l.b16 %v2786
      %v3151 = vunpack.c.l.b16 %v2800
      %v3152 = vunpack.c.l.b16 %v2810
      %v3153 = vunpack.c.l.b16 %v2824
      %v3154 = vunpack.c.l.b16 %v2834
      %v3155 = vunpack.c.l.b16 %v2848
      %v3156 = vunpack.c.l.b16 %v2858
      %v3157 = vunpack.c.l.b16 %v2872
      %v3158 = vunpack.c.l.b16 %v2882
      %v3159 = vunpack.c.l.b16 %v2896
      %v3160 = vunpack.c.l.b16 %v2906
      %v3161 = vunpack.c.l.b16 %v2920
      %v3162 = vunpack.c.l.b16 %v2930
      %v3163 = vunpack.c.l.b16 %v2944
      %v3164 = vunpack.c.l.b16 %v2954
      %v3165 = vunpack.c.l.b16 %v2968
      %v3166 = vunpack.c.l.b16 %v2978
      %v3167 = vunpack.c.l.b16 %v2992
      %v3168 = vunpack.c.l.b16 %v3002
      %v3169 = vunpack.c.l.b16 %v3016
      %v3170 = vunpack.c.l.b16 %v3026
      %v3171 = vunpack.c.l.b16 %v3040
      %v3172 = vunpack.c.l.b16 %v3050
      %v3173 = vunpack.c.l.b16 %v3064
      %v3174 = vunpack.c.l.b16 %v3074
      %v3175 = vunpack.c.l.b16 %v3088
      %v3176 = vunpack.c.l.b16 %v3098
      %v3177 = vunpack.c.l.b16 %v3112
      %v3178 = vunpack.c.l.b16 %v3122
      %v3179 = vunpack.c.l.b16 %v3136
      %v3180 = vunpack.c.l.b16 %v3146
      %v3181 = vpack.c.b16 %v3150, %v3149
      %v3182 = vpack.c.b16 %v3152, %v3151
      %v3183 = vpack.c.b16 %v3154, %v3153
      %v3184 = vpack.c.b16 %v3156, %v3155
      %v3185 = vpack.c.b16 %v3158, %v3157
      %v3186 = vpack.c.b16 %v3160, %v3159
      %v3187 = vpack.c.b16 %v3162, %v3161
      %v3188 = vpack.c.b16 %v3164, %v3163
      %v3189 = vpack.c.b16 %v3166, %v3165
      %v3190 = vpack.c.b16 %v3168, %v3167
      %v3191 = vpack.c.b16 %v3170, %v3169
      %v3192 = vpack.c.b16 %v3172, %v3171
      %v3193 = vpack.c.b16 %v3174, %v3173
      %v3194 = vpack.c.b16 %v3176, %v3175
      %v3195 = vpack.c.b16 %v3178, %v3177
      %v3196 = vpack.c.b16 %v3180, %v3179
      %v3198 = vsel %vm684, %v3181, 0
      %v3201 = vsel %vm684, %v3182, 0
      %v3204 = vsel %vm684, %v3183, 0
      %v3207 = vsel %vm684, %v3184, 0
      %v3210 = vsel %vm684, %v3185, 0
      %v3213 = vsel %vm684, %v3186, 0
      %v3216 = vsel %vm684, %v3187, 0
      %v3219 = vsel %vm684, %v3188, 0
      %v3222 = vsel %vm684, %v3189, 0
      %v3225 = vsel %vm684, %v3190, 0
      %v3228 = vsel %vm684, %v3191, 0
      %v3231 = vsel %vm684, %v3192, 0
      %v3234 = vsel %vm684, %v3193, 0
      %v3237 = vsel %vm684, %v3194, 0
      %v3240 = vsel %vm684, %v3195, 0
      %v3243 = vsel %vm684, %v3196, 0
      %v3246 = vsel %vm733, %v3148, 0
      %3248 = vmatpush.bf16.msra.mxu0 0
      %3249 = vmatpush.bf16.msra.mxu0 0
      %3250 = vmatpush.bf16.msra.mxu0 0
      %3251 = vmatpush.bf16.msra.mxu0 0
      %3252 = vmatpush.bf16.msra.mxu0 0
      %3253 = vmatpush.bf16.msra.mxu0 0
      %3254 = vmatpush.bf16.msra.mxu0 0
      %3255 = vmatpush.bf16.msra.mxu0 %v3246
      %3256 = vmatmul.bf16.gmra.mxu0 %v3198
      %v3257 = vpop.f32.mrf.mxu0
      %v3258 = vadd.f32 0.0, %v3257
      %v3259 = vpop.f32.mrf.mxu0
      %v3260 = vadd.f32 0.0, %v3259
      %3261 = vmatmul.bf16.gmra.mxu0 %v3201
      %v3262 = vpop.f32.mrf.mxu0
      %v3263 = vadd.f32 0.0, %v3262
      %v3264 = vpop.f32.mrf.mxu0
      %v3265 = vadd.f32 0.0, %v3264
      %3266 = vmatmul.bf16.gmra.mxu0 %v3204
      %v3267 = vpop.f32.mrf.mxu0
      %v3268 = vadd.f32 0.0, %v3267
      %v3269 = vpop.f32.mrf.mxu0
      %v3270 = vadd.f32 0.0, %v3269
      %3271 = vmatmul.bf16.gmra.mxu0 %v3207
      %v3272 = vpop.f32.mrf.mxu0
      %v3273 = vadd.f32 0.0, %v3272
      %v3274 = vpop.f32.mrf.mxu0
      %v3275 = vadd.f32 0.0, %v3274
      %3276 = vmatmul.bf16.gmra.mxu0 %v3210
      %v3277 = vpop.f32.mrf.mxu0
      %v3278 = vadd.f32 0.0, %v3277
      %v3279 = vpop.f32.mrf.mxu0
      %v3280 = vadd.f32 0.0, %v3279
      %3281 = vmatmul.bf16.gmra.mxu0 %v3213
      %v3282 = vpop.f32.mrf.mxu0
      %v3283 = vadd.f32 0.0, %v3282
      %v3284 = vpop.f32.mrf.mxu0
      %v3285 = vadd.f32 0.0, %v3284
      %3286 = vmatmul.bf16.gmra.mxu0 %v3216
      %v3287 = vpop.f32.mrf.mxu0
      %v3288 = vadd.f32 0.0, %v3287
      %v3289 = vpop.f32.mrf.mxu0
      %v3290 = vadd.f32 0.0, %v3289
      %3291 = vmatmul.bf16.gmra.mxu0 %v3219
      %v3292 = vpop.f32.mrf.mxu0
      %v3293 = vadd.f32 0.0, %v3292
      %v3294 = vpop.f32.mrf.mxu0
      %v3295 = vadd.f32 0.0, %v3294
      %3296 = vmatmul.bf16.gmra.mxu0 %v3222
      %v3297 = vpop.f32.mrf.mxu0
      %v3298 = vadd.f32 0.0, %v3297
      %v3299 = vpop.f32.mrf.mxu0
      %v3300 = vadd.f32 0.0, %v3299
      %3301 = vmatmul.bf16.gmra.mxu0 %v3225
      %v3302 = vpop.f32.mrf.mxu0
      %v3303 = vadd.f32 0.0, %v3302
      %v3304 = vpop.f32.mrf.mxu0
      %v3305 = vadd.f32 0.0, %v3304
      %3306 = vmatmul.bf16.gmra.mxu0 %v3228
      %v3307 = vpop.f32.mrf.mxu0
      %v3308 = vadd.f32 0.0, %v3307
      %v3309 = vpop.f32.mrf.mxu0
      %v3310 = vadd.f32 0.0, %v3309
      %3311 = vmatmul.bf16.gmra.mxu0 %v3231
      %v3312 = vpop.f32.mrf.mxu0
      %v3313 = vadd.f32 0.0, %v3312
      %v3314 = vpop.f32.mrf.mxu0
      %v3315 = vadd.f32 0.0, %v3314
      %3316 = vmatmul.bf16.gmra.mxu0 %v3234
      %v3317 = vpop.f32.mrf.mxu0
      %v3318 = vadd.f32 0.0, %v3317
      %v3319 = vpop.f32.mrf.mxu0
      %v3320 = vadd.f32 0.0, %v3319
      %3321 = vmatmul.bf16.gmra.mxu0 %v3237
      %v3322 = vpop.f32.mrf.mxu0
      %v3323 = vadd.f32 0.0, %v3322
      %v3324 = vpop.f32.mrf.mxu0
      %v3325 = vadd.f32 0.0, %v3324
      %3326 = vmatmul.bf16.gmra.mxu0 %v3240
      %v3327 = vpop.f32.mrf.mxu0
      %v3328 = vadd.f32 0.0, %v3327
      %v3329 = vpop.f32.mrf.mxu0
      %v3330 = vadd.f32 0.0, %v3329
      %3331 = vmatmul.bf16.gmra.mxu0 %v3243
      %v3332 = vpop.f32.mrf.mxu0
      %v3333 = vadd.f32 0.0, %v3332
      %v3334 = vpop.f32.mrf.mxu0
      %v3335 = vadd.f32 0.0, %v3334
      %3336 = vdwg.mxu0
      %v3337 = vadd.f32 %v2683, %v3258
      %v3338 = vadd.f32 %v2684, %v3260
      %v3339 = vadd.f32 %v2685, %v3263
      %v3340 = vadd.f32 %v2686, %v3265
      %v3341 = vadd.f32 %v2687, %v3268
      %v3342 = vadd.f32 %v2688, %v3270
      %v3343 = vadd.f32 %v2689, %v3273
      %v3344 = vadd.f32 %v2690, %v3275
      %v3345 = vadd.f32 %v2691, %v3278
      %v3346 = vadd.f32 %v2692, %v3280
      %v3347 = vadd.f32 %v2693, %v3283
      %v3348 = vadd.f32 %v2694, %v3285
      %v3349 = vadd.f32 %v2695, %v3288
      %v3350 = vadd.f32 %v2696, %v3290
      %v3351 = vadd.f32 %v2697, %v3293
      %v3352 = vadd.f32 %v2698, %v3295
      %v3353 = vadd.f32 %v2699, %v3298
      %v3354 = vadd.f32 %v2700, %v3300
      %v3355 = vadd.f32 %v2701, %v3303
      %v3356 = vadd.f32 %v2702, %v3305
      %v3357 = vadd.f32 %v2703, %v3308
      %v3358 = vadd.f32 %v2704, %v3310
      %v3359 = vadd.f32 %v2705, %v3313
      %v3360 = vadd.f32 %v2706, %v3315
      %v3361 = vadd.f32 %v2707, %v3318
      %v3362 = vadd.f32 %v2708, %v3320
      %v3363 = vadd.f32 %v2709, %v3323
      %v3364 = vadd.f32 %v2710, %v3325
      %v3365 = vadd.f32 %v2711, %v3328
      %v3366 = vadd.f32 %v2712, %v3330
      %v3367 = vadd.f32 %v2713, %v3333
      %v3368 = vadd.f32 %v2714, %v3335
      %v3369 = vld [vmem:[%s2428] sm:$0xe]
      %v3370 = vld [vmem:[%s2428 + $0xc] sm:$0xe]
      %v3371 = vld [vmem:[%s2428 + $0x18] sm:$0xe]
      %v3372 = vld [vmem:[%s2428 + $0x24] sm:$0xe]
      %v3373 = vld [vmem:[%s2428 + $0x30] sm:$0xe]
      %v3374 = vld [vmem:[%s2428 + $0x3c] sm:$0xe]
      %v3375 = vld [vmem:[%s2428 + $0x48] sm:$0xe]
      %v3376 = vld [vmem:[%s2428 + $0x54] sm:$0xe]
      %v3377 = vld [vmem:[%s2428 + $0x60] sm:$0xe]
      %v3378 = vld [vmem:[%s2428 + $0x6c] sm:$0xe]
      %v3379 = vld [vmem:[%s2428 + $0x78] sm:$0xe]
      %v3380 = vld [vmem:[%s2428 + $0x84] sm:$0xe]
      %v3381 = vld [vmem:[%s2428 + $0x90] sm:$0xe]
      %v3382 = vld [vmem:[%s2428 + $0x9c] sm:$0xe]
      %v3383 = vld [vmem:[%s2428 + $0xa8] sm:$0xe]
      %v3384 = vld [vmem:[%s2428 + $0xb4] sm:$0xe]
      %v3433 = vrot.slane %v3369, 5
      %v3434 = vrot.slane %v3433, 4
      %v3435 = vrot.slane %v2716, 5
      %v3436 = vsel %vm1096, %v3434, %v3435
      %v3437 = vrot.slane %v3435, 4
      %v3438 = vrot.slane %v2717, 5
      %v3439 = vsel %vm1096, %v3437, %v3438
      %v3440 = vrot.slane %v3370, 5
      %v3441 = vrot.slane %v3440, 4
      %v3442 = vrot.slane %v2719, 5
      %v3443 = vsel %vm1096, %v3441, %v3442
      %v3444 = vrot.slane %v3442, 4
      %v3445 = vrot.slane %v2720, 5
      %v3446 = vsel %vm1096, %v3444, %v3445
      %v3447 = vrot.slane %v3371, 5
      %v3448 = vrot.slane %v3447, 4
      %v3449 = vrot.slane %v2722, 5
      %v3450 = vsel %vm1096, %v3448, %v3449
      %v3451 = vrot.slane %v3449, 4
      %v3452 = vrot.slane %v2723, 5
      %v3453 = vsel %vm1096, %v3451, %v3452
      %v3454 = vrot.slane %v3372, 5
      %v3455 = vrot.slane %v3454, 4
      %v3456 = vrot.slane %v2725, 5
      %v3457 = vsel %vm1096, %v3455, %v3456
      %v3458 = vrot.slane %v3456, 4
      %v3459 = vrot.slane %v2726, 5
      %v3460 = vsel %vm1096, %v3458, %v3459
      %v3461 = vrot.slane %v3373, 5
      %v3462 = vrot.slane %v3461, 4
      %v3463 = vrot.slane %v2728, 5
      %v3464 = vsel %vm1096, %v3462, %v3463
      %v3465 = vrot.slane %v3463, 4
      %v3466 = vrot.slane %v2729, 5
      %v3467 = vsel %vm1096, %v3465, %v3466
      %v3468 = vrot.slane %v3374, 5
      %v3469 = vrot.slane %v3468, 4
      %v3470 = vrot.slane %v2731, 5
      %v3471 = vsel %vm1096, %v3469, %v3470
      %v3472 = vrot.slane %v3470, 4
      %v3473 = vrot.slane %v2732, 5
      %v3474 = vsel %vm1096, %v3472, %v3473
      %v3475 = vrot.slane %v3375, 5
      %v3476 = vrot.slane %v3475, 4
      %v3477 = vrot.slane %v2734, 5
      %v3478 = vsel %vm1096, %v3476, %v3477
      %v3479 = vrot.slane %v3477, 4
      %v3480 = vrot.slane %v2735, 5
      %v3481 = vsel %vm1096, %v3479, %v3480
      %v3482 = vrot.slane %v3376, 5
      %v3483 = vrot.slane %v3482, 4
      %v3484 = vrot.slane %v2737, 5
      %v3485 = vsel %vm1096, %v3483, %v3484
      %v3486 = vrot.slane %v3484, 4
      %v3487 = vrot.slane %v2738, 5
      %v3488 = vsel %vm1096, %v3486, %v3487
      %v3489 = vrot.slane %v3377, 5
      %v3490 = vrot.slane %v3489, 4
      %v3491 = vrot.slane %v2740, 5
      %v3492 = vsel %vm1096, %v3490, %v3491
      %v3493 = vrot.slane %v3491, 4
      %v3494 = vrot.slane %v2741, 5
      %v3495 = vsel %vm1096, %v3493, %v3494
      %v3496 = vrot.slane %v3378, 5
      %v3497 = vrot.slane %v3496, 4
      %v3498 = vrot.slane %v2743, 5
      %v3499 = vsel %vm1096, %v3497, %v3498
      %v3500 = vrot.slane %v3498, 4
      %v3501 = vrot.slane %v2744, 5
      %v3502 = vsel %vm1096, %v3500, %v3501
      %v3503 = vrot.slane %v3379, 5
      %v3504 = vrot.slane %v3503, 4
      %v3505 = vrot.slane %v2746, 5
      %v3506 = vsel %vm1096, %v3504, %v3505
      %v3507 = vrot.slane %v3505, 4
      %v3508 = vrot.slane %v2747, 5
      %v3509 = vsel %vm1096, %v3507, %v3508
      %v3510 = vrot.slane %v3380, 5
      %v3511 = vrot.slane %v3510, 4
      %v3512 = vrot.slane %v2749, 5
      %v3513 = vsel %vm1096, %v3511, %v3512
      %v3514 = vrot.slane %v3512, 4
      %v3515 = vrot.slane %v2750, 5
      %v3516 = vsel %vm1096, %v3514, %v3515
      %v3517 = vrot.slane %v3381, 5
      %v3518 = vrot.slane %v3517, 4
      %v3519 = vrot.slane %v2752, 5
      %v3520 = vsel %vm1096, %v3518, %v3519
      %v3521 = vrot.slane %v3519, 4
      %v3522 = vrot.slane %v2753, 5
      %v3523 = vsel %vm1096, %v3521, %v3522
      %v3524 = vrot.slane %v3382, 5
      %v3525 = vrot.slane %v3524, 4
      %v3526 = vrot.slane %v2755, 5
      %v3527 = vsel %vm1096, %v3525, %v3526
      %v3528 = vrot.slane %v3526, 4
      %v3529 = vrot.slane %v2756, 5
      %v3530 = vsel %vm1096, %v3528, %v3529
      %v3531 = vrot.slane %v3383, 5
      %v3532 = vrot.slane %v3531, 4
      %v3533 = vrot.slane %v2758, 5
      %v3534 = vsel %vm1096, %v3532, %v3533
      %v3535 = vrot.slane %v3533, 4
      %v3536 = vrot.slane %v2759, 5
      %v3537 = vsel %vm1096, %v3535, %v3536
      %v3538 = vrot.slane %v3384, 5
      %v3539 = vrot.slane %v3538, 4
      %v3540 = vrot.slane %v2761, 5
      %v3541 = vsel %vm1096, %v3539, %v3540
      %v3542 = vrot.slane %v3540, 4
      %v3543 = vrot.slane %v2762, 5
      %v3544 = vsel %vm1096, %v3542, %v3543
      %s3545 = scalar_lea.vmem %s1, 14
      %v3546 = vld [vmem:[%s3545] sm:$0x3]
      %v3547 = vunpack.c.l.b16 %v3436
      %v3548 = vunpack.c.l.b16 %v3439
      %v3549 = vunpack.c.l.b16 %v3443
      %v3550 = vunpack.c.l.b16 %v3446
      %v3551 = vunpack.c.l.b16 %v3450
      %v3552 = vunpack.c.l.b16 %v3453
      %v3553 = vunpack.c.l.b16 %v3457
      %v3554 = vunpack.c.l.b16 %v3460
      %v3555 = vunpack.c.l.b16 %v3464
      %v3556 = vunpack.c.l.b16 %v3467
      %v3557 = vunpack.c.l.b16 %v3471
      %v3558 = vunpack.c.l.b16 %v3474
      %v3559 = vunpack.c.l.b16 %v3478
      %v3560 = vunpack.c.l.b16 %v3481
      %v3561 = vunpack.c.l.b16 %v3485
      %v3562 = vunpack.c.l.b16 %v3488
      %v3563 = vunpack.c.l.b16 %v3492
      %v3564 = vunpack.c.l.b16 %v3495
      %v3565 = vunpack.c.l.b16 %v3499
      %v3566 = vunpack.c.l.b16 %v3502
      %v3567 = vunpack.c.l.b16 %v3506
      %v3568 = vunpack.c.l.b16 %v3509
      %v3569 = vunpack.c.l.b16 %v3513
      %v3570 = vunpack.c.l.b16 %v3516
      %v3571 = vunpack.c.l.b16 %v3520
      %v3572 = vunpack.c.l.b16 %v3523
      %v3573 = vunpack.c.l.b16 %v3527
      %v3574 = vunpack.c.l.b16 %v3530
      %v3575 = vunpack.c.l.b16 %v3534
      %v3576 = vunpack.c.l.b16 %v3537
      %v3577 = vunpack.c.l.b16 %v3541
      %v3578 = vunpack.c.l.b16 %v3544
      %v3579 = vpack.c.b16 %v3548, %v3547
      %v3580 = vpack.c.b16 %v3550, %v3549
      %v3581 = vpack.c.b16 %v3552, %v3551
      %v3582 = vpack.c.b16 %v3554, %v3553
      %v3583 = vpack.c.b16 %v3556, %v3555
      %v3584 = vpack.c.b16 %v3558, %v3557
      %v3585 = vpack.c.b16 %v3560, %v3559
      %v3586 = vpack.c.b16 %v3562, %v3561
      %v3587 = vpack.c.b16 %v3564, %v3563
      %v3588 = vpack.c.b16 %v3566, %v3565
      %v3589 = vpack.c.b16 %v3568, %v3567
      %v3590 = vpack.c.b16 %v3570, %v3569
      %v3591 = vpack.c.b16 %v3572, %v3571
      %v3592 = vpack.c.b16 %v3574, %v3573
      %v3593 = vpack.c.b16 %v3576, %v3575
      %v3594 = vpack.c.b16 %v3578, %v3577
      %v3596 = vsel %vm684, %v3579, 0
      %v3599 = vsel %vm684, %v3580, 0
      %v3602 = vsel %vm684, %v3581, 0
      %v3605 = vsel %vm684, %v3582, 0
      %v3608 = vsel %vm684, %v3583, 0
      %v3611 = vsel %vm684, %v3584, 0
      %v3614 = vsel %vm684, %v3585, 0
      %v3617 = vsel %vm684, %v3586, 0
      %v3620 = vsel %vm684, %v3587, 0
      %v3623 = vsel %vm684, %v3588, 0
      %v3626 = vsel %vm684, %v3589, 0
      %v3629 = vsel %vm684, %v3590, 0
      %v3632 = vsel %vm684, %v3591, 0
      %v3635 = vsel %vm684, %v3592, 0
      %v3638 = vsel %vm684, %v3593, 0
      %v3641 = vsel %vm684, %v3594, 0
      %v3644 = vsel %vm733, %v3546, 0
      %3646 = vmatpush.bf16.msra.mxu0 0
      %3647 = vmatpush.bf16.msra.mxu0 0
      %3648 = vmatpush.bf16.msra.mxu0 0
      %3649 = vmatpush.bf16.msra.mxu0 0
      %3650 = vmatpush.bf16.msra.mxu0 0
      %3651 = vmatpush.bf16.msra.mxu0 0
      %3652 = vmatpush.bf16.msra.mxu0 0
      %3653 = vmatpush.bf16.msra.mxu0 %v3644
      %3654 = vmatmul.bf16.gmra.mxu0 %v3596
      %v3655 = vpop.f32.mrf.mxu0
      %v3656 = vadd.f32 0.0, %v3655
      %v3657 = vpop.f32.mrf.mxu0
      %v3658 = vadd.f32 0.0, %v3657
      %3659 = vmatmul.bf16.gmra.mxu0 %v3599
      %v3660 = vpop.f32.mrf.mxu0
      %v3661 = vadd.f32 0.0, %v3660
      %v3662 = vpop.f32.mrf.mxu0
      %v3663 = vadd.f32 0.0, %v3662
      %3664 = vmatmul.bf16.gmra.mxu0 %v3602
      %v3665 = vpop.f32.mrf.mxu0
      %v3666 = vadd.f32 0.0, %v3665
      %v3667 = vpop.f32.mrf.mxu0
      %v3668 = vadd.f32 0.0, %v3667
      %3669 = vmatmul.bf16.gmra.mxu0 %v3605
      %v3670 = vpop.f32.mrf.mxu0
      %v3671 = vadd.f32 0.0, %v3670
      %v3672 = vpop.f32.mrf.mxu0
      %v3673 = vadd.f32 0.0, %v3672
      %3674 = vmatmul.bf16.gmra.mxu0 %v3608
      %v3675 = vpop.f32.mrf.mxu0
      %v3676 = vadd.f32 0.0, %v3675
      %v3677 = vpop.f32.mrf.mxu0
      %v3678 = vadd.f32 0.0, %v3677
      %3679 = vmatmul.bf16.gmra.mxu0 %v3611
      %v3680 = vpop.f32.mrf.mxu0
      %v3681 = vadd.f32 0.0, %v3680
      %v3682 = vpop.f32.mrf.mxu0
      %v3683 = vadd.f32 0.0, %v3682
      %3684 = vmatmul.bf16.gmra.mxu0 %v3614
      %v3685 = vpop.f32.mrf.mxu0
      %v3686 = vadd.f32 0.0, %v3685
      %v3687 = vpop.f32.mrf.mxu0
      %v3688 = vadd.f32 0.0, %v3687
      %3689 = vmatmul.bf16.gmra.mxu0 %v3617
      %v3690 = vpop.f32.mrf.mxu0
      %v3691 = vadd.f32 0.0, %v3690
      %v3692 = vpop.f32.mrf.mxu0
      %v3693 = vadd.f32 0.0, %v3692
      %3694 = vmatmul.bf16.gmra.mxu0 %v3620
      %v3695 = vpop.f32.mrf.mxu0
      %v3696 = vadd.f32 0.0, %v3695
      %v3697 = vpop.f32.mrf.mxu0
      %v3698 = vadd.f32 0.0, %v3697
      %3699 = vmatmul.bf16.gmra.mxu0 %v3623
      %v3700 = vpop.f32.mrf.mxu0
      %v3701 = vadd.f32 0.0, %v3700
      %v3702 = vpop.f32.mrf.mxu0
      %v3703 = vadd.f32 0.0, %v3702
      %3704 = vmatmul.bf16.gmra.mxu0 %v3626
      %v3705 = vpop.f32.mrf.mxu0
      %v3706 = vadd.f32 0.0, %v3705
      %v3707 = vpop.f32.mrf.mxu0
      %v3708 = vadd.f32 0.0, %v3707
      %3709 = vmatmul.bf16.gmra.mxu0 %v3629
      %v3710 = vpop.f32.mrf.mxu0
      %v3711 = vadd.f32 0.0, %v3710
      %v3712 = vpop.f32.mrf.mxu0
      %v3713 = vadd.f32 0.0, %v3712
      %3714 = vmatmul.bf16.gmra.mxu0 %v3632
      %v3715 = vpop.f32.mrf.mxu0
      %v3716 = vadd.f32 0.0, %v3715
      %v3717 = vpop.f32.mrf.mxu0
      %v3718 = vadd.f32 0.0, %v3717
      %3719 = vmatmul.bf16.gmra.mxu0 %v3635
      %v3720 = vpop.f32.mrf.mxu0
      %v3721 = vadd.f32 0.0, %v3720
      %v3722 = vpop.f32.mrf.mxu0
      %v3723 = vadd.f32 0.0, %v3722
      %3724 = vmatmul.bf16.gmra.mxu0 %v3638
      %v3725 = vpop.f32.mrf.mxu0
      %v3726 = vadd.f32 0.0, %v3725
      %v3727 = vpop.f32.mrf.mxu0
      %v3728 = vadd.f32 0.0, %v3727
      %3729 = vmatmul.bf16.gmra.mxu0 %v3641
      %v3730 = vpop.f32.mrf.mxu0
      %v3731 = vadd.f32 0.0, %v3730
      %v3732 = vpop.f32.mrf.mxu0
      %v3733 = vadd.f32 0.0, %v3732
      %3734 = vdwg.mxu0
      %v3735 = vadd.f32 %v3337, %v3656
      %v3736 = vadd.f32 %v3338, %v3658
      %v3737 = vadd.f32 %v3339, %v3661
      %v3738 = vadd.f32 %v3340, %v3663
      %v3739 = vadd.f32 %v3341, %v3666
      %v3740 = vadd.f32 %v3342, %v3668
      %v3741 = vadd.f32 %v3343, %v3671
      %v3742 = vadd.f32 %v3344, %v3673
      %v3743 = vadd.f32 %v3345, %v3676
      %v3744 = vadd.f32 %v3346, %v3678
      %v3745 = vadd.f32 %v3347, %v3681
      %v3746 = vadd.f32 %v3348, %v3683
      %v3747 = vadd.f32 %v3349, %v3686
      %v3748 = vadd.f32 %v3350, %v3688
      %v3749 = vadd.f32 %v3351, %v3691
      %v3750 = vadd.f32 %v3352, %v3693
      %v3751 = vadd.f32 %v3353, %v3696
      %v3752 = vadd.f32 %v3354, %v3698
      %v3753 = vadd.f32 %v3355, %v3701
      %v3754 = vadd.f32 %v3356, %v3703
      %v3755 = vadd.f32 %v3357, %v3706
      %v3756 = vadd.f32 %v3358, %v3708
      %v3757 = vadd.f32 %v3359, %v3711
      %v3758 = vadd.f32 %v3360, %v3713
      %v3759 = vadd.f32 %v3361, %v3716
      %v3760 = vadd.f32 %v3362, %v3718
      %v3761 = vadd.f32 %v3363, %v3721
      %v3762 = vadd.f32 %v3364, %v3723
      %v3763 = vadd.f32 %v3365, %v3726
      %v3764 = vadd.f32 %v3366, %v3728
      %v3765 = vadd.f32 %v3367, %v3731
      %v3766 = vadd.f32 %v3368, %v3733
      %v3767 = vld [vmem:[%s2428 + $0x8] sm:$0x3]
      %v3768 = vld [vmem:[%s2428 + $0x14] sm:$0x3]
      %v3769 = vld [vmem:[%s2428 + $0x20] sm:$0x3]
      %v3770 = vld [vmem:[%s2428 + $0x2c] sm:$0x3]
      %v3771 = vld [vmem:[%s2428 + $0x38] sm:$0x3]
      %v3772 = vld [vmem:[%s2428 + $0x44] sm:$0x3]
      %v3773 = vld [vmem:[%s2428 + $0x50] sm:$0x3]
      %v3774 = vld [vmem:[%s2428 + $0x5c] sm:$0x3]
      %v3775 = vld [vmem:[%s2428 + $0x68] sm:$0x3]
      %v3776 = vld [vmem:[%s2428 + $0x74] sm:$0x3]
      %v3777 = vld [vmem:[%s2428 + $0x80] sm:$0x3]
      %v3778 = vld [vmem:[%s2428 + $0x8c] sm:$0x3]
      %v3779 = vld [vmem:[%s2428 + $0x98] sm:$0x3]
      %v3780 = vld [vmem:[%s2428 + $0xa4] sm:$0x3]
      %v3781 = vld [vmem:[%s2428 + $0xb0] sm:$0x3]
      %v3782 = vld [vmem:[%s2428 + $0xbc] sm:$0x3]
      %v3784 = vshrl.u32 %v3369, 16
      %v3786 = vrot.slane %v3784, 5
      %v3787 = vshll.u32 %v3369, 16
      %v3789 = vrot.slane %v3787, 6
      %v3790 = vor.u32 %v3786, %v3789
      %v3791 = vrot.slane %v3790, 4
      %v3792 = vrot.slane %v2777, 5
      %v3793 = vrot.slane %v2773, 6
      %v3794 = vor.u32 %v3792, %v3793
      %v3795 = vsel %vm1449, %v3791, %v3794
      %v3796 = vrot.slane %v3794, 4
      %v3798 = vshrl.u32 %v3767, 16
      %v3800 = vrot.slane %v3798, 5
      %v3801 = vshll.u32 %v3767, 16
      %v3803 = vrot.slane %v3801, 6
      %v3804 = vor.u32 %v3800, %v3803
      %v3805 = vsel %vm1449, %v3796, %v3804
      %v3807 = vshrl.u32 %v3370, 16
      %v3809 = vrot.slane %v3807, 5
      %v3810 = vshll.u32 %v3370, 16
      %v3812 = vrot.slane %v3810, 6
      %v3813 = vor.u32 %v3809, %v3812
      %v3814 = vrot.slane %v3813, 4
      %v3815 = vrot.slane %v2801, 5
      %v3816 = vrot.slane %v2797, 6
      %v3817 = vor.u32 %v3815, %v3816
      %v3818 = vsel %vm1449, %v3814, %v3817
      %v3819 = vrot.slane %v3817, 4
      %v3821 = vshrl.u32 %v3768, 16
      %v3823 = vrot.slane %v3821, 5
      %v3824 = vshll.u32 %v3768, 16
      %v3826 = vrot.slane %v3824, 6
      %v3827 = vor.u32 %v3823, %v3826
      %v3828 = vsel %vm1449, %v3819, %v3827
      %v3830 = vshrl.u32 %v3371, 16
      %v3832 = vrot.slane %v3830, 5
      %v3833 = vshll.u32 %v3371, 16
      %v3835 = vrot.slane %v3833, 6
      %v3836 = vor.u32 %v3832, %v3835
      %v3837 = vrot.slane %v3836, 4
      %v3838 = vrot.slane %v2825, 5
      %v3839 = vrot.slane %v2821, 6
      %v3840 = vor.u32 %v3838, %v3839
      %v3841 = vsel %vm1449, %v3837, %v3840
      %v3842 = vrot.slane %v3840, 4
      %v3844 = vshrl.u32 %v3769, 16
      %v3846 = vrot.slane %v3844, 5
      %v3847 = vshll.u32 %v3769, 16
      %v3849 = vrot.slane %v3847, 6
      %v3850 = vor.u32 %v3846, %v3849
      %v3851 = vsel %vm1449, %v3842, %v3850
      %v3853 = vshrl.u32 %v3372, 16
      %v3855 = vrot.slane %v3853, 5
      %v3856 = vshll.u32 %v3372, 16
      %v3858 = vrot.slane %v3856, 6
      %v3859 = vor.u32 %v3855, %v3858
      %v3860 = vrot.slane %v3859, 4
      %v3861 = vrot.slane %v2849, 5
      %v3862 = vrot.slane %v2845, 6
      %v3863 = vor.u32 %v3861, %v3862
      %v3864 = vsel %vm1449, %v3860, %v3863
      %v3865 = vrot.slane %v3863, 4
      %v3867 = vshrl.u32 %v3770, 16
      %v3869 = vrot.slane %v3867, 5
      %v3870 = vshll.u32 %v3770, 16
      %v3872 = vrot.slane %v3870, 6
      %v3873 = vor.u32 %v3869, %v3872
      %v3874 = vsel %vm1449, %v3865, %v3873
      %v3876 = vshrl.u32 %v3373, 16
      %v3878 = vrot.slane %v3876, 5
      %v3879 = vshll.u32 %v3373, 16
      %v3881 = vrot.slane %v3879, 6
      %v3882 = vor.u32 %v3878, %v3881
      %v3883 = vrot.slane %v3882, 4
      %v3884 = vrot.slane %v2873, 5
      %v3885 = vrot.slane %v2869, 6
      %v3886 = vor.u32 %v3884, %v3885
      %v3887 = vsel %vm1449, %v3883, %v3886
      %v3888 = vrot.slane %v3886, 4
      %v3890 = vshrl.u32 %v3771, 16
      %v3892 = vrot.slane %v3890, 5
      %v3893 = vshll.u32 %v3771, 16
      %v3895 = vrot.slane %v3893, 6
      %v3896 = vor.u32 %v3892, %v3895
      %v3897 = vsel %vm1449, %v3888, %v3896
      %v3899 = vshrl.u32 %v3374, 16
      %v3901 = vrot.slane %v3899, 5
      %v3902 = vshll.u32 %v3374, 16
      %v3904 = vrot.slane %v3902, 6
      %v3905 = vor.u32 %v3901, %v3904
      %v3906 = vrot.slane %v3905, 4
      %v3907 = vrot.slane %v2897, 5
      %v3908 = vrot.slane %v2893, 6
      %v3909 = vor.u32 %v3907, %v3908
      %v3910 = vsel %vm1449, %v3906, %v3909
      %v3911 = vrot.slane %v3909, 4
      %v3913 = vshrl.u32 %v3772, 16
      %v3915 = vrot.slane %v3913, 5
      %v3916 = vshll.u32 %v3772, 16
      %v3918 = vrot.slane %v3916, 6
      %v3919 = vor.u32 %v3915, %v3918
      %v3920 = vsel %vm1449, %v3911, %v3919
      %v3922 = vshrl.u32 %v3375, 16
      %v3924 = vrot.slane %v3922, 5
      %v3925 = vshll.u32 %v3375, 16
      %v3927 = vrot.slane %v3925, 6
      %v3928 = vor.u32 %v3924, %v3927
      %v3929 = vrot.slane %v3928, 4
      %v3930 = vrot.slane %v2921, 5
      %v3931 = vrot.slane %v2917, 6
      %v3932 = vor.u32 %v3930, %v3931
      %v3933 = vsel %vm1449, %v3929, %v3932
      %v3934 = vrot.slane %v3932, 4
      %v3936 = vshrl.u32 %v3773, 16
      %v3938 = vrot.slane %v3936, 5
      %v3939 = vshll.u32 %v3773, 16
      %v3941 = vrot.slane %v3939, 6
      %v3942 = vor.u32 %v3938, %v3941
      %v3943 = vsel %vm1449, %v3934, %v3942
      %v3945 = vshrl.u32 %v3376, 16
      %v3947 = vrot.slane %v3945, 5
      %v3948 = vshll.u32 %v3376, 16
      %v3950 = vrot.slane %v3948, 6
      %v3951 = vor.u32 %v3947, %v3950
      %v3952 = vrot.slane %v3951, 4
      %v3953 = vrot.slane %v2945, 5
      %v3954 = vrot.slane %v2941, 6
      %v3955 = vor.u32 %v3953, %v3954
      %v3956 = vsel %vm1449, %v3952, %v3955
      %v3957 = vrot.slane %v3955, 4
      %v3959 = vshrl.u32 %v3774, 16
      %v3961 = vrot.slane %v3959, 5
      %v3962 = vshll.u32 %v3774, 16
      %v3964 = vrot.slane %v3962, 6
      %v3965 = vor.u32 %v3961, %v3964
      %v3966 = vsel %vm1449, %v3957, %v3965
      %v3968 = vshrl.u32 %v3377, 16
      %v3970 = vrot.slane %v3968, 5
      %v3971 = vshll.u32 %v3377, 16
      %v3973 = vrot.slane %v3971, 6
      %v3974 = vor.u32 %v3970, %v3973
      %v3975 = vrot.slane %v3974, 4
      %v3976 = vrot.slane %v2969, 5
      %v3977 = vrot.slane %v2965, 6
      %v3978 = vor.u32 %v3976, %v3977
      %v3979 = vsel %vm1449, %v3975, %v3978
      %v3980 = vrot.slane %v3978, 4
      %v3982 = vshrl.u32 %v3775, 16
      %v3984 = vrot.slane %v3982, 5
      %v3985 = vshll.u32 %v3775, 16
      %v3987 = vrot.slane %v3985, 6
      %v3988 = vor.u32 %v3984, %v3987
      %v3989 = vsel %vm1449, %v3980, %v3988
      %v3991 = vshrl.u32 %v3378, 16
      %v3993 = vrot.slane %v3991, 5
      %v3994 = vshll.u32 %v3378, 16
      %v3996 = vrot.slane %v3994, 6
      %v3997 = vor.u32 %v3993, %v3996
      %v3998 = vrot.slane %v3997, 4
      %v3999 = vrot.slane %v2993, 5
      %v4000 = vrot.slane %v2989, 6
      %v4001 = vor.u32 %v3999, %v4000
      %v4002 = vsel %vm1449, %v3998, %v4001
      %v4003 = vrot.slane %v4001, 4
      %v4005 = vshrl.u32 %v3776, 16
      %v4007 = vrot.slane %v4005, 5
      %v4008 = vshll.u32 %v3776, 16
      %v4010 = vrot.slane %v4008, 6
      %v4011 = vor.u32 %v4007, %v4010
      %v4012 = vsel %vm1449, %v4003, %v4011
      %v4014 = vshrl.u32 %v3379, 16
      %v4016 = vrot.slane %v4014, 5
      %v4017 = vshll.u32 %v3379, 16
      %v4019 = vrot.slane %v4017, 6
      %v4020 = vor.u32 %v4016, %v4019
      %v4021 = vrot.slane %v4020, 4
      %v4022 = vrot.slane %v3017, 5
      %v4023 = vrot.slane %v3013, 6
      %v4024 = vor.u32 %v4022, %v4023
      %v4025 = vsel %vm1449, %v4021, %v4024
      %v4026 = vrot.slane %v4024, 4
      %v4028 = vshrl.u32 %v3777, 16
      %v4030 = vrot.slane %v4028, 5
      %v4031 = vshll.u32 %v3777, 16
      %v4033 = vrot.slane %v4031, 6
      %v4034 = vor.u32 %v4030, %v4033
      %v4035 = vsel %vm1449, %v4026, %v4034
      %v4037 = vshrl.u32 %v3380, 16
      %v4039 = vrot.slane %v4037, 5
      %v4040 = vshll.u32 %v3380, 16
      %v4042 = vrot.slane %v4040, 6
      %v4043 = vor.u32 %v4039, %v4042
      %v4044 = vrot.slane %v4043, 4
      %v4045 = vrot.slane %v3041, 5
      %v4046 = vrot.slane %v3037, 6
      %v4047 = vor.u32 %v4045, %v4046
      %v4048 = vsel %vm1449, %v4044, %v4047
      %v4049 = vrot.slane %v4047, 4
      %v4051 = vshrl.u32 %v3778, 16
      %v4053 = vrot.slane %v4051, 5
      %v4054 = vshll.u32 %v3778, 16
      %v4056 = vrot.slane %v4054, 6
      %v4057 = vor.u32 %v4053, %v4056
      %v4058 = vsel %vm1449, %v4049, %v4057
      %v4060 = vshrl.u32 %v3381, 16
      %v4062 = vrot.slane %v4060, 5
      %v4063 = vshll.u32 %v3381, 16
      %v4065 = vrot.slane %v4063, 6
      %v4066 = vor.u32 %v4062, %v4065
      %v4067 = vrot.slane %v4066, 4
      %v4068 = vrot.slane %v3065, 5
      %v4069 = vrot.slane %v3061, 6
      %v4070 = vor.u32 %v4068, %v4069
      %v4071 = vsel %vm1449, %v4067, %v4070
      %v4072 = vrot.slane %v4070, 4
      %v4074 = vshrl.u32 %v3779, 16
      %v4076 = vrot.slane %v4074, 5
      %v4077 = vshll.u32 %v3779, 16
      %v4079 = vrot.slane %v4077, 6
      %v4080 = vor.u32 %v4076, %v4079
      %v4081 = vsel %vm1449, %v4072, %v4080
      %v4083 = vshrl.u32 %v3382, 16
      %v4085 = vrot.slane %v4083, 5
      %v4086 = vshll.u32 %v3382, 16
      %v4088 = vrot.slane %v4086, 6
      %v4089 = vor.u32 %v4085, %v4088
      %v4090 = vrot.slane %v4089, 4
      %v4091 = vrot.slane %v3089, 5
      %v4092 = vrot.slane %v3085, 6
      %v4093 = vor.u32 %v4091, %v4092
      %v4094 = vsel %vm1449, %v4090, %v4093
      %v4095 = vrot.slane %v4093, 4
      %v4097 = vshrl.u32 %v3780, 16
      %v4099 = vrot.slane %v4097, 5
      %v4100 = vshll.u32 %v3780, 16
      %v4102 = vrot.slane %v4100, 6
      %v4103 = vor.u32 %v4099, %v4102
      %v4104 = vsel %vm1449, %v4095, %v4103
      %v4106 = vshrl.u32 %v3383, 16
      %v4108 = vrot.slane %v4106, 5
      %v4109 = vshll.u32 %v3383, 16
      %v4111 = vrot.slane %v4109, 6
      %v4112 = vor.u32 %v4108, %v4111
      %v4113 = vrot.slane %v4112, 4
      %v4114 = vrot.slane %v3113, 5
      %v4115 = vrot.slane %v3109, 6
      %v4116 = vor.u32 %v4114, %v4115
      %v4117 = vsel %vm1449, %v4113, %v4116
      %v4118 = vrot.slane %v4116, 4
      %v4120 = vshrl.u32 %v3781, 16
      %v4122 = vrot.slane %v4120, 5
      %v4123 = vshll.u32 %v3781, 16
      %v4125 = vrot.slane %v4123, 6
      %v4126 = vor.u32 %v4122, %v4125
      %v4127 = vsel %vm1449, %v4118, %v4126
      %v4129 = vshrl.u32 %v3384, 16
      %v4131 = vrot.slane %v4129, 5
      %v4132 = vshll.u32 %v3384, 16
      %v4134 = vrot.slane %v4132, 6
      %v4135 = vor.u32 %v4131, %v4134
      %v4136 = vrot.slane %v4135, 4
      %v4137 = vrot.slane %v3137, 5
      %v4138 = vrot.slane %v3133, 6
      %v4139 = vor.u32 %v4137, %v4138
      %v4140 = vsel %vm1449, %v4136, %v4139
      %v4141 = vrot.slane %v4139, 4
      %v4143 = vshrl.u32 %v3782, 16
      %v4145 = vrot.slane %v4143, 5
      %v4146 = vshll.u32 %v3782, 16
      %v4148 = vrot.slane %v4146, 6
      %v4149 = vor.u32 %v4145, %v4148
      %v4150 = vsel %vm1449, %v4141, %v4149
      %s4151 = scalar_lea.vmem %s1, 16
      %v4152 = vld [vmem:[%s4151] sm:$0x3]
      %v4153 = vunpack.c.l.b16 %v3795
      %v4154 = vunpack.c.l.b16 %v3805
      %v4155 = vunpack.c.l.b16 %v3818
      %v4156 = vunpack.c.l.b16 %v3828
      %v4157 = vunpack.c.l.b16 %v3841
      %v4158 = vunpack.c.l.b16 %v3851
      %v4159 = vunpack.c.l.b16 %v3864
      %v4160 = vunpack.c.l.b16 %v3874
      %v4161 = vunpack.c.l.b16 %v3887
      %v4162 = vunpack.c.l.b16 %v3897
      %v4163 = vunpack.c.l.b16 %v3910
      %v4164 = vunpack.c.l.b16 %v3920
      %v4165 = vunpack.c.l.b16 %v3933
      %v4166 = vunpack.c.l.b16 %v3943
      %v4167 = vunpack.c.l.b16 %v3956
      %v4168 = vunpack.c.l.b16 %v3966
      %v4169 = vunpack.c.l.b16 %v3979
      %v4170 = vunpack.c.l.b16 %v3989
      %v4171 = vunpack.c.l.b16 %v4002
      %v4172 = vunpack.c.l.b16 %v4012
      %v4173 = vunpack.c.l.b16 %v4025
      %v4174 = vunpack.c.l.b16 %v4035
      %v4175 = vunpack.c.l.b16 %v4048
      %v4176 = vunpack.c.l.b16 %v4058
      %v4177 = vunpack.c.l.b16 %v4071
      %v4178 = vunpack.c.l.b16 %v4081
      %v4179 = vunpack.c.l.b16 %v4094
      %v4180 = vunpack.c.l.b16 %v4104
      %v4181 = vunpack.c.l.b16 %v4117
      %v4182 = vunpack.c.l.b16 %v4127
      %v4183 = vunpack.c.l.b16 %v4140
      %v4184 = vunpack.c.l.b16 %v4150
      %v4185 = vpack.c.b16 %v4154, %v4153
      %v4186 = vpack.c.b16 %v4156, %v4155
      %v4187 = vpack.c.b16 %v4158, %v4157
      %v4188 = vpack.c.b16 %v4160, %v4159
      %v4189 = vpack.c.b16 %v4162, %v4161
      %v4190 = vpack.c.b16 %v4164, %v4163
      %v4191 = vpack.c.b16 %v4166, %v4165
      %v4192 = vpack.c.b16 %v4168, %v4167
      %v4193 = vpack.c.b16 %v4170, %v4169
      %v4194 = vpack.c.b16 %v4172, %v4171
      %v4195 = vpack.c.b16 %v4174, %v4173
      %v4196 = vpack.c.b16 %v4176, %v4175
      %v4197 = vpack.c.b16 %v4178, %v4177
      %v4198 = vpack.c.b16 %v4180, %v4179
      %v4199 = vpack.c.b16 %v4182, %v4181
      %v4200 = vpack.c.b16 %v4184, %v4183
      %v4202 = vsel %vm684, %v4185, 0
      %v4205 = vsel %vm684, %v4186, 0
      %v4208 = vsel %vm684, %v4187, 0
      %v4211 = vsel %vm684, %v4188, 0
      %v4214 = vsel %vm684, %v4189, 0
      %v4217 = vsel %vm684, %v4190, 0
      %v4220 = vsel %vm684, %v4191, 0
      %v4223 = vsel %vm684, %v4192, 0
      %v4226 = vsel %vm684, %v4193, 0
      %v4229 = vsel %vm684, %v4194, 0
      %v4232 = vsel %vm684, %v4195, 0
      %v4235 = vsel %vm684, %v4196, 0
      %v4238 = vsel %vm684, %v4197, 0
      %v4241 = vsel %vm684, %v4198, 0
      %v4244 = vsel %vm684, %v4199, 0
      %v4247 = vsel %vm684, %v4200, 0
      %v4250 = vsel %vm733, %v4152, 0
      %4252 = vmatpush.bf16.msra.mxu0 0
      %4253 = vmatpush.bf16.msra.mxu0 0
      %4254 = vmatpush.bf16.msra.mxu0 0
      %4255 = vmatpush.bf16.msra.mxu0 0
      %4256 = vmatpush.bf16.msra.mxu0 0
      %4257 = vmatpush.bf16.msra.mxu0 0
      %4258 = vmatpush.bf16.msra.mxu0 0
      %4259 = vmatpush.bf16.msra.mxu0 %v4250
      %4260 = vmatmul.bf16.gmra.mxu0 %v4202
      %v4261 = vpop.f32.mrf.mxu0
      %v4262 = vadd.f32 0.0, %v4261
      %v4263 = vpop.f32.mrf.mxu0
      %v4264 = vadd.f32 0.0, %v4263
      %4265 = vmatmul.bf16.gmra.mxu0 %v4205
      %v4266 = vpop.f32.mrf.mxu0
      %v4267 = vadd.f32 0.0, %v4266
      %v4268 = vpop.f32.mrf.mxu0
      %v4269 = vadd.f32 0.0, %v4268
      %4270 = vmatmul.bf16.gmra.mxu0 %v4208
      %v4271 = vpop.f32.mrf.mxu0
      %v4272 = vadd.f32 0.0, %v4271
      %v4273 = vpop.f32.mrf.mxu0
      %v4274 = vadd.f32 0.0, %v4273
      %4275 = vmatmul.bf16.gmra.mxu0 %v4211
      %v4276 = vpop.f32.mrf.mxu0
      %v4277 = vadd.f32 0.0, %v4276
      %v4278 = vpop.f32.mrf.mxu0
      %v4279 = vadd.f32 0.0, %v4278
      %4280 = vmatmul.bf16.gmra.mxu0 %v4214
      %v4281 = vpop.f32.mrf.mxu0
      %v4282 = vadd.f32 0.0, %v4281
      %v4283 = vpop.f32.mrf.mxu0
      %v4284 = vadd.f32 0.0, %v4283
      %4285 = vmatmul.bf16.gmra.mxu0 %v4217
      %v4286 = vpop.f32.mrf.mxu0
      %v4287 = vadd.f32 0.0, %v4286
      %v4288 = vpop.f32.mrf.mxu0
      %v4289 = vadd.f32 0.0, %v4288
      %4290 = vmatmul.bf16.gmra.mxu0 %v4220
      %v4291 = vpop.f32.mrf.mxu0
      %v4292 = vadd.f32 0.0, %v4291
      %v4293 = vpop.f32.mrf.mxu0
      %v4294 = vadd.f32 0.0, %v4293
      %4295 = vmatmul.bf16.gmra.mxu0 %v4223
      %v4296 = vpop.f32.mrf.mxu0
      %v4297 = vadd.f32 0.0, %v4296
      %v4298 = vpop.f32.mrf.mxu0
      %v4299 = vadd.f32 0.0, %v4298
      %4300 = vmatmul.bf16.gmra.mxu0 %v4226
      %v4301 = vpop.f32.mrf.mxu0
      %v4302 = vadd.f32 0.0, %v4301
      %v4303 = vpop.f32.mrf.mxu0
      %v4304 = vadd.f32 0.0, %v4303
      %4305 = vmatmul.bf16.gmra.mxu0 %v4229
      %v4306 = vpop.f32.mrf.mxu0
      %v4307 = vadd.f32 0.0, %v4306
      %v4308 = vpop.f32.mrf.mxu0
      %v4309 = vadd.f32 0.0, %v4308
      %4310 = vmatmul.bf16.gmra.mxu0 %v4232
      %v4311 = vpop.f32.mrf.mxu0
      %v4312 = vadd.f32 0.0, %v4311
      %v4313 = vpop.f32.mrf.mxu0
      %v4314 = vadd.f32 0.0, %v4313
      %4315 = vmatmul.bf16.gmra.mxu0 %v4235
      %v4316 = vpop.f32.mrf.mxu0
      %v4317 = vadd.f32 0.0, %v4316
      %v4318 = vpop.f32.mrf.mxu0
      %v4319 = vadd.f32 0.0, %v4318
      %4320 = vmatmul.bf16.gmra.mxu0 %v4238
      %v4321 = vpop.f32.mrf.mxu0
      %v4322 = vadd.f32 0.0, %v4321
      %v4323 = vpop.f32.mrf.mxu0
      %v4324 = vadd.f32 0.0, %v4323
      %4325 = vmatmul.bf16.gmra.mxu0 %v4241
      %v4326 = vpop.f32.mrf.mxu0
      %v4327 = vadd.f32 0.0, %v4326
      %v4328 = vpop.f32.mrf.mxu0
      %v4329 = vadd.f32 0.0, %v4328
      %4330 = vmatmul.bf16.gmra.mxu0 %v4244
      %v4331 = vpop.f32.mrf.mxu0
      %v4332 = vadd.f32 0.0, %v4331
      %v4333 = vpop.f32.mrf.mxu0
      %v4334 = vadd.f32 0.0, %v4333
      %4335 = vmatmul.bf16.gmra.mxu0 %v4247
      %v4336 = vpop.f32.mrf.mxu0
      %v4337 = vadd.f32 0.0, %v4336
      %v4338 = vpop.f32.mrf.mxu0
      %v4339 = vadd.f32 0.0, %v4338
      %4340 = vdwg.mxu0
      %v4341 = vadd.f32 %v3735, %v4262
      %v4342 = vadd.f32 %v3736, %v4264
      %v4343 = vadd.f32 %v3737, %v4267
      %v4344 = vadd.f32 %v3738, %v4269
      %v4345 = vadd.f32 %v3739, %v4272
      %v4346 = vadd.f32 %v3740, %v4274
      %v4347 = vadd.f32 %v3741, %v4277
      %v4348 = vadd.f32 %v3742, %v4279
      %v4349 = vadd.f32 %v3743, %v4282
      %v4350 = vadd.f32 %v3744, %v4284
      %v4351 = vadd.f32 %v3745, %v4287
      %v4352 = vadd.f32 %v3746, %v4289
      %v4353 = vadd.f32 %v3747, %v4292
      %v4354 = vadd.f32 %v3748, %v4294
      %v4355 = vadd.f32 %v3749, %v4297
      %v4356 = vadd.f32 %v3750, %v4299
      %v4357 = vadd.f32 %v3751, %v4302
      %v4358 = vadd.f32 %v3752, %v4304
      %v4359 = vadd.f32 %v3753, %v4307
      %v4360 = vadd.f32 %v3754, %v4309
      %v4361 = vadd.f32 %v3755, %v4312
      %v4362 = vadd.f32 %v3756, %v4314
      %v4363 = vadd.f32 %v3757, %v4317
      %v4364 = vadd.f32 %v3758, %v4319
      %v4365 = vadd.f32 %v3759, %v4322
      %v4366 = vadd.f32 %v3760, %v4324
      %v4367 = vadd.f32 %v3761, %v4327
      %v4368 = vadd.f32 %v3762, %v4329
      %v4369 = vadd.f32 %v3763, %v4332
      %v4370 = vadd.f32 %v3764, %v4334
      %v4371 = vadd.f32 %v3765, %v4337
      %v4372 = vadd.f32 %v3766, %v4339
      %v4373 = vld [vmem:[%s2428] sm:$0xc]
      %v4374 = vld [vmem:[%s2428 + $0xc] sm:$0xc]
      %v4375 = vld [vmem:[%s2428 + $0x18] sm:$0xc]
      %v4376 = vld [vmem:[%s2428 + $0x24] sm:$0xc]
      %v4377 = vld [vmem:[%s2428 + $0x30] sm:$0xc]
      %v4378 = vld [vmem:[%s2428 + $0x3c] sm:$0xc]
      %v4379 = vld [vmem:[%s2428 + $0x48] sm:$0xc]
      %v4380 = vld [vmem:[%s2428 + $0x54] sm:$0xc]
      %v4381 = vld [vmem:[%s2428 + $0x60] sm:$0xc]
      %v4382 = vld [vmem:[%s2428 + $0x6c] sm:$0xc]
      %v4383 = vld [vmem:[%s2428 + $0x78] sm:$0xc]
      %v4384 = vld [vmem:[%s2428 + $0x84] sm:$0xc]
      %v4385 = vld [vmem:[%s2428 + $0x90] sm:$0xc]
      %v4386 = vld [vmem:[%s2428 + $0x9c] sm:$0xc]
      %v4387 = vld [vmem:[%s2428 + $0xa8] sm:$0xc]
      %v4388 = vld [vmem:[%s2428 + $0xb4] sm:$0xc]
      %v4421 = vrot.slane %v4373, 6
      %v4422 = vrot.slane %v4421, 4
      %v4423 = vrot.slane %v2716, 6
      %v4424 = vsel %vm2090, %v4422, %v4423
      %v4425 = vrot.slane %v4423, 4
      %v4426 = vrot.slane %v3767, 6
      %v4427 = vsel %vm2090, %v4425, %v4426
      %v4428 = vrot.slane %v4374, 6
      %v4429 = vrot.slane %v4428, 4
      %v4430 = vrot.slane %v2719, 6
      %v4431 = vsel %vm2090, %v4429, %v4430
      %v4432 = vrot.slane %v4430, 4
      %v4433 = vrot.slane %v3768, 6
      %v4434 = vsel %vm2090, %v4432, %v4433
      %v4435 = vrot.slane %v4375, 6
      %v4436 = vrot.slane %v4435, 4
      %v4437 = vrot.slane %v2722, 6
      %v4438 = vsel %vm2090, %v4436, %v4437
      %v4439 = vrot.slane %v4437, 4
      %v4440 = vrot.slane %v3769, 6
      %v4441 = vsel %vm2090, %v4439, %v4440
      %v4442 = vrot.slane %v4376, 6
      %v4443 = vrot.slane %v4442, 4
      %v4444 = vrot.slane %v2725, 6
      %v4445 = vsel %vm2090, %v4443, %v4444
      %v4446 = vrot.slane %v4444, 4
      %v4447 = vrot.slane %v3770, 6
      %v4448 = vsel %vm2090, %v4446, %v4447
      %v4449 = vrot.slane %v4377, 6
      %v4450 = vrot.slane %v4449, 4
      %v4451 = vrot.slane %v2728, 6
      %v4452 = vsel %vm2090, %v4450, %v4451
      %v4453 = vrot.slane %v4451, 4
      %v4454 = vrot.slane %v3771, 6
      %v4455 = vsel %vm2090, %v4453, %v4454
      %v4456 = vrot.slane %v4378, 6
      %v4457 = vrot.slane %v4456, 4
      %v4458 = vrot.slane %v2731, 6
      %v4459 = vsel %vm2090, %v4457, %v4458
      %v4460 = vrot.slane %v4458, 4
      %v4461 = vrot.slane %v3772, 6
      %v4462 = vsel %vm2090, %v4460, %v4461
      %v4463 = vrot.slane %v4379, 6
      %v4464 = vrot.slane %v4463, 4
      %v4465 = vrot.slane %v2734, 6
      %v4466 = vsel %vm2090, %v4464, %v4465
      %v4467 = vrot.slane %v4465, 4
      %v4468 = vrot.slane %v3773, 6
      %v4469 = vsel %vm2090, %v4467, %v4468
      %v4470 = vrot.slane %v4380, 6
      %v4471 = vrot.slane %v4470, 4
      %v4472 = vrot.slane %v2737, 6
      %v4473 = vsel %vm2090, %v4471, %v4472
      %v4474 = vrot.slane %v4472, 4
      %v4475 = vrot.slane %v3774, 6
      %v4476 = vsel %vm2090, %v4474, %v4475
      %v4477 = vrot.slane %v4381, 6
      %v4478 = vrot.slane %v4477, 4
      %v4479 = vrot.slane %v2740, 6
      %v4480 = vsel %vm2090, %v4478, %v4479
      %v4481 = vrot.slane %v4479, 4
      %v4482 = vrot.slane %v3775, 6
      %v4483 = vsel %vm2090, %v4481, %v4482
      %v4484 = vrot.slane %v4382, 6
      %v4485 = vrot.slane %v4484, 4
      %v4486 = vrot.slane %v2743, 6
      %v4487 = vsel %vm2090, %v4485, %v4486
      %v4488 = vrot.slane %v4486, 4
      %v4489 = vrot.slane %v3776, 6
      %v4490 = vsel %vm2090, %v4488, %v4489
      %v4491 = vrot.slane %v4383, 6
      %v4492 = vrot.slane %v4491, 4
      %v4493 = vrot.slane %v2746, 6
      %v4494 = vsel %vm2090, %v4492, %v4493
      %v4495 = vrot.slane %v4493, 4
      %v4496 = vrot.slane %v3777, 6
      %v4497 = vsel %vm2090, %v4495, %v4496
      %v4498 = vrot.slane %v4384, 6
      %v4499 = vrot.slane %v4498, 4
      %v4500 = vrot.slane %v2749, 6
      %v4501 = vsel %vm2090, %v4499, %v4500
      %v4502 = vrot.slane %v4500, 4
      %v4503 = vrot.slane %v3778, 6
      %v4504 = vsel %vm2090, %v4502, %v4503
      %v4505 = vrot.slane %v4385, 6
      %v4506 = vrot.slane %v4505, 4
      %v4507 = vrot.slane %v2752, 6
      %v4508 = vsel %vm2090, %v4506, %v4507
      %v4509 = vrot.slane %v4507, 4
      %v4510 = vrot.slane %v3779, 6
      %v4511 = vsel %vm2090, %v4509, %v4510
      %v4512 = vrot.slane %v4386, 6
      %v4513 = vrot.slane %v4512, 4
      %v4514 = vrot.slane %v2755, 6
      %v4515 = vsel %vm2090, %v4513, %v4514
      %v4516 = vrot.slane %v4514, 4
      %v4517 = vrot.slane %v3780, 6
      %v4518 = vsel %vm2090, %v4516, %v4517
      %v4519 = vrot.slane %v4387, 6
      %v4520 = vrot.slane %v4519, 4
      %v4521 = vrot.slane %v2758, 6
      %v4522 = vsel %vm2090, %v4520, %v4521
      %v4523 = vrot.slane %v4521, 4
      %v4524 = vrot.slane %v3781, 6
      %v4525 = vsel %vm2090, %v4523, %v4524
      %v4526 = vrot.slane %v4388, 6
      %v4527 = vrot.slane %v4526, 4
      %v4528 = vrot.slane %v2761, 6
      %v4529 = vsel %vm2090, %v4527, %v4528
      %v4530 = vrot.slane %v4528, 4
      %v4531 = vrot.slane %v3782, 6
      %v4532 = vsel %vm2090, %v4530, %v4531
      %s4533 = scalar_lea.vmem %s1, 18
      %v4534 = vld [vmem:[%s4533] sm:$0x3]
      %v4535 = vunpack.c.l.b16 %v4424
      %v4536 = vunpack.c.l.b16 %v4427
      %v4537 = vunpack.c.l.b16 %v4431
      %v4538 = vunpack.c.l.b16 %v4434
      %v4539 = vunpack.c.l.b16 %v4438
      %v4540 = vunpack.c.l.b16 %v4441
      %v4541 = vunpack.c.l.b16 %v4445
      %v4542 = vunpack.c.l.b16 %v4448
      %v4543 = vunpack.c.l.b16 %v4452
      %v4544 = vunpack.c.l.b16 %v4455
      %v4545 = vunpack.c.l.b16 %v4459
      %v4546 = vunpack.c.l.b16 %v4462
      %v4547 = vunpack.c.l.b16 %v4466
      %v4548 = vunpack.c.l.b16 %v4469
      %v4549 = vunpack.c.l.b16 %v4473
      %v4550 = vunpack.c.l.b16 %v4476
      %v4551 = vunpack.c.l.b16 %v4480
      %v4552 = vunpack.c.l.b16 %v4483
      %v4553 = vunpack.c.l.b16 %v4487
      %v4554 = vunpack.c.l.b16 %v4490
      %v4555 = vunpack.c.l.b16 %v4494
      %v4556 = vunpack.c.l.b16 %v4497
      %v4557 = vunpack.c.l.b16 %v4501
      %v4558 = vunpack.c.l.b16 %v4504
      %v4559 = vunpack.c.l.b16 %v4508
      %v4560 = vunpack.c.l.b16 %v4511
      %v4561 = vunpack.c.l.b16 %v4515
      %v4562 = vunpack.c.l.b16 %v4518
      %v4563 = vunpack.c.l.b16 %v4522
      %v4564 = vunpack.c.l.b16 %v4525
      %v4565 = vunpack.c.l.b16 %v4529
      %v4566 = vunpack.c.l.b16 %v4532
      %v4567 = vpack.c.b16 %v4536, %v4535
      %v4568 = vpack.c.b16 %v4538, %v4537
      %v4569 = vpack.c.b16 %v4540, %v4539
      %v4570 = vpack.c.b16 %v4542, %v4541
      %v4571 = vpack.c.b16 %v4544, %v4543
      %v4572 = vpack.c.b16 %v4546, %v4545
      %v4573 = vpack.c.b16 %v4548, %v4547
      %v4574 = vpack.c.b16 %v4550, %v4549
      %v4575 = vpack.c.b16 %v4552, %v4551
      %v4576 = vpack.c.b16 %v4554, %v4553
      %v4577 = vpack.c.b16 %v4556, %v4555
      %v4578 = vpack.c.b16 %v4558, %v4557
      %v4579 = vpack.c.b16 %v4560, %v4559
      %v4580 = vpack.c.b16 %v4562, %v4561
      %v4581 = vpack.c.b16 %v4564, %v4563
      %v4582 = vpack.c.b16 %v4566, %v4565
      %v4584 = vsel %vm684, %v4567, 0
      %v4587 = vsel %vm684, %v4568, 0
      %v4590 = vsel %vm684, %v4569, 0
      %v4593 = vsel %vm684, %v4570, 0
      %v4596 = vsel %vm684, %v4571, 0
      %v4599 = vsel %vm684, %v4572, 0
      %v4602 = vsel %vm684, %v4573, 0
      %v4605 = vsel %vm684, %v4574, 0
      %v4608 = vsel %vm684, %v4575, 0
      %v4611 = vsel %vm684, %v4576, 0
      %v4614 = vsel %vm684, %v4577, 0
      %v4617 = vsel %vm684, %v4578, 0
      %v4620 = vsel %vm684, %v4579, 0
      %v4623 = vsel %vm684, %v4580, 0
      %v4626 = vsel %vm684, %v4581, 0
      %v4629 = vsel %vm684, %v4582, 0
      %v4632 = vsel %vm733, %v4534, 0
      %4634 = vmatpush.bf16.msra.mxu0 0
      %4635 = vmatpush.bf16.msra.mxu0 0
      %4636 = vmatpush.bf16.msra.mxu0 0
      %4637 = vmatpush.bf16.msra.mxu0 0
      %4638 = vmatpush.bf16.msra.mxu0 0
      %4639 = vmatpush.bf16.msra.mxu0 0
      %4640 = vmatpush.bf16.msra.mxu0 0
      %4641 = vmatpush.bf16.msra.mxu0 %v4632
      %4642 = vmatmul.bf16.gmra.mxu0 %v4584
      %v4643 = vpop.f32.mrf.mxu0
      %v4644 = vadd.f32 0.0, %v4643
      %v4645 = vpop.f32.mrf.mxu0
      %v4646 = vadd.f32 0.0, %v4645
      %4647 = vmatmul.bf16.gmra.mxu0 %v4587
      %v4648 = vpop.f32.mrf.mxu0
      %v4649 = vadd.f32 0.0, %v4648
      %v4650 = vpop.f32.mrf.mxu0
      %v4651 = vadd.f32 0.0, %v4650
      %4652 = vmatmul.bf16.gmra.mxu0 %v4590
      %v4653 = vpop.f32.mrf.mxu0
      %v4654 = vadd.f32 0.0, %v4653
      %v4655 = vpop.f32.mrf.mxu0
      %v4656 = vadd.f32 0.0, %v4655
      %4657 = vmatmul.bf16.gmra.mxu0 %v4593
      %v4658 = vpop.f32.mrf.mxu0
      %v4659 = vadd.f32 0.0, %v4658
      %v4660 = vpop.f32.mrf.mxu0
      %v4661 = vadd.f32 0.0, %v4660
      %4662 = vmatmul.bf16.gmra.mxu0 %v4596
      %v4663 = vpop.f32.mrf.mxu0
      %v4664 = vadd.f32 0.0, %v4663
      %v4665 = vpop.f32.mrf.mxu0
      %v4666 = vadd.f32 0.0, %v4665
      %4667 = vmatmul.bf16.gmra.mxu0 %v4599
      %v4668 = vpop.f32.mrf.mxu0
      %v4669 = vadd.f32 0.0, %v4668
      %v4670 = vpop.f32.mrf.mxu0
      %v4671 = vadd.f32 0.0, %v4670
      %4672 = vmatmul.bf16.gmra.mxu0 %v4602
      %v4673 = vpop.f32.mrf.mxu0
      %v4674 = vadd.f32 0.0, %v4673
      %v4675 = vpop.f32.mrf.mxu0
      %v4676 = vadd.f32 0.0, %v4675
      %4677 = vmatmul.bf16.gmra.mxu0 %v4605
      %v4678 = vpop.f32.mrf.mxu0
      %v4679 = vadd.f32 0.0, %v4678
      %v4680 = vpop.f32.mrf.mxu0
      %v4681 = vadd.f32 0.0, %v4680
      %4682 = vmatmul.bf16.gmra.mxu0 %v4608
      %v4683 = vpop.f32.mrf.mxu0
      %v4684 = vadd.f32 0.0, %v4683
      %v4685 = vpop.f32.mrf.mxu0
      %v4686 = vadd.f32 0.0, %v4685
      %4687 = vmatmul.bf16.gmra.mxu0 %v4611
      %v4688 = vpop.f32.mrf.mxu0
      %v4689 = vadd.f32 0.0, %v4688
      %v4690 = vpop.f32.mrf.mxu0
      %v4691 = vadd.f32 0.0, %v4690
      %4692 = vmatmul.bf16.gmra.mxu0 %v4614
      %v4693 = vpop.f32.mrf.mxu0
      %v4694 = vadd.f32 0.0, %v4693
      %v4695 = vpop.f32.mrf.mxu0
      %v4696 = vadd.f32 0.0, %v4695
      %4697 = vmatmul.bf16.gmra.mxu0 %v4617
      %v4698 = vpop.f32.mrf.mxu0
      %v4699 = vadd.f32 0.0, %v4698
      %v4700 = vpop.f32.mrf.mxu0
      %v4701 = vadd.f32 0.0, %v4700
      %4702 = vmatmul.bf16.gmra.mxu0 %v4620
      %v4703 = vpop.f32.mrf.mxu0
      %v4704 = vadd.f32 0.0, %v4703
      %v4705 = vpop.f32.mrf.mxu0
      %v4706 = vadd.f32 0.0, %v4705
      %4707 = vmatmul.bf16.gmra.mxu0 %v4623
      %v4708 = vpop.f32.mrf.mxu0
      %v4709 = vadd.f32 0.0, %v4708
      %v4710 = vpop.f32.mrf.mxu0
      %v4711 = vadd.f32 0.0, %v4710
      %4712 = vmatmul.bf16.gmra.mxu0 %v4626
      %v4713 = vpop.f32.mrf.mxu0
      %v4714 = vadd.f32 0.0, %v4713
      %v4715 = vpop.f32.mrf.mxu0
      %v4716 = vadd.f32 0.0, %v4715
      %4717 = vmatmul.bf16.gmra.mxu0 %v4629
      %v4718 = vpop.f32.mrf.mxu0
      %v4719 = vadd.f32 0.0, %v4718
      %v4720 = vpop.f32.mrf.mxu0
      %v4721 = vadd.f32 0.0, %v4720
      %4722 = vdwg.mxu0
      %v4723 = vadd.f32 %v4341, %v4644
      %v4724 = vadd.f32 %v4342, %v4646
      %v4725 = vadd.f32 %v4343, %v4649
      %v4726 = vadd.f32 %v4344, %v4651
      %v4727 = vadd.f32 %v4345, %v4654
      %v4728 = vadd.f32 %v4346, %v4656
      %v4729 = vadd.f32 %v4347, %v4659
      %v4730 = vadd.f32 %v4348, %v4661
      %v4731 = vadd.f32 %v4349, %v4664
      %v4732 = vadd.f32 %v4350, %v4666
      %v4733 = vadd.f32 %v4351, %v4669
      %v4734 = vadd.f32 %v4352, %v4671
      %v4735 = vadd.f32 %v4353, %v4674
      %v4736 = vadd.f32 %v4354, %v4676
      %v4737 = vadd.f32 %v4355, %v4679
      %v4738 = vadd.f32 %v4356, %v4681
      %v4739 = vadd.f32 %v4357, %v4684
      %v4740 = vadd.f32 %v4358, %v4686
      %v4741 = vadd.f32 %v4359, %v4689
      %v4742 = vadd.f32 %v4360, %v4691
      %v4743 = vadd.f32 %v4361, %v4694
      %v4744 = vadd.f32 %v4362, %v4696
      %v4745 = vadd.f32 %v4363, %v4699
      %v4746 = vadd.f32 %v4364, %v4701
      %v4747 = vadd.f32 %v4365, %v4704
      %v4748 = vadd.f32 %v4366, %v4706
      %v4749 = vadd.f32 %v4367, %v4709
      %v4750 = vadd.f32 %v4368, %v4711
      %v4751 = vadd.f32 %v4369, %v4714
      %v4752 = vadd.f32 %v4370, %v4716
      %v4753 = vadd.f32 %v4371, %v4719
      %v4754 = vadd.f32 %v4372, %v4721
      %s4755 = sadd.s32 %s194, 2
      %s4756 = smul.u32 %s4755, 3
      %s4757 = smul.addr %s4756, 4
      %s4758 = scalar_lea.vmem %s183, %s4757
      %v4759 = vld [vmem:[%s4758] sm:$0xf]
      %v4760 = vld [vmem:[%s4758 + $0x4] sm:$0xf]
      %v4761 = vld [vmem:[%s4758 + $0xc] sm:$0xf]
      %v4762 = vld [vmem:[%s4758 + $0x10] sm:$0xf]
      %v4763 = vld [vmem:[%s4758 + $0x18] sm:$0xf]
      %v4764 = vld [vmem:[%s4758 + $0x1c] sm:$0xf]
      %v4765 = vld [vmem:[%s4758 + $0x24] sm:$0xf]
      %v4766 = vld [vmem:[%s4758 + $0x28] sm:$0xf]
      %v4767 = vld [vmem:[%s4758 + $0x30] sm:$0xf]
      %v4768 = vld [vmem:[%s4758 + $0x34] sm:$0xf]
      %v4769 = vld [vmem:[%s4758 + $0x3c] sm:$0xf]
      %v4770 = vld [vmem:[%s4758 + $0x40] sm:$0xf]
      %v4771 = vld [vmem:[%s4758 + $0x48] sm:$0xf]
      %v4772 = vld [vmem:[%s4758 + $0x4c] sm:$0xf]
      %v4773 = vld [vmem:[%s4758 + $0x54] sm:$0xf]
      %v4774 = vld [vmem:[%s4758 + $0x58] sm:$0xf]
      %v4775 = vld [vmem:[%s4758 + $0x60] sm:$0xf]
      %v4776 = vld [vmem:[%s4758 + $0x64] sm:$0xf]
      %v4777 = vld [vmem:[%s4758 + $0x6c] sm:$0xf]
      %v4778 = vld [vmem:[%s4758 + $0x70] sm:$0xf]
      %v4779 = vld [vmem:[%s4758 + $0x78] sm:$0xf]
      %v4780 = vld [vmem:[%s4758 + $0x7c] sm:$0xf]
      %v4781 = vld [vmem:[%s4758 + $0x84] sm:$0xf]
      %v4782 = vld [vmem:[%s4758 + $0x88] sm:$0xf]
      %v4783 = vld [vmem:[%s4758 + $0x90] sm:$0xf]
      %v4784 = vld [vmem:[%s4758 + $0x94] sm:$0xf]
      %v4785 = vld [vmem:[%s4758 + $0x9c] sm:$0xf]
      %v4786 = vld [vmem:[%s4758 + $0xa0] sm:$0xf]
      %v4787 = vld [vmem:[%s4758 + $0xa8] sm:$0xf]
      %v4788 = vld [vmem:[%s4758 + $0xac] sm:$0xf]
      %v4789 = vld [vmem:[%s4758 + $0xb4] sm:$0xf]
      %v4790 = vld [vmem:[%s4758 + $0xb8] sm:$0xf]
      %s4791 = scalar_lea.vmem %s1, 20
      %v4792 = vld [vmem:[%s4791] sm:$0x3]
      %v4825 = vunpack.c.l.b16 %v4759
      %v4826 = vunpack.c.l.b16 %v4760
      %v4827 = vunpack.c.l.b16 %v4761
      %v4828 = vunpack.c.l.b16 %v4762
      %v4829 = vunpack.c.l.b16 %v4763
      %v4830 = vunpack.c.l.b16 %v4764
      %v4831 = vunpack.c.l.b16 %v4765
      %v4832 = vunpack.c.l.b16 %v4766
      %v4833 = vunpack.c.l.b16 %v4767
      %v4834 = vunpack.c.l.b16 %v4768
      %v4835 = vunpack.c.l.b16 %v4769
      %v4836 = vunpack.c.l.b16 %v4770
      %v4837 = vunpack.c.l.b16 %v4771
      %v4838 = vunpack.c.l.b16 %v4772
      %v4839 = vunpack.c.l.b16 %v4773
      %v4840 = vunpack.c.l.b16 %v4774
      %v4841 = vunpack.c.l.b16 %v4775
      %v4842 = vunpack.c.l.b16 %v4776
      %v4843 = vunpack.c.l.b16 %v4777
      %v4844 = vunpack.c.l.b16 %v4778
      %v4845 = vunpack.c.l.b16 %v4779
      %v4846 = vunpack.c.l.b16 %v4780
      %v4847 = vunpack.c.l.b16 %v4781
      %v4848 = vunpack.c.l.b16 %v4782
      %v4849 = vunpack.c.l.b16 %v4783
      %v4850 = vunpack.c.l.b16 %v4784
      %v4851 = vunpack.c.l.b16 %v4785
      %v4852 = vunpack.c.l.b16 %v4786
      %v4853 = vunpack.c.l.b16 %v4787
      %v4854 = vunpack.c.l.b16 %v4788
      %v4855 = vunpack.c.l.b16 %v4789
      %v4856 = vunpack.c.l.b16 %v4790
      %v4857 = vpack.c.b16 %v4826, %v4825
      %v4858 = vpack.c.b16 %v4828, %v4827
      %v4859 = vpack.c.b16 %v4830, %v4829
      %v4860 = vpack.c.b16 %v4832, %v4831
      %v4861 = vpack.c.b16 %v4834, %v4833
      %v4862 = vpack.c.b16 %v4836, %v4835
      %v4863 = vpack.c.b16 %v4838, %v4837
      %v4864 = vpack.c.b16 %v4840, %v4839
      %v4865 = vpack.c.b16 %v4842, %v4841
      %v4866 = vpack.c.b16 %v4844, %v4843
      %v4867 = vpack.c.b16 %v4846, %v4845
      %v4868 = vpack.c.b16 %v4848, %v4847
      %v4869 = vpack.c.b16 %v4850, %v4849
      %v4870 = vpack.c.b16 %v4852, %v4851
      %v4871 = vpack.c.b16 %v4854, %v4853
      %v4872 = vpack.c.b16 %v4856, %v4855
      %v4874 = vsel %vm684, %v4857, 0
      %v4877 = vsel %vm684, %v4858, 0
      %v4880 = vsel %vm684, %v4859, 0
      %v4883 = vsel %vm684, %v4860, 0
      %v4886 = vsel %vm684, %v4861, 0
      %v4889 = vsel %vm684, %v4862, 0
      %v4892 = vsel %vm684, %v4863, 0
      %v4895 = vsel %vm684, %v4864, 0
      %v4898 = vsel %vm684, %v4865, 0
      %v4901 = vsel %vm684, %v4866, 0
      %v4904 = vsel %vm684, %v4867, 0
      %v4907 = vsel %vm684, %v4868, 0
      %v4910 = vsel %vm684, %v4869, 0
      %v4913 = vsel %vm684, %v4870, 0
      %v4916 = vsel %vm684, %v4871, 0
      %v4919 = vsel %vm684, %v4872, 0
      %v4922 = vsel %vm733, %v4792, 0
      %4924 = vmatpush.bf16.msra.mxu0 0
      %4925 = vmatpush.bf16.msra.mxu0 0
      %4926 = vmatpush.bf16.msra.mxu0 0
      %4927 = vmatpush.bf16.msra.mxu0 0
      %4928 = vmatpush.bf16.msra.mxu0 0
      %4929 = vmatpush.bf16.msra.mxu0 0
      %4930 = vmatpush.bf16.msra.mxu0 0
      %4931 = vmatpush.bf16.msra.mxu0 %v4922
      %4932 = vmatmul.bf16.gmra.mxu0 %v4874
      %v4933 = vpop.f32.mrf.mxu0
      %v4934 = vadd.f32 0.0, %v4933
      %v4935 = vpop.f32.mrf.mxu0
      %v4936 = vadd.f32 0.0, %v4935
      %4937 = vmatmul.bf16.gmra.mxu0 %v4877
      %v4938 = vpop.f32.mrf.mxu0
      %v4939 = vadd.f32 0.0, %v4938
      %v4940 = vpop.f32.mrf.mxu0
      %v4941 = vadd.f32 0.0, %v4940
      %4942 = vmatmul.bf16.gmra.mxu0 %v4880
      %v4943 = vpop.f32.mrf.mxu0
      %v4944 = vadd.f32 0.0, %v4943
      %v4945 = vpop.f32.mrf.mxu0
      %v4946 = vadd.f32 0.0, %v4945
      %4947 = vmatmul.bf16.gmra.mxu0 %v4883
      %v4948 = vpop.f32.mrf.mxu0
      %v4949 = vadd.f32 0.0, %v4948
      %v4950 = vpop.f32.mrf.mxu0
      %v4951 = vadd.f32 0.0, %v4950
      %4952 = vmatmul.bf16.gmra.mxu0 %v4886
      %v4953 = vpop.f32.mrf.mxu0
      %v4954 = vadd.f32 0.0, %v4953
      %v4955 = vpop.f32.mrf.mxu0
      %v4956 = vadd.f32 0.0, %v4955
      %4957 = vmatmul.bf16.gmra.mxu0 %v4889
      %v4958 = vpop.f32.mrf.mxu0
      %v4959 = vadd.f32 0.0, %v4958
      %v4960 = vpop.f32.mrf.mxu0
      %v4961 = vadd.f32 0.0, %v4960
      %4962 = vmatmul.bf16.gmra.mxu0 %v4892
      %v4963 = vpop.f32.mrf.mxu0
      %v4964 = vadd.f32 0.0, %v4963
      %v4965 = vpop.f32.mrf.mxu0
      %v4966 = vadd.f32 0.0, %v4965
      %4967 = vmatmul.bf16.gmra.mxu0 %v4895
      %v4968 = vpop.f32.mrf.mxu0
      %v4969 = vadd.f32 0.0, %v4968
      %v4970 = vpop.f32.mrf.mxu0
      %v4971 = vadd.f32 0.0, %v4970
      %4972 = vmatmul.bf16.gmra.mxu0 %v4898
      %v4973 = vpop.f32.mrf.mxu0
      %v4974 = vadd.f32 0.0, %v4973
      %v4975 = vpop.f32.mrf.mxu0
      %v4976 = vadd.f32 0.0, %v4975
      %4977 = vmatmul.bf16.gmra.mxu0 %v4901
      %v4978 = vpop.f32.mrf.mxu0
      %v4979 = vadd.f32 0.0, %v4978
      %v4980 = vpop.f32.mrf.mxu0
      %v4981 = vadd.f32 0.0, %v4980
      %4982 = vmatmul.bf16.gmra.mxu0 %v4904
      %v4983 = vpop.f32.mrf.mxu0
      %v4984 = vadd.f32 0.0, %v4983
      %v4985 = vpop.f32.mrf.mxu0
      %v4986 = vadd.f32 0.0, %v4985
      %4987 = vmatmul.bf16.gmra.mxu0 %v4907
      %v4988 = vpop.f32.mrf.mxu0
      %v4989 = vadd.f32 0.0, %v4988
      %v4990 = vpop.f32.mrf.mxu0
      %v4991 = vadd.f32 0.0, %v4990
      %4992 = vmatmul.bf16.gmra.mxu0 %v4910
      %v4993 = vpop.f32.mrf.mxu0
      %v4994 = vadd.f32 0.0, %v4993
      %v4995 = vpop.f32.mrf.mxu0
      %v4996 = vadd.f32 0.0, %v4995
      %4997 = vmatmul.bf16.gmra.mxu0 %v4913
      %v4998 = vpop.f32.mrf.mxu0
      %v4999 = vadd.f32 0.0, %v4998
      %v5000 = vpop.f32.mrf.mxu0
      %v5001 = vadd.f32 0.0, %v5000
      %5002 = vmatmul.bf16.gmra.mxu0 %v4916
      %v5003 = vpop.f32.mrf.mxu0
      %v5004 = vadd.f32 0.0, %v5003
      %v5005 = vpop.f32.mrf.mxu0
      %v5006 = vadd.f32 0.0, %v5005
      %5007 = vmatmul.bf16.gmra.mxu0 %v4919
      %v5008 = vpop.f32.mrf.mxu0
      %v5009 = vadd.f32 0.0, %v5008
      %v5010 = vpop.f32.mrf.mxu0
      %v5011 = vadd.f32 0.0, %v5010
      %5012 = vdwg.mxu0
      %v5013 = vadd.f32 %v4723, %v4934
      %v5014 = vadd.f32 %v4724, %v4936
      %v5015 = vadd.f32 %v4725, %v4939
      %v5016 = vadd.f32 %v4726, %v4941
      %v5017 = vadd.f32 %v4727, %v4944
      %v5018 = vadd.f32 %v4728, %v4946
      %v5019 = vadd.f32 %v4729, %v4949
      %v5020 = vadd.f32 %v4730, %v4951
      %v5021 = vadd.f32 %v4731, %v4954
      %v5022 = vadd.f32 %v4732, %v4956
      %v5023 = vadd.f32 %v4733, %v4959
      %v5024 = vadd.f32 %v4734, %v4961
      %v5025 = vadd.f32 %v4735, %v4964
      %v5026 = vadd.f32 %v4736, %v4966
      %v5027 = vadd.f32 %v4737, %v4969
      %v5028 = vadd.f32 %v4738, %v4971
      %v5029 = vadd.f32 %v4739, %v4974
      %v5030 = vadd.f32 %v4740, %v4976
      %v5031 = vadd.f32 %v4741, %v4979
      %v5032 = vadd.f32 %v4742, %v4981
      %v5033 = vadd.f32 %v4743, %v4984
      %v5034 = vadd.f32 %v4744, %v4986
      %v5035 = vadd.f32 %v4745, %v4989
      %v5036 = vadd.f32 %v4746, %v4991
      %v5037 = vadd.f32 %v4747, %v4994
      %v5038 = vadd.f32 %v4748, %v4996
      %v5039 = vadd.f32 %v4749, %v4999
      %v5040 = vadd.f32 %v4750, %v5001
      %v5041 = vadd.f32 %v4751, %v5004
      %v5042 = vadd.f32 %v4752, %v5006
      %v5043 = vadd.f32 %v4753, %v5009
      %v5044 = vadd.f32 %v4754, %v5011
      %v5045 = vld [vmem:[%s4758] sm:$0xf]
      %v5046 = vld [vmem:[%s4758 + $0x4] sm:$0xf]
      %v5047 = vld [vmem:[%s4758 + $0x8] sm:$0x1]
      %v5048 = vld [vmem:[%s4758 + $0xc] sm:$0xf]
      %v5049 = vld [vmem:[%s4758 + $0x10] sm:$0xf]
      %v5050 = vld [vmem:[%s4758 + $0x14] sm:$0x1]
      %v5051 = vld [vmem:[%s4758 + $0x18] sm:$0xf]
      %v5052 = vld [vmem:[%s4758 + $0x1c] sm:$0xf]
      %v5053 = vld [vmem:[%s4758 + $0x20] sm:$0x1]
      %v5054 = vld [vmem:[%s4758 + $0x24] sm:$0xf]
      %v5055 = vld [vmem:[%s4758 + $0x28] sm:$0xf]
      %v5056 = vld [vmem:[%s4758 + $0x2c] sm:$0x1]
      %v5057 = vld [vmem:[%s4758 + $0x30] sm:$0xf]
      %v5058 = vld [vmem:[%s4758 + $0x34] sm:$0xf]
      %v5059 = vld [vmem:[%s4758 + $0x38] sm:$0x1]
      %v5060 = vld [vmem:[%s4758 + $0x3c] sm:$0xf]
      %v5061 = vld [vmem:[%s4758 + $0x40] sm:$0xf]
      %v5062 = vld [vmem:[%s4758 + $0x44] sm:$0x1]
      %v5063 = vld [vmem:[%s4758 + $0x48] sm:$0xf]
      %v5064 = vld [vmem:[%s4758 + $0x4c] sm:$0xf]
      %v5065 = vld [vmem:[%s4758 + $0x50] sm:$0x1]
      %v5066 = vld [vmem:[%s4758 + $0x54] sm:$0xf]
      %v5067 = vld [vmem:[%s4758 + $0x58] sm:$0xf]
      %v5068 = vld [vmem:[%s4758 + $0x5c] sm:$0x1]
      %v5069 = vld [vmem:[%s4758 + $0x60] sm:$0xf]
      %v5070 = vld [vmem:[%s4758 + $0x64] sm:$0xf]
      %v5071 = vld [vmem:[%s4758 + $0x68] sm:$0x1]
      %v5072 = vld [vmem:[%s4758 + $0x6c] sm:$0xf]
      %v5073 = vld [vmem:[%s4758 + $0x70] sm:$0xf]
      %v5074 = vld [vmem:[%s4758 + $0x74] sm:$0x1]
      %v5075 = vld [vmem:[%s4758 + $0x78] sm:$0xf]
      %v5076 = vld [vmem:[%s4758 + $0x7c] sm:$0xf]
      %v5077 = vld [vmem:[%s4758 + $0x80] sm:$0x1]
      %v5078 = vld [vmem:[%s4758 + $0x84] sm:$0xf]
      %v5079 = vld [vmem:[%s4758 + $0x88] sm:$0xf]
      %v5080 = vld [vmem:[%s4758 + $0x8c] sm:$0x1]
      %v5081 = vld [vmem:[%s4758 + $0x90] sm:$0xf]
      %v5082 = vld [vmem:[%s4758 + $0x94] sm:$0xf]
      %v5083 = vld [vmem:[%s4758 + $0x98] sm:$0x1]
      %v5084 = vld [vmem:[%s4758 + $0x9c] sm:$0xf]
      %v5085 = vld [vmem:[%s4758 + $0xa0] sm:$0xf]
      %v5086 = vld [vmem:[%s4758 + $0xa4] sm:$0x1]
      %v5087 = vld [vmem:[%s4758 + $0xa8] sm:$0xf]
      %v5088 = vld [vmem:[%s4758 + $0xac] sm:$0xf]
      %v5089 = vld [vmem:[%s4758 + $0xb0] sm:$0x1]
      %v5090 = vld [vmem:[%s4758 + $0xb4] sm:$0xf]
      %v5091 = vld [vmem:[%s4758 + $0xb8] sm:$0xf]
      %v5092 = vld [vmem:[%s4758 + $0xbc] sm:$0x1]
      %v5094 = vshrl.u32 %v5045, 16
      %v5096 = vrot.slane %v5094, 4
      %v5097 = vshll.u32 %v5045, 16
      %v5099 = vrot.slane %v5097, 5
      %v5100 = vor.u32 %v5096, %v5099
      %v5101 = vrot.slane %v5100, 4
      %v5103 = vshll.u32 %v5046, 16
      %v5105 = vrot.slane %v5103, 5
      %v5106 = vsel %vm249, %v5101, %v5105
      %v5107 = vshrl.u32 %v5046, 16
      %v5109 = vrot.slane %v5107, 4
      %v5110 = vor.u32 %v5109, %v5105
      %v5111 = vrot.slane %v5110, 4
      %v5113 = vshll.u32 %v5047, 16
      %v5115 = vrot.slane %v5113, 5
      %v5116 = vsel %vm249, %v5111, %v5115
      %v5118 = vshrl.u32 %v5048, 16
      %v5120 = vrot.slane %v5118, 4
      %v5121 = vshll.u32 %v5048, 16
      %v5123 = vrot.slane %v5121, 5
      %v5124 = vor.u32 %v5120, %v5123
      %v5125 = vrot.slane %v5124, 4
      %v5127 = vshll.u32 %v5049, 16
      %v5129 = vrot.slane %v5127, 5
      %v5130 = vsel %vm249, %v5125, %v5129
      %v5131 = vshrl.u32 %v5049, 16
      %v5133 = vrot.slane %v5131, 4
      %v5134 = vor.u32 %v5133, %v5129
      %v5135 = vrot.slane %v5134, 4
      %v5137 = vshll.u32 %v5050, 16
      %v5139 = vrot.slane %v5137, 5
      %v5140 = vsel %vm249, %v5135, %v5139
      %v5142 = vshrl.u32 %v5051, 16
      %v5144 = vrot.slane %v5142, 4
      %v5145 = vshll.u32 %v5051, 16
      %v5147 = vrot.slane %v5145, 5
      %v5148 = vor.u32 %v5144, %v5147
      %v5149 = vrot.slane %v5148, 4
      %v5151 = vshll.u32 %v5052, 16
      %v5153 = vrot.slane %v5151, 5
      %v5154 = vsel %vm249, %v5149, %v5153
      %v5155 = vshrl.u32 %v5052, 16
      %v5157 = vrot.slane %v5155, 4
      %v5158 = vor.u32 %v5157, %v5153
      %v5159 = vrot.slane %v5158, 4
      %v5161 = vshll.u32 %v5053, 16
      %v5163 = vrot.slane %v5161, 5
      %v5164 = vsel %vm249, %v5159, %v5163
      %v5166 = vshrl.u32 %v5054, 16
      %v5168 = vrot.slane %v5166, 4
      %v5169 = vshll.u32 %v5054, 16
      %v5171 = vrot.slane %v5169, 5
      %v5172 = vor.u32 %v5168, %v5171
      %v5173 = vrot.slane %v5172, 4
      %v5175 = vshll.u32 %v5055, 16
      %v5177 = vrot.slane %v5175, 5
      %v5178 = vsel %vm249, %v5173, %v5177
      %v5179 = vshrl.u32 %v5055, 16
      %v5181 = vrot.slane %v5179, 4
      %v5182 = vor.u32 %v5181, %v5177
      %v5183 = vrot.slane %v5182, 4
      %v5185 = vshll.u32 %v5056, 16
      %v5187 = vrot.slane %v5185, 5
      %v5188 = vsel %vm249, %v5183, %v5187
      %v5190 = vshrl.u32 %v5057, 16
      %v5192 = vrot.slane %v5190, 4
      %v5193 = vshll.u32 %v5057, 16
      %v5195 = vrot.slane %v5193, 5
      %v5196 = vor.u32 %v5192, %v5195
      %v5197 = vrot.slane %v5196, 4
      %v5199 = vshll.u32 %v5058, 16
      %v5201 = vrot.slane %v5199, 5
      %v5202 = vsel %vm249, %v5197, %v5201
      %v5203 = vshrl.u32 %v5058, 16
      %v5205 = vrot.slane %v5203, 4
      %v5206 = vor.u32 %v5205, %v5201
      %v5207 = vrot.slane %v5206, 4
      %v5209 = vshll.u32 %v5059, 16
      %v5211 = vrot.slane %v5209, 5
      %v5212 = vsel %vm249, %v5207, %v5211
      %v5214 = vshrl.u32 %v5060, 16
      %v5216 = vrot.slane %v5214, 4
      %v5217 = vshll.u32 %v5060, 16
      %v5219 = vrot.slane %v5217, 5
      %v5220 = vor.u32 %v5216, %v5219
      %v5221 = vrot.slane %v5220, 4
      %v5223 = vshll.u32 %v5061, 16
      %v5225 = vrot.slane %v5223, 5
      %v5226 = vsel %vm249, %v5221, %v5225
      %v5227 = vshrl.u32 %v5061, 16
      %v5229 = vrot.slane %v5227, 4
      %v5230 = vor.u32 %v5229, %v5225
      %v5231 = vrot.slane %v5230, 4
      %v5233 = vshll.u32 %v5062, 16
      %v5235 = vrot.slane %v5233, 5
      %v5236 = vsel %vm249, %v5231, %v5235
      %v5238 = vshrl.u32 %v5063, 16
      %v5240 = vrot.slane %v5238, 4
      %v5241 = vshll.u32 %v5063, 16
      %v5243 = vrot.slane %v5241, 5
      %v5244 = vor.u32 %v5240, %v5243
      %v5245 = vrot.slane %v5244, 4
      %v5247 = vshll.u32 %v5064, 16
      %v5249 = vrot.slane %v5247, 5
      %v5250 = vsel %vm249, %v5245, %v5249
      %v5251 = vshrl.u32 %v5064, 16
      %v5253 = vrot.slane %v5251, 4
      %v5254 = vor.u32 %v5253, %v5249
      %v5255 = vrot.slane %v5254, 4
      %v5257 = vshll.u32 %v5065, 16
      %v5259 = vrot.slane %v5257, 5
      %v5260 = vsel %vm249, %v5255, %v5259
      %v5262 = vshrl.u32 %v5066, 16
      %v5264 = vrot.slane %v5262, 4
      %v5265 = vshll.u32 %v5066, 16
      %v5267 = vrot.slane %v5265, 5
      %v5268 = vor.u32 %v5264, %v5267
      %v5269 = vrot.slane %v5268, 4
      %v5271 = vshll.u32 %v5067, 16
      %v5273 = vrot.slane %v5271, 5
      %v5274 = vsel %vm249, %v5269, %v5273
      %v5275 = vshrl.u32 %v5067, 16
      %v5277 = vrot.slane %v5275, 4
      %v5278 = vor.u32 %v5277, %v5273
      %v5279 = vrot.slane %v5278, 4
      %v5281 = vshll.u32 %v5068, 16
      %v5283 = vrot.slane %v5281, 5
      %v5284 = vsel %vm249, %v5279, %v5283
      %v5286 = vshrl.u32 %v5069, 16
      %v5288 = vrot.slane %v5286, 4
      %v5289 = vshll.u32 %v5069, 16
      %v5291 = vrot.slane %v5289, 5
      %v5292 = vor.u32 %v5288, %v5291
      %v5293 = vrot.slane %v5292, 4
      %v5295 = vshll.u32 %v5070, 16
      %v5297 = vrot.slane %v5295, 5
      %v5298 = vsel %vm249, %v5293, %v5297
      %v5299 = vshrl.u32 %v5070, 16
      %v5301 = vrot.slane %v5299, 4
      %v5302 = vor.u32 %v5301, %v5297
      %v5303 = vrot.slane %v5302, 4
      %v5305 = vshll.u32 %v5071, 16
      %v5307 = vrot.slane %v5305, 5
      %v5308 = vsel %vm249, %v5303, %v5307
      %v5310 = vshrl.u32 %v5072, 16
      %v5312 = vrot.slane %v5310, 4
      %v5313 = vshll.u32 %v5072, 16
      %v5315 = vrot.slane %v5313, 5
      %v5316 = vor.u32 %v5312, %v5315
      %v5317 = vrot.slane %v5316, 4
      %v5319 = vshll.u32 %v5073, 16
      %v5321 = vrot.slane %v5319, 5
      %v5322 = vsel %vm249, %v5317, %v5321
      %v5323 = vshrl.u32 %v5073, 16
      %v5325 = vrot.slane %v5323, 4
      %v5326 = vor.u32 %v5325, %v5321
      %v5327 = vrot.slane %v5326, 4
      %v5329 = vshll.u32 %v5074, 16
      %v5331 = vrot.slane %v5329, 5
      %v5332 = vsel %vm249, %v5327, %v5331
      %v5334 = vshrl.u32 %v5075, 16
      %v5336 = vrot.slane %v5334, 4
      %v5337 = vshll.u32 %v5075, 16
      %v5339 = vrot.slane %v5337, 5
      %v5340 = vor.u32 %v5336, %v5339
      %v5341 = vrot.slane %v5340, 4
      %v5343 = vshll.u32 %v5076, 16
      %v5345 = vrot.slane %v5343, 5
      %v5346 = vsel %vm249, %v5341, %v5345
      %v5347 = vshrl.u32 %v5076, 16
      %v5349 = vrot.slane %v5347, 4
      %v5350 = vor.u32 %v5349, %v5345
      %v5351 = vrot.slane %v5350, 4
      %v5353 = vshll.u32 %v5077, 16
      %v5355 = vrot.slane %v5353, 5
      %v5356 = vsel %vm249, %v5351, %v5355
      %v5358 = vshrl.u32 %v5078, 16
      %v5360 = vrot.slane %v5358, 4
      %v5361 = vshll.u32 %v5078, 16
      %v5363 = vrot.slane %v5361, 5
      %v5364 = vor.u32 %v5360, %v5363
      %v5365 = vrot.slane %v5364, 4
      %v5367 = vshll.u32 %v5079, 16
      %v5369 = vrot.slane %v5367, 5
      %v5370 = vsel %vm249, %v5365, %v5369
      %v5371 = vshrl.u32 %v5079, 16
      %v5373 = vrot.slane %v5371, 4
      %v5374 = vor.u32 %v5373, %v5369
      %v5375 = vrot.slane %v5374, 4
      %v5377 = vshll.u32 %v5080, 16
      %v5379 = vrot.slane %v5377, 5
      %v5380 = vsel %vm249, %v5375, %v5379
      %v5382 = vshrl.u32 %v5081, 16
      %v5384 = vrot.slane %v5382, 4
      %v5385 = vshll.u32 %v5081, 16
      %v5387 = vrot.slane %v5385, 5
      %v5388 = vor.u32 %v5384, %v5387
      %v5389 = vrot.slane %v5388, 4
      %v5391 = vshll.u32 %v5082, 16
      %v5393 = vrot.slane %v5391, 5
      %v5394 = vsel %vm249, %v5389, %v5393
      %v5395 = vshrl.u32 %v5082, 16
      %v5397 = vrot.slane %v5395, 4
      %v5398 = vor.u32 %v5397, %v5393
      %v5399 = vrot.slane %v5398, 4
      %v5401 = vshll.u32 %v5083, 16
      %v5403 = vrot.slane %v5401, 5
      %v5404 = vsel %vm249, %v5399, %v5403
      %v5406 = vshrl.u32 %v5084, 16
      %v5408 = vrot.slane %v5406, 4
      %v5409 = vshll.u32 %v5084, 16
      %v5411 = vrot.slane %v5409, 5
      %v5412 = vor.u32 %v5408, %v5411
      %v5413 = vrot.slane %v5412, 4
      %v5415 = vshll.u32 %v5085, 16
      %v5417 = vrot.slane %v5415, 5
      %v5418 = vsel %vm249, %v5413, %v5417
      %v5419 = vshrl.u32 %v5085, 16
      %v5421 = vrot.slane %v5419, 4
      %v5422 = vor.u32 %v5421, %v5417
      %v5423 = vrot.slane %v5422, 4
      %v5425 = vshll.u32 %v5086, 16
      %v5427 = vrot.slane %v5425, 5
      %v5428 = vsel %vm249, %v5423, %v5427
      %v5430 = vshrl.u32 %v5087, 16
      %v5432 = vrot.slane %v5430, 4
      %v5433 = vshll.u32 %v5087, 16
      %v5435 = vrot.slane %v5433, 5
      %v5436 = vor.u32 %v5432, %v5435
      %v5437 = vrot.slane %v5436, 4
      %v5439 = vshll.u32 %v5088, 16
      %v5441 = vrot.slane %v5439, 5
      %v5442 = vsel %vm249, %v5437, %v5441
      %v5443 = vshrl.u32 %v5088, 16
      %v5445 = vrot.slane %v5443, 4
      %v5446 = vor.u32 %v5445, %v5441
      %v5447 = vrot.slane %v5446, 4
      %v5449 = vshll.u32 %v5089, 16
      %v5451 = vrot.slane %v5449, 5
      %v5452 = vsel %vm249, %v5447, %v5451
      %v5454 = vshrl.u32 %v5090, 16
      %v5456 = vrot.slane %v5454, 4
      %v5457 = vshll.u32 %v5090, 16
      %v5459 = vrot.slane %v5457, 5
      %v5460 = vor.u32 %v5456, %v5459
      %v5461 = vrot.slane %v5460, 4
      %v5463 = vshll.u32 %v5091, 16
      %v5465 = vrot.slane %v5463, 5
      %v5466 = vsel %vm249, %v5461, %v5465
      %v5467 = vshrl.u32 %v5091, 16
      %v5469 = vrot.slane %v5467, 4
      %v5470 = vor.u32 %v5469, %v5465
      %v5471 = vrot.slane %v5470, 4
      %v5473 = vshll.u32 %v5092, 16
      %v5475 = vrot.slane %v5473, 5
      %v5476 = vsel %vm249, %v5471, %v5475
      %s5477 = scalar_lea.vmem %s1, 22
      %v5478 = vld [vmem:[%s5477] sm:$0x3]
      %v5479 = vunpack.c.l.b16 %v5106
      %v5480 = vunpack.c.l.b16 %v5116
      %v5481 = vunpack.c.l.b16 %v5130
      %v5482 = vunpack.c.l.b16 %v5140
      %v5483 = vunpack.c.l.b16 %v5154
      %v5484 = vunpack.c.l.b16 %v5164
      %v5485 = vunpack.c.l.b16 %v5178
      %v5486 = vunpack.c.l.b16 %v5188
      %v5487 = vunpack.c.l.b16 %v5202
      %v5488 = vunpack.c.l.b16 %v5212
      %v5489 = vunpack.c.l.b16 %v5226
      %v5490 = vunpack.c.l.b16 %v5236
      %v5491 = vunpack.c.l.b16 %v5250
      %v5492 = vunpack.c.l.b16 %v5260
      %v5493 = vunpack.c.l.b16 %v5274
      %v5494 = vunpack.c.l.b16 %v5284
      %v5495 = vunpack.c.l.b16 %v5298
      %v5496 = vunpack.c.l.b16 %v5308
      %v5497 = vunpack.c.l.b16 %v5322
      %v5498 = vunpack.c.l.b16 %v5332
      %v5499 = vunpack.c.l.b16 %v5346
      %v5500 = vunpack.c.l.b16 %v5356
      %v5501 = vunpack.c.l.b16 %v5370
      %v5502 = vunpack.c.l.b16 %v5380
      %v5503 = vunpack.c.l.b16 %v5394
      %v5504 = vunpack.c.l.b16 %v5404
      %v5505 = vunpack.c.l.b16 %v5418
      %v5506 = vunpack.c.l.b16 %v5428
      %v5507 = vunpack.c.l.b16 %v5442
      %v5508 = vunpack.c.l.b16 %v5452
      %v5509 = vunpack.c.l.b16 %v5466
      %v5510 = vunpack.c.l.b16 %v5476
      %v5511 = vpack.c.b16 %v5480, %v5479
      %v5512 = vpack.c.b16 %v5482, %v5481
      %v5513 = vpack.c.b16 %v5484, %v5483
      %v5514 = vpack.c.b16 %v5486, %v5485
      %v5515 = vpack.c.b16 %v5488, %v5487
      %v5516 = vpack.c.b16 %v5490, %v5489
      %v5517 = vpack.c.b16 %v5492, %v5491
      %v5518 = vpack.c.b16 %v5494, %v5493
      %v5519 = vpack.c.b16 %v5496, %v5495
      %v5520 = vpack.c.b16 %v5498, %v5497
      %v5521 = vpack.c.b16 %v5500, %v5499
      %v5522 = vpack.c.b16 %v5502, %v5501
      %v5523 = vpack.c.b16 %v5504, %v5503
      %v5524 = vpack.c.b16 %v5506, %v5505
      %v5525 = vpack.c.b16 %v5508, %v5507
      %v5526 = vpack.c.b16 %v5510, %v5509
      %v5528 = vsel %vm684, %v5511, 0
      %v5531 = vsel %vm684, %v5512, 0
      %v5534 = vsel %vm684, %v5513, 0
      %v5537 = vsel %vm684, %v5514, 0
      %v5540 = vsel %vm684, %v5515, 0
      %v5543 = vsel %vm684, %v5516, 0
      %v5546 = vsel %vm684, %v5517, 0
      %v5549 = vsel %vm684, %v5518, 0
      %v5552 = vsel %vm684, %v5519, 0
      %v5555 = vsel %vm684, %v5520, 0
      %v5558 = vsel %vm684, %v5521, 0
      %v5561 = vsel %vm684, %v5522, 0
      %v5564 = vsel %vm684, %v5523, 0
      %v5567 = vsel %vm684, %v5524, 0
      %v5570 = vsel %vm684, %v5525, 0
      %v5573 = vsel %vm684, %v5526, 0
      %v5576 = vsel %vm733, %v5478, 0
      %5578 = vmatpush.bf16.msra.mxu0 0
      %5579 = vmatpush.bf16.msra.mxu0 0
      %5580 = vmatpush.bf16.msra.mxu0 0
      %5581 = vmatpush.bf16.msra.mxu0 0
      %5582 = vmatpush.bf16.msra.mxu0 0
      %5583 = vmatpush.bf16.msra.mxu0 0
      %5584 = vmatpush.bf16.msra.mxu0 0
      %5585 = vmatpush.bf16.msra.mxu0 %v5576
      %5586 = vmatmul.bf16.gmra.mxu0 %v5528
      %v5587 = vpop.f32.mrf.mxu0
      %v5588 = vadd.f32 0.0, %v5587
      %v5589 = vpop.f32.mrf.mxu0
      %v5590 = vadd.f32 0.0, %v5589
      %5591 = vmatmul.bf16.gmra.mxu0 %v5531
      %v5592 = vpop.f32.mrf.mxu0
      %v5593 = vadd.f32 0.0, %v5592
      %v5594 = vpop.f32.mrf.mxu0
      %v5595 = vadd.f32 0.0, %v5594
      %5596 = vmatmul.bf16.gmra.mxu0 %v5534
      %v5597 = vpop.f32.mrf.mxu0
      %v5598 = vadd.f32 0.0, %v5597
      %v5599 = vpop.f32.mrf.mxu0
      %v5600 = vadd.f32 0.0, %v5599
      %5601 = vmatmul.bf16.gmra.mxu0 %v5537
      %v5602 = vpop.f32.mrf.mxu0
      %v5603 = vadd.f32 0.0, %v5602
      %v5604 = vpop.f32.mrf.mxu0
      %v5605 = vadd.f32 0.0, %v5604
      %5606 = vmatmul.bf16.gmra.mxu0 %v5540
      %v5607 = vpop.f32.mrf.mxu0
      %v5608 = vadd.f32 0.0, %v5607
      %v5609 = vpop.f32.mrf.mxu0
      %v5610 = vadd.f32 0.0, %v5609
      %5611 = vmatmul.bf16.gmra.mxu0 %v5543
      %v5612 = vpop.f32.mrf.mxu0
      %v5613 = vadd.f32 0.0, %v5612
      %v5614 = vpop.f32.mrf.mxu0
      %v5615 = vadd.f32 0.0, %v5614
      %5616 = vmatmul.bf16.gmra.mxu0 %v5546
      %v5617 = vpop.f32.mrf.mxu0
      %v5618 = vadd.f32 0.0, %v5617
      %v5619 = vpop.f32.mrf.mxu0
      %v5620 = vadd.f32 0.0, %v5619
      %5621 = vmatmul.bf16.gmra.mxu0 %v5549
      %v5622 = vpop.f32.mrf.mxu0
      %v5623 = vadd.f32 0.0, %v5622
      %v5624 = vpop.f32.mrf.mxu0
      %v5625 = vadd.f32 0.0, %v5624
      %5626 = vmatmul.bf16.gmra.mxu0 %v5552
      %v5627 = vpop.f32.mrf.mxu0
      %v5628 = vadd.f32 0.0, %v5627
      %v5629 = vpop.f32.mrf.mxu0
      %v5630 = vadd.f32 0.0, %v5629
      %5631 = vmatmul.bf16.gmra.mxu0 %v5555
      %v5632 = vpop.f32.mrf.mxu0
      %v5633 = vadd.f32 0.0, %v5632
      %v5634 = vpop.f32.mrf.mxu0
      %v5635 = vadd.f32 0.0, %v5634
      %5636 = vmatmul.bf16.gmra.mxu0 %v5558
      %v5637 = vpop.f32.mrf.mxu0
      %v5638 = vadd.f32 0.0, %v5637
      %v5639 = vpop.f32.mrf.mxu0
      %v5640 = vadd.f32 0.0, %v5639
      %5641 = vmatmul.bf16.gmra.mxu0 %v5561
      %v5642 = vpop.f32.mrf.mxu0
      %v5643 = vadd.f32 0.0, %v5642
      %v5644 = vpop.f32.mrf.mxu0
      %v5645 = vadd.f32 0.0, %v5644
      %5646 = vmatmul.bf16.gmra.mxu0 %v5564
      %v5647 = vpop.f32.mrf.mxu0
      %v5648 = vadd.f32 0.0, %v5647
      %v5649 = vpop.f32.mrf.mxu0
      %v5650 = vadd.f32 0.0, %v5649
      %5651 = vmatmul.bf16.gmra.mxu0 %v5567
      %v5652 = vpop.f32.mrf.mxu0
      %v5653 = vadd.f32 0.0, %v5652
      %v5654 = vpop.f32.mrf.mxu0
      %v5655 = vadd.f32 0.0, %v5654
      %5656 = vmatmul.bf16.gmra.mxu0 %v5570
      %v5657 = vpop.f32.mrf.mxu0
      %v5658 = vadd.f32 0.0, %v5657
      %v5659 = vpop.f32.mrf.mxu0
      %v5660 = vadd.f32 0.0, %v5659
      %5661 = vmatmul.bf16.gmra.mxu0 %v5573
      %v5662 = vpop.f32.mrf.mxu0
      %v5663 = vadd.f32 0.0, %v5662
      %v5664 = vpop.f32.mrf.mxu0
      %v5665 = vadd.f32 0.0, %v5664
      %5666 = vdwg.mxu0
      %v5667 = vadd.f32 %v5013, %v5588
      %v5668 = vadd.f32 %v5014, %v5590
      %v5669 = vadd.f32 %v5015, %v5593
      %v5670 = vadd.f32 %v5016, %v5595
      %v5671 = vadd.f32 %v5017, %v5598
      %v5672 = vadd.f32 %v5018, %v5600
      %v5673 = vadd.f32 %v5019, %v5603
      %v5674 = vadd.f32 %v5020, %v5605
      %v5675 = vadd.f32 %v5021, %v5608
      %v5676 = vadd.f32 %v5022, %v5610
      %v5677 = vadd.f32 %v5023, %v5613
      %v5678 = vadd.f32 %v5024, %v5615
      %v5679 = vadd.f32 %v5025, %v5618
      %v5680 = vadd.f32 %v5026, %v5620
      %v5681 = vadd.f32 %v5027, %v5623
      %v5682 = vadd.f32 %v5028, %v5625
      %v5683 = vadd.f32 %v5029, %v5628
      %v5684 = vadd.f32 %v5030, %v5630
      %v5685 = vadd.f32 %v5031, %v5633
      %v5686 = vadd.f32 %v5032, %v5635
      %v5687 = vadd.f32 %v5033, %v5638
      %v5688 = vadd.f32 %v5034, %v5640
      %v5689 = vadd.f32 %v5035, %v5643
      %v5690 = vadd.f32 %v5036, %v5645
      %v5691 = vadd.f32 %v5037, %v5648
      %v5692 = vadd.f32 %v5038, %v5650
      %v5693 = vadd.f32 %v5039, %v5653
      %v5694 = vadd.f32 %v5040, %v5655
      %v5695 = vadd.f32 %v5041, %v5658
      %v5696 = vadd.f32 %v5042, %v5660
      %v5697 = vadd.f32 %v5043, %v5663
      %v5698 = vadd.f32 %v5044, %v5665
      %v5699 = vld [vmem:[%s4758] sm:$0xe]
      %v5700 = vld [vmem:[%s4758 + $0xc] sm:$0xe]
      %v5701 = vld [vmem:[%s4758 + $0x18] sm:$0xe]
      %v5702 = vld [vmem:[%s4758 + $0x24] sm:$0xe]
      %v5703 = vld [vmem:[%s4758 + $0x30] sm:$0xe]
      %v5704 = vld [vmem:[%s4758 + $0x3c] sm:$0xe]
      %v5705 = vld [vmem:[%s4758 + $0x48] sm:$0xe]
      %v5706 = vld [vmem:[%s4758 + $0x54] sm:$0xe]
      %v5707 = vld [vmem:[%s4758 + $0x60] sm:$0xe]
      %v5708 = vld [vmem:[%s4758 + $0x6c] sm:$0xe]
      %v5709 = vld [vmem:[%s4758 + $0x78] sm:$0xe]
      %v5710 = vld [vmem:[%s4758 + $0x84] sm:$0xe]
      %v5711 = vld [vmem:[%s4758 + $0x90] sm:$0xe]
      %v5712 = vld [vmem:[%s4758 + $0x9c] sm:$0xe]
      %v5713 = vld [vmem:[%s4758 + $0xa8] sm:$0xe]
      %v5714 = vld [vmem:[%s4758 + $0xb4] sm:$0xe]
      %v5763 = vrot.slane %v5699, 5
      %v5764 = vrot.slane %v5763, 4
      %v5765 = vrot.slane %v5046, 5
      %v5766 = vsel %vm1096, %v5764, %v5765
      %v5767 = vrot.slane %v5765, 4
      %v5768 = vrot.slane %v5047, 5
      %v5769 = vsel %vm1096, %v5767, %v5768
      %v5770 = vrot.slane %v5700, 5
      %v5771 = vrot.slane %v5770, 4
      %v5772 = vrot.slane %v5049, 5
      %v5773 = vsel %vm1096, %v5771, %v5772
      %v5774 = vrot.slane %v5772, 4
      %v5775 = vrot.slane %v5050, 5
      %v5776 = vsel %vm1096, %v5774, %v5775
      %v5777 = vrot.slane %v5701, 5
      %v5778 = vrot.slane %v5777, 4
      %v5779 = vrot.slane %v5052, 5
      %v5780 = vsel %vm1096, %v5778, %v5779
      %v5781 = vrot.slane %v5779, 4
      %v5782 = vrot.slane %v5053, 5
      %v5783 = vsel %vm1096, %v5781, %v5782
      %v5784 = vrot.slane %v5702, 5
      %v5785 = vrot.slane %v5784, 4
      %v5786 = vrot.slane %v5055, 5
      %v5787 = vsel %vm1096, %v5785, %v5786
      %v5788 = vrot.slane %v5786, 4
      %v5789 = vrot.slane %v5056, 5
      %v5790 = vsel %vm1096, %v5788, %v5789
      %v5791 = vrot.slane %v5703, 5
      %v5792 = vrot.slane %v5791, 4
      %v5793 = vrot.slane %v5058, 5
      %v5794 = vsel %vm1096, %v5792, %v5793
      %v5795 = vrot.slane %v5793, 4
      %v5796 = vrot.slane %v5059, 5
      %v5797 = vsel %vm1096, %v5795, %v5796
      %v5798 = vrot.slane %v5704, 5
      %v5799 = vrot.slane %v5798, 4
      %v5800 = vrot.slane %v5061, 5
      %v5801 = vsel %vm1096, %v5799, %v5800
      %v5802 = vrot.slane %v5800, 4
      %v5803 = vrot.slane %v5062, 5
      %v5804 = vsel %vm1096, %v5802, %v5803
      %v5805 = vrot.slane %v5705, 5
      %v5806 = vrot.slane %v5805, 4
      %v5807 = vrot.slane %v5064, 5
      %v5808 = vsel %vm1096, %v5806, %v5807
      %v5809 = vrot.slane %v5807, 4
      %v5810 = vrot.slane %v5065, 5
      %v5811 = vsel %vm1096, %v5809, %v5810
      %v5812 = vrot.slane %v5706, 5
      %v5813 = vrot.slane %v5812, 4
      %v5814 = vrot.slane %v5067, 5
      %v5815 = vsel %vm1096, %v5813, %v5814
      %v5816 = vrot.slane %v5814, 4
      %v5817 = vrot.slane %v5068, 5
      %v5818 = vsel %vm1096, %v5816, %v5817
      %v5819 = vrot.slane %v5707, 5
      %v5820 = vrot.slane %v5819, 4
      %v5821 = vrot.slane %v5070, 5
      %v5822 = vsel %vm1096, %v5820, %v5821
      %v5823 = vrot.slane %v5821, 4
      %v5824 = vrot.slane %v5071, 5
      %v5825 = vsel %vm1096, %v5823, %v5824
      %v5826 = vrot.slane %v5708, 5
      %v5827 = vrot.slane %v5826, 4
      %v5828 = vrot.slane %v5073, 5
      %v5829 = vsel %vm1096, %v5827, %v5828
      %v5830 = vrot.slane %v5828, 4
      %v5831 = vrot.slane %v5074, 5
      %v5832 = vsel %vm1096, %v5830, %v5831
      %v5833 = vrot.slane %v5709, 5
      %v5834 = vrot.slane %v5833, 4
      %v5835 = vrot.slane %v5076, 5
      %v5836 = vsel %vm1096, %v5834, %v5835
      %v5837 = vrot.slane %v5835, 4
      %v5838 = vrot.slane %v5077, 5
      %v5839 = vsel %vm1096, %v5837, %v5838
      %v5840 = vrot.slane %v5710, 5
      %v5841 = vrot.slane %v5840, 4
      %v5842 = vrot.slane %v5079, 5
      %v5843 = vsel %vm1096, %v5841, %v5842
      %v5844 = vrot.slane %v5842, 4
      %v5845 = vrot.slane %v5080, 5
      %v5846 = vsel %vm1096, %v5844, %v5845
      %v5847 = vrot.slane %v5711, 5
      %v5848 = vrot.slane %v5847, 4
      %v5849 = vrot.slane %v5082, 5
      %v5850 = vsel %vm1096, %v5848, %v5849
      %v5851 = vrot.slane %v5849, 4
      %v5852 = vrot.slane %v5083, 5
      %v5853 = vsel %vm1096, %v5851, %v5852
      %v5854 = vrot.slane %v5712, 5
      %v5855 = vrot.slane %v5854, 4
      %v5856 = vrot.slane %v5085, 5
      %v5857 = vsel %vm1096, %v5855, %v5856
      %v5858 = vrot.slane %v5856, 4
      %v5859 = vrot.slane %v5086, 5
      %v5860 = vsel %vm1096, %v5858, %v5859
      %v5861 = vrot.slane %v5713, 5
      %v5862 = vrot.slane %v5861, 4
      %v5863 = vrot.slane %v5088, 5
      %v5864 = vsel %vm1096, %v5862, %v5863
      %v5865 = vrot.slane %v5863, 4
      %v5866 = vrot.slane %v5089, 5
      %v5867 = vsel %vm1096, %v5865, %v5866
      %v5868 = vrot.slane %v5714, 5
      %v5869 = vrot.slane %v5868, 4
      %v5870 = vrot.slane %v5091, 5
      %v5871 = vsel %vm1096, %v5869, %v5870
      %v5872 = vrot.slane %v5870, 4
      %v5873 = vrot.slane %v5092, 5
      %v5874 = vsel %vm1096, %v5872, %v5873
      %s5875 = scalar_lea.vmem %s1, 24
      %v5876 = vld [vmem:[%s5875] sm:$0x3]
      %v5877 = vunpack.c.l.b16 %v5766
      %v5878 = vunpack.c.l.b16 %v5769
      %v5879 = vunpack.c.l.b16 %v5773
      %v5880 = vunpack.c.l.b16 %v5776
      %v5881 = vunpack.c.l.b16 %v5780
      %v5882 = vunpack.c.l.b16 %v5783
      %v5883 = vunpack.c.l.b16 %v5787
      %v5884 = vunpack.c.l.b16 %v5790
      %v5885 = vunpack.c.l.b16 %v5794
      %v5886 = vunpack.c.l.b16 %v5797
      %v5887 = vunpack.c.l.b16 %v5801
      %v5888 = vunpack.c.l.b16 %v5804
      %v5889 = vunpack.c.l.b16 %v5808
      %v5890 = vunpack.c.l.b16 %v5811
      %v5891 = vunpack.c.l.b16 %v5815
      %v5892 = vunpack.c.l.b16 %v5818
      %v5893 = vunpack.c.l.b16 %v5822
      %v5894 = vunpack.c.l.b16 %v5825
      %v5895 = vunpack.c.l.b16 %v5829
      %v5896 = vunpack.c.l.b16 %v5832
      %v5897 = vunpack.c.l.b16 %v5836
      %v5898 = vunpack.c.l.b16 %v5839
      %v5899 = vunpack.c.l.b16 %v5843
      %v5900 = vunpack.c.l.b16 %v5846
      %v5901 = vunpack.c.l.b16 %v5850
      %v5902 = vunpack.c.l.b16 %v5853
      %v5903 = vunpack.c.l.b16 %v5857
      %v5904 = vunpack.c.l.b16 %v5860
      %v5905 = vunpack.c.l.b16 %v5864
      %v5906 = vunpack.c.l.b16 %v5867
      %v5907 = vunpack.c.l.b16 %v5871
      %v5908 = vunpack.c.l.b16 %v5874
      %v5909 = vpack.c.b16 %v5878, %v5877
      %v5910 = vpack.c.b16 %v5880, %v5879
      %v5911 = vpack.c.b16 %v5882, %v5881
      %v5912 = vpack.c.b16 %v5884, %v5883
      %v5913 = vpack.c.b16 %v5886, %v5885
      %v5914 = vpack.c.b16 %v5888, %v5887
      %v5915 = vpack.c.b16 %v5890, %v5889
      %v5916 = vpack.c.b16 %v5892, %v5891
      %v5917 = vpack.c.b16 %v5894, %v5893
      %v5918 = vpack.c.b16 %v5896, %v5895
      %v5919 = vpack.c.b16 %v5898, %v5897
      %v5920 = vpack.c.b16 %v5900, %v5899
      %v5921 = vpack.c.b16 %v5902, %v5901
      %v5922 = vpack.c.b16 %v5904, %v5903
      %v5923 = vpack.c.b16 %v5906, %v5905
      %v5924 = vpack.c.b16 %v5908, %v5907
      %v5926 = vsel %vm684, %v5909, 0
      %v5929 = vsel %vm684, %v5910, 0
      %v5932 = vsel %vm684, %v5911, 0
      %v5935 = vsel %vm684, %v5912, 0
      %v5938 = vsel %vm684, %v5913, 0
      %v5941 = vsel %vm684, %v5914, 0
      %v5944 = vsel %vm684, %v5915, 0
      %v5947 = vsel %vm684, %v5916, 0
      %v5950 = vsel %vm684, %v5917, 0
      %v5953 = vsel %vm684, %v5918, 0
      %v5956 = vsel %vm684, %v5919, 0
      %v5959 = vsel %vm684, %v5920, 0
      %v5962 = vsel %vm684, %v5921, 0
      %v5965 = vsel %vm684, %v5922, 0
      %v5968 = vsel %vm684, %v5923, 0
      %v5971 = vsel %vm684, %v5924, 0
      %v5974 = vsel %vm733, %v5876, 0
      %5976 = vmatpush.bf16.msra.mxu0 0
      %5977 = vmatpush.bf16.msra.mxu0 0
      %5978 = vmatpush.bf16.msra.mxu0 0
      %5979 = vmatpush.bf16.msra.mxu0 0
      %5980 = vmatpush.bf16.msra.mxu0 0
      %5981 = vmatpush.bf16.msra.mxu0 0
      %5982 = vmatpush.bf16.msra.mxu0 0
      %5983 = vmatpush.bf16.msra.mxu0 %v5974
      %5984 = vmatmul.bf16.gmra.mxu0 %v5926
      %v5985 = vpop.f32.mrf.mxu0
      %v5986 = vadd.f32 0.0, %v5985
      %v5987 = vpop.f32.mrf.mxu0
      %v5988 = vadd.f32 0.0, %v5987
      %5989 = vmatmul.bf16.gmra.mxu0 %v5929
      %v5990 = vpop.f32.mrf.mxu0
      %v5991 = vadd.f32 0.0, %v5990
      %v5992 = vpop.f32.mrf.mxu0
      %v5993 = vadd.f32 0.0, %v5992
      %5994 = vmatmul.bf16.gmra.mxu0 %v5932
      %v5995 = vpop.f32.mrf.mxu0
      %v5996 = vadd.f32 0.0, %v5995
      %v5997 = vpop.f32.mrf.mxu0
      %v5998 = vadd.f32 0.0, %v5997
      %5999 = vmatmul.bf16.gmra.mxu0 %v5935
      %v6000 = vpop.f32.mrf.mxu0
      %v6001 = vadd.f32 0.0, %v6000
      %v6002 = vpop.f32.mrf.mxu0
      %v6003 = vadd.f32 0.0, %v6002
      %6004 = vmatmul.bf16.gmra.mxu0 %v5938
      %v6005 = vpop.f32.mrf.mxu0
      %v6006 = vadd.f32 0.0, %v6005
      %v6007 = vpop.f32.mrf.mxu0
      %v6008 = vadd.f32 0.0, %v6007
      %6009 = vmatmul.bf16.gmra.mxu0 %v5941
      %v6010 = vpop.f32.mrf.mxu0
      %v6011 = vadd.f32 0.0, %v6010
      %v6012 = vpop.f32.mrf.mxu0
      %v6013 = vadd.f32 0.0, %v6012
      %6014 = vmatmul.bf16.gmra.mxu0 %v5944
      %v6015 = vpop.f32.mrf.mxu0
      %v6016 = vadd.f32 0.0, %v6015
      %v6017 = vpop.f32.mrf.mxu0
      %v6018 = vadd.f32 0.0, %v6017
      %6019 = vmatmul.bf16.gmra.mxu0 %v5947
      %v6020 = vpop.f32.mrf.mxu0
      %v6021 = vadd.f32 0.0, %v6020
      %v6022 = vpop.f32.mrf.mxu0
      %v6023 = vadd.f32 0.0, %v6022
      %6024 = vmatmul.bf16.gmra.mxu0 %v5950
      %v6025 = vpop.f32.mrf.mxu0
      %v6026 = vadd.f32 0.0, %v6025
      %v6027 = vpop.f32.mrf.mxu0
      %v6028 = vadd.f32 0.0, %v6027
      %6029 = vmatmul.bf16.gmra.mxu0 %v5953
      %v6030 = vpop.f32.mrf.mxu0
      %v6031 = vadd.f32 0.0, %v6030
      %v6032 = vpop.f32.mrf.mxu0
      %v6033 = vadd.f32 0.0, %v6032
      %6034 = vmatmul.bf16.gmra.mxu0 %v5956
      %v6035 = vpop.f32.mrf.mxu0
      %v6036 = vadd.f32 0.0, %v6035
      %v6037 = vpop.f32.mrf.mxu0
      %v6038 = vadd.f32 0.0, %v6037
      %6039 = vmatmul.bf16.gmra.mxu0 %v5959
      %v6040 = vpop.f32.mrf.mxu0
      %v6041 = vadd.f32 0.0, %v6040
      %v6042 = vpop.f32.mrf.mxu0
      %v6043 = vadd.f32 0.0, %v6042
      %6044 = vmatmul.bf16.gmra.mxu0 %v5962
      %v6045 = vpop.f32.mrf.mxu0
      %v6046 = vadd.f32 0.0, %v6045
      %v6047 = vpop.f32.mrf.mxu0
      %v6048 = vadd.f32 0.0, %v6047
      %6049 = vmatmul.bf16.gmra.mxu0 %v5965
      %v6050 = vpop.f32.mrf.mxu0
      %v6051 = vadd.f32 0.0, %v6050
      %v6052 = vpop.f32.mrf.mxu0
      %v6053 = vadd.f32 0.0, %v6052
      %6054 = vmatmul.bf16.gmra.mxu0 %v5968
      %v6055 = vpop.f32.mrf.mxu0
      %v6056 = vadd.f32 0.0, %v6055
      %v6057 = vpop.f32.mrf.mxu0
      %v6058 = vadd.f32 0.0, %v6057
      %6059 = vmatmul.bf16.gmra.mxu0 %v5971
      %v6060 = vpop.f32.mrf.mxu0
      %v6061 = vadd.f32 0.0, %v6060
      %v6062 = vpop.f32.mrf.mxu0
      %v6063 = vadd.f32 0.0, %v6062
      %6064 = vdwg.mxu0
      %v6065 = vadd.f32 %v5667, %v5986
      %v6066 = vadd.f32 %v5668, %v5988
      %v6067 = vadd.f32 %v5669, %v5991
      %v6068 = vadd.f32 %v5670, %v5993
      %v6069 = vadd.f32 %v5671, %v5996
      %v6070 = vadd.f32 %v5672, %v5998
      %v6071 = vadd.f32 %v5673, %v6001
      %v6072 = vadd.f32 %v5674, %v6003
      %v6073 = vadd.f32 %v5675, %v6006
      %v6074 = vadd.f32 %v5676, %v6008
      %v6075 = vadd.f32 %v5677, %v6011
      %v6076 = vadd.f32 %v5678, %v6013
      %v6077 = vadd.f32 %v5679, %v6016
      %v6078 = vadd.f32 %v5680, %v6018
      %v6079 = vadd.f32 %v5681, %v6021
      %v6080 = vadd.f32 %v5682, %v6023
      %v6081 = vadd.f32 %v5683, %v6026
      %v6082 = vadd.f32 %v5684, %v6028
      %v6083 = vadd.f32 %v5685, %v6031
      %v6084 = vadd.f32 %v5686, %v6033
      %v6085 = vadd.f32 %v5687, %v6036
      %v6086 = vadd.f32 %v5688, %v6038
      %v6087 = vadd.f32 %v5689, %v6041
      %v6088 = vadd.f32 %v5690, %v6043
      %v6089 = vadd.f32 %v5691, %v6046
      %v6090 = vadd.f32 %v5692, %v6048
      %v6091 = vadd.f32 %v5693, %v6051
      %v6092 = vadd.f32 %v5694, %v6053
      %v6093 = vadd.f32 %v5695, %v6056
      %v6094 = vadd.f32 %v5696, %v6058
      %v6095 = vadd.f32 %v5697, %v6061
      %v6096 = vadd.f32 %v5698, %v6063
      %v6097 = vld [vmem:[%s4758 + $0x8] sm:$0x3]
      %v6098 = vld [vmem:[%s4758 + $0x14] sm:$0x3]
      %v6099 = vld [vmem:[%s4758 + $0x20] sm:$0x3]
      %v6100 = vld [vmem:[%s4758 + $0x2c] sm:$0x3]
      %v6101 = vld [vmem:[%s4758 + $0x38] sm:$0x3]
      %v6102 = vld [vmem:[%s4758 + $0x44] sm:$0x3]
      %v6103 = vld [vmem:[%s4758 + $0x50] sm:$0x3]
      %v6104 = vld [vmem:[%s4758 + $0x5c] sm:$0x3]
      %v6105 = vld [vmem:[%s4758 + $0x68] sm:$0x3]
      %v6106 = vld [vmem:[%s4758 + $0x74] sm:$0x3]
      %v6107 = vld [vmem:[%s4758 + $0x80] sm:$0x3]
      %v6108 = vld [vmem:[%s4758 + $0x8c] sm:$0x3]
      %v6109 = vld [vmem:[%s4758 + $0x98] sm:$0x3]
      %v6110 = vld [vmem:[%s4758 + $0xa4] sm:$0x3]
      %v6111 = vld [vmem:[%s4758 + $0xb0] sm:$0x3]
      %v6112 = vld [vmem:[%s4758 + $0xbc] sm:$0x3]
      %v6114 = vshrl.u32 %v5699, 16
      %v6116 = vrot.slane %v6114, 5
      %v6117 = vshll.u32 %v5699, 16
      %v6119 = vrot.slane %v6117, 6
      %v6120 = vor.u32 %v6116, %v6119
      %v6121 = vrot.slane %v6120, 4
      %v6122 = vrot.slane %v5107, 5
      %v6123 = vrot.slane %v5103, 6
      %v6124 = vor.u32 %v6122, %v6123
      %v6125 = vsel %vm1449, %v6121, %v6124
      %v6126 = vrot.slane %v6124, 4
      %v6128 = vshrl.u32 %v6097, 16
      %v6130 = vrot.slane %v6128, 5
      %v6131 = vshll.u32 %v6097, 16
      %v6133 = vrot.slane %v6131, 6
      %v6134 = vor.u32 %v6130, %v6133
      %v6135 = vsel %vm1449, %v6126, %v6134
      %v6137 = vshrl.u32 %v5700, 16
      %v6139 = vrot.slane %v6137, 5
      %v6140 = vshll.u32 %v5700, 16
      %v6142 = vrot.slane %v6140, 6
      %v6143 = vor.u32 %v6139, %v6142
      %v6144 = vrot.slane %v6143, 4
      %v6145 = vrot.slane %v5131, 5
      %v6146 = vrot.slane %v5127, 6
      %v6147 = vor.u32 %v6145, %v6146
      %v6148 = vsel %vm1449, %v6144, %v6147
      %v6149 = vrot.slane %v6147, 4
      %v6151 = vshrl.u32 %v6098, 16
      %v6153 = vrot.slane %v6151, 5
      %v6154 = vshll.u32 %v6098, 16
      %v6156 = vrot.slane %v6154, 6
      %v6157 = vor.u32 %v6153, %v6156
      %v6158 = vsel %vm1449, %v6149, %v6157
      %v6160 = vshrl.u32 %v5701, 16
      %v6162 = vrot.slane %v6160, 5
      %v6163 = vshll.u32 %v5701, 16
      %v6165 = vrot.slane %v6163, 6
      %v6166 = vor.u32 %v6162, %v6165
      %v6167 = vrot.slane %v6166, 4
      %v6168 = vrot.slane %v5155, 5
      %v6169 = vrot.slane %v5151, 6
      %v6170 = vor.u32 %v6168, %v6169
      %v6171 = vsel %vm1449, %v6167, %v6170
      %v6172 = vrot.slane %v6170, 4
      %v6174 = vshrl.u32 %v6099, 16
      %v6176 = vrot.slane %v6174, 5
      %v6177 = vshll.u32 %v6099, 16
      %v6179 = vrot.slane %v6177, 6
      %v6180 = vor.u32 %v6176, %v6179
      %v6181 = vsel %vm1449, %v6172, %v6180
      %v6183 = vshrl.u32 %v5702, 16
      %v6185 = vrot.slane %v6183, 5
      %v6186 = vshll.u32 %v5702, 16
      %v6188 = vrot.slane %v6186, 6
      %v6189 = vor.u32 %v6185, %v6188
      %v6190 = vrot.slane %v6189, 4
      %v6191 = vrot.slane %v5179, 5
      %v6192 = vrot.slane %v5175, 6
      %v6193 = vor.u32 %v6191, %v6192
      %v6194 = vsel %vm1449, %v6190, %v6193
      %v6195 = vrot.slane %v6193, 4
      %v6197 = vshrl.u32 %v6100, 16
      %v6199 = vrot.slane %v6197, 5
      %v6200 = vshll.u32 %v6100, 16
      %v6202 = vrot.slane %v6200, 6
      %v6203 = vor.u32 %v6199, %v6202
      %v6204 = vsel %vm1449, %v6195, %v6203
      %v6206 = vshrl.u32 %v5703, 16
      %v6208 = vrot.slane %v6206, 5
      %v6209 = vshll.u32 %v5703, 16
      %v6211 = vrot.slane %v6209, 6
      %v6212 = vor.u32 %v6208, %v6211
      %v6213 = vrot.slane %v6212, 4
      %v6214 = vrot.slane %v5203, 5
      %v6215 = vrot.slane %v5199, 6
      %v6216 = vor.u32 %v6214, %v6215
      %v6217 = vsel %vm1449, %v6213, %v6216
      %v6218 = vrot.slane %v6216, 4
      %v6220 = vshrl.u32 %v6101, 16
      %v6222 = vrot.slane %v6220, 5
      %v6223 = vshll.u32 %v6101, 16
      %v6225 = vrot.slane %v6223, 6
      %v6226 = vor.u32 %v6222, %v6225
      %v6227 = vsel %vm1449, %v6218, %v6226
      %v6229 = vshrl.u32 %v5704, 16
      %v6231 = vrot.slane %v6229, 5
      %v6232 = vshll.u32 %v5704, 16
      %v6234 = vrot.slane %v6232, 6
      %v6235 = vor.u32 %v6231, %v6234
      %v6236 = vrot.slane %v6235, 4
      %v6237 = vrot.slane %v5227, 5
      %v6238 = vrot.slane %v5223, 6
      %v6239 = vor.u32 %v6237, %v6238
      %v6240 = vsel %vm1449, %v6236, %v6239
      %v6241 = vrot.slane %v6239, 4
      %v6243 = vshrl.u32 %v6102, 16
      %v6245 = vrot.slane %v6243, 5
      %v6246 = vshll.u32 %v6102, 16
      %v6248 = vrot.slane %v6246, 6
      %v6249 = vor.u32 %v6245, %v6248
      %v6250 = vsel %vm1449, %v6241, %v6249
      %v6252 = vshrl.u32 %v5705, 16
      %v6254 = vrot.slane %v6252, 5
      %v6255 = vshll.u32 %v5705, 16
      %v6257 = vrot.slane %v6255, 6
      %v6258 = vor.u32 %v6254, %v6257
      %v6259 = vrot.slane %v6258, 4
      %v6260 = vrot.slane %v5251, 5
      %v6261 = vrot.slane %v5247, 6
      %v6262 = vor.u32 %v6260, %v6261
      %v6263 = vsel %vm1449, %v6259, %v6262
      %v6264 = vrot.slane %v6262, 4
      %v6266 = vshrl.u32 %v6103, 16
      %v6268 = vrot.slane %v6266, 5
      %v6269 = vshll.u32 %v6103, 16
      %v6271 = vrot.slane %v6269, 6
      %v6272 = vor.u32 %v6268, %v6271
      %v6273 = vsel %vm1449, %v6264, %v6272
      %v6275 = vshrl.u32 %v5706, 16
      %v6277 = vrot.slane %v6275, 5
      %v6278 = vshll.u32 %v5706, 16
      %v6280 = vrot.slane %v6278, 6
      %v6281 = vor.u32 %v6277, %v6280
      %v6282 = vrot.slane %v6281, 4
      %v6283 = vrot.slane %v5275, 5
      %v6284 = vrot.slane %v5271, 6
      %v6285 = vor.u32 %v6283, %v6284
      %v6286 = vsel %vm1449, %v6282, %v6285
      %v6287 = vrot.slane %v6285, 4
      %v6289 = vshrl.u32 %v6104, 16
      %v6291 = vrot.slane %v6289, 5
      %v6292 = vshll.u32 %v6104, 16
      %v6294 = vrot.slane %v6292, 6
      %v6295 = vor.u32 %v6291, %v6294
      %v6296 = vsel %vm1449, %v6287, %v6295
      %v6298 = vshrl.u32 %v5707, 16
      %v6300 = vrot.slane %v6298, 5
      %v6301 = vshll.u32 %v5707, 16
      %v6303 = vrot.slane %v6301, 6
      %v6304 = vor.u32 %v6300, %v6303
      %v6305 = vrot.slane %v6304, 4
      %v6306 = vrot.slane %v5299, 5
      %v6307 = vrot.slane %v5295, 6
      %v6308 = vor.u32 %v6306, %v6307
      %v6309 = vsel %vm1449, %v6305, %v6308
      %v6310 = vrot.slane %v6308, 4
      %v6312 = vshrl.u32 %v6105, 16
      %v6314 = vrot.slane %v6312, 5
      %v6315 = vshll.u32 %v6105, 16
      %v6317 = vrot.slane %v6315, 6
      %v6318 = vor.u32 %v6314, %v6317
      %v6319 = vsel %vm1449, %v6310, %v6318
      %v6321 = vshrl.u32 %v5708, 16
      %v6323 = vrot.slane %v6321, 5
      %v6324 = vshll.u32 %v5708, 16
      %v6326 = vrot.slane %v6324, 6
      %v6327 = vor.u32 %v6323, %v6326
      %v6328 = vrot.slane %v6327, 4
      %v6329 = vrot.slane %v5323, 5
      %v6330 = vrot.slane %v5319, 6
      %v6331 = vor.u32 %v6329, %v6330
      %v6332 = vsel %vm1449, %v6328, %v6331
      %v6333 = vrot.slane %v6331, 4
      %v6335 = vshrl.u32 %v6106, 16
      %v6337 = vrot.slane %v6335, 5
      %v6338 = vshll.u32 %v6106, 16
      %v6340 = vrot.slane %v6338, 6
      %v6341 = vor.u32 %v6337, %v6340
      %v6342 = vsel %vm1449, %v6333, %v6341
      %v6344 = vshrl.u32 %v5709, 16
      %v6346 = vrot.slane %v6344, 5
      %v6347 = vshll.u32 %v5709, 16
      %v6349 = vrot.slane %v6347, 6
      %v6350 = vor.u32 %v6346, %v6349
      %v6351 = vrot.slane %v6350, 4
      %v6352 = vrot.slane %v5347, 5
      %v6353 = vrot.slane %v5343, 6
      %v6354 = vor.u32 %v6352, %v6353
      %v6355 = vsel %vm1449, %v6351, %v6354
      %v6356 = vrot.slane %v6354, 4
      %v6358 = vshrl.u32 %v6107, 16
      %v6360 = vrot.slane %v6358, 5
      %v6361 = vshll.u32 %v6107, 16
      %v6363 = vrot.slane %v6361, 6
      %v6364 = vor.u32 %v6360, %v6363
      %v6365 = vsel %vm1449, %v6356, %v6364
      %v6367 = vshrl.u32 %v5710, 16
      %v6369 = vrot.slane %v6367, 5
      %v6370 = vshll.u32 %v5710, 16
      %v6372 = vrot.slane %v6370, 6
      %v6373 = vor.u32 %v6369, %v6372
      %v6374 = vrot.slane %v6373, 4
      %v6375 = vrot.slane %v5371, 5
      %v6376 = vrot.slane %v5367, 6
      %v6377 = vor.u32 %v6375, %v6376
      %v6378 = vsel %vm1449, %v6374, %v6377
      %v6379 = vrot.slane %v6377, 4
      %v6381 = vshrl.u32 %v6108, 16
      %v6383 = vrot.slane %v6381, 5
      %v6384 = vshll.u32 %v6108, 16
      %v6386 = vrot.slane %v6384, 6
      %v6387 = vor.u32 %v6383, %v6386
      %v6388 = vsel %vm1449, %v6379, %v6387
      %v6390 = vshrl.u32 %v5711, 16
      %v6392 = vrot.slane %v6390, 5
      %v6393 = vshll.u32 %v5711, 16
      %v6395 = vrot.slane %v6393, 6
      %v6396 = vor.u32 %v6392, %v6395
      %v6397 = vrot.slane %v6396, 4
      %v6398 = vrot.slane %v5395, 5
      %v6399 = vrot.slane %v5391, 6
      %v6400 = vor.u32 %v6398, %v6399
      %v6401 = vsel %vm1449, %v6397, %v6400
      %v6402 = vrot.slane %v6400, 4
      %v6404 = vshrl.u32 %v6109, 16
      %v6406 = vrot.slane %v6404, 5
      %v6407 = vshll.u32 %v6109, 16
      %v6409 = vrot.slane %v6407, 6
      %v6410 = vor.u32 %v6406, %v6409
      %v6411 = vsel %vm1449, %v6402, %v6410
      %v6413 = vshrl.u32 %v5712, 16
      %v6415 = vrot.slane %v6413, 5
      %v6416 = vshll.u32 %v5712, 16
      %v6418 = vrot.slane %v6416, 6
      %v6419 = vor.u32 %v6415, %v6418
      %v6420 = vrot.slane %v6419, 4
      %v6421 = vrot.slane %v5419, 5
      %v6422 = vrot.slane %v5415, 6
      %v6423 = vor.u32 %v6421, %v6422
      %v6424 = vsel %vm1449, %v6420, %v6423
      %v6425 = vrot.slane %v6423, 4
      %v6427 = vshrl.u32 %v6110, 16
      %v6429 = vrot.slane %v6427, 5
      %v6430 = vshll.u32 %v6110, 16
      %v6432 = vrot.slane %v6430, 6
      %v6433 = vor.u32 %v6429, %v6432
      %v6434 = vsel %vm1449, %v6425, %v6433
      %v6436 = vshrl.u32 %v5713, 16
      %v6438 = vrot.slane %v6436, 5
      %v6439 = vshll.u32 %v5713, 16
      %v6441 = vrot.slane %v6439, 6
      %v6442 = vor.u32 %v6438, %v6441
      %v6443 = vrot.slane %v6442, 4
      %v6444 = vrot.slane %v5443, 5
      %v6445 = vrot.slane %v5439, 6
      %v6446 = vor.u32 %v6444, %v6445
      %v6447 = vsel %vm1449, %v6443, %v6446
      %v6448 = vrot.slane %v6446, 4
      %v6450 = vshrl.u32 %v6111, 16
      %v6452 = vrot.slane %v6450, 5
      %v6453 = vshll.u32 %v6111, 16
      %v6455 = vrot.slane %v6453, 6
      %v6456 = vor.u32 %v6452, %v6455
      %v6457 = vsel %vm1449, %v6448, %v6456
      %v6459 = vshrl.u32 %v5714, 16
      %v6461 = vrot.slane %v6459, 5
      %v6462 = vshll.u32 %v5714, 16
      %v6464 = vrot.slane %v6462, 6
      %v6465 = vor.u32 %v6461, %v6464
      %v6466 = vrot.slane %v6465, 4
      %v6467 = vrot.slane %v5467, 5
      %v6468 = vrot.slane %v5463, 6
      %v6469 = vor.u32 %v6467, %v6468
      %v6470 = vsel %vm1449, %v6466, %v6469
      %v6471 = vrot.slane %v6469, 4
      %v6473 = vshrl.u32 %v6112, 16
      %v6475 = vrot.slane %v6473, 5
      %v6476 = vshll.u32 %v6112, 16
      %v6478 = vrot.slane %v6476, 6
      %v6479 = vor.u32 %v6475, %v6478
      %v6480 = vsel %vm1449, %v6471, %v6479
      %s6481 = scalar_lea.vmem %s1, 26
      %v6482 = vld [vmem:[%s6481] sm:$0x3]
      %v6483 = vunpack.c.l.b16 %v6125
      %v6484 = vunpack.c.l.b16 %v6135
      %v6485 = vunpack.c.l.b16 %v6148
      %v6486 = vunpack.c.l.b16 %v6158
      %v6487 = vunpack.c.l.b16 %v6171
      %v6488 = vunpack.c.l.b16 %v6181
      %v6489 = vunpack.c.l.b16 %v6194
      %v6490 = vunpack.c.l.b16 %v6204
      %v6491 = vunpack.c.l.b16 %v6217
      %v6492 = vunpack.c.l.b16 %v6227
      %v6493 = vunpack.c.l.b16 %v6240
      %v6494 = vunpack.c.l.b16 %v6250
      %v6495 = vunpack.c.l.b16 %v6263
      %v6496 = vunpack.c.l.b16 %v6273
      %v6497 = vunpack.c.l.b16 %v6286
      %v6498 = vunpack.c.l.b16 %v6296
      %v6499 = vunpack.c.l.b16 %v6309
      %v6500 = vunpack.c.l.b16 %v6319
      %v6501 = vunpack.c.l.b16 %v6332
      %v6502 = vunpack.c.l.b16 %v6342
      %v6503 = vunpack.c.l.b16 %v6355
      %v6504 = vunpack.c.l.b16 %v6365
      %v6505 = vunpack.c.l.b16 %v6378
      %v6506 = vunpack.c.l.b16 %v6388
      %v6507 = vunpack.c.l.b16 %v6401
      %v6508 = vunpack.c.l.b16 %v6411
      %v6509 = vunpack.c.l.b16 %v6424
      %v6510 = vunpack.c.l.b16 %v6434
      %v6511 = vunpack.c.l.b16 %v6447
      %v6512 = vunpack.c.l.b16 %v6457
      %v6513 = vunpack.c.l.b16 %v6470
      %v6514 = vunpack.c.l.b16 %v6480
      %v6515 = vpack.c.b16 %v6484, %v6483
      %v6516 = vpack.c.b16 %v6486, %v6485
      %v6517 = vpack.c.b16 %v6488, %v6487
      %v6518 = vpack.c.b16 %v6490, %v6489
      %v6519 = vpack.c.b16 %v6492, %v6491
      %v6520 = vpack.c.b16 %v6494, %v6493
      %v6521 = vpack.c.b16 %v6496, %v6495
      %v6522 = vpack.c.b16 %v6498, %v6497
      %v6523 = vpack.c.b16 %v6500, %v6499
      %v6524 = vpack.c.b16 %v6502, %v6501
      %v6525 = vpack.c.b16 %v6504, %v6503
      %v6526 = vpack.c.b16 %v6506, %v6505
      %v6527 = vpack.c.b16 %v6508, %v6507
      %v6528 = vpack.c.b16 %v6510, %v6509
      %v6529 = vpack.c.b16 %v6512, %v6511
      %v6530 = vpack.c.b16 %v6514, %v6513
      %v6532 = vsel %vm684, %v6515, 0
      %v6535 = vsel %vm684, %v6516, 0
      %v6538 = vsel %vm684, %v6517, 0
      %v6541 = vsel %vm684, %v6518, 0
      %v6544 = vsel %vm684, %v6519, 0
      %v6547 = vsel %vm684, %v6520, 0
      %v6550 = vsel %vm684, %v6521, 0
      %v6553 = vsel %vm684, %v6522, 0
      %v6556 = vsel %vm684, %v6523, 0
      %v6559 = vsel %vm684, %v6524, 0
      %v6562 = vsel %vm684, %v6525, 0
      %v6565 = vsel %vm684, %v6526, 0
      %v6568 = vsel %vm684, %v6527, 0
      %v6571 = vsel %vm684, %v6528, 0
      %v6574 = vsel %vm684, %v6529, 0
      %v6577 = vsel %vm684, %v6530, 0
      %v6580 = vsel %vm733, %v6482, 0
      %6582 = vmatpush.bf16.msra.mxu0 0
      %6583 = vmatpush.bf16.msra.mxu0 0
      %6584 = vmatpush.bf16.msra.mxu0 0
      %6585 = vmatpush.bf16.msra.mxu0 0
      %6586 = vmatpush.bf16.msra.mxu0 0
      %6587 = vmatpush.bf16.msra.mxu0 0
      %6588 = vmatpush.bf16.msra.mxu0 0
      %6589 = vmatpush.bf16.msra.mxu0 %v6580
      %6590 = vmatmul.bf16.gmra.mxu0 %v6532
      %v6591 = vpop.f32.mrf.mxu0
      %v6592 = vadd.f32 0.0, %v6591
      %v6593 = vpop.f32.mrf.mxu0
      %v6594 = vadd.f32 0.0, %v6593
      %6595 = vmatmul.bf16.gmra.mxu0 %v6535
      %v6596 = vpop.f32.mrf.mxu0
      %v6597 = vadd.f32 0.0, %v6596
      %v6598 = vpop.f32.mrf.mxu0
      %v6599 = vadd.f32 0.0, %v6598
      %6600 = vmatmul.bf16.gmra.mxu0 %v6538
      %v6601 = vpop.f32.mrf.mxu0
      %v6602 = vadd.f32 0.0, %v6601
      %v6603 = vpop.f32.mrf.mxu0
      %v6604 = vadd.f32 0.0, %v6603
      %6605 = vmatmul.bf16.gmra.mxu0 %v6541
      %v6606 = vpop.f32.mrf.mxu0
      %v6607 = vadd.f32 0.0, %v6606
      %v6608 = vpop.f32.mrf.mxu0
      %v6609 = vadd.f32 0.0, %v6608
      %6610 = vmatmul.bf16.gmra.mxu0 %v6544
      %v6611 = vpop.f32.mrf.mxu0
      %v6612 = vadd.f32 0.0, %v6611
      %v6613 = vpop.f32.mrf.mxu0
      %v6614 = vadd.f32 0.0, %v6613
      %6615 = vmatmul.bf16.gmra.mxu0 %v6547
      %v6616 = vpop.f32.mrf.mxu0
      %v6617 = vadd.f32 0.0, %v6616
      %v6618 = vpop.f32.mrf.mxu0
      %v6619 = vadd.f32 0.0, %v6618
      %6620 = vmatmul.bf16.gmra.mxu0 %v6550
      %v6621 = vpop.f32.mrf.mxu0
      %v6622 = vadd.f32 0.0, %v6621
      %v6623 = vpop.f32.mrf.mxu0
      %v6624 = vadd.f32 0.0, %v6623
      %6625 = vmatmul.bf16.gmra.mxu0 %v6553
      %v6626 = vpop.f32.mrf.mxu0
      %v6627 = vadd.f32 0.0, %v6626
      %v6628 = vpop.f32.mrf.mxu0
      %v6629 = vadd.f32 0.0, %v6628
      %6630 = vmatmul.bf16.gmra.mxu0 %v6556
      %v6631 = vpop.f32.mrf.mxu0
      %v6632 = vadd.f32 0.0, %v6631
      %v6633 = vpop.f32.mrf.mxu0
      %v6634 = vadd.f32 0.0, %v6633
      %6635 = vmatmul.bf16.gmra.mxu0 %v6559
      %v6636 = vpop.f32.mrf.mxu0
      %v6637 = vadd.f32 0.0, %v6636
      %v6638 = vpop.f32.mrf.mxu0
      %v6639 = vadd.f32 0.0, %v6638
      %6640 = vmatmul.bf16.gmra.mxu0 %v6562
      %v6641 = vpop.f32.mrf.mxu0
      %v6642 = vadd.f32 0.0, %v6641
      %v6643 = vpop.f32.mrf.mxu0
      %v6644 = vadd.f32 0.0, %v6643
      %6645 = vmatmul.bf16.gmra.mxu0 %v6565
      %v6646 = vpop.f32.mrf.mxu0
      %v6647 = vadd.f32 0.0, %v6646
      %v6648 = vpop.f32.mrf.mxu0
      %v6649 = vadd.f32 0.0, %v6648
      %6650 = vmatmul.bf16.gmra.mxu0 %v6568
      %v6651 = vpop.f32.mrf.mxu0
      %v6652 = vadd.f32 0.0, %v6651
      %v6653 = vpop.f32.mrf.mxu0
      %v6654 = vadd.f32 0.0, %v6653
      %6655 = vmatmul.bf16.gmra.mxu0 %v6571
      %v6656 = vpop.f32.mrf.mxu0
      %v6657 = vadd.f32 0.0, %v6656
      %v6658 = vpop.f32.mrf.mxu0
      %v6659 = vadd.f32 0.0, %v6658
      %6660 = vmatmul.bf16.gmra.mxu0 %v6574
      %v6661 = vpop.f32.mrf.mxu0
      %v6662 = vadd.f32 0.0, %v6661
      %v6663 = vpop.f32.mrf.mxu0
      %v6664 = vadd.f32 0.0, %v6663
      %6665 = vmatmul.bf16.gmra.mxu0 %v6577
      %v6666 = vpop.f32.mrf.mxu0
      %v6667 = vadd.f32 0.0, %v6666
      %v6668 = vpop.f32.mrf.mxu0
      %v6669 = vadd.f32 0.0, %v6668
      %6670 = vdwg.mxu0
      %v6671 = vadd.f32 %v6065, %v6592
      %v6672 = vadd.f32 %v6066, %v6594
      %v6673 = vadd.f32 %v6067, %v6597
      %v6674 = vadd.f32 %v6068, %v6599
      %v6675 = vadd.f32 %v6069, %v6602
      %v6676 = vadd.f32 %v6070, %v6604
      %v6677 = vadd.f32 %v6071, %v6607
      %v6678 = vadd.f32 %v6072, %v6609
      %v6679 = vadd.f32 %v6073, %v6612
      %v6680 = vadd.f32 %v6074, %v6614
      %v6681 = vadd.f32 %v6075, %v6617
      %v6682 = vadd.f32 %v6076, %v6619
      %v6683 = vadd.f32 %v6077, %v6622
      %v6684 = vadd.f32 %v6078, %v6624
      %v6685 = vadd.f32 %v6079, %v6627
      %v6686 = vadd.f32 %v6080, %v6629
      %v6687 = vadd.f32 %v6081, %v6632
      %v6688 = vadd.f32 %v6082, %v6634
      %v6689 = vadd.f32 %v6083, %v6637
      %v6690 = vadd.f32 %v6084, %v6639
      %v6691 = vadd.f32 %v6085, %v6642
      %v6692 = vadd.f32 %v6086, %v6644
      %v6693 = vadd.f32 %v6087, %v6647
      %v6694 = vadd.f32 %v6088, %v6649
      %v6695 = vadd.f32 %v6089, %v6652
      %v6696 = vadd.f32 %v6090, %v6654
      %v6697 = vadd.f32 %v6091, %v6657
      %v6698 = vadd.f32 %v6092, %v6659
      %v6699 = vadd.f32 %v6093, %v6662
      %v6700 = vadd.f32 %v6094, %v6664
      %v6701 = vadd.f32 %v6095, %v6667
      %v6702 = vadd.f32 %v6096, %v6669
      %v6703 = vld [vmem:[%s4758] sm:$0xc]
      %v6704 = vld [vmem:[%s4758 + $0xc] sm:$0xc]
      %v6705 = vld [vmem:[%s4758 + $0x18] sm:$0xc]
      %v6706 = vld [vmem:[%s4758 + $0x24] sm:$0xc]
      %v6707 = vld [vmem:[%s4758 + $0x30] sm:$0xc]
      %v6708 = vld [vmem:[%s4758 + $0x3c] sm:$0xc]
      %v6709 = vld [vmem:[%s4758 + $0x48] sm:$0xc]
      %v6710 = vld [vmem:[%s4758 + $0x54] sm:$0xc]
      %v6711 = vld [vmem:[%s4758 + $0x60] sm:$0xc]
      %v6712 = vld [vmem:[%s4758 + $0x6c] sm:$0xc]
      %v6713 = vld [vmem:[%s4758 + $0x78] sm:$0xc]
      %v6714 = vld [vmem:[%s4758 + $0x84] sm:$0xc]
      %v6715 = vld [vmem:[%s4758 + $0x90] sm:$0xc]
      %v6716 = vld [vmem:[%s4758 + $0x9c] sm:$0xc]
      %v6717 = vld [vmem:[%s4758 + $0xa8] sm:$0xc]
      %v6718 = vld [vmem:[%s4758 + $0xb4] sm:$0xc]
      %v6751 = vrot.slane %v6703, 6
      %v6752 = vrot.slane %v6751, 4
      %v6753 = vrot.slane %v5046, 6
      %v6754 = vsel %vm2090, %v6752, %v6753
      %v6755 = vrot.slane %v6753, 4
      %v6756 = vrot.slane %v6097, 6
      %v6757 = vsel %vm2090, %v6755, %v6756
      %v6758 = vrot.slane %v6704, 6
      %v6759 = vrot.slane %v6758, 4
      %v6760 = vrot.slane %v5049, 6
      %v6761 = vsel %vm2090, %v6759, %v6760
      %v6762 = vrot.slane %v6760, 4
      %v6763 = vrot.slane %v6098, 6
      %v6764 = vsel %vm2090, %v6762, %v6763
      %v6765 = vrot.slane %v6705, 6
      %v6766 = vrot.slane %v6765, 4
      %v6767 = vrot.slane %v5052, 6
      %v6768 = vsel %vm2090, %v6766, %v6767
      %v6769 = vrot.slane %v6767, 4
      %v6770 = vrot.slane %v6099, 6
      %v6771 = vsel %vm2090, %v6769, %v6770
      %v6772 = vrot.slane %v6706, 6
      %v6773 = vrot.slane %v6772, 4
      %v6774 = vrot.slane %v5055, 6
      %v6775 = vsel %vm2090, %v6773, %v6774
      %v6776 = vrot.slane %v6774, 4
      %v6777 = vrot.slane %v6100, 6
      %v6778 = vsel %vm2090, %v6776, %v6777
      %v6779 = vrot.slane %v6707, 6
      %v6780 = vrot.slane %v6779, 4
      %v6781 = vrot.slane %v5058, 6
      %v6782 = vsel %vm2090, %v6780, %v6781
      %v6783 = vrot.slane %v6781, 4
      %v6784 = vrot.slane %v6101, 6
      %v6785 = vsel %vm2090, %v6783, %v6784
      %v6786 = vrot.slane %v6708, 6
      %v6787 = vrot.slane %v6786, 4
      %v6788 = vrot.slane %v5061, 6
      %v6789 = vsel %vm2090, %v6787, %v6788
      %v6790 = vrot.slane %v6788, 4
      %v6791 = vrot.slane %v6102, 6
      %v6792 = vsel %vm2090, %v6790, %v6791
      %v6793 = vrot.slane %v6709, 6
      %v6794 = vrot.slane %v6793, 4
      %v6795 = vrot.slane %v5064, 6
      %v6796 = vsel %vm2090, %v6794, %v6795
      %v6797 = vrot.slane %v6795, 4
      %v6798 = vrot.slane %v6103, 6
      %v6799 = vsel %vm2090, %v6797, %v6798
      %v6800 = vrot.slane %v6710, 6
      %v6801 = vrot.slane %v6800, 4
      %v6802 = vrot.slane %v5067, 6
      %v6803 = vsel %vm2090, %v6801, %v6802
      %v6804 = vrot.slane %v6802, 4
      %v6805 = vrot.slane %v6104, 6
      %v6806 = vsel %vm2090, %v6804, %v6805
      %v6807 = vrot.slane %v6711, 6
      %v6808 = vrot.slane %v6807, 4
      %v6809 = vrot.slane %v5070, 6
      %v6810 = vsel %vm2090, %v6808, %v6809
      %v6811 = vrot.slane %v6809, 4
      %v6812 = vrot.slane %v6105, 6
      %v6813 = vsel %vm2090, %v6811, %v6812
      %v6814 = vrot.slane %v6712, 6
      %v6815 = vrot.slane %v6814, 4
      %v6816 = vrot.slane %v5073, 6
      %v6817 = vsel %vm2090, %v6815, %v6816
      %v6818 = vrot.slane %v6816, 4
      %v6819 = vrot.slane %v6106, 6
      %v6820 = vsel %vm2090, %v6818, %v6819
      %v6821 = vrot.slane %v6713, 6
      %v6822 = vrot.slane %v6821, 4
      %v6823 = vrot.slane %v5076, 6
      %v6824 = vsel %vm2090, %v6822, %v6823
      %v6825 = vrot.slane %v6823, 4
      %v6826 = vrot.slane %v6107, 6
      %v6827 = vsel %vm2090, %v6825, %v6826
      %v6828 = vrot.slane %v6714, 6
      %v6829 = vrot.slane %v6828, 4
      %v6830 = vrot.slane %v5079, 6
      %v6831 = vsel %vm2090, %v6829, %v6830
      %v6832 = vrot.slane %v6830, 4
      %v6833 = vrot.slane %v6108, 6
      %v6834 = vsel %vm2090, %v6832, %v6833
      %v6835 = vrot.slane %v6715, 6
      %v6836 = vrot.slane %v6835, 4
      %v6837 = vrot.slane %v5082, 6
      %v6838 = vsel %vm2090, %v6836, %v6837
      %v6839 = vrot.slane %v6837, 4
      %v6840 = vrot.slane %v6109, 6
      %v6841 = vsel %vm2090, %v6839, %v6840
      %v6842 = vrot.slane %v6716, 6
      %v6843 = vrot.slane %v6842, 4
      %v6844 = vrot.slane %v5085, 6
      %v6845 = vsel %vm2090, %v6843, %v6844
      %v6846 = vrot.slane %v6844, 4
      %v6847 = vrot.slane %v6110, 6
      %v6848 = vsel %vm2090, %v6846, %v6847
      %v6849 = vrot.slane %v6717, 6
      %v6850 = vrot.slane %v6849, 4
      %v6851 = vrot.slane %v5088, 6
      %v6852 = vsel %vm2090, %v6850, %v6851
      %v6853 = vrot.slane %v6851, 4
      %v6854 = vrot.slane %v6111, 6
      %v6855 = vsel %vm2090, %v6853, %v6854
      %v6856 = vrot.slane %v6718, 6
      %v6857 = vrot.slane %v6856, 4
      %v6858 = vrot.slane %v5091, 6
      %v6859 = vsel %vm2090, %v6857, %v6858
      %v6860 = vrot.slane %v6858, 4
      %v6861 = vrot.slane %v6112, 6
      %v6862 = vsel %vm2090, %v6860, %v6861
      %s6863 = scalar_lea.vmem %s1, 28
      %v6864 = vld [vmem:[%s6863] sm:$0x3]
      %v6865 = vunpack.c.l.b16 %v6754
      %v6866 = vunpack.c.l.b16 %v6757
      %v6867 = vunpack.c.l.b16 %v6761
      %v6868 = vunpack.c.l.b16 %v6764
      %v6869 = vunpack.c.l.b16 %v6768
      %v6870 = vunpack.c.l.b16 %v6771
      %v6871 = vunpack.c.l.b16 %v6775
      %v6872 = vunpack.c.l.b16 %v6778
      %v6873 = vunpack.c.l.b16 %v6782
      %v6874 = vunpack.c.l.b16 %v6785
      %v6875 = vunpack.c.l.b16 %v6789
      %v6876 = vunpack.c.l.b16 %v6792
      %v6877 = vunpack.c.l.b16 %v6796
      %v6878 = vunpack.c.l.b16 %v6799
      %v6879 = vunpack.c.l.b16 %v6803
      %v6880 = vunpack.c.l.b16 %v6806
      %v6881 = vunpack.c.l.b16 %v6810
      %v6882 = vunpack.c.l.b16 %v6813
      %v6883 = vunpack.c.l.b16 %v6817
      %v6884 = vunpack.c.l.b16 %v6820
      %v6885 = vunpack.c.l.b16 %v6824
      %v6886 = vunpack.c.l.b16 %v6827
      %v6887 = vunpack.c.l.b16 %v6831
      %v6888 = vunpack.c.l.b16 %v6834
      %v6889 = vunpack.c.l.b16 %v6838
      %v6890 = vunpack.c.l.b16 %v6841
      %v6891 = vunpack.c.l.b16 %v6845
      %v6892 = vunpack.c.l.b16 %v6848
      %v6893 = vunpack.c.l.b16 %v6852
      %v6894 = vunpack.c.l.b16 %v6855
      %v6895 = vunpack.c.l.b16 %v6859
      %v6896 = vunpack.c.l.b16 %v6862
      %v6897 = vpack.c.b16 %v6866, %v6865
      %v6898 = vpack.c.b16 %v6868, %v6867
      %v6899 = vpack.c.b16 %v6870, %v6869
      %v6900 = vpack.c.b16 %v6872, %v6871
      %v6901 = vpack.c.b16 %v6874, %v6873
      %v6902 = vpack.c.b16 %v6876, %v6875
      %v6903 = vpack.c.b16 %v6878, %v6877
      %v6904 = vpack.c.b16 %v6880, %v6879
      %v6905 = vpack.c.b16 %v6882, %v6881
      %v6906 = vpack.c.b16 %v6884, %v6883
      %v6907 = vpack.c.b16 %v6886, %v6885
      %v6908 = vpack.c.b16 %v6888, %v6887
      %v6909 = vpack.c.b16 %v6890, %v6889
      %v6910 = vpack.c.b16 %v6892, %v6891
      %v6911 = vpack.c.b16 %v6894, %v6893
      %v6912 = vpack.c.b16 %v6896, %v6895
      %v6914 = vsel %vm684, %v6897, 0
      %v6917 = vsel %vm684, %v6898, 0
      %v6920 = vsel %vm684, %v6899, 0
      %v6923 = vsel %vm684, %v6900, 0
      %v6926 = vsel %vm684, %v6901, 0
      %v6929 = vsel %vm684, %v6902, 0
      %v6932 = vsel %vm684, %v6903, 0
      %v6935 = vsel %vm684, %v6904, 0
      %v6938 = vsel %vm684, %v6905, 0
      %v6941 = vsel %vm684, %v6906, 0
      %v6944 = vsel %vm684, %v6907, 0
      %v6947 = vsel %vm684, %v6908, 0
      %v6950 = vsel %vm684, %v6909, 0
      %v6953 = vsel %vm684, %v6910, 0
      %v6956 = vsel %vm684, %v6911, 0
      %v6959 = vsel %vm684, %v6912, 0
      %v6962 = vsel %vm733, %v6864, 0
      %6964 = vmatpush.bf16.msra.mxu0 0
      %6965 = vmatpush.bf16.msra.mxu0 0
      %6966 = vmatpush.bf16.msra.mxu0 0
      %6967 = vmatpush.bf16.msra.mxu0 0
      %6968 = vmatpush.bf16.msra.mxu0 0
      %6969 = vmatpush.bf16.msra.mxu0 0
      %6970 = vmatpush.bf16.msra.mxu0 0
      %6971 = vmatpush.bf16.msra.mxu0 %v6962
      %6972 = vmatmul.bf16.gmra.mxu0 %v6914
      %v6973 = vpop.f32.mrf.mxu0
      %v6974 = vadd.f32 0.0, %v6973
      %v6975 = vpop.f32.mrf.mxu0
      %v6976 = vadd.f32 0.0, %v6975
      %6977 = vmatmul.bf16.gmra.mxu0 %v6917
      %v6978 = vpop.f32.mrf.mxu0
      %v6979 = vadd.f32 0.0, %v6978
      %v6980 = vpop.f32.mrf.mxu0
      %v6981 = vadd.f32 0.0, %v6980
      %6982 = vmatmul.bf16.gmra.mxu0 %v6920
      %v6983 = vpop.f32.mrf.mxu0
      %v6984 = vadd.f32 0.0, %v6983
      %v6985 = vpop.f32.mrf.mxu0
      %v6986 = vadd.f32 0.0, %v6985
      %6987 = vmatmul.bf16.gmra.mxu0 %v6923
      %v6988 = vpop.f32.mrf.mxu0
      %v6989 = vadd.f32 0.0, %v6988
      %v6990 = vpop.f32.mrf.mxu0
      %v6991 = vadd.f32 0.0, %v6990
      %6992 = vmatmul.bf16.gmra.mxu0 %v6926
      %v6993 = vpop.f32.mrf.mxu0
      %v6994 = vadd.f32 0.0, %v6993
      %v6995 = vpop.f32.mrf.mxu0
      %v6996 = vadd.f32 0.0, %v6995
      %6997 = vmatmul.bf16.gmra.mxu0 %v6929
      %v6998 = vpop.f32.mrf.mxu0
      %v6999 = vadd.f32 0.0, %v6998
      %v7000 = vpop.f32.mrf.mxu0
      %v7001 = vadd.f32 0.0, %v7000
      %7002 = vmatmul.bf16.gmra.mxu0 %v6932
      %v7003 = vpop.f32.mrf.mxu0
      %v7004 = vadd.f32 0.0, %v7003
      %v7005 = vpop.f32.mrf.mxu0
      %v7006 = vadd.f32 0.0, %v7005
      %7007 = vmatmul.bf16.gmra.mxu0 %v6935
      %v7008 = vpop.f32.mrf.mxu0
      %v7009 = vadd.f32 0.0, %v7008
      %v7010 = vpop.f32.mrf.mxu0
      %v7011 = vadd.f32 0.0, %v7010
      %7012 = vmatmul.bf16.gmra.mxu0 %v6938
      %v7013 = vpop.f32.mrf.mxu0
      %v7014 = vadd.f32 0.0, %v7013
      %v7015 = vpop.f32.mrf.mxu0
      %v7016 = vadd.f32 0.0, %v7015
      %7017 = vmatmul.bf16.gmra.mxu0 %v6941
      %v7018 = vpop.f32.mrf.mxu0
      %v7019 = vadd.f32 0.0, %v7018
      %v7020 = vpop.f32.mrf.mxu0
      %v7021 = vadd.f32 0.0, %v7020
      %7022 = vmatmul.bf16.gmra.mxu0 %v6944
      %v7023 = vpop.f32.mrf.mxu0
      %v7024 = vadd.f32 0.0, %v7023
      %v7025 = vpop.f32.mrf.mxu0
      %v7026 = vadd.f32 0.0, %v7025
      %7027 = vmatmul.bf16.gmra.mxu0 %v6947
      %v7028 = vpop.f32.mrf.mxu0
      %v7029 = vadd.f32 0.0, %v7028
      %v7030 = vpop.f32.mrf.mxu0
      %v7031 = vadd.f32 0.0, %v7030
      %7032 = vmatmul.bf16.gmra.mxu0 %v6950
      %v7033 = vpop.f32.mrf.mxu0
      %v7034 = vadd.f32 0.0, %v7033
      %v7035 = vpop.f32.mrf.mxu0
      %v7036 = vadd.f32 0.0, %v7035
      %7037 = vmatmul.bf16.gmra.mxu0 %v6953
      %v7038 = vpop.f32.mrf.mxu0
      %v7039 = vadd.f32 0.0, %v7038
      %v7040 = vpop.f32.mrf.mxu0
      %v7041 = vadd.f32 0.0, %v7040
      %7042 = vmatmul.bf16.gmra.mxu0 %v6956
      %v7043 = vpop.f32.mrf.mxu0
      %v7044 = vadd.f32 0.0, %v7043
      %v7045 = vpop.f32.mrf.mxu0
      %v7046 = vadd.f32 0.0, %v7045
      %7047 = vmatmul.bf16.gmra.mxu0 %v6959
      %v7048 = vpop.f32.mrf.mxu0
      %v7049 = vadd.f32 0.0, %v7048
      %v7050 = vpop.f32.mrf.mxu0
      %v7051 = vadd.f32 0.0, %v7050
      %7052 = vdwg.mxu0
      %v7053 = vadd.f32 %v6671, %v6974
      %v7054 = vadd.f32 %v6672, %v6976
      %v7055 = vadd.f32 %v6673, %v6979
      %v7056 = vadd.f32 %v6674, %v6981
      %v7057 = vadd.f32 %v6675, %v6984
      %v7058 = vadd.f32 %v6676, %v6986
      %v7059 = vadd.f32 %v6677, %v6989
      %v7060 = vadd.f32 %v6678, %v6991
      %v7061 = vadd.f32 %v6679, %v6994
      %v7062 = vadd.f32 %v6680, %v6996
      %v7063 = vadd.f32 %v6681, %v6999
      %v7064 = vadd.f32 %v6682, %v7001
      %v7065 = vadd.f32 %v6683, %v7004
      %v7066 = vadd.f32 %v6684, %v7006
      %v7067 = vadd.f32 %v6685, %v7009
      %v7068 = vadd.f32 %v6686, %v7011
      %v7069 = vadd.f32 %v6687, %v7014
      %v7070 = vadd.f32 %v6688, %v7016
      %v7071 = vadd.f32 %v6689, %v7019
      %v7072 = vadd.f32 %v6690, %v7021
      %v7073 = vadd.f32 %v6691, %v7024
      %v7074 = vadd.f32 %v6692, %v7026
      %v7075 = vadd.f32 %v6693, %v7029
      %v7076 = vadd.f32 %v6694, %v7031
      %v7077 = vadd.f32 %v6695, %v7034
      %v7078 = vadd.f32 %v6696, %v7036
      %v7079 = vadd.f32 %v6697, %v7039
      %v7080 = vadd.f32 %v6698, %v7041
      %v7081 = vadd.f32 %v6699, %v7044
      %v7082 = vadd.f32 %v6700, %v7046
      %v7083 = vadd.f32 %v6701, %v7049
      %v7084 = vadd.f32 %v6702, %v7051
      %s7085 = sadd.s32 %s194, 3
      %s7086 = smul.u32 %s7085, 3
      %s7087 = smul.addr %s7086, 4
      %s7088 = scalar_lea.vmem %s183, %s7087
      %v7089 = vld [vmem:[%s7088] sm:$0xf]
      %v7090 = vld [vmem:[%s7088 + $0x4] sm:$0xf]
      %v7091 = vld [vmem:[%s7088 + $0xc] sm:$0xf]
      %v7092 = vld [vmem:[%s7088 + $0x10] sm:$0xf]
      %v7093 = vld [vmem:[%s7088 + $0x18] sm:$0xf]
      %v7094 = vld [vmem:[%s7088 + $0x1c] sm:$0xf]
      %v7095 = vld [vmem:[%s7088 + $0x24] sm:$0xf]
      %v7096 = vld [vmem:[%s7088 + $0x28] sm:$0xf]
      %v7097 = vld [vmem:[%s7088 + $0x30] sm:$0xf]
      %v7098 = vld [vmem:[%s7088 + $0x34] sm:$0xf]
      %v7099 = vld [vmem:[%s7088 + $0x3c] sm:$0xf]
      %v7100 = vld [vmem:[%s7088 + $0x40] sm:$0xf]
      %v7101 = vld [vmem:[%s7088 + $0x48] sm:$0xf]
      %v7102 = vld [vmem:[%s7088 + $0x4c] sm:$0xf]
      %v7103 = vld [vmem:[%s7088 + $0x54] sm:$0xf]
      %v7104 = vld [vmem:[%s7088 + $0x58] sm:$0xf]
      %v7105 = vld [vmem:[%s7088 + $0x60] sm:$0xf]
      %v7106 = vld [vmem:[%s7088 + $0x64] sm:$0xf]
      %v7107 = vld [vmem:[%s7088 + $0x6c] sm:$0xf]
      %v7108 = vld [vmem:[%s7088 + $0x70] sm:$0xf]
      %v7109 = vld [vmem:[%s7088 + $0x78] sm:$0xf]
      %v7110 = vld [vmem:[%s7088 + $0x7c] sm:$0xf]
      %v7111 = vld [vmem:[%s7088 + $0x84] sm:$0xf]
      %v7112 = vld [vmem:[%s7088 + $0x88] sm:$0xf]
      %v7113 = vld [vmem:[%s7088 + $0x90] sm:$0xf]
      %v7114 = vld [vmem:[%s7088 + $0x94] sm:$0xf]
      %v7115 = vld [vmem:[%s7088 + $0x9c] sm:$0xf]
      %v7116 = vld [vmem:[%s7088 + $0xa0] sm:$0xf]
      %v7117 = vld [vmem:[%s7088 + $0xa8] sm:$0xf]
      %v7118 = vld [vmem:[%s7088 + $0xac] sm:$0xf]
      %v7119 = vld [vmem:[%s7088 + $0xb4] sm:$0xf]
      %v7120 = vld [vmem:[%s7088 + $0xb8] sm:$0xf]
      %s7121 = scalar_lea.vmem %s1, 30
      %v7122 = vld [vmem:[%s7121] sm:$0x3]
      %v7155 = vunpack.c.l.b16 %v7089
      %v7156 = vunpack.c.l.b16 %v7090
      %v7157 = vunpack.c.l.b16 %v7091
      %v7158 = vunpack.c.l.b16 %v7092
      %v7159 = vunpack.c.l.b16 %v7093
      %v7160 = vunpack.c.l.b16 %v7094
      %v7161 = vunpack.c.l.b16 %v7095
      %v7162 = vunpack.c.l.b16 %v7096
      %v7163 = vunpack.c.l.b16 %v7097
      %v7164 = vunpack.c.l.b16 %v7098
      %v7165 = vunpack.c.l.b16 %v7099
      %v7166 = vunpack.c.l.b16 %v7100
      %v7167 = vunpack.c.l.b16 %v7101
      %v7168 = vunpack.c.l.b16 %v7102
      %v7169 = vunpack.c.l.b16 %v7103
      %v7170 = vunpack.c.l.b16 %v7104
      %v7171 = vunpack.c.l.b16 %v7105
      %v7172 = vunpack.c.l.b16 %v7106
      %v7173 = vunpack.c.l.b16 %v7107
      %v7174 = vunpack.c.l.b16 %v7108
      %v7175 = vunpack.c.l.b16 %v7109
      %v7176 = vunpack.c.l.b16 %v7110
      %v7177 = vunpack.c.l.b16 %v7111
      %v7178 = vunpack.c.l.b16 %v7112
      %v7179 = vunpack.c.l.b16 %v7113
      %v7180 = vunpack.c.l.b16 %v7114
      %v7181 = vunpack.c.l.b16 %v7115
      %v7182 = vunpack.c.l.b16 %v7116
      %v7183 = vunpack.c.l.b16 %v7117
      %v7184 = vunpack.c.l.b16 %v7118
      %v7185 = vunpack.c.l.b16 %v7119
      %v7186 = vunpack.c.l.b16 %v7120
      %v7187 = vpack.c.b16 %v7156, %v7155
      %v7188 = vpack.c.b16 %v7158, %v7157
      %v7189 = vpack.c.b16 %v7160, %v7159
      %v7190 = vpack.c.b16 %v7162, %v7161
      %v7191 = vpack.c.b16 %v7164, %v7163
      %v7192 = vpack.c.b16 %v7166, %v7165
      %v7193 = vpack.c.b16 %v7168, %v7167
      %v7194 = vpack.c.b16 %v7170, %v7169
      %v7195 = vpack.c.b16 %v7172, %v7171
      %v7196 = vpack.c.b16 %v7174, %v7173
      %v7197 = vpack.c.b16 %v7176, %v7175
      %v7198 = vpack.c.b16 %v7178, %v7177
      %v7199 = vpack.c.b16 %v7180, %v7179
      %v7200 = vpack.c.b16 %v7182, %v7181
      %v7201 = vpack.c.b16 %v7184, %v7183
      %v7202 = vpack.c.b16 %v7186, %v7185
      %v7204 = vsel %vm684, %v7187, 0
      %v7207 = vsel %vm684, %v7188, 0
      %v7210 = vsel %vm684, %v7189, 0
      %v7213 = vsel %vm684, %v7190, 0
      %v7216 = vsel %vm684, %v7191, 0
      %v7219 = vsel %vm684, %v7192, 0
      %v7222 = vsel %vm684, %v7193, 0
      %v7225 = vsel %vm684, %v7194, 0
      %v7228 = vsel %vm684, %v7195, 0
      %v7231 = vsel %vm684, %v7196, 0
      %v7234 = vsel %vm684, %v7197, 0
      %v7237 = vsel %vm684, %v7198, 0
      %v7240 = vsel %vm684, %v7199, 0
      %v7243 = vsel %vm684, %v7200, 0
      %v7246 = vsel %vm684, %v7201, 0
      %v7249 = vsel %vm684, %v7202, 0
      %v7252 = vsel %vm733, %v7122, 0
      %7254 = vmatpush.bf16.msra.mxu0 0
      %7255 = vmatpush.bf16.msra.mxu0 0
      %7256 = vmatpush.bf16.msra.mxu0 0
      %7257 = vmatpush.bf16.msra.mxu0 0
      %7258 = vmatpush.bf16.msra.mxu0 0
      %7259 = vmatpush.bf16.msra.mxu0 0
      %7260 = vmatpush.bf16.msra.mxu0 0
      %7261 = vmatpush.bf16.msra.mxu0 %v7252
      %7262 = vmatmul.bf16.gmra.mxu0 %v7204
      %v7263 = vpop.f32.mrf.mxu0
      %v7264 = vadd.f32 0.0, %v7263
      %v7265 = vpop.f32.mrf.mxu0
      %v7266 = vadd.f32 0.0, %v7265
      %7267 = vmatmul.bf16.gmra.mxu0 %v7207
      %v7268 = vpop.f32.mrf.mxu0
      %v7269 = vadd.f32 0.0, %v7268
      %v7270 = vpop.f32.mrf.mxu0
      %v7271 = vadd.f32 0.0, %v7270
      %7272 = vmatmul.bf16.gmra.mxu0 %v7210
      %v7273 = vpop.f32.mrf.mxu0
      %v7274 = vadd.f32 0.0, %v7273
      %v7275 = vpop.f32.mrf.mxu0
      %v7276 = vadd.f32 0.0, %v7275
      %7277 = vmatmul.bf16.gmra.mxu0 %v7213
      %v7278 = vpop.f32.mrf.mxu0
      %v7279 = vadd.f32 0.0, %v7278
      %v7280 = vpop.f32.mrf.mxu0
      %v7281 = vadd.f32 0.0, %v7280
      %7282 = vmatmul.bf16.gmra.mxu0 %v7216
      %v7283 = vpop.f32.mrf.mxu0
      %v7284 = vadd.f32 0.0, %v7283
      %v7285 = vpop.f32.mrf.mxu0
      %v7286 = vadd.f32 0.0, %v7285
      %7287 = vmatmul.bf16.gmra.mxu0 %v7219
      %v7288 = vpop.f32.mrf.mxu0
      %v7289 = vadd.f32 0.0, %v7288
      %v7290 = vpop.f32.mrf.mxu0
      %v7291 = vadd.f32 0.0, %v7290
      %7292 = vmatmul.bf16.gmra.mxu0 %v7222
      %v7293 = vpop.f32.mrf.mxu0
      %v7294 = vadd.f32 0.0, %v7293
      %v7295 = vpop.f32.mrf.mxu0
      %v7296 = vadd.f32 0.0, %v7295
      %7297 = vmatmul.bf16.gmra.mxu0 %v7225
      %v7298 = vpop.f32.mrf.mxu0
      %v7299 = vadd.f32 0.0, %v7298
      %v7300 = vpop.f32.mrf.mxu0
      %v7301 = vadd.f32 0.0, %v7300
      %7302 = vmatmul.bf16.gmra.mxu0 %v7228
      %v7303 = vpop.f32.mrf.mxu0
      %v7304 = vadd.f32 0.0, %v7303
      %v7305 = vpop.f32.mrf.mxu0
      %v7306 = vadd.f32 0.0, %v7305
      %7307 = vmatmul.bf16.gmra.mxu0 %v7231
      %v7308 = vpop.f32.mrf.mxu0
      %v7309 = vadd.f32 0.0, %v7308
      %v7310 = vpop.f32.mrf.mxu0
      %v7311 = vadd.f32 0.0, %v7310
      %7312 = vmatmul.bf16.gmra.mxu0 %v7234
      %v7313 = vpop.f32.mrf.mxu0
      %v7314 = vadd.f32 0.0, %v7313
      %v7315 = vpop.f32.mrf.mxu0
      %v7316 = vadd.f32 0.0, %v7315
      %7317 = vmatmul.bf16.gmra.mxu0 %v7237
      %v7318 = vpop.f32.mrf.mxu0
      %v7319 = vadd.f32 0.0, %v7318
      %v7320 = vpop.f32.mrf.mxu0
      %v7321 = vadd.f32 0.0, %v7320
      %7322 = vmatmul.bf16.gmra.mxu0 %v7240
      %v7323 = vpop.f32.mrf.mxu0
      %v7324 = vadd.f32 0.0, %v7323
      %v7325 = vpop.f32.mrf.mxu0
      %v7326 = vadd.f32 0.0, %v7325
      %7327 = vmatmul.bf16.gmra.mxu0 %v7243
      %v7328 = vpop.f32.mrf.mxu0
      %v7329 = vadd.f32 0.0, %v7328
      %v7330 = vpop.f32.mrf.mxu0
      %v7331 = vadd.f32 0.0, %v7330
      %7332 = vmatmul.bf16.gmra.mxu0 %v7246
      %v7333 = vpop.f32.mrf.mxu0
      %v7334 = vadd.f32 0.0, %v7333
      %v7335 = vpop.f32.mrf.mxu0
      %v7336 = vadd.f32 0.0, %v7335
      %7337 = vmatmul.bf16.gmra.mxu0 %v7249
      %v7338 = vpop.f32.mrf.mxu0
      %v7339 = vadd.f32 0.0, %v7338
      %v7340 = vpop.f32.mrf.mxu0
      %v7341 = vadd.f32 0.0, %v7340
      %7342 = vdwg.mxu0
      %v7343 = vadd.f32 %v7053, %v7264
      %v7344 = vadd.f32 %v7054, %v7266
      %v7345 = vadd.f32 %v7055, %v7269
      %v7346 = vadd.f32 %v7056, %v7271
      %v7347 = vadd.f32 %v7057, %v7274
      %v7348 = vadd.f32 %v7058, %v7276
      %v7349 = vadd.f32 %v7059, %v7279
      %v7350 = vadd.f32 %v7060, %v7281
      %v7351 = vadd.f32 %v7061, %v7284
      %v7352 = vadd.f32 %v7062, %v7286
      %v7353 = vadd.f32 %v7063, %v7289
      %v7354 = vadd.f32 %v7064, %v7291
      %v7355 = vadd.f32 %v7065, %v7294
      %v7356 = vadd.f32 %v7066, %v7296
      %v7357 = vadd.f32 %v7067, %v7299
      %v7358 = vadd.f32 %v7068, %v7301
      %v7359 = vadd.f32 %v7069, %v7304
      %v7360 = vadd.f32 %v7070, %v7306
      %v7361 = vadd.f32 %v7071, %v7309
      %v7362 = vadd.f32 %v7072, %v7311
      %v7363 = vadd.f32 %v7073, %v7314
      %v7364 = vadd.f32 %v7074, %v7316
      %v7365 = vadd.f32 %v7075, %v7319
      %v7366 = vadd.f32 %v7076, %v7321
      %v7367 = vadd.f32 %v7077, %v7324
      %v7368 = vadd.f32 %v7078, %v7326
      %v7369 = vadd.f32 %v7079, %v7329
      %v7370 = vadd.f32 %v7080, %v7331
      %v7371 = vadd.f32 %v7081, %v7334
      %v7372 = vadd.f32 %v7082, %v7336
      %v7373 = vadd.f32 %v7083, %v7339
      %v7374 = vadd.f32 %v7084, %v7341
      %v7375 = vld [vmem:[%s7088] sm:$0xf]
      %v7376 = vld [vmem:[%s7088 + $0x4] sm:$0xf]
      %v7377 = vld [vmem:[%s7088 + $0x8] sm:$0x1]
      %v7378 = vld [vmem:[%s7088 + $0xc] sm:$0xf]
      %v7379 = vld [vmem:[%s7088 + $0x10] sm:$0xf]
      %v7380 = vld [vmem:[%s7088 + $0x14] sm:$0x1]
      %v7381 = vld [vmem:[%s7088 + $0x18] sm:$0xf]
      %v7382 = vld [vmem:[%s7088 + $0x1c] sm:$0xf]
      %v7383 = vld [vmem:[%s7088 + $0x20] sm:$0x1]
      %v7384 = vld [vmem:[%s7088 + $0x24] sm:$0xf]
      %v7385 = vld [vmem:[%s7088 + $0x28] sm:$0xf]
      %v7386 = vld [vmem:[%s7088 + $0x2c] sm:$0x1]
      %v7387 = vld [vmem:[%s7088 + $0x30] sm:$0xf]
      %v7388 = vld [vmem:[%s7088 + $0x34] sm:$0xf]
      %v7389 = vld [vmem:[%s7088 + $0x38] sm:$0x1]
      %v7390 = vld [vmem:[%s7088 + $0x3c] sm:$0xf]
      %v7391 = vld [vmem:[%s7088 + $0x40] sm:$0xf]
      %v7392 = vld [vmem:[%s7088 + $0x44] sm:$0x1]
      %v7393 = vld [vmem:[%s7088 + $0x48] sm:$0xf]
      %v7394 = vld [vmem:[%s7088 + $0x4c] sm:$0xf]
      %v7395 = vld [vmem:[%s7088 + $0x50] sm:$0x1]
      %v7396 = vld [vmem:[%s7088 + $0x54] sm:$0xf]
      %v7397 = vld [vmem:[%s7088 + $0x58] sm:$0xf]
      %v7398 = vld [vmem:[%s7088 + $0x5c] sm:$0x1]
      %v7399 = vld [vmem:[%s7088 + $0x60] sm:$0xf]
      %v7400 = vld [vmem:[%s7088 + $0x64] sm:$0xf]
      %v7401 = vld [vmem:[%s7088 + $0x68] sm:$0x1]
      %v7402 = vld [vmem:[%s7088 + $0x6c] sm:$0xf]
      %v7403 = vld [vmem:[%s7088 + $0x70] sm:$0xf]
      %v7404 = vld [vmem:[%s7088 + $0x74] sm:$0x1]
      %v7405 = vld [vmem:[%s7088 + $0x78] sm:$0xf]
      %v7406 = vld [vmem:[%s7088 + $0x7c] sm:$0xf]
      %v7407 = vld [vmem:[%s7088 + $0x80] sm:$0x1]
      %v7408 = vld [vmem:[%s7088 + $0x84] sm:$0xf]
      %v7409 = vld [vmem:[%s7088 + $0x88] sm:$0xf]
      %v7410 = vld [vmem:[%s7088 + $0x8c] sm:$0x1]
      %v7411 = vld [vmem:[%s7088 + $0x90] sm:$0xf]
      %v7412 = vld [vmem:[%s7088 + $0x94] sm:$0xf]
      %v7413 = vld [vmem:[%s7088 + $0x98] sm:$0x1]
      %v7414 = vld [vmem:[%s7088 + $0x9c] sm:$0xf]
      %v7415 = vld [vmem:[%s7088 + $0xa0] sm:$0xf]
      %v7416 = vld [vmem:[%s7088 + $0xa4] sm:$0x1]
      %v7417 = vld [vmem:[%s7088 + $0xa8] sm:$0xf]
      %v7418 = vld [vmem:[%s7088 + $0xac] sm:$0xf]
      %v7419 = vld [vmem:[%s7088 + $0xb0] sm:$0x1]
      %v7420 = vld [vmem:[%s7088 + $0xb4] sm:$0xf]
      %v7421 = vld [vmem:[%s7088 + $0xb8] sm:$0xf]
      %v7422 = vld [vmem:[%s7088 + $0xbc] sm:$0x1]
      %v7424 = vshrl.u32 %v7375, 16
      %v7426 = vrot.slane %v7424, 4
      %v7427 = vshll.u32 %v7375, 16
      %v7429 = vrot.slane %v7427, 5
      %v7430 = vor.u32 %v7426, %v7429
      %v7431 = vrot.slane %v7430, 4
      %v7433 = vshll.u32 %v7376, 16
      %v7435 = vrot.slane %v7433, 5
      %v7436 = vsel %vm249, %v7431, %v7435
      %v7437 = vshrl.u32 %v7376, 16
      %v7439 = vrot.slane %v7437, 4
      %v7440 = vor.u32 %v7439, %v7435
      %v7441 = vrot.slane %v7440, 4
      %v7443 = vshll.u32 %v7377, 16
      %v7445 = vrot.slane %v7443, 5
      %v7446 = vsel %vm249, %v7441, %v7445
      %v7448 = vshrl.u32 %v7378, 16
      %v7450 = vrot.slane %v7448, 4
      %v7451 = vshll.u32 %v7378, 16
      %v7453 = vrot.slane %v7451, 5
      %v7454 = vor.u32 %v7450, %v7453
      %v7455 = vrot.slane %v7454, 4
      %v7457 = vshll.u32 %v7379, 16
      %v7459 = vrot.slane %v7457, 5
      %v7460 = vsel %vm249, %v7455, %v7459
      %v7461 = vshrl.u32 %v7379, 16
      %v7463 = vrot.slane %v7461, 4
      %v7464 = vor.u32 %v7463, %v7459
      %v7465 = vrot.slane %v7464, 4
      %v7467 = vshll.u32 %v7380, 16
      %v7469 = vrot.slane %v7467, 5
      %v7470 = vsel %vm249, %v7465, %v7469
      %v7472 = vshrl.u32 %v7381, 16
      %v7474 = vrot.slane %v7472, 4
      %v7475 = vshll.u32 %v7381, 16
      %v7477 = vrot.slane %v7475, 5
      %v7478 = vor.u32 %v7474, %v7477
      %v7479 = vrot.slane %v7478, 4
      %v7481 = vshll.u32 %v7382, 16
      %v7483 = vrot.slane %v7481, 5
      %v7484 = vsel %vm249, %v7479, %v7483
      %v7485 = vshrl.u32 %v7382, 16
      %v7487 = vrot.slane %v7485, 4
      %v7488 = vor.u32 %v7487, %v7483
      %v7489 = vrot.slane %v7488, 4
      %v7491 = vshll.u32 %v7383, 16
      %v7493 = vrot.slane %v7491, 5
      %v7494 = vsel %vm249, %v7489, %v7493
      %v7496 = vshrl.u32 %v7384, 16
      %v7498 = vrot.slane %v7496, 4
      %v7499 = vshll.u32 %v7384, 16
      %v7501 = vrot.slane %v7499, 5
      %v7502 = vor.u32 %v7498, %v7501
      %v7503 = vrot.slane %v7502, 4
      %v7505 = vshll.u32 %v7385, 16
      %v7507 = vrot.slane %v7505, 5
      %v7508 = vsel %vm249, %v7503, %v7507
      %v7509 = vshrl.u32 %v7385, 16
      %v7511 = vrot.slane %v7509, 4
      %v7512 = vor.u32 %v7511, %v7507
      %v7513 = vrot.slane %v7512, 4
      %v7515 = vshll.u32 %v7386, 16
      %v7517 = vrot.slane %v7515, 5
      %v7518 = vsel %vm249, %v7513, %v7517
      %v7520 = vshrl.u32 %v7387, 16
      %v7522 = vrot.slane %v7520, 4
      %v7523 = vshll.u32 %v7387, 16
      %v7525 = vrot.slane %v7523, 5
      %v7526 = vor.u32 %v7522, %v7525
      %v7527 = vrot.slane %v7526, 4
      %v7529 = vshll.u32 %v7388, 16
      %v7531 = vrot.slane %v7529, 5
      %v7532 = vsel %vm249, %v7527, %v7531
      %v7533 = vshrl.u32 %v7388, 16
      %v7535 = vrot.slane %v7533, 4
      %v7536 = vor.u32 %v7535, %v7531
      %v7537 = vrot.slane %v7536, 4
      %v7539 = vshll.u32 %v7389, 16
      %v7541 = vrot.slane %v7539, 5
      %v7542 = vsel %vm249, %v7537, %v7541
      %v7544 = vshrl.u32 %v7390, 16
      %v7546 = vrot.slane %v7544, 4
      %v7547 = vshll.u32 %v7390, 16
      %v7549 = vrot.slane %v7547, 5
      %v7550 = vor.u32 %v7546, %v7549
      %v7551 = vrot.slane %v7550, 4
      %v7553 = vshll.u32 %v7391, 16
      %v7555 = vrot.slane %v7553, 5
      %v7556 = vsel %vm249, %v7551, %v7555
      %v7557 = vshrl.u32 %v7391, 16
      %v7559 = vrot.slane %v7557, 4
      %v7560 = vor.u32 %v7559, %v7555
      %v7561 = vrot.slane %v7560, 4
      %v7563 = vshll.u32 %v7392, 16
      %v7565 = vrot.slane %v7563, 5
      %v7566 = vsel %vm249, %v7561, %v7565
      %v7568 = vshrl.u32 %v7393, 16
      %v7570 = vrot.slane %v7568, 4
      %v7571 = vshll.u32 %v7393, 16
      %v7573 = vrot.slane %v7571, 5
      %v7574 = vor.u32 %v7570, %v7573
      %v7575 = vrot.slane %v7574, 4
      %v7577 = vshll.u32 %v7394, 16
      %v7579 = vrot.slane %v7577, 5
      %v7580 = vsel %vm249, %v7575, %v7579
      %v7581 = vshrl.u32 %v7394, 16
      %v7583 = vrot.slane %v7581, 4
      %v7584 = vor.u32 %v7583, %v7579
      %v7585 = vrot.slane %v7584, 4
      %v7587 = vshll.u32 %v7395, 16
      %v7589 = vrot.slane %v7587, 5
      %v7590 = vsel %vm249, %v7585, %v7589
      %v7592 = vshrl.u32 %v7396, 16
      %v7594 = vrot.slane %v7592, 4
      %v7595 = vshll.u32 %v7396, 16
      %v7597 = vrot.slane %v7595, 5
      %v7598 = vor.u32 %v7594, %v7597
      %v7599 = vrot.slane %v7598, 4
      %v7601 = vshll.u32 %v7397, 16
      %v7603 = vrot.slane %v7601, 5
      %v7604 = vsel %vm249, %v7599, %v7603
      %v7605 = vshrl.u32 %v7397, 16
      %v7607 = vrot.slane %v7605, 4
      %v7608 = vor.u32 %v7607, %v7603
      %v7609 = vrot.slane %v7608, 4
      %v7611 = vshll.u32 %v7398, 16
      %v7613 = vrot.slane %v7611, 5
      %v7614 = vsel %vm249, %v7609, %v7613
      %v7616 = vshrl.u32 %v7399, 16
      %v7618 = vrot.slane %v7616, 4
      %v7619 = vshll.u32 %v7399, 16
      %v7621 = vrot.slane %v7619, 5
      %v7622 = vor.u32 %v7618, %v7621
      %v7623 = vrot.slane %v7622, 4
      %v7625 = vshll.u32 %v7400, 16
      %v7627 = vrot.slane %v7625, 5
      %v7628 = vsel %vm249, %v7623, %v7627
      %v7629 = vshrl.u32 %v7400, 16
      %v7631 = vrot.slane %v7629, 4
      %v7632 = vor.u32 %v7631, %v7627
      %v7633 = vrot.slane %v7632, 4
      %v7635 = vshll.u32 %v7401, 16
      %v7637 = vrot.slane %v7635, 5
      %v7638 = vsel %vm249, %v7633, %v7637
      %v7640 = vshrl.u32 %v7402, 16
      %v7642 = vrot.slane %v7640, 4
      %v7643 = vshll.u32 %v7402, 16
      %v7645 = vrot.slane %v7643, 5
      %v7646 = vor.u32 %v7642, %v7645
      %v7647 = vrot.slane %v7646, 4
      %v7649 = vshll.u32 %v7403, 16
      %v7651 = vrot.slane %v7649, 5
      %v7652 = vsel %vm249, %v7647, %v7651
      %v7653 = vshrl.u32 %v7403, 16
      %v7655 = vrot.slane %v7653, 4
      %v7656 = vor.u32 %v7655, %v7651
      %v7657 = vrot.slane %v7656, 4
      %v7659 = vshll.u32 %v7404, 16
      %v7661 = vrot.slane %v7659, 5
      %v7662 = vsel %vm249, %v7657, %v7661
      %v7664 = vshrl.u32 %v7405, 16
      %v7666 = vrot.slane %v7664, 4
      %v7667 = vshll.u32 %v7405, 16
      %v7669 = vrot.slane %v7667, 5
      %v7670 = vor.u32 %v7666, %v7669
      %v7671 = vrot.slane %v7670, 4
      %v7673 = vshll.u32 %v7406, 16
      %v7675 = vrot.slane %v7673, 5
      %v7676 = vsel %vm249, %v7671, %v7675
      %v7677 = vshrl.u32 %v7406, 16
      %v7679 = vrot.slane %v7677, 4
      %v7680 = vor.u32 %v7679, %v7675
      %v7681 = vrot.slane %v7680, 4
      %v7683 = vshll.u32 %v7407, 16
      %v7685 = vrot.slane %v7683, 5
      %v7686 = vsel %vm249, %v7681, %v7685
      %v7688 = vshrl.u32 %v7408, 16
      %v7690 = vrot.slane %v7688, 4
      %v7691 = vshll.u32 %v7408, 16
      %v7693 = vrot.slane %v7691, 5
      %v7694 = vor.u32 %v7690, %v7693
      %v7695 = vrot.slane %v7694, 4
      %v7697 = vshll.u32 %v7409, 16
      %v7699 = vrot.slane %v7697, 5
      %v7700 = vsel %vm249, %v7695, %v7699
      %v7701 = vshrl.u32 %v7409, 16
      %v7703 = vrot.slane %v7701, 4
      %v7704 = vor.u32 %v7703, %v7699
      %v7705 = vrot.slane %v7704, 4
      %v7707 = vshll.u32 %v7410, 16
      %v7709 = vrot.slane %v7707, 5
      %v7710 = vsel %vm249, %v7705, %v7709
      %v7712 = vshrl.u32 %v7411, 16
      %v7714 = vrot.slane %v7712, 4
      %v7715 = vshll.u32 %v7411, 16
      %v7717 = vrot.slane %v7715, 5
      %v7718 = vor.u32 %v7714, %v7717
      %v7719 = vrot.slane %v7718, 4
      %v7721 = vshll.u32 %v7412, 16
      %v7723 = vrot.slane %v7721, 5
      %v7724 = vsel %vm249, %v7719, %v7723
      %v7725 = vshrl.u32 %v7412, 16
      %v7727 = vrot.slane %v7725, 4
      %v7728 = vor.u32 %v7727, %v7723
      %v7729 = vrot.slane %v7728, 4
      %v7731 = vshll.u32 %v7413, 16
      %v7733 = vrot.slane %v7731, 5
      %v7734 = vsel %vm249, %v7729, %v7733
      %v7736 = vshrl.u32 %v7414, 16
      %v7738 = vrot.slane %v7736, 4
      %v7739 = vshll.u32 %v7414, 16
      %v7741 = vrot.slane %v7739, 5
      %v7742 = vor.u32 %v7738, %v7741
      %v7743 = vrot.slane %v7742, 4
      %v7745 = vshll.u32 %v7415, 16
      %v7747 = vrot.slane %v7745, 5
      %v7748 = vsel %vm249, %v7743, %v7747
      %v7749 = vshrl.u32 %v7415, 16
      %v7751 = vrot.slane %v7749, 4
      %v7752 = vor.u32 %v7751, %v7747
      %v7753 = vrot.slane %v7752, 4
      %v7755 = vshll.u32 %v7416, 16
      %v7757 = vrot.slane %v7755, 5
      %v7758 = vsel %vm249, %v7753, %v7757
      %v7760 = vshrl.u32 %v7417, 16
      %v7762 = vrot.slane %v7760, 4
      %v7763 = vshll.u32 %v7417, 16
      %v7765 = vrot.slane %v7763, 5
      %v7766 = vor.u32 %v7762, %v7765
      %v7767 = vrot.slane %v7766, 4
      %v7769 = vshll.u32 %v7418, 16
      %v7771 = vrot.slane %v7769, 5
      %v7772 = vsel %vm249, %v7767, %v7771
      %v7773 = vshrl.u32 %v7418, 16
      %v7775 = vrot.slane %v7773, 4
      %v7776 = vor.u32 %v7775, %v7771
      %v7777 = vrot.slane %v7776, 4
      %v7779 = vshll.u32 %v7419, 16
      %v7781 = vrot.slane %v7779, 5
      %v7782 = vsel %vm249, %v7777, %v7781
      %v7784 = vshrl.u32 %v7420, 16
      %v7786 = vrot.slane %v7784, 4
      %v7787 = vshll.u32 %v7420, 16
      %v7789 = vrot.slane %v7787, 5
      %v7790 = vor.u32 %v7786, %v7789
      %v7791 = vrot.slane %v7790, 4
      %v7793 = vshll.u32 %v7421, 16
      %v7795 = vrot.slane %v7793, 5
      %v7796 = vsel %vm249, %v7791, %v7795
      %v7797 = vshrl.u32 %v7421, 16
      %v7799 = vrot.slane %v7797, 4
      %v7800 = vor.u32 %v7799, %v7795
      %v7801 = vrot.slane %v7800, 4
      %v7803 = vshll.u32 %v7422, 16
      %v7805 = vrot.slane %v7803, 5
      %v7806 = vsel %vm249, %v7801, %v7805
      %s7807 = scalar_lea.vmem %s1, 32
      %v7808 = vld [vmem:[%s7807] sm:$0x3]
      %v7809 = vunpack.c.l.b16 %v7436
      %v7810 = vunpack.c.l.b16 %v7446
      %v7811 = vunpack.c.l.b16 %v7460
      %v7812 = vunpack.c.l.b16 %v7470
      %v7813 = vunpack.c.l.b16 %v7484
      %v7814 = vunpack.c.l.b16 %v7494
      %v7815 = vunpack.c.l.b16 %v7508
      %v7816 = vunpack.c.l.b16 %v7518
      %v7817 = vunpack.c.l.b16 %v7532
      %v7818 = vunpack.c.l.b16 %v7542
      %v7819 = vunpack.c.l.b16 %v7556
      %v7820 = vunpack.c.l.b16 %v7566
      %v7821 = vunpack.c.l.b16 %v7580
      %v7822 = vunpack.c.l.b16 %v7590
      %v7823 = vunpack.c.l.b16 %v7604
      %v7824 = vunpack.c.l.b16 %v7614
      %v7825 = vunpack.c.l.b16 %v7628
      %v7826 = vunpack.c.l.b16 %v7638
      %v7827 = vunpack.c.l.b16 %v7652
      %v7828 = vunpack.c.l.b16 %v7662
      %v7829 = vunpack.c.l.b16 %v7676
      %v7830 = vunpack.c.l.b16 %v7686
      %v7831 = vunpack.c.l.b16 %v7700
      %v7832 = vunpack.c.l.b16 %v7710
      %v7833 = vunpack.c.l.b16 %v7724
      %v7834 = vunpack.c.l.b16 %v7734
      %v7835 = vunpack.c.l.b16 %v7748
      %v7836 = vunpack.c.l.b16 %v7758
      %v7837 = vunpack.c.l.b16 %v7772
      %v7838 = vunpack.c.l.b16 %v7782
      %v7839 = vunpack.c.l.b16 %v7796
      %v7840 = vunpack.c.l.b16 %v7806
      %v7841 = vpack.c.b16 %v7810, %v7809
      %v7842 = vpack.c.b16 %v7812, %v7811
      %v7843 = vpack.c.b16 %v7814, %v7813
      %v7844 = vpack.c.b16 %v7816, %v7815
      %v7845 = vpack.c.b16 %v7818, %v7817
      %v7846 = vpack.c.b16 %v7820, %v7819
      %v7847 = vpack.c.b16 %v7822, %v7821
      %v7848 = vpack.c.b16 %v7824, %v7823
      %v7849 = vpack.c.b16 %v7826, %v7825
      %v7850 = vpack.c.b16 %v7828, %v7827
      %v7851 = vpack.c.b16 %v7830, %v7829
      %v7852 = vpack.c.b16 %v7832, %v7831
      %v7853 = vpack.c.b16 %v7834, %v7833
      %v7854 = vpack.c.b16 %v7836, %v7835
      %v7855 = vpack.c.b16 %v7838, %v7837
      %v7856 = vpack.c.b16 %v7840, %v7839
      %v7858 = vsel %vm684, %v7841, 0
      %v7861 = vsel %vm684, %v7842, 0
      %v7864 = vsel %vm684, %v7843, 0
      %v7867 = vsel %vm684, %v7844, 0
      %v7870 = vsel %vm684, %v7845, 0
      %v7873 = vsel %vm684, %v7846, 0
      %v7876 = vsel %vm684, %v7847, 0
      %v7879 = vsel %vm684, %v7848, 0
      %v7882 = vsel %vm684, %v7849, 0
      %v7885 = vsel %vm684, %v7850, 0
      %v7888 = vsel %vm684, %v7851, 0
      %v7891 = vsel %vm684, %v7852, 0
      %v7894 = vsel %vm684, %v7853, 0
      %v7897 = vsel %vm684, %v7854, 0
      %v7900 = vsel %vm684, %v7855, 0
      %v7903 = vsel %vm684, %v7856, 0
      %v7906 = vsel %vm733, %v7808, 0
      %7908 = vmatpush.bf16.msra.mxu0 0
      %7909 = vmatpush.bf16.msra.mxu0 0
      %7910 = vmatpush.bf16.msra.mxu0 0
      %7911 = vmatpush.bf16.msra.mxu0 0
      %7912 = vmatpush.bf16.msra.mxu0 0
      %7913 = vmatpush.bf16.msra.mxu0 0
      %7914 = vmatpush.bf16.msra.mxu0 0
      %7915 = vmatpush.bf16.msra.mxu0 %v7906
      %7916 = vmatmul.bf16.gmra.mxu0 %v7858
      %v7917 = vpop.f32.mrf.mxu0
      %v7918 = vadd.f32 0.0, %v7917
      %v7919 = vpop.f32.mrf.mxu0
      %v7920 = vadd.f32 0.0, %v7919
      %7921 = vmatmul.bf16.gmra.mxu0 %v7861
      %v7922 = vpop.f32.mrf.mxu0
      %v7923 = vadd.f32 0.0, %v7922
      %v7924 = vpop.f32.mrf.mxu0
      %v7925 = vadd.f32 0.0, %v7924
      %7926 = vmatmul.bf16.gmra.mxu0 %v7864
      %v7927 = vpop.f32.mrf.mxu0
      %v7928 = vadd.f32 0.0, %v7927
      %v7929 = vpop.f32.mrf.mxu0
      %v7930 = vadd.f32 0.0, %v7929
      %7931 = vmatmul.bf16.gmra.mxu0 %v7867
      %v7932 = vpop.f32.mrf.mxu0
      %v7933 = vadd.f32 0.0, %v7932
      %v7934 = vpop.f32.mrf.mxu0
      %v7935 = vadd.f32 0.0, %v7934
      %7936 = vmatmul.bf16.gmra.mxu0 %v7870
      %v7937 = vpop.f32.mrf.mxu0
      %v7938 = vadd.f32 0.0, %v7937
      %v7939 = vpop.f32.mrf.mxu0
      %v7940 = vadd.f32 0.0, %v7939
      %7941 = vmatmul.bf16.gmra.mxu0 %v7873
      %v7942 = vpop.f32.mrf.mxu0
      %v7943 = vadd.f32 0.0, %v7942
      %v7944 = vpop.f32.mrf.mxu0
      %v7945 = vadd.f32 0.0, %v7944
      %7946 = vmatmul.bf16.gmra.mxu0 %v7876
      %v7947 = vpop.f32.mrf.mxu0
      %v7948 = vadd.f32 0.0, %v7947
      %v7949 = vpop.f32.mrf.mxu0
      %v7950 = vadd.f32 0.0, %v7949
      %7951 = vmatmul.bf16.gmra.mxu0 %v7879
      %v7952 = vpop.f32.mrf.mxu0
      %v7953 = vadd.f32 0.0, %v7952
      %v7954 = vpop.f32.mrf.mxu0
      %v7955 = vadd.f32 0.0, %v7954
      %7956 = vmatmul.bf16.gmra.mxu0 %v7882
      %v7957 = vpop.f32.mrf.mxu0
      %v7958 = vadd.f32 0.0, %v7957
      %v7959 = vpop.f32.mrf.mxu0
      %v7960 = vadd.f32 0.0, %v7959
      %7961 = vmatmul.bf16.gmra.mxu0 %v7885
      %v7962 = vpop.f32.mrf.mxu0
      %v7963 = vadd.f32 0.0, %v7962
      %v7964 = vpop.f32.mrf.mxu0
      %v7965 = vadd.f32 0.0, %v7964
      %7966 = vmatmul.bf16.gmra.mxu0 %v7888
      %v7967 = vpop.f32.mrf.mxu0
      %v7968 = vadd.f32 0.0, %v7967
      %v7969 = vpop.f32.mrf.mxu0
      %v7970 = vadd.f32 0.0, %v7969
      %7971 = vmatmul.bf16.gmra.mxu0 %v7891
      %v7972 = vpop.f32.mrf.mxu0
      %v7973 = vadd.f32 0.0, %v7972
      %v7974 = vpop.f32.mrf.mxu0
      %v7975 = vadd.f32 0.0, %v7974
      %7976 = vmatmul.bf16.gmra.mxu0 %v7894
      %v7977 = vpop.f32.mrf.mxu0
      %v7978 = vadd.f32 0.0, %v7977
      %v7979 = vpop.f32.mrf.mxu0
      %v7980 = vadd.f32 0.0, %v7979
      %7981 = vmatmul.bf16.gmra.mxu0 %v7897
      %v7982 = vpop.f32.mrf.mxu0
      %v7983 = vadd.f32 0.0, %v7982
      %v7984 = vpop.f32.mrf.mxu0
      %v7985 = vadd.f32 0.0, %v7984
      %7986 = vmatmul.bf16.gmra.mxu0 %v7900
      %v7987 = vpop.f32.mrf.mxu0
      %v7988 = vadd.f32 0.0, %v7987
      %v7989 = vpop.f32.mrf.mxu0
      %v7990 = vadd.f32 0.0, %v7989
      %7991 = vmatmul.bf16.gmra.mxu0 %v7903
      %v7992 = vpop.f32.mrf.mxu0
      %v7993 = vadd.f32 0.0, %v7992
      %v7994 = vpop.f32.mrf.mxu0
      %v7995 = vadd.f32 0.0, %v7994
      %7996 = vdwg.mxu0
      %v7997 = vadd.f32 %v7343, %v7918
      %v7998 = vadd.f32 %v7344, %v7920
      %v7999 = vadd.f32 %v7345, %v7923
      %v8000 = vadd.f32 %v7346, %v7925
      %v8001 = vadd.f32 %v7347, %v7928
      %v8002 = vadd.f32 %v7348, %v7930
      %v8003 = vadd.f32 %v7349, %v7933
      %v8004 = vadd.f32 %v7350, %v7935
      %v8005 = vadd.f32 %v7351, %v7938
      %v8006 = vadd.f32 %v7352, %v7940
      %v8007 = vadd.f32 %v7353, %v7943
      %v8008 = vadd.f32 %v7354, %v7945
      %v8009 = vadd.f32 %v7355, %v7948
      %v8010 = vadd.f32 %v7356, %v7950
      %v8011 = vadd.f32 %v7357, %v7953
      %v8012 = vadd.f32 %v7358, %v7955
      %v8013 = vadd.f32 %v7359, %v7958
      %v8014 = vadd.f32 %v7360, %v7960
      %v8015 = vadd.f32 %v7361, %v7963
      %v8016 = vadd.f32 %v7362, %v7965
      %v8017 = vadd.f32 %v7363, %v7968
      %v8018 = vadd.f32 %v7364, %v7970
      %v8019 = vadd.f32 %v7365, %v7973
      %v8020 = vadd.f32 %v7366, %v7975
      %v8021 = vadd.f32 %v7367, %v7978
      %v8022 = vadd.f32 %v7368, %v7980
      %v8023 = vadd.f32 %v7369, %v7983
      %v8024 = vadd.f32 %v7370, %v7985
      %v8025 = vadd.f32 %v7371, %v7988
      %v8026 = vadd.f32 %v7372, %v7990
      %v8027 = vadd.f32 %v7373, %v7993
      %v8028 = vadd.f32 %v7374, %v7995
      %v8029 = vld [vmem:[%s7088] sm:$0xe]
      %v8030 = vld [vmem:[%s7088 + $0xc] sm:$0xe]
      %v8031 = vld [vmem:[%s7088 + $0x18] sm:$0xe]
      %v8032 = vld [vmem:[%s7088 + $0x24] sm:$0xe]
      %v8033 = vld [vmem:[%s7088 + $0x30] sm:$0xe]
      %v8034 = vld [vmem:[%s7088 + $0x3c] sm:$0xe]
      %v8035 = vld [vmem:[%s7088 + $0x48] sm:$0xe]
      %v8036 = vld [vmem:[%s7088 + $0x54] sm:$0xe]
      %v8037 = vld [vmem:[%s7088 + $0x60] sm:$0xe]
      %v8038 = vld [vmem:[%s7088 + $0x6c] sm:$0xe]
      %v8039 = vld [vmem:[%s7088 + $0x78] sm:$0xe]
      %v8040 = vld [vmem:[%s7088 + $0x84] sm:$0xe]
      %v8041 = vld [vmem:[%s7088 + $0x90] sm:$0xe]
      %v8042 = vld [vmem:[%s7088 + $0x9c] sm:$0xe]
      %v8043 = vld [vmem:[%s7088 + $0xa8] sm:$0xe]
      %v8044 = vld [vmem:[%s7088 + $0xb4] sm:$0xe]
      %v8093 = vrot.slane %v8029, 5
      %v8094 = vrot.slane %v8093, 4
      %v8095 = vrot.slane %v7376, 5
      %v8096 = vsel %vm1096, %v8094, %v8095
      %v8097 = vrot.slane %v8095, 4
      %v8098 = vrot.slane %v7377, 5
      %v8099 = vsel %vm1096, %v8097, %v8098
      %v8100 = vrot.slane %v8030, 5
      %v8101 = vrot.slane %v8100, 4
      %v8102 = vrot.slane %v7379, 5
      %v8103 = vsel %vm1096, %v8101, %v8102
      %v8104 = vrot.slane %v8102, 4
      %v8105 = vrot.slane %v7380, 5
      %v8106 = vsel %vm1096, %v8104, %v8105
      %v8107 = vrot.slane %v8031, 5
      %v8108 = vrot.slane %v8107, 4
      %v8109 = vrot.slane %v7382, 5
      %v8110 = vsel %vm1096, %v8108, %v8109
      %v8111 = vrot.slane %v8109, 4
      %v8112 = vrot.slane %v7383, 5
      %v8113 = vsel %vm1096, %v8111, %v8112
      %v8114 = vrot.slane %v8032, 5
      %v8115 = vrot.slane %v8114, 4
      %v8116 = vrot.slane %v7385, 5
      %v8117 = vsel %vm1096, %v8115, %v8116
      %v8118 = vrot.slane %v8116, 4
      %v8119 = vrot.slane %v7386, 5
      %v8120 = vsel %vm1096, %v8118, %v8119
      %v8121 = vrot.slane %v8033, 5
      %v8122 = vrot.slane %v8121, 4
      %v8123 = vrot.slane %v7388, 5
      %v8124 = vsel %vm1096, %v8122, %v8123
      %v8125 = vrot.slane %v8123, 4
      %v8126 = vrot.slane %v7389, 5
      %v8127 = vsel %vm1096, %v8125, %v8126
      %v8128 = vrot.slane %v8034, 5
      %v8129 = vrot.slane %v8128, 4
      %v8130 = vrot.slane %v7391, 5
      %v8131 = vsel %vm1096, %v8129, %v8130
      %v8132 = vrot.slane %v8130, 4
      %v8133 = vrot.slane %v7392, 5
      %v8134 = vsel %vm1096, %v8132, %v8133
      %v8135 = vrot.slane %v8035, 5
      %v8136 = vrot.slane %v8135, 4
      %v8137 = vrot.slane %v7394, 5
      %v8138 = vsel %vm1096, %v8136, %v8137
      %v8139 = vrot.slane %v8137, 4
      %v8140 = vrot.slane %v7395, 5
      %v8141 = vsel %vm1096, %v8139, %v8140
      %v8142 = vrot.slane %v8036, 5
      %v8143 = vrot.slane %v8142, 4
      %v8144 = vrot.slane %v7397, 5
      %v8145 = vsel %vm1096, %v8143, %v8144
      %v8146 = vrot.slane %v8144, 4
      %v8147 = vrot.slane %v7398, 5
      %v8148 = vsel %vm1096, %v8146, %v8147
      %v8149 = vrot.slane %v8037, 5
      %v8150 = vrot.slane %v8149, 4
      %v8151 = vrot.slane %v7400, 5
      %v8152 = vsel %vm1096, %v8150, %v8151
      %v8153 = vrot.slane %v8151, 4
      %v8154 = vrot.slane %v7401, 5
      %v8155 = vsel %vm1096, %v8153, %v8154
      %v8156 = vrot.slane %v8038, 5
      %v8157 = vrot.slane %v8156, 4
      %v8158 = vrot.slane %v7403, 5
      %v8159 = vsel %vm1096, %v8157, %v8158
      %v8160 = vrot.slane %v8158, 4
      %v8161 = vrot.slane %v7404, 5
      %v8162 = vsel %vm1096, %v8160, %v8161
      %v8163 = vrot.slane %v8039, 5
      %v8164 = vrot.slane %v8163, 4
      %v8165 = vrot.slane %v7406, 5
      %v8166 = vsel %vm1096, %v8164, %v8165
      %v8167 = vrot.slane %v8165, 4
      %v8168 = vrot.slane %v7407, 5
      %v8169 = vsel %vm1096, %v8167, %v8168
      %v8170 = vrot.slane %v8040, 5
      %v8171 = vrot.slane %v8170, 4
      %v8172 = vrot.slane %v7409, 5
      %v8173 = vsel %vm1096, %v8171, %v8172
      %v8174 = vrot.slane %v8172, 4
      %v8175 = vrot.slane %v7410, 5
      %v8176 = vsel %vm1096, %v8174, %v8175
      %v8177 = vrot.slane %v8041, 5
      %v8178 = vrot.slane %v8177, 4
      %v8179 = vrot.slane %v7412, 5
      %v8180 = vsel %vm1096, %v8178, %v8179
      %v8181 = vrot.slane %v8179, 4
      %v8182 = vrot.slane %v7413, 5
      %v8183 = vsel %vm1096, %v8181, %v8182
      %v8184 = vrot.slane %v8042, 5
      %v8185 = vrot.slane %v8184, 4
      %v8186 = vrot.slane %v7415, 5
      %v8187 = vsel %vm1096, %v8185, %v8186
      %v8188 = vrot.slane %v8186, 4
      %v8189 = vrot.slane %v7416, 5
      %v8190 = vsel %vm1096, %v8188, %v8189
      %v8191 = vrot.slane %v8043, 5
      %v8192 = vrot.slane %v8191, 4
      %v8193 = vrot.slane %v7418, 5
      %v8194 = vsel %vm1096, %v8192, %v8193
      %v8195 = vrot.slane %v8193, 4
      %v8196 = vrot.slane %v7419, 5
      %v8197 = vsel %vm1096, %v8195, %v8196
      %v8198 = vrot.slane %v8044, 5
      %v8199 = vrot.slane %v8198, 4
      %v8200 = vrot.slane %v7421, 5
      %v8201 = vsel %vm1096, %v8199, %v8200
      %v8202 = vrot.slane %v8200, 4
      %v8203 = vrot.slane %v7422, 5
      %v8204 = vsel %vm1096, %v8202, %v8203
      %s8205 = scalar_lea.vmem %s1, 34
      %v8206 = vld [vmem:[%s8205] sm:$0x3]
      %v8207 = vunpack.c.l.b16 %v8096
      %v8208 = vunpack.c.l.b16 %v8099
      %v8209 = vunpack.c.l.b16 %v8103
      %v8210 = vunpack.c.l.b16 %v8106
      %v8211 = vunpack.c.l.b16 %v8110
      %v8212 = vunpack.c.l.b16 %v8113
      %v8213 = vunpack.c.l.b16 %v8117
      %v8214 = vunpack.c.l.b16 %v8120
      %v8215 = vunpack.c.l.b16 %v8124
      %v8216 = vunpack.c.l.b16 %v8127
      %v8217 = vunpack.c.l.b16 %v8131
      %v8218 = vunpack.c.l.b16 %v8134
      %v8219 = vunpack.c.l.b16 %v8138
      %v8220 = vunpack.c.l.b16 %v8141
      %v8221 = vunpack.c.l.b16 %v8145
      %v8222 = vunpack.c.l.b16 %v8148
      %v8223 = vunpack.c.l.b16 %v8152
      %v8224 = vunpack.c.l.b16 %v8155
      %v8225 = vunpack.c.l.b16 %v8159
      %v8226 = vunpack.c.l.b16 %v8162
      %v8227 = vunpack.c.l.b16 %v8166
      %v8228 = vunpack.c.l.b16 %v8169
      %v8229 = vunpack.c.l.b16 %v8173
      %v8230 = vunpack.c.l.b16 %v8176
      %v8231 = vunpack.c.l.b16 %v8180
      %v8232 = vunpack.c.l.b16 %v8183
      %v8233 = vunpack.c.l.b16 %v8187
      %v8234 = vunpack.c.l.b16 %v8190
      %v8235 = vunpack.c.l.b16 %v8194
      %v8236 = vunpack.c.l.b16 %v8197
      %v8237 = vunpack.c.l.b16 %v8201
      %v8238 = vunpack.c.l.b16 %v8204
      %v8239 = vpack.c.b16 %v8208, %v8207
      %v8240 = vpack.c.b16 %v8210, %v8209
      %v8241 = vpack.c.b16 %v8212, %v8211
      %v8242 = vpack.c.b16 %v8214, %v8213
      %v8243 = vpack.c.b16 %v8216, %v8215
      %v8244 = vpack.c.b16 %v8218, %v8217
      %v8245 = vpack.c.b16 %v8220, %v8219
      %v8246 = vpack.c.b16 %v8222, %v8221
      %v8247 = vpack.c.b16 %v8224, %v8223
      %v8248 = vpack.c.b16 %v8226, %v8225
      %v8249 = vpack.c.b16 %v8228, %v8227
      %v8250 = vpack.c.b16 %v8230, %v8229
      %v8251 = vpack.c.b16 %v8232, %v8231
      %v8252 = vpack.c.b16 %v8234, %v8233
      %v8253 = vpack.c.b16 %v8236, %v8235
      %v8254 = vpack.c.b16 %v8238, %v8237
      %v8256 = vsel %vm684, %v8239, 0
      %v8259 = vsel %vm684, %v8240, 0
      %v8262 = vsel %vm684, %v8241, 0
      %v8265 = vsel %vm684, %v8242, 0
      %v8268 = vsel %vm684, %v8243, 0
      %v8271 = vsel %vm684, %v8244, 0
      %v8274 = vsel %vm684, %v8245, 0
      %v8277 = vsel %vm684, %v8246, 0
      %v8280 = vsel %vm684, %v8247, 0
      %v8283 = vsel %vm684, %v8248, 0
      %v8286 = vsel %vm684, %v8249, 0
      %v8289 = vsel %vm684, %v8250, 0
      %v8292 = vsel %vm684, %v8251, 0
      %v8295 = vsel %vm684, %v8252, 0
      %v8298 = vsel %vm684, %v8253, 0
      %v8301 = vsel %vm684, %v8254, 0
      %v8304 = vsel %vm733, %v8206, 0
      %8306 = vmatpush.bf16.msra.mxu0 0
      %8307 = vmatpush.bf16.msra.mxu0 0
      %8308 = vmatpush.bf16.msra.mxu0 0
      %8309 = vmatpush.bf16.msra.mxu0 0
      %8310 = vmatpush.bf16.msra.mxu0 0
      %8311 = vmatpush.bf16.msra.mxu0 0
      %8312 = vmatpush.bf16.msra.mxu0 0
      %8313 = vmatpush.bf16.msra.mxu0 %v8304
      %8314 = vmatmul.bf16.gmra.mxu0 %v8256
      %v8315 = vpop.f32.mrf.mxu0
      %v8316 = vadd.f32 0.0, %v8315
      %v8317 = vpop.f32.mrf.mxu0
      %v8318 = vadd.f32 0.0, %v8317
      %8319 = vmatmul.bf16.gmra.mxu0 %v8259
      %v8320 = vpop.f32.mrf.mxu0
      %v8321 = vadd.f32 0.0, %v8320
      %v8322 = vpop.f32.mrf.mxu0
      %v8323 = vadd.f32 0.0, %v8322
      %8324 = vmatmul.bf16.gmra.mxu0 %v8262
      %v8325 = vpop.f32.mrf.mxu0
      %v8326 = vadd.f32 0.0, %v8325
      %v8327 = vpop.f32.mrf.mxu0
      %v8328 = vadd.f32 0.0, %v8327
      %8329 = vmatmul.bf16.gmra.mxu0 %v8265
      %v8330 = vpop.f32.mrf.mxu0
      %v8331 = vadd.f32 0.0, %v8330
      %v8332 = vpop.f32.mrf.mxu0
      %v8333 = vadd.f32 0.0, %v8332
      %8334 = vmatmul.bf16.gmra.mxu0 %v8268
      %v8335 = vpop.f32.mrf.mxu0
      %v8336 = vadd.f32 0.0, %v8335
      %v8337 = vpop.f32.mrf.mxu0
      %v8338 = vadd.f32 0.0, %v8337
      %8339 = vmatmul.bf16.gmra.mxu0 %v8271
      %v8340 = vpop.f32.mrf.mxu0
      %v8341 = vadd.f32 0.0, %v8340
      %v8342 = vpop.f32.mrf.mxu0
      %v8343 = vadd.f32 0.0, %v8342
      %8344 = vmatmul.bf16.gmra.mxu0 %v8274
      %v8345 = vpop.f32.mrf.mxu0
      %v8346 = vadd.f32 0.0, %v8345
      %v8347 = vpop.f32.mrf.mxu0
      %v8348 = vadd.f32 0.0, %v8347
      %8349 = vmatmul.bf16.gmra.mxu0 %v8277
      %v8350 = vpop.f32.mrf.mxu0
      %v8351 = vadd.f32 0.0, %v8350
      %v8352 = vpop.f32.mrf.mxu0
      %v8353 = vadd.f32 0.0, %v8352
      %8354 = vmatmul.bf16.gmra.mxu0 %v8280
      %v8355 = vpop.f32.mrf.mxu0
      %v8356 = vadd.f32 0.0, %v8355
      %v8357 = vpop.f32.mrf.mxu0
      %v8358 = vadd.f32 0.0, %v8357
      %8359 = vmatmul.bf16.gmra.mxu0 %v8283
      %v8360 = vpop.f32.mrf.mxu0
      %v8361 = vadd.f32 0.0, %v8360
      %v8362 = vpop.f32.mrf.mxu0
      %v8363 = vadd.f32 0.0, %v8362
      %8364 = vmatmul.bf16.gmra.mxu0 %v8286
      %v8365 = vpop.f32.mrf.mxu0
      %v8366 = vadd.f32 0.0, %v8365
      %v8367 = vpop.f32.mrf.mxu0
      %v8368 = vadd.f32 0.0, %v8367
      %8369 = vmatmul.bf16.gmra.mxu0 %v8289
      %v8370 = vpop.f32.mrf.mxu0
      %v8371 = vadd.f32 0.0, %v8370
      %v8372 = vpop.f32.mrf.mxu0
      %v8373 = vadd.f32 0.0, %v8372
      %8374 = vmatmul.bf16.gmra.mxu0 %v8292
      %v8375 = vpop.f32.mrf.mxu0
      %v8376 = vadd.f32 0.0, %v8375
      %v8377 = vpop.f32.mrf.mxu0
      %v8378 = vadd.f32 0.0, %v8377
      %8379 = vmatmul.bf16.gmra.mxu0 %v8295
      %v8380 = vpop.f32.mrf.mxu0
      %v8381 = vadd.f32 0.0, %v8380
      %v8382 = vpop.f32.mrf.mxu0
      %v8383 = vadd.f32 0.0, %v8382
      %8384 = vmatmul.bf16.gmra.mxu0 %v8298
      %v8385 = vpop.f32.mrf.mxu0
      %v8386 = vadd.f32 0.0, %v8385
      %v8387 = vpop.f32.mrf.mxu0
      %v8388 = vadd.f32 0.0, %v8387
      %8389 = vmatmul.bf16.gmra.mxu0 %v8301
      %v8390 = vpop.f32.mrf.mxu0
      %v8391 = vadd.f32 0.0, %v8390
      %v8392 = vpop.f32.mrf.mxu0
      %v8393 = vadd.f32 0.0, %v8392
      %8394 = vdwg.mxu0
      %v8395 = vadd.f32 %v7997, %v8316
      %v8396 = vadd.f32 %v7998, %v8318
      %v8397 = vadd.f32 %v7999, %v8321
      %v8398 = vadd.f32 %v8000, %v8323
      %v8399 = vadd.f32 %v8001, %v8326
      %v8400 = vadd.f32 %v8002, %v8328
      %v8401 = vadd.f32 %v8003, %v8331
      %v8402 = vadd.f32 %v8004, %v8333
      %v8403 = vadd.f32 %v8005, %v8336
      %v8404 = vadd.f32 %v8006, %v8338
      %v8405 = vadd.f32 %v8007, %v8341
      %v8406 = vadd.f32 %v8008, %v8343
      %v8407 = vadd.f32 %v8009, %v8346
      %v8408 = vadd.f32 %v8010, %v8348
      %v8409 = vadd.f32 %v8011, %v8351
      %v8410 = vadd.f32 %v8012, %v8353
      %v8411 = vadd.f32 %v8013, %v8356
      %v8412 = vadd.f32 %v8014, %v8358
      %v8413 = vadd.f32 %v8015, %v8361
      %v8414 = vadd.f32 %v8016, %v8363
      %v8415 = vadd.f32 %v8017, %v8366
      %v8416 = vadd.f32 %v8018, %v8368
      %v8417 = vadd.f32 %v8019, %v8371
      %v8418 = vadd.f32 %v8020, %v8373
      %v8419 = vadd.f32 %v8021, %v8376
      %v8420 = vadd.f32 %v8022, %v8378
      %v8421 = vadd.f32 %v8023, %v8381
      %v8422 = vadd.f32 %v8024, %v8383
      %v8423 = vadd.f32 %v8025, %v8386
      %v8424 = vadd.f32 %v8026, %v8388
      %v8425 = vadd.f32 %v8027, %v8391
      %v8426 = vadd.f32 %v8028, %v8393
      %v8427 = vld [vmem:[%s7088 + $0x8] sm:$0x3]
      %v8428 = vld [vmem:[%s7088 + $0x14] sm:$0x3]
      %v8429 = vld [vmem:[%s7088 + $0x20] sm:$0x3]
      %v8430 = vld [vmem:[%s7088 + $0x2c] sm:$0x3]
      %v8431 = vld [vmem:[%s7088 + $0x38] sm:$0x3]
      %v8432 = vld [vmem:[%s7088 + $0x44] sm:$0x3]
      %v8433 = vld [vmem:[%s7088 + $0x50] sm:$0x3]
      %v8434 = vld [vmem:[%s7088 + $0x5c] sm:$0x3]
      %v8435 = vld [vmem:[%s7088 + $0x68] sm:$0x3]
      %v8436 = vld [vmem:[%s7088 + $0x74] sm:$0x3]
      %v8437 = vld [vmem:[%s7088 + $0x80] sm:$0x3]
      %v8438 = vld [vmem:[%s7088 + $0x8c] sm:$0x3]
      %v8439 = vld [vmem:[%s7088 + $0x98] sm:$0x3]
      %v8440 = vld [vmem:[%s7088 + $0xa4] sm:$0x3]
      %v8441 = vld [vmem:[%s7088 + $0xb0] sm:$0x3]
      %v8442 = vld [vmem:[%s7088 + $0xbc] sm:$0x3]
      %v8444 = vshrl.u32 %v8029, 16
      %v8446 = vrot.slane %v8444, 5
      %v8447 = vshll.u32 %v8029, 16
      %v8449 = vrot.slane %v8447, 6
      %v8450 = vor.u32 %v8446, %v8449
      %v8451 = vrot.slane %v8450, 4
      %v8452 = vrot.slane %v7437, 5
      %v8453 = vrot.slane %v7433, 6
      %v8454 = vor.u32 %v8452, %v8453
      %v8455 = vsel %vm1449, %v8451, %v8454
      %v8456 = vrot.slane %v8454, 4
      %v8458 = vshrl.u32 %v8427, 16
      %v8460 = vrot.slane %v8458, 5
      %v8461 = vshll.u32 %v8427, 16
      %v8463 = vrot.slane %v8461, 6
      %v8464 = vor.u32 %v8460, %v8463
      %v8465 = vsel %vm1449, %v8456, %v8464
      %v8467 = vshrl.u32 %v8030, 16
      %v8469 = vrot.slane %v8467, 5
      %v8470 = vshll.u32 %v8030, 16
      %v8472 = vrot.slane %v8470, 6
      %v8473 = vor.u32 %v8469, %v8472
      %v8474 = vrot.slane %v8473, 4
      %v8475 = vrot.slane %v7461, 5
      %v8476 = vrot.slane %v7457, 6
      %v8477 = vor.u32 %v8475, %v8476
      %v8478 = vsel %vm1449, %v8474, %v8477
      %v8479 = vrot.slane %v8477, 4
      %v8481 = vshrl.u32 %v8428, 16
      %v8483 = vrot.slane %v8481, 5
      %v8484 = vshll.u32 %v8428, 16
      %v8486 = vrot.slane %v8484, 6
      %v8487 = vor.u32 %v8483, %v8486
      %v8488 = vsel %vm1449, %v8479, %v8487
      %v8490 = vshrl.u32 %v8031, 16
      %v8492 = vrot.slane %v8490, 5
      %v8493 = vshll.u32 %v8031, 16
      %v8495 = vrot.slane %v8493, 6
      %v8496 = vor.u32 %v8492, %v8495
      %v8497 = vrot.slane %v8496, 4
      %v8498 = vrot.slane %v7485, 5
      %v8499 = vrot.slane %v7481, 6
      %v8500 = vor.u32 %v8498, %v8499
      %v8501 = vsel %vm1449, %v8497, %v8500
      %v8502 = vrot.slane %v8500, 4
      %v8504 = vshrl.u32 %v8429, 16
      %v8506 = vrot.slane %v8504, 5
      %v8507 = vshll.u32 %v8429, 16
      %v8509 = vrot.slane %v8507, 6
      %v8510 = vor.u32 %v8506, %v8509
      %v8511 = vsel %vm1449, %v8502, %v8510
      %v8513 = vshrl.u32 %v8032, 16
      %v8515 = vrot.slane %v8513, 5
      %v8516 = vshll.u32 %v8032, 16
      %v8518 = vrot.slane %v8516, 6
      %v8519 = vor.u32 %v8515, %v8518
      %v8520 = vrot.slane %v8519, 4
      %v8521 = vrot.slane %v7509, 5
      %v8522 = vrot.slane %v7505, 6
      %v8523 = vor.u32 %v8521, %v8522
      %v8524 = vsel %vm1449, %v8520, %v8523
      %v8525 = vrot.slane %v8523, 4
      %v8527 = vshrl.u32 %v8430, 16
      %v8529 = vrot.slane %v8527, 5
      %v8530 = vshll.u32 %v8430, 16
      %v8532 = vrot.slane %v8530, 6
      %v8533 = vor.u32 %v8529, %v8532
      %v8534 = vsel %vm1449, %v8525, %v8533
      %v8536 = vshrl.u32 %v8033, 16
      %v8538 = vrot.slane %v8536, 5
      %v8539 = vshll.u32 %v8033, 16
      %v8541 = vrot.slane %v8539, 6
      %v8542 = vor.u32 %v8538, %v8541
      %v8543 = vrot.slane %v8542, 4
      %v8544 = vrot.slane %v7533, 5
      %v8545 = vrot.slane %v7529, 6
      %v8546 = vor.u32 %v8544, %v8545
      %v8547 = vsel %vm1449, %v8543, %v8546
      %v8548 = vrot.slane %v8546, 4
      %v8550 = vshrl.u32 %v8431, 16
      %v8552 = vrot.slane %v8550, 5
      %v8553 = vshll.u32 %v8431, 16
      %v8555 = vrot.slane %v8553, 6
      %v8556 = vor.u32 %v8552, %v8555
      %v8557 = vsel %vm1449, %v8548, %v8556
      %v8559 = vshrl.u32 %v8034, 16
      %v8561 = vrot.slane %v8559, 5
      %v8562 = vshll.u32 %v8034, 16
      %v8564 = vrot.slane %v8562, 6
      %v8565 = vor.u32 %v8561, %v8564
      %v8566 = vrot.slane %v8565, 4
      %v8567 = vrot.slane %v7557, 5
      %v8568 = vrot.slane %v7553, 6
      %v8569 = vor.u32 %v8567, %v8568
      %v8570 = vsel %vm1449, %v8566, %v8569
      %v8571 = vrot.slane %v8569, 4
      %v8573 = vshrl.u32 %v8432, 16
      %v8575 = vrot.slane %v8573, 5
      %v8576 = vshll.u32 %v8432, 16
      %v8578 = vrot.slane %v8576, 6
      %v8579 = vor.u32 %v8575, %v8578
      %v8580 = vsel %vm1449, %v8571, %v8579
      %v8582 = vshrl.u32 %v8035, 16
      %v8584 = vrot.slane %v8582, 5
      %v8585 = vshll.u32 %v8035, 16
      %v8587 = vrot.slane %v8585, 6
      %v8588 = vor.u32 %v8584, %v8587
      %v8589 = vrot.slane %v8588, 4
      %v8590 = vrot.slane %v7581, 5
      %v8591 = vrot.slane %v7577, 6
      %v8592 = vor.u32 %v8590, %v8591
      %v8593 = vsel %vm1449, %v8589, %v8592
      %v8594 = vrot.slane %v8592, 4
      %v8596 = vshrl.u32 %v8433, 16
      %v8598 = vrot.slane %v8596, 5
      %v8599 = vshll.u32 %v8433, 16
      %v8601 = vrot.slane %v8599, 6
      %v8602 = vor.u32 %v8598, %v8601
      %v8603 = vsel %vm1449, %v8594, %v8602
      %v8605 = vshrl.u32 %v8036, 16
      %v8607 = vrot.slane %v8605, 5
      %v8608 = vshll.u32 %v8036, 16
      %v8610 = vrot.slane %v8608, 6
      %v8611 = vor.u32 %v8607, %v8610
      %v8612 = vrot.slane %v8611, 4
      %v8613 = vrot.slane %v7605, 5
      %v8614 = vrot.slane %v7601, 6
      %v8615 = vor.u32 %v8613, %v8614
      %v8616 = vsel %vm1449, %v8612, %v8615
      %v8617 = vrot.slane %v8615, 4
      %v8619 = vshrl.u32 %v8434, 16
      %v8621 = vrot.slane %v8619, 5
      %v8622 = vshll.u32 %v8434, 16
      %v8624 = vrot.slane %v8622, 6
      %v8625 = vor.u32 %v8621, %v8624
      %v8626 = vsel %vm1449, %v8617, %v8625
      %v8628 = vshrl.u32 %v8037, 16
      %v8630 = vrot.slane %v8628, 5
      %v8631 = vshll.u32 %v8037, 16
      %v8633 = vrot.slane %v8631, 6
      %v8634 = vor.u32 %v8630, %v8633
      %v8635 = vrot.slane %v8634, 4
      %v8636 = vrot.slane %v7629, 5
      %v8637 = vrot.slane %v7625, 6
      %v8638 = vor.u32 %v8636, %v8637
      %v8639 = vsel %vm1449, %v8635, %v8638
      %v8640 = vrot.slane %v8638, 4
      %v8642 = vshrl.u32 %v8435, 16
      %v8644 = vrot.slane %v8642, 5
      %v8645 = vshll.u32 %v8435, 16
      %v8647 = vrot.slane %v8645, 6
      %v8648 = vor.u32 %v8644, %v8647
      %v8649 = vsel %vm1449, %v8640, %v8648
      %v8651 = vshrl.u32 %v8038, 16
      %v8653 = vrot.slane %v8651, 5
      %v8654 = vshll.u32 %v8038, 16
      %v8656 = vrot.slane %v8654, 6
      %v8657 = vor.u32 %v8653, %v8656
      %v8658 = vrot.slane %v8657, 4
      %v8659 = vrot.slane %v7653, 5
      %v8660 = vrot.slane %v7649, 6
      %v8661 = vor.u32 %v8659, %v8660
      %v8662 = vsel %vm1449, %v8658, %v8661
      %v8663 = vrot.slane %v8661, 4
      %v8665 = vshrl.u32 %v8436, 16
      %v8667 = vrot.slane %v8665, 5
      %v8668 = vshll.u32 %v8436, 16
      %v8670 = vrot.slane %v8668, 6
      %v8671 = vor.u32 %v8667, %v8670
      %v8672 = vsel %vm1449, %v8663, %v8671
      %v8674 = vshrl.u32 %v8039, 16
      %v8676 = vrot.slane %v8674, 5
      %v8677 = vshll.u32 %v8039, 16
      %v8679 = vrot.slane %v8677, 6
      %v8680 = vor.u32 %v8676, %v8679
      %v8681 = vrot.slane %v8680, 4
      %v8682 = vrot.slane %v7677, 5
      %v8683 = vrot.slane %v7673, 6
      %v8684 = vor.u32 %v8682, %v8683
      %v8685 = vsel %vm1449, %v8681, %v8684
      %v8686 = vrot.slane %v8684, 4
      %v8688 = vshrl.u32 %v8437, 16
      %v8690 = vrot.slane %v8688, 5
      %v8691 = vshll.u32 %v8437, 16
      %v8693 = vrot.slane %v8691, 6
      %v8694 = vor.u32 %v8690, %v8693
      %v8695 = vsel %vm1449, %v8686, %v8694
      %v8697 = vshrl.u32 %v8040, 16
      %v8699 = vrot.slane %v8697, 5
      %v8700 = vshll.u32 %v8040, 16
      %v8702 = vrot.slane %v8700, 6
      %v8703 = vor.u32 %v8699, %v8702
      %v8704 = vrot.slane %v8703, 4
      %v8705 = vrot.slane %v7701, 5
      %v8706 = vrot.slane %v7697, 6
      %v8707 = vor.u32 %v8705, %v8706
      %v8708 = vsel %vm1449, %v8704, %v8707
      %v8709 = vrot.slane %v8707, 4
      %v8711 = vshrl.u32 %v8438, 16
      %v8713 = vrot.slane %v8711, 5
      %v8714 = vshll.u32 %v8438, 16
      %v8716 = vrot.slane %v8714, 6
      %v8717 = vor.u32 %v8713, %v8716
      %v8718 = vsel %vm1449, %v8709, %v8717
      %v8720 = vshrl.u32 %v8041, 16
      %v8722 = vrot.slane %v8720, 5
      %v8723 = vshll.u32 %v8041, 16
      %v8725 = vrot.slane %v8723, 6
      %v8726 = vor.u32 %v8722, %v8725
      %v8727 = vrot.slane %v8726, 4
      %v8728 = vrot.slane %v7725, 5
      %v8729 = vrot.slane %v7721, 6
      %v8730 = vor.u32 %v8728, %v8729
      %v8731 = vsel %vm1449, %v8727, %v8730
      %v8732 = vrot.slane %v8730, 4
      %v8734 = vshrl.u32 %v8439, 16
      %v8736 = vrot.slane %v8734, 5
      %v8737 = vshll.u32 %v8439, 16
      %v8739 = vrot.slane %v8737, 6
      %v8740 = vor.u32 %v8736, %v8739
      %v8741 = vsel %vm1449, %v8732, %v8740
      %v8743 = vshrl.u32 %v8042, 16
      %v8745 = vrot.slane %v8743, 5
      %v8746 = vshll.u32 %v8042, 16
      %v8748 = vrot.slane %v8746, 6
      %v8749 = vor.u32 %v8745, %v8748
      %v8750 = vrot.slane %v8749, 4
      %v8751 = vrot.slane %v7749, 5
      %v8752 = vrot.slane %v7745, 6
      %v8753 = vor.u32 %v8751, %v8752
      %v8754 = vsel %vm1449, %v8750, %v8753
      %v8755 = vrot.slane %v8753, 4
      %v8757 = vshrl.u32 %v8440, 16
      %v8759 = vrot.slane %v8757, 5
      %v8760 = vshll.u32 %v8440, 16
      %v8762 = vrot.slane %v8760, 6
      %v8763 = vor.u32 %v8759, %v8762
      %v8764 = vsel %vm1449, %v8755, %v8763
      %v8766 = vshrl.u32 %v8043, 16
      %v8768 = vrot.slane %v8766, 5
      %v8769 = vshll.u32 %v8043, 16
      %v8771 = vrot.slane %v8769, 6
      %v8772 = vor.u32 %v8768, %v8771
      %v8773 = vrot.slane %v8772, 4
      %v8774 = vrot.slane %v7773, 5
      %v8775 = vrot.slane %v7769, 6
      %v8776 = vor.u32 %v8774, %v8775
      %v8777 = vsel %vm1449, %v8773, %v8776
      %v8778 = vrot.slane %v8776, 4
      %v8780 = vshrl.u32 %v8441, 16
      %v8782 = vrot.slane %v8780, 5
      %v8783 = vshll.u32 %v8441, 16
      %v8785 = vrot.slane %v8783, 6
      %v8786 = vor.u32 %v8782, %v8785
      %v8787 = vsel %vm1449, %v8778, %v8786
      %v8789 = vshrl.u32 %v8044, 16
      %v8791 = vrot.slane %v8789, 5
      %v8792 = vshll.u32 %v8044, 16
      %v8794 = vrot.slane %v8792, 6
      %v8795 = vor.u32 %v8791, %v8794
      %v8796 = vrot.slane %v8795, 4
      %v8797 = vrot.slane %v7797, 5
      %v8798 = vrot.slane %v7793, 6
      %v8799 = vor.u32 %v8797, %v8798
      %v8800 = vsel %vm1449, %v8796, %v8799
      %v8801 = vrot.slane %v8799, 4
      %v8803 = vshrl.u32 %v8442, 16
      %v8805 = vrot.slane %v8803, 5
      %v8806 = vshll.u32 %v8442, 16
      %v8808 = vrot.slane %v8806, 6
      %v8809 = vor.u32 %v8805, %v8808
      %v8810 = vsel %vm1449, %v8801, %v8809
      %s8811 = scalar_lea.vmem %s1, 36
      %v8812 = vld [vmem:[%s8811] sm:$0x3]
      %v8813 = vunpack.c.l.b16 %v8455
      %v8814 = vunpack.c.l.b16 %v8465
      %v8815 = vunpack.c.l.b16 %v8478
      %v8816 = vunpack.c.l.b16 %v8488
      %v8817 = vunpack.c.l.b16 %v8501
      %v8818 = vunpack.c.l.b16 %v8511
      %v8819 = vunpack.c.l.b16 %v8524
      %v8820 = vunpack.c.l.b16 %v8534
      %v8821 = vunpack.c.l.b16 %v8547
      %v8822 = vunpack.c.l.b16 %v8557
      %v8823 = vunpack.c.l.b16 %v8570
      %v8824 = vunpack.c.l.b16 %v8580
      %v8825 = vunpack.c.l.b16 %v8593
      %v8826 = vunpack.c.l.b16 %v8603
      %v8827 = vunpack.c.l.b16 %v8616
      %v8828 = vunpack.c.l.b16 %v8626
      %v8829 = vunpack.c.l.b16 %v8639
      %v8830 = vunpack.c.l.b16 %v8649
      %v8831 = vunpack.c.l.b16 %v8662
      %v8832 = vunpack.c.l.b16 %v8672
      %v8833 = vunpack.c.l.b16 %v8685
      %v8834 = vunpack.c.l.b16 %v8695
      %v8835 = vunpack.c.l.b16 %v8708
      %v8836 = vunpack.c.l.b16 %v8718
      %v8837 = vunpack.c.l.b16 %v8731
      %v8838 = vunpack.c.l.b16 %v8741
      %v8839 = vunpack.c.l.b16 %v8754
      %v8840 = vunpack.c.l.b16 %v8764
      %v8841 = vunpack.c.l.b16 %v8777
      %v8842 = vunpack.c.l.b16 %v8787
      %v8843 = vunpack.c.l.b16 %v8800
      %v8844 = vunpack.c.l.b16 %v8810
      %v8845 = vpack.c.b16 %v8814, %v8813
      %v8846 = vpack.c.b16 %v8816, %v8815
      %v8847 = vpack.c.b16 %v8818, %v8817
      %v8848 = vpack.c.b16 %v8820, %v8819
      %v8849 = vpack.c.b16 %v8822, %v8821
      %v8850 = vpack.c.b16 %v8824, %v8823
      %v8851 = vpack.c.b16 %v8826, %v8825
      %v8852 = vpack.c.b16 %v8828, %v8827
      %v8853 = vpack.c.b16 %v8830, %v8829
      %v8854 = vpack.c.b16 %v8832, %v8831
      %v8855 = vpack.c.b16 %v8834, %v8833
      %v8856 = vpack.c.b16 %v8836, %v8835
      %v8857 = vpack.c.b16 %v8838, %v8837
      %v8858 = vpack.c.b16 %v8840, %v8839
      %v8859 = vpack.c.b16 %v8842, %v8841
      %v8860 = vpack.c.b16 %v8844, %v8843
      %v8862 = vsel %vm684, %v8845, 0
      %v8865 = vsel %vm684, %v8846, 0
      %v8868 = vsel %vm684, %v8847, 0
      %v8871 = vsel %vm684, %v8848, 0
      %v8874 = vsel %vm684, %v8849, 0
      %v8877 = vsel %vm684, %v8850, 0
      %v8880 = vsel %vm684, %v8851, 0
      %v8883 = vsel %vm684, %v8852, 0
      %v8886 = vsel %vm684, %v8853, 0
      %v8889 = vsel %vm684, %v8854, 0
      %v8892 = vsel %vm684, %v8855, 0
      %v8895 = vsel %vm684, %v8856, 0
      %v8898 = vsel %vm684, %v8857, 0
      %v8901 = vsel %vm684, %v8858, 0
      %v8904 = vsel %vm684, %v8859, 0
      %v8907 = vsel %vm684, %v8860, 0
      %v8910 = vsel %vm733, %v8812, 0
      %8912 = vmatpush.bf16.msra.mxu0 0
      %8913 = vmatpush.bf16.msra.mxu0 0
      %8914 = vmatpush.bf16.msra.mxu0 0
      %8915 = vmatpush.bf16.msra.mxu0 0
      %8916 = vmatpush.bf16.msra.mxu0 0
      %8917 = vmatpush.bf16.msra.mxu0 0
      %8918 = vmatpush.bf16.msra.mxu0 0
      %8919 = vmatpush.bf16.msra.mxu0 %v8910
      %8920 = vmatmul.bf16.gmra.mxu0 %v8862
      %v8921 = vpop.f32.mrf.mxu0
      %v8922 = vadd.f32 0.0, %v8921
      %v8923 = vpop.f32.mrf.mxu0
      %v8924 = vadd.f32 0.0, %v8923
      %8925 = vmatmul.bf16.gmra.mxu0 %v8865
      %v8926 = vpop.f32.mrf.mxu0
      %v8927 = vadd.f32 0.0, %v8926
      %v8928 = vpop.f32.mrf.mxu0
      %v8929 = vadd.f32 0.0, %v8928
      %8930 = vmatmul.bf16.gmra.mxu0 %v8868
      %v8931 = vpop.f32.mrf.mxu0
      %v8932 = vadd.f32 0.0, %v8931
      %v8933 = vpop.f32.mrf.mxu0
      %v8934 = vadd.f32 0.0, %v8933
      %8935 = vmatmul.bf16.gmra.mxu0 %v8871
      %v8936 = vpop.f32.mrf.mxu0
      %v8937 = vadd.f32 0.0, %v8936
      %v8938 = vpop.f32.mrf.mxu0
      %v8939 = vadd.f32 0.0, %v8938
      %8940 = vmatmul.bf16.gmra.mxu0 %v8874
      %v8941 = vpop.f32.mrf.mxu0
      %v8942 = vadd.f32 0.0, %v8941
      %v8943 = vpop.f32.mrf.mxu0
      %v8944 = vadd.f32 0.0, %v8943
      %8945 = vmatmul.bf16.gmra.mxu0 %v8877
      %v8946 = vpop.f32.mrf.mxu0
      %v8947 = vadd.f32 0.0, %v8946
      %v8948 = vpop.f32.mrf.mxu0
      %v8949 = vadd.f32 0.0, %v8948
      %8950 = vmatmul.bf16.gmra.mxu0 %v8880
      %v8951 = vpop.f32.mrf.mxu0
      %v8952 = vadd.f32 0.0, %v8951
      %v8953 = vpop.f32.mrf.mxu0
      %v8954 = vadd.f32 0.0, %v8953
      %8955 = vmatmul.bf16.gmra.mxu0 %v8883
      %v8956 = vpop.f32.mrf.mxu0
      %v8957 = vadd.f32 0.0, %v8956
      %v8958 = vpop.f32.mrf.mxu0
      %v8959 = vadd.f32 0.0, %v8958
      %8960 = vmatmul.bf16.gmra.mxu0 %v8886
      %v8961 = vpop.f32.mrf.mxu0
      %v8962 = vadd.f32 0.0, %v8961
      %v8963 = vpop.f32.mrf.mxu0
      %v8964 = vadd.f32 0.0, %v8963
      %8965 = vmatmul.bf16.gmra.mxu0 %v8889
      %v8966 = vpop.f32.mrf.mxu0
      %v8967 = vadd.f32 0.0, %v8966
      %v8968 = vpop.f32.mrf.mxu0
      %v8969 = vadd.f32 0.0, %v8968
      %8970 = vmatmul.bf16.gmra.mxu0 %v8892
      %v8971 = vpop.f32.mrf.mxu0
      %v8972 = vadd.f32 0.0, %v8971
      %v8973 = vpop.f32.mrf.mxu0
      %v8974 = vadd.f32 0.0, %v8973
      %8975 = vmatmul.bf16.gmra.mxu0 %v8895
      %v8976 = vpop.f32.mrf.mxu0
      %v8977 = vadd.f32 0.0, %v8976
      %v8978 = vpop.f32.mrf.mxu0
      %v8979 = vadd.f32 0.0, %v8978
      %8980 = vmatmul.bf16.gmra.mxu0 %v8898
      %v8981 = vpop.f32.mrf.mxu0
      %v8982 = vadd.f32 0.0, %v8981
      %v8983 = vpop.f32.mrf.mxu0
      %v8984 = vadd.f32 0.0, %v8983
      %8985 = vmatmul.bf16.gmra.mxu0 %v8901
      %v8986 = vpop.f32.mrf.mxu0
      %v8987 = vadd.f32 0.0, %v8986
      %v8988 = vpop.f32.mrf.mxu0
      %v8989 = vadd.f32 0.0, %v8988
      %8990 = vmatmul.bf16.gmra.mxu0 %v8904
      %v8991 = vpop.f32.mrf.mxu0
      %v8992 = vadd.f32 0.0, %v8991
      %v8993 = vpop.f32.mrf.mxu0
      %v8994 = vadd.f32 0.0, %v8993
      %8995 = vmatmul.bf16.gmra.mxu0 %v8907
      %v8996 = vpop.f32.mrf.mxu0
      %v8997 = vadd.f32 0.0, %v8996
      %v8998 = vpop.f32.mrf.mxu0
      %v8999 = vadd.f32 0.0, %v8998
      %9000 = vdwg.mxu0
      %v9001 = vadd.f32 %v8395, %v8922
      %v9002 = vadd.f32 %v8396, %v8924
      %v9003 = vadd.f32 %v8397, %v8927
      %v9004 = vadd.f32 %v8398, %v8929
      %v9005 = vadd.f32 %v8399, %v8932
      %v9006 = vadd.f32 %v8400, %v8934
      %v9007 = vadd.f32 %v8401, %v8937
      %v9008 = vadd.f32 %v8402, %v8939
      %v9009 = vadd.f32 %v8403, %v8942
      %v9010 = vadd.f32 %v8404, %v8944
      %v9011 = vadd.f32 %v8405, %v8947
      %v9012 = vadd.f32 %v8406, %v8949
      %v9013 = vadd.f32 %v8407, %v8952
      %v9014 = vadd.f32 %v8408, %v8954
      %v9015 = vadd.f32 %v8409, %v8957
      %v9016 = vadd.f32 %v8410, %v8959
      %v9017 = vadd.f32 %v8411, %v8962
      %v9018 = vadd.f32 %v8412, %v8964
      %v9019 = vadd.f32 %v8413, %v8967
      %v9020 = vadd.f32 %v8414, %v8969
      %v9021 = vadd.f32 %v8415, %v8972
      %v9022 = vadd.f32 %v8416, %v8974
      %v9023 = vadd.f32 %v8417, %v8977
      %v9024 = vadd.f32 %v8418, %v8979
      %v9025 = vadd.f32 %v8419, %v8982
      %v9026 = vadd.f32 %v8420, %v8984
      %v9027 = vadd.f32 %v8421, %v8987
      %v9028 = vadd.f32 %v8422, %v8989
      %v9029 = vadd.f32 %v8423, %v8992
      %v9030 = vadd.f32 %v8424, %v8994
      %v9031 = vadd.f32 %v8425, %v8997
      %v9032 = vadd.f32 %v8426, %v8999
      %v9033 = vld [vmem:[%s7088] sm:$0xc]
      %v9034 = vld [vmem:[%s7088 + $0xc] sm:$0xc]
      %v9035 = vld [vmem:[%s7088 + $0x18] sm:$0xc]
      %v9036 = vld [vmem:[%s7088 + $0x24] sm:$0xc]
      %v9037 = vld [vmem:[%s7088 + $0x30] sm:$0xc]
      %v9038 = vld [vmem:[%s7088 + $0x3c] sm:$0xc]
      %v9039 = vld [vmem:[%s7088 + $0x48] sm:$0xc]
      %v9040 = vld [vmem:[%s7088 + $0x54] sm:$0xc]
      %v9041 = vld [vmem:[%s7088 + $0x60] sm:$0xc]
      %v9042 = vld [vmem:[%s7088 + $0x6c] sm:$0xc]
      %v9043 = vld [vmem:[%s7088 + $0x78] sm:$0xc]
      %v9044 = vld [vmem:[%s7088 + $0x84] sm:$0xc]
      %v9045 = vld [vmem:[%s7088 + $0x90] sm:$0xc]
      %v9046 = vld [vmem:[%s7088 + $0x9c] sm:$0xc]
      %v9047 = vld [vmem:[%s7088 + $0xa8] sm:$0xc]
      %v9048 = vld [vmem:[%s7088 + $0xb4] sm:$0xc]
      %v9081 = vrot.slane %v9033, 6
      %v9082 = vrot.slane %v9081, 4
      %v9083 = vrot.slane %v7376, 6
      %v9084 = vsel %vm2090, %v9082, %v9083
      %v9085 = vrot.slane %v9083, 4
      %v9086 = vrot.slane %v8427, 6
      %v9087 = vsel %vm2090, %v9085, %v9086
      %v9088 = vrot.slane %v9034, 6
      %v9089 = vrot.slane %v9088, 4
      %v9090 = vrot.slane %v7379, 6
      %v9091 = vsel %vm2090, %v9089, %v9090
      %v9092 = vrot.slane %v9090, 4
      %v9093 = vrot.slane %v8428, 6
      %v9094 = vsel %vm2090, %v9092, %v9093
      %v9095 = vrot.slane %v9035, 6
      %v9096 = vrot.slane %v9095, 4
      %v9097 = vrot.slane %v7382, 6
      %v9098 = vsel %vm2090, %v9096, %v9097
      %v9099 = vrot.slane %v9097, 4
      %v9100 = vrot.slane %v8429, 6
      %v9101 = vsel %vm2090, %v9099, %v9100
      %v9102 = vrot.slane %v9036, 6
      %v9103 = vrot.slane %v9102, 4
      %v9104 = vrot.slane %v7385, 6
      %v9105 = vsel %vm2090, %v9103, %v9104
      %v9106 = vrot.slane %v9104, 4
      %v9107 = vrot.slane %v8430, 6
      %v9108 = vsel %vm2090, %v9106, %v9107
      %v9109 = vrot.slane %v9037, 6
      %v9110 = vrot.slane %v9109, 4
      %v9111 = vrot.slane %v7388, 6
      %v9112 = vsel %vm2090, %v9110, %v9111
      %v9113 = vrot.slane %v9111, 4
      %v9114 = vrot.slane %v8431, 6
      %v9115 = vsel %vm2090, %v9113, %v9114
      %v9116 = vrot.slane %v9038, 6
      %v9117 = vrot.slane %v9116, 4
      %v9118 = vrot.slane %v7391, 6
      %v9119 = vsel %vm2090, %v9117, %v9118
      %v9120 = vrot.slane %v9118, 4
      %v9121 = vrot.slane %v8432, 6
      %v9122 = vsel %vm2090, %v9120, %v9121
      %v9123 = vrot.slane %v9039, 6
      %v9124 = vrot.slane %v9123, 4
      %v9125 = vrot.slane %v7394, 6
      %v9126 = vsel %vm2090, %v9124, %v9125
      %v9127 = vrot.slane %v9125, 4
      %v9128 = vrot.slane %v8433, 6
      %v9129 = vsel %vm2090, %v9127, %v9128
      %v9130 = vrot.slane %v9040, 6
      %v9131 = vrot.slane %v9130, 4
      %v9132 = vrot.slane %v7397, 6
      %v9133 = vsel %vm2090, %v9131, %v9132
      %v9134 = vrot.slane %v9132, 4
      %v9135 = vrot.slane %v8434, 6
      %v9136 = vsel %vm2090, %v9134, %v9135
      %v9137 = vrot.slane %v9041, 6
      %v9138 = vrot.slane %v9137, 4
      %v9139 = vrot.slane %v7400, 6
      %v9140 = vsel %vm2090, %v9138, %v9139
      %v9141 = vrot.slane %v9139, 4
      %v9142 = vrot.slane %v8435, 6
      %v9143 = vsel %vm2090, %v9141, %v9142
      %v9144 = vrot.slane %v9042, 6
      %v9145 = vrot.slane %v9144, 4
      %v9146 = vrot.slane %v7403, 6
      %v9147 = vsel %vm2090, %v9145, %v9146
      %v9148 = vrot.slane %v9146, 4
      %v9149 = vrot.slane %v8436, 6
      %v9150 = vsel %vm2090, %v9148, %v9149
      %v9151 = vrot.slane %v9043, 6
      %v9152 = vrot.slane %v9151, 4
      %v9153 = vrot.slane %v7406, 6
      %v9154 = vsel %vm2090, %v9152, %v9153
      %v9155 = vrot.slane %v9153, 4
      %v9156 = vrot.slane %v8437, 6
      %v9157 = vsel %vm2090, %v9155, %v9156
      %v9158 = vrot.slane %v9044, 6
      %v9159 = vrot.slane %v9158, 4
      %v9160 = vrot.slane %v7409, 6
      %v9161 = vsel %vm2090, %v9159, %v9160
      %v9162 = vrot.slane %v9160, 4
      %v9163 = vrot.slane %v8438, 6
      %v9164 = vsel %vm2090, %v9162, %v9163
      %v9165 = vrot.slane %v9045, 6
      %v9166 = vrot.slane %v9165, 4
      %v9167 = vrot.slane %v7412, 6
      %v9168 = vsel %vm2090, %v9166, %v9167
      %v9169 = vrot.slane %v9167, 4
      %v9170 = vrot.slane %v8439, 6
      %v9171 = vsel %vm2090, %v9169, %v9170
      %v9172 = vrot.slane %v9046, 6
      %v9173 = vrot.slane %v9172, 4
      %v9174 = vrot.slane %v7415, 6
      %v9175 = vsel %vm2090, %v9173, %v9174
      %v9176 = vrot.slane %v9174, 4
      %v9177 = vrot.slane %v8440, 6
      %v9178 = vsel %vm2090, %v9176, %v9177
      %v9179 = vrot.slane %v9047, 6
      %v9180 = vrot.slane %v9179, 4
      %v9181 = vrot.slane %v7418, 6
      %v9182 = vsel %vm2090, %v9180, %v9181
      %v9183 = vrot.slane %v9181, 4
      %v9184 = vrot.slane %v8441, 6
      %v9185 = vsel %vm2090, %v9183, %v9184
      %v9186 = vrot.slane %v9048, 6
      %v9187 = vrot.slane %v9186, 4
      %v9188 = vrot.slane %v7421, 6
      %v9189 = vsel %vm2090, %v9187, %v9188
      %v9190 = vrot.slane %v9188, 4
      %v9191 = vrot.slane %v8442, 6
      %v9192 = vsel %vm2090, %v9190, %v9191
      %s9193 = scalar_lea.vmem %s1, 38
      %v9194 = vld [vmem:[%s9193] sm:$0x3]
      %v9195 = vunpack.c.l.b16 %v9084
      %v9196 = vunpack.c.l.b16 %v9087
      %v9197 = vunpack.c.l.b16 %v9091
      %v9198 = vunpack.c.l.b16 %v9094
      %v9199 = vunpack.c.l.b16 %v9098
      %v9200 = vunpack.c.l.b16 %v9101
      %v9201 = vunpack.c.l.b16 %v9105
      %v9202 = vunpack.c.l.b16 %v9108
      %v9203 = vunpack.c.l.b16 %v9112
      %v9204 = vunpack.c.l.b16 %v9115
      %v9205 = vunpack.c.l.b16 %v9119
      %v9206 = vunpack.c.l.b16 %v9122
      %v9207 = vunpack.c.l.b16 %v9126
      %v9208 = vunpack.c.l.b16 %v9129
      %v9209 = vunpack.c.l.b16 %v9133
      %v9210 = vunpack.c.l.b16 %v9136
      %v9211 = vunpack.c.l.b16 %v9140
      %v9212 = vunpack.c.l.b16 %v9143
      %v9213 = vunpack.c.l.b16 %v9147
      %v9214 = vunpack.c.l.b16 %v9150
      %v9215 = vunpack.c.l.b16 %v9154
      %v9216 = vunpack.c.l.b16 %v9157
      %v9217 = vunpack.c.l.b16 %v9161
      %v9218 = vunpack.c.l.b16 %v9164
      %v9219 = vunpack.c.l.b16 %v9168
      %v9220 = vunpack.c.l.b16 %v9171
      %v9221 = vunpack.c.l.b16 %v9175
      %v9222 = vunpack.c.l.b16 %v9178
      %v9223 = vunpack.c.l.b16 %v9182
      %v9224 = vunpack.c.l.b16 %v9185
      %v9225 = vunpack.c.l.b16 %v9189
      %v9226 = vunpack.c.l.b16 %v9192
      %v9227 = vpack.c.b16 %v9196, %v9195
      %v9228 = vpack.c.b16 %v9198, %v9197
      %v9229 = vpack.c.b16 %v9200, %v9199
      %v9230 = vpack.c.b16 %v9202, %v9201
      %v9231 = vpack.c.b16 %v9204, %v9203
      %v9232 = vpack.c.b16 %v9206, %v9205
      %v9233 = vpack.c.b16 %v9208, %v9207
      %v9234 = vpack.c.b16 %v9210, %v9209
      %v9235 = vpack.c.b16 %v9212, %v9211
      %v9236 = vpack.c.b16 %v9214, %v9213
      %v9237 = vpack.c.b16 %v9216, %v9215
      %v9238 = vpack.c.b16 %v9218, %v9217
      %v9239 = vpack.c.b16 %v9220, %v9219
      %v9240 = vpack.c.b16 %v9222, %v9221
      %v9241 = vpack.c.b16 %v9224, %v9223
      %v9242 = vpack.c.b16 %v9226, %v9225
      %v9244 = vsel %vm684, %v9227, 0
      %v9247 = vsel %vm684, %v9228, 0
      %v9250 = vsel %vm684, %v9229, 0
      %v9253 = vsel %vm684, %v9230, 0
      %v9256 = vsel %vm684, %v9231, 0
      %v9259 = vsel %vm684, %v9232, 0
      %v9262 = vsel %vm684, %v9233, 0
      %v9265 = vsel %vm684, %v9234, 0
      %v9268 = vsel %vm684, %v9235, 0
      %v9271 = vsel %vm684, %v9236, 0
      %v9274 = vsel %vm684, %v9237, 0
      %v9277 = vsel %vm684, %v9238, 0
      %v9280 = vsel %vm684, %v9239, 0
      %v9283 = vsel %vm684, %v9240, 0
      %v9286 = vsel %vm684, %v9241, 0
      %v9289 = vsel %vm684, %v9242, 0
      %v9292 = vsel %vm733, %v9194, 0
      %9294 = vmatpush.bf16.msra.mxu0 0
      %9295 = vmatpush.bf16.msra.mxu0 0
      %9296 = vmatpush.bf16.msra.mxu0 0
      %9297 = vmatpush.bf16.msra.mxu0 0
      %9298 = vmatpush.bf16.msra.mxu0 0
      %9299 = vmatpush.bf16.msra.mxu0 0
      %9300 = vmatpush.bf16.msra.mxu0 0
      %9301 = vmatpush.bf16.msra.mxu0 %v9292
      %9302 = vmatmul.bf16.gmra.mxu0 %v9244
      %v9303 = vpop.f32.mrf.mxu0
      %v9304 = vadd.f32 0.0, %v9303
      %v9305 = vpop.f32.mrf.mxu0
      %v9306 = vadd.f32 0.0, %v9305
      %9307 = vmatmul.bf16.gmra.mxu0 %v9247
      %v9308 = vpop.f32.mrf.mxu0
      %v9309 = vadd.f32 0.0, %v9308
      %v9310 = vpop.f32.mrf.mxu0
      %v9311 = vadd.f32 0.0, %v9310
      %9312 = vmatmul.bf16.gmra.mxu0 %v9250
      %v9313 = vpop.f32.mrf.mxu0
      %v9314 = vadd.f32 0.0, %v9313
      %v9315 = vpop.f32.mrf.mxu0
      %v9316 = vadd.f32 0.0, %v9315
      %9317 = vmatmul.bf16.gmra.mxu0 %v9253
      %v9318 = vpop.f32.mrf.mxu0
      %v9319 = vadd.f32 0.0, %v9318
      %v9320 = vpop.f32.mrf.mxu0
      %v9321 = vadd.f32 0.0, %v9320
      %9322 = vmatmul.bf16.gmra.mxu0 %v9256
      %v9323 = vpop.f32.mrf.mxu0
      %v9324 = vadd.f32 0.0, %v9323
      %v9325 = vpop.f32.mrf.mxu0
      %v9326 = vadd.f32 0.0, %v9325
      %9327 = vmatmul.bf16.gmra.mxu0 %v9259
      %v9328 = vpop.f32.mrf.mxu0
      %v9329 = vadd.f32 0.0, %v9328
      %v9330 = vpop.f32.mrf.mxu0
      %v9331 = vadd.f32 0.0, %v9330
      %9332 = vmatmul.bf16.gmra.mxu0 %v9262
      %v9333 = vpop.f32.mrf.mxu0
      %v9334 = vadd.f32 0.0, %v9333
      %v9335 = vpop.f32.mrf.mxu0
      %v9336 = vadd.f32 0.0, %v9335
      %9337 = vmatmul.bf16.gmra.mxu0 %v9265
      %v9338 = vpop.f32.mrf.mxu0
      %v9339 = vadd.f32 0.0, %v9338
      %v9340 = vpop.f32.mrf.mxu0
      %v9341 = vadd.f32 0.0, %v9340
      %9342 = vmatmul.bf16.gmra.mxu0 %v9268
      %v9343 = vpop.f32.mrf.mxu0
      %v9344 = vadd.f32 0.0, %v9343
      %v9345 = vpop.f32.mrf.mxu0
      %v9346 = vadd.f32 0.0, %v9345
      %9347 = vmatmul.bf16.gmra.mxu0 %v9271
      %v9348 = vpop.f32.mrf.mxu0
      %v9349 = vadd.f32 0.0, %v9348
      %v9350 = vpop.f32.mrf.mxu0
      %v9351 = vadd.f32 0.0, %v9350
      %9352 = vmatmul.bf16.gmra.mxu0 %v9274
      %v9353 = vpop.f32.mrf.mxu0
      %v9354 = vadd.f32 0.0, %v9353
      %v9355 = vpop.f32.mrf.mxu0
      %v9356 = vadd.f32 0.0, %v9355
      %9357 = vmatmul.bf16.gmra.mxu0 %v9277
      %v9358 = vpop.f32.mrf.mxu0
      %v9359 = vadd.f32 0.0, %v9358
      %v9360 = vpop.f32.mrf.mxu0
      %v9361 = vadd.f32 0.0, %v9360
      %9362 = vmatmul.bf16.gmra.mxu0 %v9280
      %v9363 = vpop.f32.mrf.mxu0
      %v9364 = vadd.f32 0.0, %v9363
      %v9365 = vpop.f32.mrf.mxu0
      %v9366 = vadd.f32 0.0, %v9365
      %9367 = vmatmul.bf16.gmra.mxu0 %v9283
      %v9368 = vpop.f32.mrf.mxu0
      %v9369 = vadd.f32 0.0, %v9368
      %v9370 = vpop.f32.mrf.mxu0
      %v9371 = vadd.f32 0.0, %v9370
      %9372 = vmatmul.bf16.gmra.mxu0 %v9286
      %v9373 = vpop.f32.mrf.mxu0
      %v9374 = vadd.f32 0.0, %v9373
      %v9375 = vpop.f32.mrf.mxu0
      %v9376 = vadd.f32 0.0, %v9375
      %9377 = vmatmul.bf16.gmra.mxu0 %v9289
      %v9378 = vpop.f32.mrf.mxu0
      %v9379 = vadd.f32 0.0, %v9378
      %v9380 = vpop.f32.mrf.mxu0
      %v9381 = vadd.f32 0.0, %v9380
      %9382 = vdwg.mxu0
      %v9383 = vadd.f32 %v9001, %v9304
      %v9384 = vadd.f32 %v9002, %v9306
      %v9385 = vadd.f32 %v9003, %v9309
      %v9386 = vadd.f32 %v9004, %v9311
      %v9387 = vadd.f32 %v9005, %v9314
      %v9388 = vadd.f32 %v9006, %v9316
      %v9389 = vadd.f32 %v9007, %v9319
      %v9390 = vadd.f32 %v9008, %v9321
      %v9391 = vadd.f32 %v9009, %v9324
      %v9392 = vadd.f32 %v9010, %v9326
      %v9393 = vadd.f32 %v9011, %v9329
      %v9394 = vadd.f32 %v9012, %v9331
      %v9395 = vadd.f32 %v9013, %v9334
      %v9396 = vadd.f32 %v9014, %v9336
      %v9397 = vadd.f32 %v9015, %v9339
      %v9398 = vadd.f32 %v9016, %v9341
      %v9399 = vadd.f32 %v9017, %v9344
      %v9400 = vadd.f32 %v9018, %v9346
      %v9401 = vadd.f32 %v9019, %v9349
      %v9402 = vadd.f32 %v9020, %v9351
      %v9403 = vadd.f32 %v9021, %v9354
      %v9404 = vadd.f32 %v9022, %v9356
      %v9405 = vadd.f32 %v9023, %v9359
      %v9406 = vadd.f32 %v9024, %v9361
      %v9407 = vadd.f32 %v9025, %v9364
      %v9408 = vadd.f32 %v9026, %v9366
      %v9409 = vadd.f32 %v9027, %v9369
      %v9410 = vadd.f32 %v9028, %v9371
      %v9411 = vadd.f32 %v9029, %v9374
      %v9412 = vadd.f32 %v9030, %v9376
      %v9413 = vadd.f32 %v9031, %v9379
      %v9414 = vadd.f32 %v9032, %v9381
      %s9415 = sadd.s32 %s194, 4
      %s9416 = smul.u32 %s9415, 3
      %s9417 = smul.addr %s9416, 4
      %s9418 = scalar_lea.vmem %s183, %s9417
      %v9419 = vld [vmem:[%s9418] sm:$0xf]
      %v9420 = vld [vmem:[%s9418 + $0x4] sm:$0xf]
      %v9421 = vld [vmem:[%s9418 + $0xc] sm:$0xf]
      %v9422 = vld [vmem:[%s9418 + $0x10] sm:$0xf]
      %v9423 = vld [vmem:[%s9418 + $0x18] sm:$0xf]
      %v9424 = vld [vmem:[%s9418 + $0x1c] sm:$0xf]
      %v9425 = vld [vmem:[%s9418 + $0x24] sm:$0xf]
      %v9426 = vld [vmem:[%s9418 + $0x28] sm:$0xf]
      %v9427 = vld [vmem:[%s9418 + $0x30] sm:$0xf]
      %v9428 = vld [vmem:[%s9418 + $0x34] sm:$0xf]
      %v9429 = vld [vmem:[%s9418 + $0x3c] sm:$0xf]
      %v9430 = vld [vmem:[%s9418 + $0x40] sm:$0xf]
      %v9431 = vld [vmem:[%s9418 + $0x48] sm:$0xf]
      %v9432 = vld [vmem:[%s9418 + $0x4c] sm:$0xf]
      %v9433 = vld [vmem:[%s9418 + $0x54] sm:$0xf]
      %v9434 = vld [vmem:[%s9418 + $0x58] sm:$0xf]
      %v9435 = vld [vmem:[%s9418 + $0x60] sm:$0xf]
      %v9436 = vld [vmem:[%s9418 + $0x64] sm:$0xf]
      %v9437 = vld [vmem:[%s9418 + $0x6c] sm:$0xf]
      %v9438 = vld [vmem:[%s9418 + $0x70] sm:$0xf]
      %v9439 = vld [vmem:[%s9418 + $0x78] sm:$0xf]
      %v9440 = vld [vmem:[%s9418 + $0x7c] sm:$0xf]
      %v9441 = vld [vmem:[%s9418 + $0x84] sm:$0xf]
      %v9442 = vld [vmem:[%s9418 + $0x88] sm:$0xf]
      %v9443 = vld [vmem:[%s9418 + $0x90] sm:$0xf]
      %v9444 = vld [vmem:[%s9418 + $0x94] sm:$0xf]
      %v9445 = vld [vmem:[%s9418 + $0x9c] sm:$0xf]
      %v9446 = vld [vmem:[%s9418 + $0xa0] sm:$0xf]
      %v9447 = vld [vmem:[%s9418 + $0xa8] sm:$0xf]
      %v9448 = vld [vmem:[%s9418 + $0xac] sm:$0xf]
      %v9449 = vld [vmem:[%s9418 + $0xb4] sm:$0xf]
      %v9450 = vld [vmem:[%s9418 + $0xb8] sm:$0xf]
      %s9451 = scalar_lea.vmem %s1, 40
      %v9452 = vld [vmem:[%s9451] sm:$0x3]
      %v9485 = vunpack.c.l.b16 %v9419
      %v9486 = vunpack.c.l.b16 %v9420
      %v9487 = vunpack.c.l.b16 %v9421
      %v9488 = vunpack.c.l.b16 %v9422
      %v9489 = vunpack.c.l.b16 %v9423
      %v9490 = vunpack.c.l.b16 %v9424
      %v9491 = vunpack.c.l.b16 %v9425
      %v9492 = vunpack.c.l.b16 %v9426
      %v9493 = vunpack.c.l.b16 %v9427
      %v9494 = vunpack.c.l.b16 %v9428
      %v9495 = vunpack.c.l.b16 %v9429
      %v9496 = vunpack.c.l.b16 %v9430
      %v9497 = vunpack.c.l.b16 %v9431
      %v9498 = vunpack.c.l.b16 %v9432
      %v9499 = vunpack.c.l.b16 %v9433
      %v9500 = vunpack.c.l.b16 %v9434
      %v9501 = vunpack.c.l.b16 %v9435
      %v9502 = vunpack.c.l.b16 %v9436
      %v9503 = vunpack.c.l.b16 %v9437
      %v9504 = vunpack.c.l.b16 %v9438
      %v9505 = vunpack.c.l.b16 %v9439
      %v9506 = vunpack.c.l.b16 %v9440
      %v9507 = vunpack.c.l.b16 %v9441
      %v9508 = vunpack.c.l.b16 %v9442
      %v9509 = vunpack.c.l.b16 %v9443
      %v9510 = vunpack.c.l.b16 %v9444
      %v9511 = vunpack.c.l.b16 %v9445
      %v9512 = vunpack.c.l.b16 %v9446
      %v9513 = vunpack.c.l.b16 %v9447
      %v9514 = vunpack.c.l.b16 %v9448
      %v9515 = vunpack.c.l.b16 %v9449
      %v9516 = vunpack.c.l.b16 %v9450
      %v9517 = vpack.c.b16 %v9486, %v9485
      %v9518 = vpack.c.b16 %v9488, %v9487
      %v9519 = vpack.c.b16 %v9490, %v9489
      %v9520 = vpack.c.b16 %v9492, %v9491
      %v9521 = vpack.c.b16 %v9494, %v9493
      %v9522 = vpack.c.b16 %v9496, %v9495
      %v9523 = vpack.c.b16 %v9498, %v9497
      %v9524 = vpack.c.b16 %v9500, %v9499
      %v9525 = vpack.c.b16 %v9502, %v9501
      %v9526 = vpack.c.b16 %v9504, %v9503
      %v9527 = vpack.c.b16 %v9506, %v9505
      %v9528 = vpack.c.b16 %v9508, %v9507
      %v9529 = vpack.c.b16 %v9510, %v9509
      %v9530 = vpack.c.b16 %v9512, %v9511
      %v9531 = vpack.c.b16 %v9514, %v9513
      %v9532 = vpack.c.b16 %v9516, %v9515
      %v9534 = vsel %vm684, %v9517, 0
      %v9537 = vsel %vm684, %v9518, 0
      %v9540 = vsel %vm684, %v9519, 0
      %v9543 = vsel %vm684, %v9520, 0
      %v9546 = vsel %vm684, %v9521, 0
      %v9549 = vsel %vm684, %v9522, 0
      %v9552 = vsel %vm684, %v9523, 0
      %v9555 = vsel %vm684, %v9524, 0
      %v9558 = vsel %vm684, %v9525, 0
      %v9561 = vsel %vm684, %v9526, 0
      %v9564 = vsel %vm684, %v9527, 0
      %v9567 = vsel %vm684, %v9528, 0
      %v9570 = vsel %vm684, %v9529, 0
      %v9573 = vsel %vm684, %v9530, 0
      %v9576 = vsel %vm684, %v9531, 0
      %v9579 = vsel %vm684, %v9532, 0
      %v9582 = vsel %vm733, %v9452, 0
      %9584 = vmatpush.bf16.msra.mxu0 0
      %9585 = vmatpush.bf16.msra.mxu0 0
      %9586 = vmatpush.bf16.msra.mxu0 0
      %9587 = vmatpush.bf16.msra.mxu0 0
      %9588 = vmatpush.bf16.msra.mxu0 0
      %9589 = vmatpush.bf16.msra.mxu0 0
      %9590 = vmatpush.bf16.msra.mxu0 0
      %9591 = vmatpush.bf16.msra.mxu0 %v9582
      %9592 = vmatmul.bf16.gmra.mxu0 %v9534
      %v9593 = vpop.f32.mrf.mxu0
      %v9594 = vadd.f32 0.0, %v9593
      %v9595 = vpop.f32.mrf.mxu0
      %v9596 = vadd.f32 0.0, %v9595
      %9597 = vmatmul.bf16.gmra.mxu0 %v9537
      %v9598 = vpop.f32.mrf.mxu0
      %v9599 = vadd.f32 0.0, %v9598
      %v9600 = vpop.f32.mrf.mxu0
      %v9601 = vadd.f32 0.0, %v9600
      %9602 = vmatmul.bf16.gmra.mxu0 %v9540
      %v9603 = vpop.f32.mrf.mxu0
      %v9604 = vadd.f32 0.0, %v9603
      %v9605 = vpop.f32.mrf.mxu0
      %v9606 = vadd.f32 0.0, %v9605
      %9607 = vmatmul.bf16.gmra.mxu0 %v9543
      %v9608 = vpop.f32.mrf.mxu0
      %v9609 = vadd.f32 0.0, %v9608
      %v9610 = vpop.f32.mrf.mxu0
      %v9611 = vadd.f32 0.0, %v9610
      %9612 = vmatmul.bf16.gmra.mxu0 %v9546
      %v9613 = vpop.f32.mrf.mxu0
      %v9614 = vadd.f32 0.0, %v9613
      %v9615 = vpop.f32.mrf.mxu0
      %v9616 = vadd.f32 0.0, %v9615
      %9617 = vmatmul.bf16.gmra.mxu0 %v9549
      %v9618 = vpop.f32.mrf.mxu0
      %v9619 = vadd.f32 0.0, %v9618
      %v9620 = vpop.f32.mrf.mxu0
      %v9621 = vadd.f32 0.0, %v9620
      %9622 = vmatmul.bf16.gmra.mxu0 %v9552
      %v9623 = vpop.f32.mrf.mxu0
      %v9624 = vadd.f32 0.0, %v9623
      %v9625 = vpop.f32.mrf.mxu0
      %v9626 = vadd.f32 0.0, %v9625
      %9627 = vmatmul.bf16.gmra.mxu0 %v9555
      %v9628 = vpop.f32.mrf.mxu0
      %v9629 = vadd.f32 0.0, %v9628
      %v9630 = vpop.f32.mrf.mxu0
      %v9631 = vadd.f32 0.0, %v9630
      %9632 = vmatmul.bf16.gmra.mxu0 %v9558
      %v9633 = vpop.f32.mrf.mxu0
      %v9634 = vadd.f32 0.0, %v9633
      %v9635 = vpop.f32.mrf.mxu0
      %v9636 = vadd.f32 0.0, %v9635
      %9637 = vmatmul.bf16.gmra.mxu0 %v9561
      %v9638 = vpop.f32.mrf.mxu0
      %v9639 = vadd.f32 0.0, %v9638
      %v9640 = vpop.f32.mrf.mxu0
      %v9641 = vadd.f32 0.0, %v9640
      %9642 = vmatmul.bf16.gmra.mxu0 %v9564
      %v9643 = vpop.f32.mrf.mxu0
      %v9644 = vadd.f32 0.0, %v9643
      %v9645 = vpop.f32.mrf.mxu0
      %v9646 = vadd.f32 0.0, %v9645
      %9647 = vmatmul.bf16.gmra.mxu0 %v9567
      %v9648 = vpop.f32.mrf.mxu0
      %v9649 = vadd.f32 0.0, %v9648
      %v9650 = vpop.f32.mrf.mxu0
      %v9651 = vadd.f32 0.0, %v9650
      %9652 = vmatmul.bf16.gmra.mxu0 %v9570
      %v9653 = vpop.f32.mrf.mxu0
      %v9654 = vadd.f32 0.0, %v9653
      %v9655 = vpop.f32.mrf.mxu0
      %v9656 = vadd.f32 0.0, %v9655
      %9657 = vmatmul.bf16.gmra.mxu0 %v9573
      %v9658 = vpop.f32.mrf.mxu0
      %v9659 = vadd.f32 0.0, %v9658
      %v9660 = vpop.f32.mrf.mxu0
      %v9661 = vadd.f32 0.0, %v9660
      %9662 = vmatmul.bf16.gmra.mxu0 %v9576
      %v9663 = vpop.f32.mrf.mxu0
      %v9664 = vadd.f32 0.0, %v9663
      %v9665 = vpop.f32.mrf.mxu0
      %v9666 = vadd.f32 0.0, %v9665
      %9667 = vmatmul.bf16.gmra.mxu0 %v9579
      %v9668 = vpop.f32.mrf.mxu0
      %v9669 = vadd.f32 0.0, %v9668
      %v9670 = vpop.f32.mrf.mxu0
      %v9671 = vadd.f32 0.0, %v9670
      %9672 = vdwg.mxu0
      %v9673 = vadd.f32 %v9383, %v9594
      %v9674 = vadd.f32 %v9384, %v9596
      %v9675 = vadd.f32 %v9385, %v9599
      %v9676 = vadd.f32 %v9386, %v9601
      %v9677 = vadd.f32 %v9387, %v9604
      %v9678 = vadd.f32 %v9388, %v9606
      %v9679 = vadd.f32 %v9389, %v9609
      %v9680 = vadd.f32 %v9390, %v9611
      %v9681 = vadd.f32 %v9391, %v9614
      %v9682 = vadd.f32 %v9392, %v9616
      %v9683 = vadd.f32 %v9393, %v9619
      %v9684 = vadd.f32 %v9394, %v9621
      %v9685 = vadd.f32 %v9395, %v9624
      %v9686 = vadd.f32 %v9396, %v9626
      %v9687 = vadd.f32 %v9397, %v9629
      %v9688 = vadd.f32 %v9398, %v9631
      %v9689 = vadd.f32 %v9399, %v9634
      %v9690 = vadd.f32 %v9400, %v9636
      %v9691 = vadd.f32 %v9401, %v9639
      %v9692 = vadd.f32 %v9402, %v9641
      %v9693 = vadd.f32 %v9403, %v9644
      %v9694 = vadd.f32 %v9404, %v9646
      %v9695 = vadd.f32 %v9405, %v9649
      %v9696 = vadd.f32 %v9406, %v9651
      %v9697 = vadd.f32 %v9407, %v9654
      %v9698 = vadd.f32 %v9408, %v9656
      %v9699 = vadd.f32 %v9409, %v9659
      %v9700 = vadd.f32 %v9410, %v9661
      %v9701 = vadd.f32 %v9411, %v9664
      %v9702 = vadd.f32 %v9412, %v9666
      %v9703 = vadd.f32 %v9413, %v9669
      %v9704 = vadd.f32 %v9414, %v9671
      %v9705 = vld [vmem:[%s9418] sm:$0xf]
      %v9706 = vld [vmem:[%s9418 + $0x4] sm:$0xf]
      %v9707 = vld [vmem:[%s9418 + $0x8] sm:$0x1]
      %v9708 = vld [vmem:[%s9418 + $0xc] sm:$0xf]
      %v9709 = vld [vmem:[%s9418 + $0x10] sm:$0xf]
      %v9710 = vld [vmem:[%s9418 + $0x14] sm:$0x1]
      %v9711 = vld [vmem:[%s9418 + $0x18] sm:$0xf]
      %v9712 = vld [vmem:[%s9418 + $0x1c] sm:$0xf]
      %v9713 = vld [vmem:[%s9418 + $0x20] sm:$0x1]
      %v9714 = vld [vmem:[%s9418 + $0x24] sm:$0xf]
      %v9715 = vld [vmem:[%s9418 + $0x28] sm:$0xf]
      %v9716 = vld [vmem:[%s9418 + $0x2c] sm:$0x1]
      %v9717 = vld [vmem:[%s9418 + $0x30] sm:$0xf]
      %v9718 = vld [vmem:[%s9418 + $0x34] sm:$0xf]
      %v9719 = vld [vmem:[%s9418 + $0x38] sm:$0x1]
      %v9720 = vld [vmem:[%s9418 + $0x3c] sm:$0xf]
      %v9721 = vld [vmem:[%s9418 + $0x40] sm:$0xf]
      %v9722 = vld [vmem:[%s9418 + $0x44] sm:$0x1]
      %v9723 = vld [vmem:[%s9418 + $0x48] sm:$0xf]
      %v9724 = vld [vmem:[%s9418 + $0x4c] sm:$0xf]
      %v9725 = vld [vmem:[%s9418 + $0x50] sm:$0x1]
      %v9726 = vld [vmem:[%s9418 + $0x54] sm:$0xf]
      %v9727 = vld [vmem:[%s9418 + $0x58] sm:$0xf]
      %v9728 = vld [vmem:[%s9418 + $0x5c] sm:$0x1]
      %v9729 = vld [vmem:[%s9418 + $0x60] sm:$0xf]
      %v9730 = vld [vmem:[%s9418 + $0x64] sm:$0xf]
      %v9731 = vld [vmem:[%s9418 + $0x68] sm:$0x1]
      %v9732 = vld [vmem:[%s9418 + $0x6c] sm:$0xf]
      %v9733 = vld [vmem:[%s9418 + $0x70] sm:$0xf]
      %v9734 = vld [vmem:[%s9418 + $0x74] sm:$0x1]
      %v9735 = vld [vmem:[%s9418 + $0x78] sm:$0xf]
      %v9736 = vld [vmem:[%s9418 + $0x7c] sm:$0xf]
      %v9737 = vld [vmem:[%s9418 + $0x80] sm:$0x1]
      %v9738 = vld [vmem:[%s9418 + $0x84] sm:$0xf]
      %v9739 = vld [vmem:[%s9418 + $0x88] sm:$0xf]
      %v9740 = vld [vmem:[%s9418 + $0x8c] sm:$0x1]
      %v9741 = vld [vmem:[%s9418 + $0x90] sm:$0xf]
      %v9742 = vld [vmem:[%s9418 + $0x94] sm:$0xf]
      %v9743 = vld [vmem:[%s9418 + $0x98] sm:$0x1]
      %v9744 = vld [vmem:[%s9418 + $0x9c] sm:$0xf]
      %v9745 = vld [vmem:[%s9418 + $0xa0] sm:$0xf]
      %v9746 = vld [vmem:[%s9418 + $0xa4] sm:$0x1]
      %v9747 = vld [vmem:[%s9418 + $0xa8] sm:$0xf]
      %v9748 = vld [vmem:[%s9418 + $0xac] sm:$0xf]
      %v9749 = vld [vmem:[%s9418 + $0xb0] sm:$0x1]
      %v9750 = vld [vmem:[%s9418 + $0xb4] sm:$0xf]
      %v9751 = vld [vmem:[%s9418 + $0xb8] sm:$0xf]
      %v9752 = vld [vmem:[%s9418 + $0xbc] sm:$0x1]
      %v9754 = vshrl.u32 %v9705, 16
      %v9756 = vrot.slane %v9754, 4
      %v9757 = vshll.u32 %v9705, 16
      %v9759 = vrot.slane %v9757, 5
      %v9760 = vor.u32 %v9756, %v9759
      %v9761 = vrot.slane %v9760, 4
      %v9763 = vshll.u32 %v9706, 16
      %v9765 = vrot.slane %v9763, 5
      %v9766 = vsel %vm249, %v9761, %v9765
      %v9767 = vshrl.u32 %v9706, 16
      %v9769 = vrot.slane %v9767, 4
      %v9770 = vor.u32 %v9769, %v9765
      %v9771 = vrot.slane %v9770, 4
      %v9773 = vshll.u32 %v9707, 16
      %v9775 = vrot.slane %v9773, 5
      %v9776 = vsel %vm249, %v9771, %v9775
      %v9778 = vshrl.u32 %v9708, 16
      %v9780 = vrot.slane %v9778, 4
      %v9781 = vshll.u32 %v9708, 16
      %v9783 = vrot.slane %v9781, 5
      %v9784 = vor.u32 %v9780, %v9783
      %v9785 = vrot.slane %v9784, 4
      %v9787 = vshll.u32 %v9709, 16
      %v9789 = vrot.slane %v9787, 5
      %v9790 = vsel %vm249, %v9785, %v9789
      %v9791 = vshrl.u32 %v9709, 16
      %v9793 = vrot.slane %v9791, 4
      %v9794 = vor.u32 %v9793, %v9789
      %v9795 = vrot.slane %v9794, 4
      %v9797 = vshll.u32 %v9710, 16
      %v9799 = vrot.slane %v9797, 5
      %v9800 = vsel %vm249, %v9795, %v9799
      %v9802 = vshrl.u32 %v9711, 16
      %v9804 = vrot.slane %v9802, 4
      %v9805 = vshll.u32 %v9711, 16
      %v9807 = vrot.slane %v9805, 5
      %v9808 = vor.u32 %v9804, %v9807
      %v9809 = vrot.slane %v9808, 4
      %v9811 = vshll.u32 %v9712, 16
      %v9813 = vrot.slane %v9811, 5
      %v9814 = vsel %vm249, %v9809, %v9813
      %v9815 = vshrl.u32 %v9712, 16
      %v9817 = vrot.slane %v9815, 4
      %v9818 = vor.u32 %v9817, %v9813
      %v9819 = vrot.slane %v9818, 4
      %v9821 = vshll.u32 %v9713, 16
      %v9823 = vrot.slane %v9821, 5
      %v9824 = vsel %vm249, %v9819, %v9823
      %v9826 = vshrl.u32 %v9714, 16
      %v9828 = vrot.slane %v9826, 4
      %v9829 = vshll.u32 %v9714, 16
      %v9831 = vrot.slane %v9829, 5
      %v9832 = vor.u32 %v9828, %v9831
      %v9833 = vrot.slane %v9832, 4
      %v9835 = vshll.u32 %v9715, 16
      %v9837 = vrot.slane %v9835, 5
      %v9838 = vsel %vm249, %v9833, %v9837
      %v9839 = vshrl.u32 %v9715, 16
      %v9841 = vrot.slane %v9839, 4
      %v9842 = vor.u32 %v9841, %v9837
      %v9843 = vrot.slane %v9842, 4
      %v9845 = vshll.u32 %v9716, 16
      %v9847 = vrot.slane %v9845, 5
      %v9848 = vsel %vm249, %v9843, %v9847
      %v9850 = vshrl.u32 %v9717, 16
      %v9852 = vrot.slane %v9850, 4
      %v9853 = vshll.u32 %v9717, 16
      %v9855 = vrot.slane %v9853, 5
      %v9856 = vor.u32 %v9852, %v9855
      %v9857 = vrot.slane %v9856, 4
      %v9859 = vshll.u32 %v9718, 16
      %v9861 = vrot.slane %v9859, 5
      %v9862 = vsel %vm249, %v9857, %v9861
      %v9863 = vshrl.u32 %v9718, 16
      %v9865 = vrot.slane %v9863, 4
      %v9866 = vor.u32 %v9865, %v9861
      %v9867 = vrot.slane %v9866, 4
      %v9869 = vshll.u32 %v9719, 16
      %v9871 = vrot.slane %v9869, 5
      %v9872 = vsel %vm249, %v9867, %v9871
      %v9874 = vshrl.u32 %v9720, 16
      %v9876 = vrot.slane %v9874, 4
      %v9877 = vshll.u32 %v9720, 16
      %v9879 = vrot.slane %v9877, 5
      %v9880 = vor.u32 %v9876, %v9879
      %v9881 = vrot.slane %v9880, 4
      %v9883 = vshll.u32 %v9721, 16
      %v9885 = vrot.slane %v9883, 5
      %v9886 = vsel %vm249, %v9881, %v9885
      %v9887 = vshrl.u32 %v9721, 16
      %v9889 = vrot.slane %v9887, 4
      %v9890 = vor.u32 %v9889, %v9885
      %v9891 = vrot.slane %v9890, 4
      %v9893 = vshll.u32 %v9722, 16
      %v9895 = vrot.slane %v9893, 5
      %v9896 = vsel %vm249, %v9891, %v9895
      %v9898 = vshrl.u32 %v9723, 16
      %v9900 = vrot.slane %v9898, 4
      %v9901 = vshll.u32 %v9723, 16
      %v9903 = vrot.slane %v9901, 5
      %v9904 = vor.u32 %v9900, %v9903
      %v9905 = vrot.slane %v9904, 4
      %v9907 = vshll.u32 %v9724, 16
      %v9909 = vrot.slane %v9907, 5
      %v9910 = vsel %vm249, %v9905, %v9909
      %v9911 = vshrl.u32 %v9724, 16
      %v9913 = vrot.slane %v9911, 4
      %v9914 = vor.u32 %v9913, %v9909
      %v9915 = vrot.slane %v9914, 4
      %v9917 = vshll.u32 %v9725, 16
      %v9919 = vrot.slane %v9917, 5
      %v9920 = vsel %vm249, %v9915, %v9919
      %v9922 = vshrl.u32 %v9726, 16
      %v9924 = vrot.slane %v9922, 4
      %v9925 = vshll.u32 %v9726, 16
      %v9927 = vrot.slane %v9925, 5
      %v9928 = vor.u32 %v9924, %v9927
      %v9929 = vrot.slane %v9928, 4
      %v9931 = vshll.u32 %v9727, 16
      %v9933 = vrot.slane %v9931, 5
      %v9934 = vsel %vm249, %v9929, %v9933
      %v9935 = vshrl.u32 %v9727, 16
      %v9937 = vrot.slane %v9935, 4
      %v9938 = vor.u32 %v9937, %v9933
      %v9939 = vrot.slane %v9938, 4
      %v9941 = vshll.u32 %v9728, 16
      %v9943 = vrot.slane %v9941, 5
      %v9944 = vsel %vm249, %v9939, %v9943
      %v9946 = vshrl.u32 %v9729, 16
      %v9948 = vrot.slane %v9946, 4
      %v9949 = vshll.u32 %v9729, 16
      %v9951 = vrot.slane %v9949, 5
      %v9952 = vor.u32 %v9948, %v9951
      %v9953 = vrot.slane %v9952, 4
      %v9955 = vshll.u32 %v9730, 16
      %v9957 = vrot.slane %v9955, 5
      %v9958 = vsel %vm249, %v9953, %v9957
      %v9959 = vshrl.u32 %v9730, 16
      %v9961 = vrot.slane %v9959, 4
      %v9962 = vor.u32 %v9961, %v9957
      %v9963 = vrot.slane %v9962, 4
      %v9965 = vshll.u32 %v9731, 16
      %v9967 = vrot.slane %v9965, 5
      %v9968 = vsel %vm249, %v9963, %v9967
      %v9970 = vshrl.u32 %v9732, 16
      %v9972 = vrot.slane %v9970, 4
      %v9973 = vshll.u32 %v9732, 16
      %v9975 = vrot.slane %v9973, 5
      %v9976 = vor.u32 %v9972, %v9975
      %v9977 = vrot.slane %v9976, 4
      %v9979 = vshll.u32 %v9733, 16
      %v9981 = vrot.slane %v9979, 5
      %v9982 = vsel %vm249, %v9977, %v9981
      %v9983 = vshrl.u32 %v9733, 16
      %v9985 = vrot.slane %v9983, 4
      %v9986 = vor.u32 %v9985, %v9981
      %v9987 = vrot.slane %v9986, 4
      %v9989 = vshll.u32 %v9734, 16
      %v9991 = vrot.slane %v9989, 5
      %v9992 = vsel %vm249, %v9987, %v9991
      %v9994 = vshrl.u32 %v9735, 16
      %v9996 = vrot.slane %v9994, 4
      %v9997 = vshll.u32 %v9735, 16
      %v9999 = vrot.slane %v9997, 5
      %v10000 = vor.u32 %v9996, %v9999
      %v10001 = vrot.slane %v10000, 4
      %v10003 = vshll.u32 %v9736, 16
      %v10005 = vrot.slane %v10003, 5
      %v10006 = vsel %vm249, %v10001, %v10005
      %v10007 = vshrl.u32 %v9736, 16
      %v10009 = vrot.slane %v10007, 4
      %v10010 = vor.u32 %v10009, %v10005
      %v10011 = vrot.slane %v10010, 4
      %v10013 = vshll.u32 %v9737, 16
      %v10015 = vrot.slane %v10013, 5
      %v10016 = vsel %vm249, %v10011, %v10015
      %v10018 = vshrl.u32 %v9738, 16
      %v10020 = vrot.slane %v10018, 4
      %v10021 = vshll.u32 %v9738, 16
      %v10023 = vrot.slane %v10021, 5
      %v10024 = vor.u32 %v10020, %v10023
      %v10025 = vrot.slane %v10024, 4
      %v10027 = vshll.u32 %v9739, 16
      %v10029 = vrot.slane %v10027, 5
      %v10030 = vsel %vm249, %v10025, %v10029
      %v10031 = vshrl.u32 %v9739, 16
      %v10033 = vrot.slane %v10031, 4
      %v10034 = vor.u32 %v10033, %v10029
      %v10035 = vrot.slane %v10034, 4
      %v10037 = vshll.u32 %v9740, 16
      %v10039 = vrot.slane %v10037, 5
      %v10040 = vsel %vm249, %v10035, %v10039
      %v10042 = vshrl.u32 %v9741, 16
      %v10044 = vrot.slane %v10042, 4
      %v10045 = vshll.u32 %v9741, 16
      %v10047 = vrot.slane %v10045, 5
      %v10048 = vor.u32 %v10044, %v10047
      %v10049 = vrot.slane %v10048, 4
      %v10051 = vshll.u32 %v9742, 16
      %v10053 = vrot.slane %v10051, 5
      %v10054 = vsel %vm249, %v10049, %v10053
      %v10055 = vshrl.u32 %v9742, 16
      %v10057 = vrot.slane %v10055, 4
      %v10058 = vor.u32 %v10057, %v10053
      %v10059 = vrot.slane %v10058, 4
      %v10061 = vshll.u32 %v9743, 16
      %v10063 = vrot.slane %v10061, 5
      %v10064 = vsel %vm249, %v10059, %v10063
      %v10066 = vshrl.u32 %v9744, 16
      %v10068 = vrot.slane %v10066, 4
      %v10069 = vshll.u32 %v9744, 16
      %v10071 = vrot.slane %v10069, 5
      %v10072 = vor.u32 %v10068, %v10071
      %v10073 = vrot.slane %v10072, 4
      %v10075 = vshll.u32 %v9745, 16
      %v10077 = vrot.slane %v10075, 5
      %v10078 = vsel %vm249, %v10073, %v10077
      %v10079 = vshrl.u32 %v9745, 16
      %v10081 = vrot.slane %v10079, 4
      %v10082 = vor.u32 %v10081, %v10077
      %v10083 = vrot.slane %v10082, 4
      %v10085 = vshll.u32 %v9746, 16
      %v10087 = vrot.slane %v10085, 5
      %v10088 = vsel %vm249, %v10083, %v10087
      %v10090 = vshrl.u32 %v9747, 16
      %v10092 = vrot.slane %v10090, 4
      %v10093 = vshll.u32 %v9747, 16
      %v10095 = vrot.slane %v10093, 5
      %v10096 = vor.u32 %v10092, %v10095
      %v10097 = vrot.slane %v10096, 4
      %v10099 = vshll.u32 %v9748, 16
      %v10101 = vrot.slane %v10099, 5
      %v10102 = vsel %vm249, %v10097, %v10101
      %v10103 = vshrl.u32 %v9748, 16
      %v10105 = vrot.slane %v10103, 4
      %v10106 = vor.u32 %v10105, %v10101
      %v10107 = vrot.slane %v10106, 4
      %v10109 = vshll.u32 %v9749, 16
      %v10111 = vrot.slane %v10109, 5
      %v10112 = vsel %vm249, %v10107, %v10111
      %v10114 = vshrl.u32 %v9750, 16
      %v10116 = vrot.slane %v10114, 4
      %v10117 = vshll.u32 %v9750, 16
      %v10119 = vrot.slane %v10117, 5
      %v10120 = vor.u32 %v10116, %v10119
      %v10121 = vrot.slane %v10120, 4
      %v10123 = vshll.u32 %v9751, 16
      %v10125 = vrot.slane %v10123, 5
      %v10126 = vsel %vm249, %v10121, %v10125
      %v10127 = vshrl.u32 %v9751, 16
      %v10129 = vrot.slane %v10127, 4
      %v10130 = vor.u32 %v10129, %v10125
      %v10131 = vrot.slane %v10130, 4
      %v10133 = vshll.u32 %v9752, 16
      %v10135 = vrot.slane %v10133, 5
      %v10136 = vsel %vm249, %v10131, %v10135
      %s10137 = scalar_lea.vmem %s1, 42
      %v10138 = vld [vmem:[%s10137] sm:$0x3]
      %v10139 = vunpack.c.l.b16 %v9766
      %v10140 = vunpack.c.l.b16 %v9776
      %v10141 = vunpack.c.l.b16 %v9790
      %v10142 = vunpack.c.l.b16 %v9800
      %v10143 = vunpack.c.l.b16 %v9814
      %v10144 = vunpack.c.l.b16 %v9824
      %v10145 = vunpack.c.l.b16 %v9838
      %v10146 = vunpack.c.l.b16 %v9848
      %v10147 = vunpack.c.l.b16 %v9862
      %v10148 = vunpack.c.l.b16 %v9872
      %v10149 = vunpack.c.l.b16 %v9886
      %v10150 = vunpack.c.l.b16 %v9896
      %v10151 = vunpack.c.l.b16 %v9910
      %v10152 = vunpack.c.l.b16 %v9920
      %v10153 = vunpack.c.l.b16 %v9934
      %v10154 = vunpack.c.l.b16 %v9944
      %v10155 = vunpack.c.l.b16 %v9958
      %v10156 = vunpack.c.l.b16 %v9968
      %v10157 = vunpack.c.l.b16 %v9982
      %v10158 = vunpack.c.l.b16 %v9992
      %v10159 = vunpack.c.l.b16 %v10006
      %v10160 = vunpack.c.l.b16 %v10016
      %v10161 = vunpack.c.l.b16 %v10030
      %v10162 = vunpack.c.l.b16 %v10040
      %v10163 = vunpack.c.l.b16 %v10054
      %v10164 = vunpack.c.l.b16 %v10064
      %v10165 = vunpack.c.l.b16 %v10078
      %v10166 = vunpack.c.l.b16 %v10088
      %v10167 = vunpack.c.l.b16 %v10102
      %v10168 = vunpack.c.l.b16 %v10112
      %v10169 = vunpack.c.l.b16 %v10126
      %v10170 = vunpack.c.l.b16 %v10136
      %v10171 = vpack.c.b16 %v10140, %v10139
      %v10172 = vpack.c.b16 %v10142, %v10141
      %v10173 = vpack.c.b16 %v10144, %v10143
      %v10174 = vpack.c.b16 %v10146, %v10145
      %v10175 = vpack.c.b16 %v10148, %v10147
      %v10176 = vpack.c.b16 %v10150, %v10149
      %v10177 = vpack.c.b16 %v10152, %v10151
      %v10178 = vpack.c.b16 %v10154, %v10153
      %v10179 = vpack.c.b16 %v10156, %v10155
      %v10180 = vpack.c.b16 %v10158, %v10157
      %v10181 = vpack.c.b16 %v10160, %v10159
      %v10182 = vpack.c.b16 %v10162, %v10161
      %v10183 = vpack.c.b16 %v10164, %v10163
      %v10184 = vpack.c.b16 %v10166, %v10165
      %v10185 = vpack.c.b16 %v10168, %v10167
      %v10186 = vpack.c.b16 %v10170, %v10169
      %v10188 = vsel %vm684, %v10171, 0
      %v10191 = vsel %vm684, %v10172, 0
      %v10194 = vsel %vm684, %v10173, 0
      %v10197 = vsel %vm684, %v10174, 0
      %v10200 = vsel %vm684, %v10175, 0
      %v10203 = vsel %vm684, %v10176, 0
      %v10206 = vsel %vm684, %v10177, 0
      %v10209 = vsel %vm684, %v10178, 0
      %v10212 = vsel %vm684, %v10179, 0
      %v10215 = vsel %vm684, %v10180, 0
      %v10218 = vsel %vm684, %v10181, 0
      %v10221 = vsel %vm684, %v10182, 0
      %v10224 = vsel %vm684, %v10183, 0
      %v10227 = vsel %vm684, %v10184, 0
      %v10230 = vsel %vm684, %v10185, 0
      %v10233 = vsel %vm684, %v10186, 0
      %v10236 = vsel %vm733, %v10138, 0
      %10238 = vmatpush.bf16.msra.mxu0 0
      %10239 = vmatpush.bf16.msra.mxu0 0
      %10240 = vmatpush.bf16.msra.mxu0 0
      %10241 = vmatpush.bf16.msra.mxu0 0
      %10242 = vmatpush.bf16.msra.mxu0 0
      %10243 = vmatpush.bf16.msra.mxu0 0
      %10244 = vmatpush.bf16.msra.mxu0 0
      %10245 = vmatpush.bf16.msra.mxu0 %v10236
      %10246 = vmatmul.bf16.gmra.mxu0 %v10188
      %v10247 = vpop.f32.mrf.mxu0
      %v10248 = vadd.f32 0.0, %v10247
      %v10249 = vpop.f32.mrf.mxu0
      %v10250 = vadd.f32 0.0, %v10249
      %10251 = vmatmul.bf16.gmra.mxu0 %v10191
      %v10252 = vpop.f32.mrf.mxu0
      %v10253 = vadd.f32 0.0, %v10252
      %v10254 = vpop.f32.mrf.mxu0
      %v10255 = vadd.f32 0.0, %v10254
      %10256 = vmatmul.bf16.gmra.mxu0 %v10194
      %v10257 = vpop.f32.mrf.mxu0
      %v10258 = vadd.f32 0.0, %v10257
      %v10259 = vpop.f32.mrf.mxu0
      %v10260 = vadd.f32 0.0, %v10259
      %10261 = vmatmul.bf16.gmra.mxu0 %v10197
      %v10262 = vpop.f32.mrf.mxu0
      %v10263 = vadd.f32 0.0, %v10262
      %v10264 = vpop.f32.mrf.mxu0
      %v10265 = vadd.f32 0.0, %v10264
      %10266 = vmatmul.bf16.gmra.mxu0 %v10200
      %v10267 = vpop.f32.mrf.mxu0
      %v10268 = vadd.f32 0.0, %v10267
      %v10269 = vpop.f32.mrf.mxu0
      %v10270 = vadd.f32 0.0, %v10269
      %10271 = vmatmul.bf16.gmra.mxu0 %v10203
      %v10272 = vpop.f32.mrf.mxu0
      %v10273 = vadd.f32 0.0, %v10272
      %v10274 = vpop.f32.mrf.mxu0
      %v10275 = vadd.f32 0.0, %v10274
      %10276 = vmatmul.bf16.gmra.mxu0 %v10206
      %v10277 = vpop.f32.mrf.mxu0
      %v10278 = vadd.f32 0.0, %v10277
      %v10279 = vpop.f32.mrf.mxu0
      %v10280 = vadd.f32 0.0, %v10279
      %10281 = vmatmul.bf16.gmra.mxu0 %v10209
      %v10282 = vpop.f32.mrf.mxu0
      %v10283 = vadd.f32 0.0, %v10282
      %v10284 = vpop.f32.mrf.mxu0
      %v10285 = vadd.f32 0.0, %v10284
      %10286 = vmatmul.bf16.gmra.mxu0 %v10212
      %v10287 = vpop.f32.mrf.mxu0
      %v10288 = vadd.f32 0.0, %v10287
      %v10289 = vpop.f32.mrf.mxu0
      %v10290 = vadd.f32 0.0, %v10289
      %10291 = vmatmul.bf16.gmra.mxu0 %v10215
      %v10292 = vpop.f32.mrf.mxu0
      %v10293 = vadd.f32 0.0, %v10292
      %v10294 = vpop.f32.mrf.mxu0
      %v10295 = vadd.f32 0.0, %v10294
      %10296 = vmatmul.bf16.gmra.mxu0 %v10218
      %v10297 = vpop.f32.mrf.mxu0
      %v10298 = vadd.f32 0.0, %v10297
      %v10299 = vpop.f32.mrf.mxu0
      %v10300 = vadd.f32 0.0, %v10299
      %10301 = vmatmul.bf16.gmra.mxu0 %v10221
      %v10302 = vpop.f32.mrf.mxu0
      %v10303 = vadd.f32 0.0, %v10302
      %v10304 = vpop.f32.mrf.mxu0
      %v10305 = vadd.f32 0.0, %v10304
      %10306 = vmatmul.bf16.gmra.mxu0 %v10224
      %v10307 = vpop.f32.mrf.mxu0
      %v10308 = vadd.f32 0.0, %v10307
      %v10309 = vpop.f32.mrf.mxu0
      %v10310 = vadd.f32 0.0, %v10309
      %10311 = vmatmul.bf16.gmra.mxu0 %v10227
      %v10312 = vpop.f32.mrf.mxu0
      %v10313 = vadd.f32 0.0, %v10312
      %v10314 = vpop.f32.mrf.mxu0
      %v10315 = vadd.f32 0.0, %v10314
      %10316 = vmatmul.bf16.gmra.mxu0 %v10230
      %v10317 = vpop.f32.mrf.mxu0
      %v10318 = vadd.f32 0.0, %v10317
      %v10319 = vpop.f32.mrf.mxu0
      %v10320 = vadd.f32 0.0, %v10319
      %10321 = vmatmul.bf16.gmra.mxu0 %v10233
      %v10322 = vpop.f32.mrf.mxu0
      %v10323 = vadd.f32 0.0, %v10322
      %v10324 = vpop.f32.mrf.mxu0
      %v10325 = vadd.f32 0.0, %v10324
      %10326 = vdwg.mxu0
      %v10327 = vadd.f32 %v9673, %v10248
      %v10328 = vadd.f32 %v9674, %v10250
      %v10329 = vadd.f32 %v9675, %v10253
      %v10330 = vadd.f32 %v9676, %v10255
      %v10331 = vadd.f32 %v9677, %v10258
      %v10332 = vadd.f32 %v9678, %v10260
      %v10333 = vadd.f32 %v9679, %v10263
      %v10334 = vadd.f32 %v9680, %v10265
      %v10335 = vadd.f32 %v9681, %v10268
      %v10336 = vadd.f32 %v9682, %v10270
      %v10337 = vadd.f32 %v9683, %v10273
      %v10338 = vadd.f32 %v9684, %v10275
      %v10339 = vadd.f32 %v9685, %v10278
      %v10340 = vadd.f32 %v9686, %v10280
      %v10341 = vadd.f32 %v9687, %v10283
      %v10342 = vadd.f32 %v9688, %v10285
      %v10343 = vadd.f32 %v9689, %v10288
      %v10344 = vadd.f32 %v9690, %v10290
      %v10345 = vadd.f32 %v9691, %v10293
      %v10346 = vadd.f32 %v9692, %v10295
      %v10347 = vadd.f32 %v9693, %v10298
      %v10348 = vadd.f32 %v9694, %v10300
      %v10349 = vadd.f32 %v9695, %v10303
      %v10350 = vadd.f32 %v9696, %v10305
      %v10351 = vadd.f32 %v9697, %v10308
      %v10352 = vadd.f32 %v9698, %v10310
      %v10353 = vadd.f32 %v9699, %v10313
      %v10354 = vadd.f32 %v9700, %v10315
      %v10355 = vadd.f32 %v9701, %v10318
      %v10356 = vadd.f32 %v9702, %v10320
      %v10357 = vadd.f32 %v9703, %v10323
      %v10358 = vadd.f32 %v9704, %v10325
      %v10359 = vld [vmem:[%s9418] sm:$0xe]
      %v10360 = vld [vmem:[%s9418 + $0xc] sm:$0xe]
      %v10361 = vld [vmem:[%s9418 + $0x18] sm:$0xe]
      %v10362 = vld [vmem:[%s9418 + $0x24] sm:$0xe]
      %v10363 = vld [vmem:[%s9418 + $0x30] sm:$0xe]
      %v10364 = vld [vmem:[%s9418 + $0x3c] sm:$0xe]
      %v10365 = vld [vmem:[%s9418 + $0x48] sm:$0xe]
      %v10366 = vld [vmem:[%s9418 + $0x54] sm:$0xe]
      %v10367 = vld [vmem:[%s9418 + $0x60] sm:$0xe]
      %v10368 = vld [vmem:[%s9418 + $0x6c] sm:$0xe]
      %v10369 = vld [vmem:[%s9418 + $0x78] sm:$0xe]
      %v10370 = vld [vmem:[%s9418 + $0x84] sm:$0xe]
      %v10371 = vld [vmem:[%s9418 + $0x90] sm:$0xe]
      %v10372 = vld [vmem:[%s9418 + $0x9c] sm:$0xe]
      %v10373 = vld [vmem:[%s9418 + $0xa8] sm:$0xe]
      %v10374 = vld [vmem:[%s9418 + $0xb4] sm:$0xe]
      %v10423 = vrot.slane %v10359, 5
      %v10424 = vrot.slane %v10423, 4
      %v10425 = vrot.slane %v9706, 5
      %v10426 = vsel %vm1096, %v10424, %v10425
      %v10427 = vrot.slane %v10425, 4
      %v10428 = vrot.slane %v9707, 5
      %v10429 = vsel %vm1096, %v10427, %v10428
      %v10430 = vrot.slane %v10360, 5
      %v10431 = vrot.slane %v10430, 4
      %v10432 = vrot.slane %v9709, 5
      %v10433 = vsel %vm1096, %v10431, %v10432
      %v10434 = vrot.slane %v10432, 4
      %v10435 = vrot.slane %v9710, 5
      %v10436 = vsel %vm1096, %v10434, %v10435
      %v10437 = vrot.slane %v10361, 5
      %v10438 = vrot.slane %v10437, 4
      %v10439 = vrot.slane %v9712, 5
      %v10440 = vsel %vm1096, %v10438, %v10439
      %v10441 = vrot.slane %v10439, 4
      %v10442 = vrot.slane %v9713, 5
      %v10443 = vsel %vm1096, %v10441, %v10442
      %v10444 = vrot.slane %v10362, 5
      %v10445 = vrot.slane %v10444, 4
      %v10446 = vrot.slane %v9715, 5
      %v10447 = vsel %vm1096, %v10445, %v10446
      %v10448 = vrot.slane %v10446, 4
      %v10449 = vrot.slane %v9716, 5
      %v10450 = vsel %vm1096, %v10448, %v10449
      %v10451 = vrot.slane %v10363, 5
      %v10452 = vrot.slane %v10451, 4
      %v10453 = vrot.slane %v9718, 5
      %v10454 = vsel %vm1096, %v10452, %v10453
      %v10455 = vrot.slane %v10453, 4
      %v10456 = vrot.slane %v9719, 5
      %v10457 = vsel %vm1096, %v10455, %v10456
      %v10458 = vrot.slane %v10364, 5
      %v10459 = vrot.slane %v10458, 4
      %v10460 = vrot.slane %v9721, 5
      %v10461 = vsel %vm1096, %v10459, %v10460
      %v10462 = vrot.slane %v10460, 4
      %v10463 = vrot.slane %v9722, 5
      %v10464 = vsel %vm1096, %v10462, %v10463
      %v10465 = vrot.slane %v10365, 5
      %v10466 = vrot.slane %v10465, 4
      %v10467 = vrot.slane %v9724, 5
      %v10468 = vsel %vm1096, %v10466, %v10467
      %v10469 = vrot.slane %v10467, 4
      %v10470 = vrot.slane %v9725, 5
      %v10471 = vsel %vm1096, %v10469, %v10470
      %v10472 = vrot.slane %v10366, 5
      %v10473 = vrot.slane %v10472, 4
      %v10474 = vrot.slane %v9727, 5
      %v10475 = vsel %vm1096, %v10473, %v10474
      %v10476 = vrot.slane %v10474, 4
      %v10477 = vrot.slane %v9728, 5
      %v10478 = vsel %vm1096, %v10476, %v10477
      %v10479 = vrot.slane %v10367, 5
      %v10480 = vrot.slane %v10479, 4
      %v10481 = vrot.slane %v9730, 5
      %v10482 = vsel %vm1096, %v10480, %v10481
      %v10483 = vrot.slane %v10481, 4
      %v10484 = vrot.slane %v9731, 5
      %v10485 = vsel %vm1096, %v10483, %v10484
      %v10486 = vrot.slane %v10368, 5
      %v10487 = vrot.slane %v10486, 4
      %v10488 = vrot.slane %v9733, 5
      %v10489 = vsel %vm1096, %v10487, %v10488
      %v10490 = vrot.slane %v10488, 4
      %v10491 = vrot.slane %v9734, 5
      %v10492 = vsel %vm1096, %v10490, %v10491
      %v10493 = vrot.slane %v10369, 5
      %v10494 = vrot.slane %v10493, 4
      %v10495 = vrot.slane %v9736, 5
      %v10496 = vsel %vm1096, %v10494, %v10495
      %v10497 = vrot.slane %v10495, 4
      %v10498 = vrot.slane %v9737, 5
      %v10499 = vsel %vm1096, %v10497, %v10498
      %v10500 = vrot.slane %v10370, 5
      %v10501 = vrot.slane %v10500, 4
      %v10502 = vrot.slane %v9739, 5
      %v10503 = vsel %vm1096, %v10501, %v10502
      %v10504 = vrot.slane %v10502, 4
      %v10505 = vrot.slane %v9740, 5
      %v10506 = vsel %vm1096, %v10504, %v10505
      %v10507 = vrot.slane %v10371, 5
      %v10508 = vrot.slane %v10507, 4
      %v10509 = vrot.slane %v9742, 5
      %v10510 = vsel %vm1096, %v10508, %v10509
      %v10511 = vrot.slane %v10509, 4
      %v10512 = vrot.slane %v9743, 5
      %v10513 = vsel %vm1096, %v10511, %v10512
      %v10514 = vrot.slane %v10372, 5
      %v10515 = vrot.slane %v10514, 4
      %v10516 = vrot.slane %v9745, 5
      %v10517 = vsel %vm1096, %v10515, %v10516
      %v10518 = vrot.slane %v10516, 4
      %v10519 = vrot.slane %v9746, 5
      %v10520 = vsel %vm1096, %v10518, %v10519
      %v10521 = vrot.slane %v10373, 5
      %v10522 = vrot.slane %v10521, 4
      %v10523 = vrot.slane %v9748, 5
      %v10524 = vsel %vm1096, %v10522, %v10523
      %v10525 = vrot.slane %v10523, 4
      %v10526 = vrot.slane %v9749, 5
      %v10527 = vsel %vm1096, %v10525, %v10526
      %v10528 = vrot.slane %v10374, 5
      %v10529 = vrot.slane %v10528, 4
      %v10530 = vrot.slane %v9751, 5
      %v10531 = vsel %vm1096, %v10529, %v10530
      %v10532 = vrot.slane %v10530, 4
      %v10533 = vrot.slane %v9752, 5
      %v10534 = vsel %vm1096, %v10532, %v10533
      %s10535 = scalar_lea.vmem %s1, 44
      %v10536 = vld [vmem:[%s10535] sm:$0x3]
      %v10537 = vunpack.c.l.b16 %v10426
      %v10538 = vunpack.c.l.b16 %v10429
      %v10539 = vunpack.c.l.b16 %v10433
      %v10540 = vunpack.c.l.b16 %v10436
      %v10541 = vunpack.c.l.b16 %v10440
      %v10542 = vunpack.c.l.b16 %v10443
      %v10543 = vunpack.c.l.b16 %v10447
      %v10544 = vunpack.c.l.b16 %v10450
      %v10545 = vunpack.c.l.b16 %v10454
      %v10546 = vunpack.c.l.b16 %v10457
      %v10547 = vunpack.c.l.b16 %v10461
      %v10548 = vunpack.c.l.b16 %v10464
      %v10549 = vunpack.c.l.b16 %v10468
      %v10550 = vunpack.c.l.b16 %v10471
      %v10551 = vunpack.c.l.b16 %v10475
      %v10552 = vunpack.c.l.b16 %v10478
      %v10553 = vunpack.c.l.b16 %v10482
      %v10554 = vunpack.c.l.b16 %v10485
      %v10555 = vunpack.c.l.b16 %v10489
      %v10556 = vunpack.c.l.b16 %v10492
      %v10557 = vunpack.c.l.b16 %v10496
      %v10558 = vunpack.c.l.b16 %v10499
      %v10559 = vunpack.c.l.b16 %v10503
      %v10560 = vunpack.c.l.b16 %v10506
      %v10561 = vunpack.c.l.b16 %v10510
      %v10562 = vunpack.c.l.b16 %v10513
      %v10563 = vunpack.c.l.b16 %v10517
      %v10564 = vunpack.c.l.b16 %v10520
      %v10565 = vunpack.c.l.b16 %v10524
      %v10566 = vunpack.c.l.b16 %v10527
      %v10567 = vunpack.c.l.b16 %v10531
      %v10568 = vunpack.c.l.b16 %v10534
      %v10569 = vpack.c.b16 %v10538, %v10537
      %v10570 = vpack.c.b16 %v10540, %v10539
      %v10571 = vpack.c.b16 %v10542, %v10541
      %v10572 = vpack.c.b16 %v10544, %v10543
      %v10573 = vpack.c.b16 %v10546, %v10545
      %v10574 = vpack.c.b16 %v10548, %v10547
      %v10575 = vpack.c.b16 %v10550, %v10549
      %v10576 = vpack.c.b16 %v10552, %v10551
      %v10577 = vpack.c.b16 %v10554, %v10553
      %v10578 = vpack.c.b16 %v10556, %v10555
      %v10579 = vpack.c.b16 %v10558, %v10557
      %v10580 = vpack.c.b16 %v10560, %v10559
      %v10581 = vpack.c.b16 %v10562, %v10561
      %v10582 = vpack.c.b16 %v10564, %v10563
      %v10583 = vpack.c.b16 %v10566, %v10565
      %v10584 = vpack.c.b16 %v10568, %v10567
      %v10586 = vsel %vm684, %v10569, 0
      %v10589 = vsel %vm684, %v10570, 0
      %v10592 = vsel %vm684, %v10571, 0
      %v10595 = vsel %vm684, %v10572, 0
      %v10598 = vsel %vm684, %v10573, 0
      %v10601 = vsel %vm684, %v10574, 0
      %v10604 = vsel %vm684, %v10575, 0
      %v10607 = vsel %vm684, %v10576, 0
      %v10610 = vsel %vm684, %v10577, 0
      %v10613 = vsel %vm684, %v10578, 0
      %v10616 = vsel %vm684, %v10579, 0
      %v10619 = vsel %vm684, %v10580, 0
      %v10622 = vsel %vm684, %v10581, 0
      %v10625 = vsel %vm684, %v10582, 0
      %v10628 = vsel %vm684, %v10583, 0
      %v10631 = vsel %vm684, %v10584, 0
      %v10634 = vsel %vm733, %v10536, 0
      %10636 = vmatpush.bf16.msra.mxu0 0
      %10637 = vmatpush.bf16.msra.mxu0 0
      %10638 = vmatpush.bf16.msra.mxu0 0
      %10639 = vmatpush.bf16.msra.mxu0 0
      %10640 = vmatpush.bf16.msra.mxu0 0
      %10641 = vmatpush.bf16.msra.mxu0 0
      %10642 = vmatpush.bf16.msra.mxu0 0
      %10643 = vmatpush.bf16.msra.mxu0 %v10634
      %10644 = vmatmul.bf16.gmra.mxu0 %v10586
      %v10645 = vpop.f32.mrf.mxu0
      %v10646 = vadd.f32 0.0, %v10645
      %v10647 = vpop.f32.mrf.mxu0
      %v10648 = vadd.f32 0.0, %v10647
      %10649 = vmatmul.bf16.gmra.mxu0 %v10589
      %v10650 = vpop.f32.mrf.mxu0
      %v10651 = vadd.f32 0.0, %v10650
      %v10652 = vpop.f32.mrf.mxu0
      %v10653 = vadd.f32 0.0, %v10652
      %10654 = vmatmul.bf16.gmra.mxu0 %v10592
      %v10655 = vpop.f32.mrf.mxu0
      %v10656 = vadd.f32 0.0, %v10655
      %v10657 = vpop.f32.mrf.mxu0
      %v10658 = vadd.f32 0.0, %v10657
      %10659 = vmatmul.bf16.gmra.mxu0 %v10595
      %v10660 = vpop.f32.mrf.mxu0
      %v10661 = vadd.f32 0.0, %v10660
      %v10662 = vpop.f32.mrf.mxu0
      %v10663 = vadd.f32 0.0, %v10662
      %10664 = vmatmul.bf16.gmra.mxu0 %v10598
      %v10665 = vpop.f32.mrf.mxu0
      %v10666 = vadd.f32 0.0, %v10665
      %v10667 = vpop.f32.mrf.mxu0
      %v10668 = vadd.f32 0.0, %v10667
      %10669 = vmatmul.bf16.gmra.mxu0 %v10601
      %v10670 = vpop.f32.mrf.mxu0
      %v10671 = vadd.f32 0.0, %v10670
      %v10672 = vpop.f32.mrf.mxu0
      %v10673 = vadd.f32 0.0, %v10672
      %10674 = vmatmul.bf16.gmra.mxu0 %v10604
      %v10675 = vpop.f32.mrf.mxu0
      %v10676 = vadd.f32 0.0, %v10675
      %v10677 = vpop.f32.mrf.mxu0
      %v10678 = vadd.f32 0.0, %v10677
      %10679 = vmatmul.bf16.gmra.mxu0 %v10607
      %v10680 = vpop.f32.mrf.mxu0
      %v10681 = vadd.f32 0.0, %v10680
      %v10682 = vpop.f32.mrf.mxu0
      %v10683 = vadd.f32 0.0, %v10682
      %10684 = vmatmul.bf16.gmra.mxu0 %v10610
      %v10685 = vpop.f32.mrf.mxu0
      %v10686 = vadd.f32 0.0, %v10685
      %v10687 = vpop.f32.mrf.mxu0
      %v10688 = vadd.f32 0.0, %v10687
      %10689 = vmatmul.bf16.gmra.mxu0 %v10613
      %v10690 = vpop.f32.mrf.mxu0
      %v10691 = vadd.f32 0.0, %v10690
      %v10692 = vpop.f32.mrf.mxu0
      %v10693 = vadd.f32 0.0, %v10692
      %10694 = vmatmul.bf16.gmra.mxu0 %v10616
      %v10695 = vpop.f32.mrf.mxu0
      %v10696 = vadd.f32 0.0, %v10695
      %v10697 = vpop.f32.mrf.mxu0
      %v10698 = vadd.f32 0.0, %v10697
      %10699 = vmatmul.bf16.gmra.mxu0 %v10619
      %v10700 = vpop.f32.mrf.mxu0
      %v10701 = vadd.f32 0.0, %v10700
      %v10702 = vpop.f32.mrf.mxu0
      %v10703 = vadd.f32 0.0, %v10702
      %10704 = vmatmul.bf16.gmra.mxu0 %v10622
      %v10705 = vpop.f32.mrf.mxu0
      %v10706 = vadd.f32 0.0, %v10705
      %v10707 = vpop.f32.mrf.mxu0
      %v10708 = vadd.f32 0.0, %v10707
      %10709 = vmatmul.bf16.gmra.mxu0 %v10625
      %v10710 = vpop.f32.mrf.mxu0
      %v10711 = vadd.f32 0.0, %v10710
      %v10712 = vpop.f32.mrf.mxu0
      %v10713 = vadd.f32 0.0, %v10712
      %10714 = vmatmul.bf16.gmra.mxu0 %v10628
      %v10715 = vpop.f32.mrf.mxu0
      %v10716 = vadd.f32 0.0, %v10715
      %v10717 = vpop.f32.mrf.mxu0
      %v10718 = vadd.f32 0.0, %v10717
      %10719 = vmatmul.bf16.gmra.mxu0 %v10631
      %v10720 = vpop.f32.mrf.mxu0
      %v10721 = vadd.f32 0.0, %v10720
      %v10722 = vpop.f32.mrf.mxu0
      %v10723 = vadd.f32 0.0, %v10722
      %10724 = vdwg.mxu0
      %v10725 = vadd.f32 %v10327, %v10646
      %v10726 = vadd.f32 %v10328, %v10648
      %v10727 = vadd.f32 %v10329, %v10651
      %v10728 = vadd.f32 %v10330, %v10653
      %v10729 = vadd.f32 %v10331, %v10656
      %v10730 = vadd.f32 %v10332, %v10658
      %v10731 = vadd.f32 %v10333, %v10661
      %v10732 = vadd.f32 %v10334, %v10663
      %v10733 = vadd.f32 %v10335, %v10666
      %v10734 = vadd.f32 %v10336, %v10668
      %v10735 = vadd.f32 %v10337, %v10671
      %v10736 = vadd.f32 %v10338, %v10673
      %v10737 = vadd.f32 %v10339, %v10676
      %v10738 = vadd.f32 %v10340, %v10678
      %v10739 = vadd.f32 %v10341, %v10681
      %v10740 = vadd.f32 %v10342, %v10683
      %v10741 = vadd.f32 %v10343, %v10686
      %v10742 = vadd.f32 %v10344, %v10688
      %v10743 = vadd.f32 %v10345, %v10691
      %v10744 = vadd.f32 %v10346, %v10693
      %v10745 = vadd.f32 %v10347, %v10696
      %v10746 = vadd.f32 %v10348, %v10698
      %v10747 = vadd.f32 %v10349, %v10701
      %v10748 = vadd.f32 %v10350, %v10703
      %v10749 = vadd.f32 %v10351, %v10706
      %v10750 = vadd.f32 %v10352, %v10708
      %v10751 = vadd.f32 %v10353, %v10711
      %v10752 = vadd.f32 %v10354, %v10713
      %v10753 = vadd.f32 %v10355, %v10716
      %v10754 = vadd.f32 %v10356, %v10718
      %v10755 = vadd.f32 %v10357, %v10721
      %v10756 = vadd.f32 %v10358, %v10723
      %v10757 = vld [vmem:[%s9418 + $0x8] sm:$0x3]
      %v10758 = vld [vmem:[%s9418 + $0x14] sm:$0x3]
      %v10759 = vld [vmem:[%s9418 + $0x20] sm:$0x3]
      %v10760 = vld [vmem:[%s9418 + $0x2c] sm:$0x3]
      %v10761 = vld [vmem:[%s9418 + $0x38] sm:$0x3]
      %v10762 = vld [vmem:[%s9418 + $0x44] sm:$0x3]
      %v10763 = vld [vmem:[%s9418 + $0x50] sm:$0x3]
      %v10764 = vld [vmem:[%s9418 + $0x5c] sm:$0x3]
      %v10765 = vld [vmem:[%s9418 + $0x68] sm:$0x3]
      %v10766 = vld [vmem:[%s9418 + $0x74] sm:$0x3]
      %v10767 = vld [vmem:[%s9418 + $0x80] sm:$0x3]
      %v10768 = vld [vmem:[%s9418 + $0x8c] sm:$0x3]
      %v10769 = vld [vmem:[%s9418 + $0x98] sm:$0x3]
      %v10770 = vld [vmem:[%s9418 + $0xa4] sm:$0x3]
      %v10771 = vld [vmem:[%s9418 + $0xb0] sm:$0x3]
      %v10772 = vld [vmem:[%s9418 + $0xbc] sm:$0x3]
      %v10774 = vshrl.u32 %v10359, 16
      %v10776 = vrot.slane %v10774, 5
      %v10777 = vshll.u32 %v10359, 16
      %v10779 = vrot.slane %v10777, 6
      %v10780 = vor.u32 %v10776, %v10779
      %v10781 = vrot.slane %v10780, 4
      %v10782 = vrot.slane %v9767, 5
      %v10783 = vrot.slane %v9763, 6
      %v10784 = vor.u32 %v10782, %v10783
      %v10785 = vsel %vm1449, %v10781, %v10784
      %v10786 = vrot.slane %v10784, 4
      %v10788 = vshrl.u32 %v10757, 16
      %v10790 = vrot.slane %v10788, 5
      %v10791 = vshll.u32 %v10757, 16
      %v10793 = vrot.slane %v10791, 6
      %v10794 = vor.u32 %v10790, %v10793
      %v10795 = vsel %vm1449, %v10786, %v10794
      %v10797 = vshrl.u32 %v10360, 16
      %v10799 = vrot.slane %v10797, 5
      %v10800 = vshll.u32 %v10360, 16
      %v10802 = vrot.slane %v10800, 6
      %v10803 = vor.u32 %v10799, %v10802
      %v10804 = vrot.slane %v10803, 4
      %v10805 = vrot.slane %v9791, 5
      %v10806 = vrot.slane %v9787, 6
      %v10807 = vor.u32 %v10805, %v10806
      %v10808 = vsel %vm1449, %v10804, %v10807
      %v10809 = vrot.slane %v10807, 4
      %v10811 = vshrl.u32 %v10758, 16
      %v10813 = vrot.slane %v10811, 5
      %v10814 = vshll.u32 %v10758, 16
      %v10816 = vrot.slane %v10814, 6
      %v10817 = vor.u32 %v10813, %v10816
      %v10818 = vsel %vm1449, %v10809, %v10817
      %v10820 = vshrl.u32 %v10361, 16
      %v10822 = vrot.slane %v10820, 5
      %v10823 = vshll.u32 %v10361, 16
      %v10825 = vrot.slane %v10823, 6
      %v10826 = vor.u32 %v10822, %v10825
      %v10827 = vrot.slane %v10826, 4
      %v10828 = vrot.slane %v9815, 5
      %v10829 = vrot.slane %v9811, 6
      %v10830 = vor.u32 %v10828, %v10829
      %v10831 = vsel %vm1449, %v10827, %v10830
      %v10832 = vrot.slane %v10830, 4
      %v10834 = vshrl.u32 %v10759, 16
      %v10836 = vrot.slane %v10834, 5
      %v10837 = vshll.u32 %v10759, 16
      %v10839 = vrot.slane %v10837, 6
      %v10840 = vor.u32 %v10836, %v10839
      %v10841 = vsel %vm1449, %v10832, %v10840
      %v10843 = vshrl.u32 %v10362, 16
      %v10845 = vrot.slane %v10843, 5
      %v10846 = vshll.u32 %v10362, 16
      %v10848 = vrot.slane %v10846, 6
      %v10849 = vor.u32 %v10845, %v10848
      %v10850 = vrot.slane %v10849, 4
      %v10851 = vrot.slane %v9839, 5
      %v10852 = vrot.slane %v9835, 6
      %v10853 = vor.u32 %v10851, %v10852
      %v10854 = vsel %vm1449, %v10850, %v10853
      %v10855 = vrot.slane %v10853, 4
      %v10857 = vshrl.u32 %v10760, 16
      %v10859 = vrot.slane %v10857, 5
      %v10860 = vshll.u32 %v10760, 16
      %v10862 = vrot.slane %v10860, 6
      %v10863 = vor.u32 %v10859, %v10862
      %v10864 = vsel %vm1449, %v10855, %v10863
      %v10866 = vshrl.u32 %v10363, 16
      %v10868 = vrot.slane %v10866, 5
      %v10869 = vshll.u32 %v10363, 16
      %v10871 = vrot.slane %v10869, 6
      %v10872 = vor.u32 %v10868, %v10871
      %v10873 = vrot.slane %v10872, 4
      %v10874 = vrot.slane %v9863, 5
      %v10875 = vrot.slane %v9859, 6
      %v10876 = vor.u32 %v10874, %v10875
      %v10877 = vsel %vm1449, %v10873, %v10876
      %v10878 = vrot.slane %v10876, 4
      %v10880 = vshrl.u32 %v10761, 16
      %v10882 = vrot.slane %v10880, 5
      %v10883 = vshll.u32 %v10761, 16
      %v10885 = vrot.slane %v10883, 6
      %v10886 = vor.u32 %v10882, %v10885
      %v10887 = vsel %vm1449, %v10878, %v10886
      %v10889 = vshrl.u32 %v10364, 16
      %v10891 = vrot.slane %v10889, 5
      %v10892 = vshll.u32 %v10364, 16
      %v10894 = vrot.slane %v10892, 6
      %v10895 = vor.u32 %v10891, %v10894
      %v10896 = vrot.slane %v10895, 4
      %v10897 = vrot.slane %v9887, 5
      %v10898 = vrot.slane %v9883, 6
      %v10899 = vor.u32 %v10897, %v10898
      %v10900 = vsel %vm1449, %v10896, %v10899
      %v10901 = vrot.slane %v10899, 4
      %v10903 = vshrl.u32 %v10762, 16
      %v10905 = vrot.slane %v10903, 5
      %v10906 = vshll.u32 %v10762, 16
      %v10908 = vrot.slane %v10906, 6
      %v10909 = vor.u32 %v10905, %v10908
      %v10910 = vsel %vm1449, %v10901, %v10909
      %v10912 = vshrl.u32 %v10365, 16
      %v10914 = vrot.slane %v10912, 5
      %v10915 = vshll.u32 %v10365, 16
      %v10917 = vrot.slane %v10915, 6
      %v10918 = vor.u32 %v10914, %v10917
      %v10919 = vrot.slane %v10918, 4
      %v10920 = vrot.slane %v9911, 5
      %v10921 = vrot.slane %v9907, 6
      %v10922 = vor.u32 %v10920, %v10921
      %v10923 = vsel %vm1449, %v10919, %v10922
      %v10924 = vrot.slane %v10922, 4
      %v10926 = vshrl.u32 %v10763, 16
      %v10928 = vrot.slane %v10926, 5
      %v10929 = vshll.u32 %v10763, 16
      %v10931 = vrot.slane %v10929, 6
      %v10932 = vor.u32 %v10928, %v10931
      %v10933 = vsel %vm1449, %v10924, %v10932
      %v10935 = vshrl.u32 %v10366, 16
      %v10937 = vrot.slane %v10935, 5
      %v10938 = vshll.u32 %v10366, 16
      %v10940 = vrot.slane %v10938, 6
      %v10941 = vor.u32 %v10937, %v10940
      %v10942 = vrot.slane %v10941, 4
      %v10943 = vrot.slane %v9935, 5
      %v10944 = vrot.slane %v9931, 6
      %v10945 = vor.u32 %v10943, %v10944
      %v10946 = vsel %vm1449, %v10942, %v10945
      %v10947 = vrot.slane %v10945, 4
      %v10949 = vshrl.u32 %v10764, 16
      %v10951 = vrot.slane %v10949, 5
      %v10952 = vshll.u32 %v10764, 16
      %v10954 = vrot.slane %v10952, 6
      %v10955 = vor.u32 %v10951, %v10954
      %v10956 = vsel %vm1449, %v10947, %v10955
      %v10958 = vshrl.u32 %v10367, 16
      %v10960 = vrot.slane %v10958, 5
      %v10961 = vshll.u32 %v10367, 16
      %v10963 = vrot.slane %v10961, 6
      %v10964 = vor.u32 %v10960, %v10963
      %v10965 = vrot.slane %v10964, 4
      %v10966 = vrot.slane %v9959, 5
      %v10967 = vrot.slane %v9955, 6
      %v10968 = vor.u32 %v10966, %v10967
      %v10969 = vsel %vm1449, %v10965, %v10968
      %v10970 = vrot.slane %v10968, 4
      %v10972 = vshrl.u32 %v10765, 16
      %v10974 = vrot.slane %v10972, 5
      %v10975 = vshll.u32 %v10765, 16
      %v10977 = vrot.slane %v10975, 6
      %v10978 = vor.u32 %v10974, %v10977
      %v10979 = vsel %vm1449, %v10970, %v10978
      %v10981 = vshrl.u32 %v10368, 16
      %v10983 = vrot.slane %v10981, 5
      %v10984 = vshll.u32 %v10368, 16
      %v10986 = vrot.slane %v10984, 6
      %v10987 = vor.u32 %v10983, %v10986
      %v10988 = vrot.slane %v10987, 4
      %v10989 = vrot.slane %v9983, 5
      %v10990 = vrot.slane %v9979, 6
      %v10991 = vor.u32 %v10989, %v10990
      %v10992 = vsel %vm1449, %v10988, %v10991
      %v10993 = vrot.slane %v10991, 4
      %v10995 = vshrl.u32 %v10766, 16
      %v10997 = vrot.slane %v10995, 5
      %v10998 = vshll.u32 %v10766, 16
      %v11000 = vrot.slane %v10998, 6
      %v11001 = vor.u32 %v10997, %v11000
      %v11002 = vsel %vm1449, %v10993, %v11001
      %v11004 = vshrl.u32 %v10369, 16
      %v11006 = vrot.slane %v11004, 5
      %v11007 = vshll.u32 %v10369, 16
      %v11009 = vrot.slane %v11007, 6
      %v11010 = vor.u32 %v11006, %v11009
      %v11011 = vrot.slane %v11010, 4
      %v11012 = vrot.slane %v10007, 5
      %v11013 = vrot.slane %v10003, 6
      %v11014 = vor.u32 %v11012, %v11013
      %v11015 = vsel %vm1449, %v11011, %v11014
      %v11016 = vrot.slane %v11014, 4
      %v11018 = vshrl.u32 %v10767, 16
      %v11020 = vrot.slane %v11018, 5
      %v11021 = vshll.u32 %v10767, 16
      %v11023 = vrot.slane %v11021, 6
      %v11024 = vor.u32 %v11020, %v11023
      %v11025 = vsel %vm1449, %v11016, %v11024
      %v11027 = vshrl.u32 %v10370, 16
      %v11029 = vrot.slane %v11027, 5
      %v11030 = vshll.u32 %v10370, 16
      %v11032 = vrot.slane %v11030, 6
      %v11033 = vor.u32 %v11029, %v11032
      %v11034 = vrot.slane %v11033, 4
      %v11035 = vrot.slane %v10031, 5
      %v11036 = vrot.slane %v10027, 6
      %v11037 = vor.u32 %v11035, %v11036
      %v11038 = vsel %vm1449, %v11034, %v11037
      %v11039 = vrot.slane %v11037, 4
      %v11041 = vshrl.u32 %v10768, 16
      %v11043 = vrot.slane %v11041, 5
      %v11044 = vshll.u32 %v10768, 16
      %v11046 = vrot.slane %v11044, 6
      %v11047 = vor.u32 %v11043, %v11046
      %v11048 = vsel %vm1449, %v11039, %v11047
      %v11050 = vshrl.u32 %v10371, 16
      %v11052 = vrot.slane %v11050, 5
      %v11053 = vshll.u32 %v10371, 16
      %v11055 = vrot.slane %v11053, 6
      %v11056 = vor.u32 %v11052, %v11055
      %v11057 = vrot.slane %v11056, 4
      %v11058 = vrot.slane %v10055, 5
      %v11059 = vrot.slane %v10051, 6
      %v11060 = vor.u32 %v11058, %v11059
      %v11061 = vsel %vm1449, %v11057, %v11060
      %v11062 = vrot.slane %v11060, 4
      %v11064 = vshrl.u32 %v10769, 16
      %v11066 = vrot.slane %v11064, 5
      %v11067 = vshll.u32 %v10769, 16
      %v11069 = vrot.slane %v11067, 6
      %v11070 = vor.u32 %v11066, %v11069
      %v11071 = vsel %vm1449, %v11062, %v11070
      %v11073 = vshrl.u32 %v10372, 16
      %v11075 = vrot.slane %v11073, 5
      %v11076 = vshll.u32 %v10372, 16
      %v11078 = vrot.slane %v11076, 6
      %v11079 = vor.u32 %v11075, %v11078
      %v11080 = vrot.slane %v11079, 4
      %v11081 = vrot.slane %v10079, 5
      %v11082 = vrot.slane %v10075, 6
      %v11083 = vor.u32 %v11081, %v11082
      %v11084 = vsel %vm1449, %v11080, %v11083
      %v11085 = vrot.slane %v11083, 4
      %v11087 = vshrl.u32 %v10770, 16
      %v11089 = vrot.slane %v11087, 5
      %v11090 = vshll.u32 %v10770, 16
      %v11092 = vrot.slane %v11090, 6
      %v11093 = vor.u32 %v11089, %v11092
      %v11094 = vsel %vm1449, %v11085, %v11093
      %v11096 = vshrl.u32 %v10373, 16
      %v11098 = vrot.slane %v11096, 5
      %v11099 = vshll.u32 %v10373, 16
      %v11101 = vrot.slane %v11099, 6
      %v11102 = vor.u32 %v11098, %v11101
      %v11103 = vrot.slane %v11102, 4
      %v11104 = vrot.slane %v10103, 5
      %v11105 = vrot.slane %v10099, 6
      %v11106 = vor.u32 %v11104, %v11105
      %v11107 = vsel %vm1449, %v11103, %v11106
      %v11108 = vrot.slane %v11106, 4
      %v11110 = vshrl.u32 %v10771, 16
      %v11112 = vrot.slane %v11110, 5
      %v11113 = vshll.u32 %v10771, 16
      %v11115 = vrot.slane %v11113, 6
      %v11116 = vor.u32 %v11112, %v11115
      %v11117 = vsel %vm1449, %v11108, %v11116
      %v11119 = vshrl.u32 %v10374, 16
      %v11121 = vrot.slane %v11119, 5
      %v11122 = vshll.u32 %v10374, 16
      %v11124 = vrot.slane %v11122, 6
      %v11125 = vor.u32 %v11121, %v11124
      %v11126 = vrot.slane %v11125, 4
      %v11127 = vrot.slane %v10127, 5
      %v11128 = vrot.slane %v10123, 6
      %v11129 = vor.u32 %v11127, %v11128
      %v11130 = vsel %vm1449, %v11126, %v11129
      %v11131 = vrot.slane %v11129, 4
      %v11133 = vshrl.u32 %v10772, 16
      %v11135 = vrot.slane %v11133, 5
      %v11136 = vshll.u32 %v10772, 16
      %v11138 = vrot.slane %v11136, 6
      %v11139 = vor.u32 %v11135, %v11138
      %v11140 = vsel %vm1449, %v11131, %v11139
      %s11141 = scalar_lea.vmem %s1, 46
      %v11142 = vld [vmem:[%s11141] sm:$0x3]
      %v11143 = vunpack.c.l.b16 %v10785
      %v11144 = vunpack.c.l.b16 %v10795
      %v11145 = vunpack.c.l.b16 %v10808
      %v11146 = vunpack.c.l.b16 %v10818
      %v11147 = vunpack.c.l.b16 %v10831
      %v11148 = vunpack.c.l.b16 %v10841
      %v11149 = vunpack.c.l.b16 %v10854
      %v11150 = vunpack.c.l.b16 %v10864
      %v11151 = vunpack.c.l.b16 %v10877
      %v11152 = vunpack.c.l.b16 %v10887
      %v11153 = vunpack.c.l.b16 %v10900
      %v11154 = vunpack.c.l.b16 %v10910
      %v11155 = vunpack.c.l.b16 %v10923
      %v11156 = vunpack.c.l.b16 %v10933
      %v11157 = vunpack.c.l.b16 %v10946
      %v11158 = vunpack.c.l.b16 %v10956
      %v11159 = vunpack.c.l.b16 %v10969
      %v11160 = vunpack.c.l.b16 %v10979
      %v11161 = vunpack.c.l.b16 %v10992
      %v11162 = vunpack.c.l.b16 %v11002
      %v11163 = vunpack.c.l.b16 %v11015
      %v11164 = vunpack.c.l.b16 %v11025
      %v11165 = vunpack.c.l.b16 %v11038
      %v11166 = vunpack.c.l.b16 %v11048
      %v11167 = vunpack.c.l.b16 %v11061
      %v11168 = vunpack.c.l.b16 %v11071
      %v11169 = vunpack.c.l.b16 %v11084
      %v11170 = vunpack.c.l.b16 %v11094
      %v11171 = vunpack.c.l.b16 %v11107
      %v11172 = vunpack.c.l.b16 %v11117
      %v11173 = vunpack.c.l.b16 %v11130
      %v11174 = vunpack.c.l.b16 %v11140
      %v11175 = vpack.c.b16 %v11144, %v11143
      %v11176 = vpack.c.b16 %v11146, %v11145
      %v11177 = vpack.c.b16 %v11148, %v11147
      %v11178 = vpack.c.b16 %v11150, %v11149
      %v11179 = vpack.c.b16 %v11152, %v11151
      %v11180 = vpack.c.b16 %v11154, %v11153
      %v11181 = vpack.c.b16 %v11156, %v11155
      %v11182 = vpack.c.b16 %v11158, %v11157
      %v11183 = vpack.c.b16 %v11160, %v11159
      %v11184 = vpack.c.b16 %v11162, %v11161
      %v11185 = vpack.c.b16 %v11164, %v11163
      %v11186 = vpack.c.b16 %v11166, %v11165
      %v11187 = vpack.c.b16 %v11168, %v11167
      %v11188 = vpack.c.b16 %v11170, %v11169
      %v11189 = vpack.c.b16 %v11172, %v11171
      %v11190 = vpack.c.b16 %v11174, %v11173
      %v11192 = vsel %vm684, %v11175, 0
      %v11195 = vsel %vm684, %v11176, 0
      %v11198 = vsel %vm684, %v11177, 0
      %v11201 = vsel %vm684, %v11178, 0
      %v11204 = vsel %vm684, %v11179, 0
      %v11207 = vsel %vm684, %v11180, 0
      %v11210 = vsel %vm684, %v11181, 0
      %v11213 = vsel %vm684, %v11182, 0
      %v11216 = vsel %vm684, %v11183, 0
      %v11219 = vsel %vm684, %v11184, 0
      %v11222 = vsel %vm684, %v11185, 0
      %v11225 = vsel %vm684, %v11186, 0
      %v11228 = vsel %vm684, %v11187, 0
      %v11231 = vsel %vm684, %v11188, 0
      %v11234 = vsel %vm684, %v11189, 0
      %v11237 = vsel %vm684, %v11190, 0
      %v11240 = vsel %vm733, %v11142, 0
      %11242 = vmatpush.bf16.msra.mxu0 0
      %11243 = vmatpush.bf16.msra.mxu0 0
      %11244 = vmatpush.bf16.msra.mxu0 0
      %11245 = vmatpush.bf16.msra.mxu0 0
      %11246 = vmatpush.bf16.msra.mxu0 0
      %11247 = vmatpush.bf16.msra.mxu0 0
      %11248 = vmatpush.bf16.msra.mxu0 0
      %11249 = vmatpush.bf16.msra.mxu0 %v11240
      %11250 = vmatmul.bf16.gmra.mxu0 %v11192
      %v11251 = vpop.f32.mrf.mxu0
      %v11252 = vadd.f32 0.0, %v11251
      %v11253 = vpop.f32.mrf.mxu0
      %v11254 = vadd.f32 0.0, %v11253
      %11255 = vmatmul.bf16.gmra.mxu0 %v11195
      %v11256 = vpop.f32.mrf.mxu0
      %v11257 = vadd.f32 0.0, %v11256
      %v11258 = vpop.f32.mrf.mxu0
      %v11259 = vadd.f32 0.0, %v11258
      %11260 = vmatmul.bf16.gmra.mxu0 %v11198
      %v11261 = vpop.f32.mrf.mxu0
      %v11262 = vadd.f32 0.0, %v11261
      %v11263 = vpop.f32.mrf.mxu0
      %v11264 = vadd.f32 0.0, %v11263
      %11265 = vmatmul.bf16.gmra.mxu0 %v11201
      %v11266 = vpop.f32.mrf.mxu0
      %v11267 = vadd.f32 0.0, %v11266
      %v11268 = vpop.f32.mrf.mxu0
      %v11269 = vadd.f32 0.0, %v11268
      %11270 = vmatmul.bf16.gmra.mxu0 %v11204
      %v11271 = vpop.f32.mrf.mxu0
      %v11272 = vadd.f32 0.0, %v11271
      %v11273 = vpop.f32.mrf.mxu0
      %v11274 = vadd.f32 0.0, %v11273
      %11275 = vmatmul.bf16.gmra.mxu0 %v11207
      %v11276 = vpop.f32.mrf.mxu0
      %v11277 = vadd.f32 0.0, %v11276
      %v11278 = vpop.f32.mrf.mxu0
      %v11279 = vadd.f32 0.0, %v11278
      %11280 = vmatmul.bf16.gmra.mxu0 %v11210
      %v11281 = vpop.f32.mrf.mxu0
      %v11282 = vadd.f32 0.0, %v11281
      %v11283 = vpop.f32.mrf.mxu0
      %v11284 = vadd.f32 0.0, %v11283
      %11285 = vmatmul.bf16.gmra.mxu0 %v11213
      %v11286 = vpop.f32.mrf.mxu0
      %v11287 = vadd.f32 0.0, %v11286
      %v11288 = vpop.f32.mrf.mxu0
      %v11289 = vadd.f32 0.0, %v11288
      %11290 = vmatmul.bf16.gmra.mxu0 %v11216
      %v11291 = vpop.f32.mrf.mxu0
      %v11292 = vadd.f32 0.0, %v11291
      %v11293 = vpop.f32.mrf.mxu0
      %v11294 = vadd.f32 0.0, %v11293
      %11295 = vmatmul.bf16.gmra.mxu0 %v11219
      %v11296 = vpop.f32.mrf.mxu0
      %v11297 = vadd.f32 0.0, %v11296
      %v11298 = vpop.f32.mrf.mxu0
      %v11299 = vadd.f32 0.0, %v11298
      %11300 = vmatmul.bf16.gmra.mxu0 %v11222
      %v11301 = vpop.f32.mrf.mxu0
      %v11302 = vadd.f32 0.0, %v11301
      %v11303 = vpop.f32.mrf.mxu0
      %v11304 = vadd.f32 0.0, %v11303
      %11305 = vmatmul.bf16.gmra.mxu0 %v11225
      %v11306 = vpop.f32.mrf.mxu0
      %v11307 = vadd.f32 0.0, %v11306
      %v11308 = vpop.f32.mrf.mxu0
      %v11309 = vadd.f32 0.0, %v11308
      %11310 = vmatmul.bf16.gmra.mxu0 %v11228
      %v11311 = vpop.f32.mrf.mxu0
      %v11312 = vadd.f32 0.0, %v11311
      %v11313 = vpop.f32.mrf.mxu0
      %v11314 = vadd.f32 0.0, %v11313
      %11315 = vmatmul.bf16.gmra.mxu0 %v11231
      %v11316 = vpop.f32.mrf.mxu0
      %v11317 = vadd.f32 0.0, %v11316
      %v11318 = vpop.f32.mrf.mxu0
      %v11319 = vadd.f32 0.0, %v11318
      %11320 = vmatmul.bf16.gmra.mxu0 %v11234
      %v11321 = vpop.f32.mrf.mxu0
      %v11322 = vadd.f32 0.0, %v11321
      %v11323 = vpop.f32.mrf.mxu0
      %v11324 = vadd.f32 0.0, %v11323
      %11325 = vmatmul.bf16.gmra.mxu0 %v11237
      %v11326 = vpop.f32.mrf.mxu0
      %v11327 = vadd.f32 0.0, %v11326
      %v11328 = vpop.f32.mrf.mxu0
      %v11329 = vadd.f32 0.0, %v11328
      %11330 = vdwg.mxu0
      %v11331 = vadd.f32 %v10725, %v11252
      %v11332 = vadd.f32 %v10726, %v11254
      %v11333 = vadd.f32 %v10727, %v11257
      %v11334 = vadd.f32 %v10728, %v11259
      %v11335 = vadd.f32 %v10729, %v11262
      %v11336 = vadd.f32 %v10730, %v11264
      %v11337 = vadd.f32 %v10731, %v11267
      %v11338 = vadd.f32 %v10732, %v11269
      %v11339 = vadd.f32 %v10733, %v11272
      %v11340 = vadd.f32 %v10734, %v11274
      %v11341 = vadd.f32 %v10735, %v11277
      %v11342 = vadd.f32 %v10736, %v11279
      %v11343 = vadd.f32 %v10737, %v11282
      %v11344 = vadd.f32 %v10738, %v11284
      %v11345 = vadd.f32 %v10739, %v11287
      %v11346 = vadd.f32 %v10740, %v11289
      %v11347 = vadd.f32 %v10741, %v11292
      %v11348 = vadd.f32 %v10742, %v11294
      %v11349 = vadd.f32 %v10743, %v11297
      %v11350 = vadd.f32 %v10744, %v11299
      %v11351 = vadd.f32 %v10745, %v11302
      %v11352 = vadd.f32 %v10746, %v11304
      %v11353 = vadd.f32 %v10747, %v11307
      %v11354 = vadd.f32 %v10748, %v11309
      %v11355 = vadd.f32 %v10749, %v11312
      %v11356 = vadd.f32 %v10750, %v11314
      %v11357 = vadd.f32 %v10751, %v11317
      %v11358 = vadd.f32 %v10752, %v11319
      %v11359 = vadd.f32 %v10753, %v11322
      %v11360 = vadd.f32 %v10754, %v11324
      %v11361 = vadd.f32 %v10755, %v11327
      %v11362 = vadd.f32 %v10756, %v11329
      %v11363 = vld [vmem:[%s9418] sm:$0xc]
      %v11364 = vld [vmem:[%s9418 + $0xc] sm:$0xc]
      %v11365 = vld [vmem:[%s9418 + $0x18] sm:$0xc]
      %v11366 = vld [vmem:[%s9418 + $0x24] sm:$0xc]
      %v11367 = vld [vmem:[%s9418 + $0x30] sm:$0xc]
      %v11368 = vld [vmem:[%s9418 + $0x3c] sm:$0xc]
      %v11369 = vld [vmem:[%s9418 + $0x48] sm:$0xc]
      %v11370 = vld [vmem:[%s9418 + $0x54] sm:$0xc]
      %v11371 = vld [vmem:[%s9418 + $0x60] sm:$0xc]
      %v11372 = vld [vmem:[%s9418 + $0x6c] sm:$0xc]
      %v11373 = vld [vmem:[%s9418 + $0x78] sm:$0xc]
      %v11374 = vld [vmem:[%s9418 + $0x84] sm:$0xc]
      %v11375 = vld [vmem:[%s9418 + $0x90] sm:$0xc]
      %v11376 = vld [vmem:[%s9418 + $0x9c] sm:$0xc]
      %v11377 = vld [vmem:[%s9418 + $0xa8] sm:$0xc]
      %v11378 = vld [vmem:[%s9418 + $0xb4] sm:$0xc]
      %v11411 = vrot.slane %v11363, 6
      %v11412 = vrot.slane %v11411, 4
      %v11413 = vrot.slane %v9706, 6
      %v11414 = vsel %vm2090, %v11412, %v11413
      %v11415 = vrot.slane %v11413, 4
      %v11416 = vrot.slane %v10757, 6
      %v11417 = vsel %vm2090, %v11415, %v11416
      %v11418 = vrot.slane %v11364, 6
      %v11419 = vrot.slane %v11418, 4
      %v11420 = vrot.slane %v9709, 6
      %v11421 = vsel %vm2090, %v11419, %v11420
      %v11422 = vrot.slane %v11420, 4
      %v11423 = vrot.slane %v10758, 6
      %v11424 = vsel %vm2090, %v11422, %v11423
      %v11425 = vrot.slane %v11365, 6
      %v11426 = vrot.slane %v11425, 4
      %v11427 = vrot.slane %v9712, 6
      %v11428 = vsel %vm2090, %v11426, %v11427
      %v11429 = vrot.slane %v11427, 4
      %v11430 = vrot.slane %v10759, 6
      %v11431 = vsel %vm2090, %v11429, %v11430
      %v11432 = vrot.slane %v11366, 6
      %v11433 = vrot.slane %v11432, 4
      %v11434 = vrot.slane %v9715, 6
      %v11435 = vsel %vm2090, %v11433, %v11434
      %v11436 = vrot.slane %v11434, 4
      %v11437 = vrot.slane %v10760, 6
      %v11438 = vsel %vm2090, %v11436, %v11437
      %v11439 = vrot.slane %v11367, 6
      %v11440 = vrot.slane %v11439, 4
      %v11441 = vrot.slane %v9718, 6
      %v11442 = vsel %vm2090, %v11440, %v11441
      %v11443 = vrot.slane %v11441, 4
      %v11444 = vrot.slane %v10761, 6
      %v11445 = vsel %vm2090, %v11443, %v11444
      %v11446 = vrot.slane %v11368, 6
      %v11447 = vrot.slane %v11446, 4
      %v11448 = vrot.slane %v9721, 6
      %v11449 = vsel %vm2090, %v11447, %v11448
      %v11450 = vrot.slane %v11448, 4
      %v11451 = vrot.slane %v10762, 6
      %v11452 = vsel %vm2090, %v11450, %v11451
      %v11453 = vrot.slane %v11369, 6
      %v11454 = vrot.slane %v11453, 4
      %v11455 = vrot.slane %v9724, 6
      %v11456 = vsel %vm2090, %v11454, %v11455
      %v11457 = vrot.slane %v11455, 4
      %v11458 = vrot.slane %v10763, 6
      %v11459 = vsel %vm2090, %v11457, %v11458
      %v11460 = vrot.slane %v11370, 6
      %v11461 = vrot.slane %v11460, 4
      %v11462 = vrot.slane %v9727, 6
      %v11463 = vsel %vm2090, %v11461, %v11462
      %v11464 = vrot.slane %v11462, 4
      %v11465 = vrot.slane %v10764, 6
      %v11466 = vsel %vm2090, %v11464, %v11465
      %v11467 = vrot.slane %v11371, 6
      %v11468 = vrot.slane %v11467, 4
      %v11469 = vrot.slane %v9730, 6
      %v11470 = vsel %vm2090, %v11468, %v11469
      %v11471 = vrot.slane %v11469, 4
      %v11472 = vrot.slane %v10765, 6
      %v11473 = vsel %vm2090, %v11471, %v11472
      %v11474 = vrot.slane %v11372, 6
      %v11475 = vrot.slane %v11474, 4
      %v11476 = vrot.slane %v9733, 6
      %v11477 = vsel %vm2090, %v11475, %v11476
      %v11478 = vrot.slane %v11476, 4
      %v11479 = vrot.slane %v10766, 6
      %v11480 = vsel %vm2090, %v11478, %v11479
      %v11481 = vrot.slane %v11373, 6
      %v11482 = vrot.slane %v11481, 4
      %v11483 = vrot.slane %v9736, 6
      %v11484 = vsel %vm2090, %v11482, %v11483
      %v11485 = vrot.slane %v11483, 4
      %v11486 = vrot.slane %v10767, 6
      %v11487 = vsel %vm2090, %v11485, %v11486
      %v11488 = vrot.slane %v11374, 6
      %v11489 = vrot.slane %v11488, 4
      %v11490 = vrot.slane %v9739, 6
      %v11491 = vsel %vm2090, %v11489, %v11490
      %v11492 = vrot.slane %v11490, 4
      %v11493 = vrot.slane %v10768, 6
      %v11494 = vsel %vm2090, %v11492, %v11493
      %v11495 = vrot.slane %v11375, 6
      %v11496 = vrot.slane %v11495, 4
      %v11497 = vrot.slane %v9742, 6
      %v11498 = vsel %vm2090, %v11496, %v11497
      %v11499 = vrot.slane %v11497, 4
      %v11500 = vrot.slane %v10769, 6
      %v11501 = vsel %vm2090, %v11499, %v11500
      %v11502 = vrot.slane %v11376, 6
      %v11503 = vrot.slane %v11502, 4
      %v11504 = vrot.slane %v9745, 6
      %v11505 = vsel %vm2090, %v11503, %v11504
      %v11506 = vrot.slane %v11504, 4
      %v11507 = vrot.slane %v10770, 6
      %v11508 = vsel %vm2090, %v11506, %v11507
      %v11509 = vrot.slane %v11377, 6
      %v11510 = vrot.slane %v11509, 4
      %v11511 = vrot.slane %v9748, 6
      %v11512 = vsel %vm2090, %v11510, %v11511
      %v11513 = vrot.slane %v11511, 4
      %v11514 = vrot.slane %v10771, 6
      %v11515 = vsel %vm2090, %v11513, %v11514
      %v11516 = vrot.slane %v11378, 6
      %v11517 = vrot.slane %v11516, 4
      %v11518 = vrot.slane %v9751, 6
      %v11519 = vsel %vm2090, %v11517, %v11518
      %v11520 = vrot.slane %v11518, 4
      %v11521 = vrot.slane %v10772, 6
      %v11522 = vsel %vm2090, %v11520, %v11521
      %s11523 = scalar_lea.vmem %s1, 48
      %v11524 = vld [vmem:[%s11523] sm:$0x3]
      %v11525 = vunpack.c.l.b16 %v11414
      %v11526 = vunpack.c.l.b16 %v11417
      %v11527 = vunpack.c.l.b16 %v11421
      %v11528 = vunpack.c.l.b16 %v11424
      %v11529 = vunpack.c.l.b16 %v11428
      %v11530 = vunpack.c.l.b16 %v11431
      %v11531 = vunpack.c.l.b16 %v11435
      %v11532 = vunpack.c.l.b16 %v11438
      %v11533 = vunpack.c.l.b16 %v11442
      %v11534 = vunpack.c.l.b16 %v11445
      %v11535 = vunpack.c.l.b16 %v11449
      %v11536 = vunpack.c.l.b16 %v11452
      %v11537 = vunpack.c.l.b16 %v11456
      %v11538 = vunpack.c.l.b16 %v11459
      %v11539 = vunpack.c.l.b16 %v11463
      %v11540 = vunpack.c.l.b16 %v11466
      %v11541 = vunpack.c.l.b16 %v11470
      %v11542 = vunpack.c.l.b16 %v11473
      %v11543 = vunpack.c.l.b16 %v11477
      %v11544 = vunpack.c.l.b16 %v11480
      %v11545 = vunpack.c.l.b16 %v11484
      %v11546 = vunpack.c.l.b16 %v11487
      %v11547 = vunpack.c.l.b16 %v11491
      %v11548 = vunpack.c.l.b16 %v11494
      %v11549 = vunpack.c.l.b16 %v11498
      %v11550 = vunpack.c.l.b16 %v11501
      %v11551 = vunpack.c.l.b16 %v11505
      %v11552 = vunpack.c.l.b16 %v11508
      %v11553 = vunpack.c.l.b16 %v11512
      %v11554 = vunpack.c.l.b16 %v11515
      %v11555 = vunpack.c.l.b16 %v11519
      %v11556 = vunpack.c.l.b16 %v11522
      %v11557 = vpack.c.b16 %v11526, %v11525
      %v11558 = vpack.c.b16 %v11528, %v11527
      %v11559 = vpack.c.b16 %v11530, %v11529
      %v11560 = vpack.c.b16 %v11532, %v11531
      %v11561 = vpack.c.b16 %v11534, %v11533
      %v11562 = vpack.c.b16 %v11536, %v11535
      %v11563 = vpack.c.b16 %v11538, %v11537
      %v11564 = vpack.c.b16 %v11540, %v11539
      %v11565 = vpack.c.b16 %v11542, %v11541
      %v11566 = vpack.c.b16 %v11544, %v11543
      %v11567 = vpack.c.b16 %v11546, %v11545
      %v11568 = vpack.c.b16 %v11548, %v11547
      %v11569 = vpack.c.b16 %v11550, %v11549
      %v11570 = vpack.c.b16 %v11552, %v11551
      %v11571 = vpack.c.b16 %v11554, %v11553
      %v11572 = vpack.c.b16 %v11556, %v11555
      %v11574 = vsel %vm684, %v11557, 0
      %v11577 = vsel %vm684, %v11558, 0
      %v11580 = vsel %vm684, %v11559, 0
      %v11583 = vsel %vm684, %v11560, 0
      %v11586 = vsel %vm684, %v11561, 0
      %v11589 = vsel %vm684, %v11562, 0
      %v11592 = vsel %vm684, %v11563, 0
      %v11595 = vsel %vm684, %v11564, 0
      %v11598 = vsel %vm684, %v11565, 0
      %v11601 = vsel %vm684, %v11566, 0
      %v11604 = vsel %vm684, %v11567, 0
      %v11607 = vsel %vm684, %v11568, 0
      %v11610 = vsel %vm684, %v11569, 0
      %v11613 = vsel %vm684, %v11570, 0
      %v11616 = vsel %vm684, %v11571, 0
      %v11619 = vsel %vm684, %v11572, 0
      %v11622 = vsel %vm733, %v11524, 0
      %11624 = vmatpush.bf16.msra.mxu0 0
      %11625 = vmatpush.bf16.msra.mxu0 0
      %11626 = vmatpush.bf16.msra.mxu0 0
      %11627 = vmatpush.bf16.msra.mxu0 0
      %11628 = vmatpush.bf16.msra.mxu0 0
      %11629 = vmatpush.bf16.msra.mxu0 0
      %11630 = vmatpush.bf16.msra.mxu0 0
      %11631 = vmatpush.bf16.msra.mxu0 %v11622
      %11632 = vmatmul.bf16.gmra.mxu0 %v11574
      %v11633 = vpop.f32.mrf.mxu0
      %v11634 = vadd.f32 0.0, %v11633
      %v11635 = vpop.f32.mrf.mxu0
      %v11636 = vadd.f32 0.0, %v11635
      %11637 = vmatmul.bf16.gmra.mxu0 %v11577
      %v11638 = vpop.f32.mrf.mxu0
      %v11639 = vadd.f32 0.0, %v11638
      %v11640 = vpop.f32.mrf.mxu0
      %v11641 = vadd.f32 0.0, %v11640
      %11642 = vmatmul.bf16.gmra.mxu0 %v11580
      %v11643 = vpop.f32.mrf.mxu0
      %v11644 = vadd.f32 0.0, %v11643
      %v11645 = vpop.f32.mrf.mxu0
      %v11646 = vadd.f32 0.0, %v11645
      %11647 = vmatmul.bf16.gmra.mxu0 %v11583
      %v11648 = vpop.f32.mrf.mxu0
      %v11649 = vadd.f32 0.0, %v11648
      %v11650 = vpop.f32.mrf.mxu0
      %v11651 = vadd.f32 0.0, %v11650
      %11652 = vmatmul.bf16.gmra.mxu0 %v11586
      %v11653 = vpop.f32.mrf.mxu0
      %v11654 = vadd.f32 0.0, %v11653
      %v11655 = vpop.f32.mrf.mxu0
      %v11656 = vadd.f32 0.0, %v11655
      %11657 = vmatmul.bf16.gmra.mxu0 %v11589
      %v11658 = vpop.f32.mrf.mxu0
      %v11659 = vadd.f32 0.0, %v11658
      %v11660 = vpop.f32.mrf.mxu0
      %v11661 = vadd.f32 0.0, %v11660
      %11662 = vmatmul.bf16.gmra.mxu0 %v11592
      %v11663 = vpop.f32.mrf.mxu0
      %v11664 = vadd.f32 0.0, %v11663
      %v11665 = vpop.f32.mrf.mxu0
      %v11666 = vadd.f32 0.0, %v11665
      %11667 = vmatmul.bf16.gmra.mxu0 %v11595
      %v11668 = vpop.f32.mrf.mxu0
      %v11669 = vadd.f32 0.0, %v11668
      %v11670 = vpop.f32.mrf.mxu0
      %v11671 = vadd.f32 0.0, %v11670
      %11672 = vmatmul.bf16.gmra.mxu0 %v11598
      %v11673 = vpop.f32.mrf.mxu0
      %v11674 = vadd.f32 0.0, %v11673
      %v11675 = vpop.f32.mrf.mxu0
      %v11676 = vadd.f32 0.0, %v11675
      %11677 = vmatmul.bf16.gmra.mxu0 %v11601
      %v11678 = vpop.f32.mrf.mxu0
      %v11679 = vadd.f32 0.0, %v11678
      %v11680 = vpop.f32.mrf.mxu0
      %v11681 = vadd.f32 0.0, %v11680
      %11682 = vmatmul.bf16.gmra.mxu0 %v11604
      %v11683 = vpop.f32.mrf.mxu0
      %v11684 = vadd.f32 0.0, %v11683
      %v11685 = vpop.f32.mrf.mxu0
      %v11686 = vadd.f32 0.0, %v11685
      %11687 = vmatmul.bf16.gmra.mxu0 %v11607
      %v11688 = vpop.f32.mrf.mxu0
      %v11689 = vadd.f32 0.0, %v11688
      %v11690 = vpop.f32.mrf.mxu0
      %v11691 = vadd.f32 0.0, %v11690
      %11692 = vmatmul.bf16.gmra.mxu0 %v11610
      %v11693 = vpop.f32.mrf.mxu0
      %v11694 = vadd.f32 0.0, %v11693
      %v11695 = vpop.f32.mrf.mxu0
      %v11696 = vadd.f32 0.0, %v11695
      %11697 = vmatmul.bf16.gmra.mxu0 %v11613
      %v11698 = vpop.f32.mrf.mxu0
      %v11699 = vadd.f32 0.0, %v11698
      %v11700 = vpop.f32.mrf.mxu0
      %v11701 = vadd.f32 0.0, %v11700
      %11702 = vmatmul.bf16.gmra.mxu0 %v11616
      %v11703 = vpop.f32.mrf.mxu0
      %v11704 = vadd.f32 0.0, %v11703
      %v11705 = vpop.f32.mrf.mxu0
      %v11706 = vadd.f32 0.0, %v11705
      %11707 = vmatmul.bf16.gmra.mxu0 %v11619
      %v11708 = vpop.f32.mrf.mxu0
      %v11709 = vadd.f32 0.0, %v11708
      %v11710 = vpop.f32.mrf.mxu0
      %v11711 = vadd.f32 0.0, %v11710
      %11712 = vdwg.mxu0
      %v11713 = vadd.f32 %v11331, %v11634
      %v11714 = vadd.f32 %v11332, %v11636
      %v11715 = vadd.f32 %v11333, %v11639
      %v11716 = vadd.f32 %v11334, %v11641
      %v11717 = vadd.f32 %v11335, %v11644
      %v11718 = vadd.f32 %v11336, %v11646
      %v11719 = vadd.f32 %v11337, %v11649
      %v11720 = vadd.f32 %v11338, %v11651
      %v11721 = vadd.f32 %v11339, %v11654
      %v11722 = vadd.f32 %v11340, %v11656
      %v11723 = vadd.f32 %v11341, %v11659
      %v11724 = vadd.f32 %v11342, %v11661
      %v11725 = vadd.f32 %v11343, %v11664
      %v11726 = vadd.f32 %v11344, %v11666
      %v11727 = vadd.f32 %v11345, %v11669
      %v11728 = vadd.f32 %v11346, %v11671
      %v11729 = vadd.f32 %v11347, %v11674
      %v11730 = vadd.f32 %v11348, %v11676
      %v11731 = vadd.f32 %v11349, %v11679
      %v11732 = vadd.f32 %v11350, %v11681
      %v11733 = vadd.f32 %v11351, %v11684
      %v11734 = vadd.f32 %v11352, %v11686
      %v11735 = vadd.f32 %v11353, %v11689
      %v11736 = vadd.f32 %v11354, %v11691
      %v11737 = vadd.f32 %v11355, %v11694
      %v11738 = vadd.f32 %v11356, %v11696
      %v11739 = vadd.f32 %v11357, %v11699
      %v11740 = vadd.f32 %v11358, %v11701
      %v11741 = vadd.f32 %v11359, %v11704
      %v11742 = vadd.f32 %v11360, %v11706
      %v11743 = vadd.f32 %v11361, %v11709
      %v11744 = vadd.f32 %v11362, %v11711
      %v11745 = vld [vmem:[%s2] sm:$0x1]
      %v11747 = vperm.slane %v11745, 0
      %v11749 = vadd.f32 %v11713, %v11747
      %v11750 = vadd.f32 %v11714, %v11747
      %v11751 = vadd.f32 %v11715, %v11747
      %v11752 = vadd.f32 %v11716, %v11747
      %v11753 = vadd.f32 %v11717, %v11747
      %v11754 = vadd.f32 %v11718, %v11747
      %v11755 = vadd.f32 %v11719, %v11747
      %v11756 = vadd.f32 %v11720, %v11747
      %v11757 = vadd.f32 %v11721, %v11747
      %v11758 = vadd.f32 %v11722, %v11747
      %v11759 = vadd.f32 %v11723, %v11747
      %v11760 = vadd.f32 %v11724, %v11747
      %v11761 = vadd.f32 %v11725, %v11747
      %v11762 = vadd.f32 %v11726, %v11747
      %v11763 = vadd.f32 %v11727, %v11747
      %v11764 = vadd.f32 %v11728, %v11747
      %v11765 = vadd.f32 %v11729, %v11747
      %v11766 = vadd.f32 %v11730, %v11747
      %v11767 = vadd.f32 %v11731, %v11747
      %v11768 = vadd.f32 %v11732, %v11747
      %v11769 = vadd.f32 %v11733, %v11747
      %v11770 = vadd.f32 %v11734, %v11747
      %v11771 = vadd.f32 %v11735, %v11747
      %v11772 = vadd.f32 %v11736, %v11747
      %v11773 = vadd.f32 %v11737, %v11747
      %v11774 = vadd.f32 %v11738, %v11747
      %v11775 = vadd.f32 %v11739, %v11747
      %v11776 = vadd.f32 %v11740, %v11747
      %v11777 = vadd.f32 %v11741, %v11747
      %v11778 = vadd.f32 %v11742, %v11747
      %v11779 = vadd.f32 %v11743, %v11747
      %v11780 = vadd.f32 %v11744, %v11747
      %11781 = vst.msk [vmem:[%s192] sm:$0xff] %vm684, %v11749
      %11782 = vst.msk [vmem:[%s192 + $0x8] sm:$0xff] %vm684, %v11750
      %11783 = vst.msk [vmem:[%s192 + $0x10] sm:$0xff] %vm684, %v11751
      %11784 = vst.msk [vmem:[%s192 + $0x18] sm:$0xff] %vm684, %v11752
      %11785 = vst.msk [vmem:[%s192 + $0x20] sm:$0xff] %vm684, %v11753
      %11786 = vst.msk [vmem:[%s192 + $0x28] sm:$0xff] %vm684, %v11754
      %11787 = vst.msk [vmem:[%s192 + $0x30] sm:$0xff] %vm684, %v11755
      %11788 = vst.msk [vmem:[%s192 + $0x38] sm:$0xff] %vm684, %v11756
      %11789 = vst.msk [vmem:[%s192 + $0x40] sm:$0xff] %vm684, %v11757
      %11790 = vst.msk [vmem:[%s192 + $0x48] sm:$0xff] %vm684, %v11758
      %11791 = vst.msk [vmem:[%s192 + $0x50] sm:$0xff] %vm684, %v11759
      %11792 = vst.msk [vmem:[%s192 + $0x58] sm:$0xff] %vm684, %v11760
      %11793 = vst.msk [vmem:[%s192 + $0x60] sm:$0xff] %vm684, %v11761
      %11794 = vst.msk [vmem:[%s192 + $0x68] sm:$0xff] %vm684, %v11762
      %11795 = vst.msk [vmem:[%s192 + $0x70] sm:$0xff] %vm684, %v11763
      %11796 = vst.msk [vmem:[%s192 + $0x78] sm:$0xff] %vm684, %v11764
      %11797 = vst.msk [vmem:[%s192 + $0x80] sm:$0xff] %vm684, %v11765
      %11798 = vst.msk [vmem:[%s192 + $0x88] sm:$0xff] %vm684, %v11766
      %11799 = vst.msk [vmem:[%s192 + $0x90] sm:$0xff] %vm684, %v11767
      %11800 = vst.msk [vmem:[%s192 + $0x98] sm:$0xff] %vm684, %v11768
      %11801 = vst.msk [vmem:[%s192 + $0xa0] sm:$0xff] %vm684, %v11769
      %11802 = vst.msk [vmem:[%s192 + $0xa8] sm:$0xff] %vm684, %v11770
      %11803 = vst.msk [vmem:[%s192 + $0xb0] sm:$0xff] %vm684, %v11771
      %11804 = vst.msk [vmem:[%s192 + $0xb8] sm:$0xff] %vm684, %v11772
      %11805 = vst.msk [vmem:[%s192 + $0xc0] sm:$0xff] %vm684, %v11773
      %11806 = vst.msk [vmem:[%s192 + $0xc8] sm:$0xff] %vm684, %v11774
      %11807 = vst.msk [vmem:[%s192 + $0xd0] sm:$0xff] %vm684, %v11775
      %11808 = vst.msk [vmem:[%s192 + $0xd8] sm:$0xff] %vm684, %v11776
      %11809 = vst.msk [vmem:[%s192 + $0xe0] sm:$0xff] %vm684, %v11777
      %11810 = vst.msk [vmem:[%s192 + $0xe8] sm:$0xff] %vm684, %v11778
      %11811 = vst.msk [vmem:[%s192 + $0xf0] sm:$0xff] %vm684, %v11779
      %11812 = vst.msk [vmem:[%s192 + $0xf8] sm:$0xff] %vm684, %v11780
      %p11813 = scmp.lt.s32.totalorder %s18, 1
      %s11814 = scalar_select %p11813, %s18, 1
      %p11815 = scmp.lt.s32.totalorder %s19, 0
      %s11816 = scalar_select %p11815, %s19, 0
      %s11817 = smul.addr %s11816, 32
      %s11818 = smul.addr %s11814, 32
      %s11819 = sadd.s32 %s11817, %s11818
      %s11820 = smul.addr %s11819, 8
      %s11821 = scalar_lea.vmem %s3, %s11820
      // Predicated region
      $region33: #{tpu_custom_call.1} parent=31 // pred_check
        %p11822 = pneg %p114
      $region34: #{tpu_custom_call.1} parent=31 // pred_check_branch
        %11824 = sbr.rel (%p11822) target = $region36
      $region35: #{tpu_custom_call.1} parent=31 // pred_region
        _
      $region36: #{tpu_custom_call.1} parent=31 // pred_fallthru
        _
    $region32: #{tpu_custom_call.1} parent=5 // pred_fallthru
      _
    %p11825 = scmp.le.s32.totalorder 2, %s9
    // Predicated region
    $region37: #{tpu_custom_call.1} parent=5 // pred_check
      %p11826 = pneg %p11825
    $region38: #{tpu_custom_call.1} parent=5 // pred_check_branch
      %11828 = sbr.rel (%p11826) target = $region40
    $region39: #{tpu_custom_call.1} parent=5 // pred_region
      %s11829 = ssub.s32 %s9, 2
      // Predicated region
      $region41: #{tpu_custom_call.1} parent=39 // pred_check
        %p11830 = pneg %p120
      $region42: #{tpu_custom_call.1} parent=39 // pred_check_branch
        %11832 = sbr.rel (%p11830) target = $region44
      $region43: #{tpu_custom_call.1} parent=39 // pred_region
        %p11833 = scmp.lt.s32.totalorder %s20, 1
        %s11834 = scalar_select %p11833, %s20, 1
        %p11835 = scmp.lt.s32.totalorder %s21, 0
        %s11836 = scalar_select %p11835, %s21, 0
        %s11837 = smul.addr %s11836, 32
        %s11838 = smul.addr %s11834, 32
        %s11839 = sadd.s32 %s11837, %s11838
        %s11840 = smul.addr %s11839, 8
        %s11841 = scalar_lea.vmem %s3, %s11840
      $region44: #{tpu_custom_call.1} parent=39 // pred_fallthru
        _
    $region40: #{tpu_custom_call.1} parent=5 // pred_fallthru
      _
  $region6: #{tpu_custom_call.1} parent=0 // loop_footer
    %s13 = sadd.s32 1, %s9
  $region7: #{tpu_custom_call.1} parent=0 // loop_footer_branch
    %8 = sbr.rel target = $region3
  $region8: #{tpu_custom_call.1} parent=0 // loop_exit
    _

</llo_original>
